<compile_context>
chip_gen: v5e
topology: v5e:2x2
jax: 0.10.0
libtpu: 0.0.40
codegen_flags: <defaults>
</compile_context>

<pallas_src>
import jax
import jax.numpy as jnp
from jax import lax
from jax.experimental import pallas as pl
from jax.experimental.pallas import tpu as pltpu

# ----- model hyper-parameters (small, consistent with the SHD forward) -----
T      = 8      # spiking time steps
B      = 128    # batch
B_TILE = 64     # batch tile per grid step (grid = 2 -> one tile per TC on v7x)
D_IN   = 64     # input units per timestep (real SHD uses 700; small synthetic here)
LAT    = 16     # encoder latent size == channel symbols per timestep
HID    = 32     # decoder hidden size
N_CLS  = 20     # SHD has 20 classes
LANE   = 128    # TPU lane width; output feature dims zero-padded to this
V_TH   = 0.5    # LIF firing threshold
BETA   = 0.9    # LIF membrane decay
SNR_DB = 10.0   # channel SNR
EPS    = 1e-6
SQRT_K = float(LAT) ** 0.5   # power-norm uses the REAL latent width (padded lanes never fire)


def shd_jscc_kernel(x_ref, noise_ref, w_enc_ref, b_enc_ref, w_d1_ref, b_d1_ref,
                    w_d2_ref, b_d2_ref, logits_ref, fire_ref):
    """SNN-JSCC forward for one batch tile, statically unrolled over T in-kernel.

    x_ref:      [T, B_TILE, D_IN]   bf16 input spikes (un-padded K = 64)
    noise_ref:  [T, B_TILE, LANE]   bf16 AWGN pre-scaled by sigma (zero past LAT)
    logits_ref: [B_TILE, LANE]      f32 time-averaged readout (cols >= N_CLS are 0)
    fire_ref:   [B_TILE, T, LANE]   bf16 encoder spike trains (cols >= LAT are 0)
    """
    # ---- hoist weight loads / bias broadcasts out of the unrolled T loop ----
    w_enc = w_enc_ref[...]                                       # [D_IN, LANE] bf16
    w_d1 = w_d1_ref[...]                                         # [LANE, LANE] bf16
    w_d2 = w_d2_ref[...]                                         # [LANE, LANE] bf16
    b_d1 = jnp.broadcast_to(b_d1_ref[...], (B_TILE, LANE))       # [B_TILE, LANE] f32

    # ---- hoisted encoder matmul: all T timesteps at once (M = T*B_TILE = 512) ----
    x_all = x_ref[...].reshape(T * B_TILE, D_IN)                 # time-major rows
    i_enc_all = (jnp.dot(x_all, w_enc, preferred_element_type=jnp.float32)
                 + b_enc_ref[...])                               # [T*B_TILE, LANE] f32

    mem_enc = jnp.zeros((B_TILE, LANE), jnp.float32)
    mem_d1 = jnp.zeros((B_TILE, LANE), jnp.float32)
    spike_sum = jnp.zeros((B_TILE, LANE), jnp.float32)

    for t in range(T):                                           # static unroll, T = 8
        # -------- encoder LIF (soft reset) --------
        i_enc = i_enc_all[t * B_TILE:(t + 1) * B_TILE, :]        # contiguous static slice
        m = mem_enc * BETA + i_enc
        spk = (m >= V_TH).astype(jnp.float32)                    # padded lanes never fire
        mem_enc = m - spk * V_TH
        fire_ref[:, t, :] = spk.astype(jnp.bfloat16)             # batch-major, lane-dense

        # -------- channel: per-sample power normalization + AWGN --------
        power = jnp.sum(spk, axis=-1, keepdims=True)             # spk in {0,1}: sum == sum-of-squares
        scale = SQRT_K * lax.rsqrt(power + EPS)                  # EUP rsqrt, frees VALU slot
        rx = spk * scale + noise_ref[t].astype(jnp.float32)      # [B_TILE, LANE] f32

        # -------- decoder hidden LIF --------
        # TODO(synk): rx downcast to bf16 for the MXU loses ~8 mantissa bits vs an
        #             f32 torch reference; near-threshold hidden spikes can flip.
        i_d1 = jnp.dot(rx.astype(jnp.bfloat16), w_d1,
                       preferred_element_type=jnp.float32) + b_d1
        m1 = mem_d1 * BETA + i_d1
        spk1 = (m1 >= V_TH).astype(jnp.float32)
        mem_d1 = m1 - spk1 * V_TH
        spike_sum = spike_sum + spk1                             # defer readout matmul

    # single deferred readout matmul (exact: counts <= T are bf16-representable);
    # bias added every step then averaged over T == added once to the average.
    out = jnp.dot(spike_sum.astype(jnp.bfloat16), w_d2,
                  preferred_element_type=jnp.float32)
    logits_ref[...] = out * (1.0 / T) + b_d2_ref[...]


def _pad2d(a, rows, cols):
    return jnp.pad(a, ((0, rows - a.shape[0]), (0, cols - a.shape[1])))


def _pad_last(a, size):
    pad = [(0, 0)] * (a.ndim - 1) + [(0, size - a.shape[-1])]
    return jnp.pad(a, pad)


@jax.jit
def shd_jscc_forward(x_btd, params, noise_tbl):
    """x_btd: [B, T, D_IN] (PyTorch layout). noise_tbl: [T, B, LAT] f32 (sigma-scaled).

    Returns (classification [B, N_CLS], fire_out [B, T, LAT])."""
    # Single fused transpose+cast for x (contraction dim kept at D_IN = 64, no pad).
    x_tbd = jnp.transpose(x_btd, (1, 0, 2)).astype(jnp.bfloat16)     # [T, B, 64]
    noise_pad = _pad_last(noise_tbl, LANE).astype(jnp.bfloat16)      # [T, B, 128] bf16

    w_enc = _pad2d(params["w_enc"], D_IN, LANE).astype(jnp.bfloat16)  # [64, 128]
    b_enc = _pad2d(params["b_enc"], 1, LANE).astype(jnp.float32)
    w_d1 = _pad2d(params["w_d1"], LANE, LANE).astype(jnp.bfloat16)
    b_d1 = _pad2d(params["b_d1"], 1, LANE).astype(jnp.float32)
    w_d2 = _pad2d(params["w_d2"], LANE, LANE).astype(jnp.bfloat16)
    b_d2 = _pad2d(params["b_d2"], 1, LANE).astype(jnp.float32)

    grid = (B // B_TILE,)
    logits_pad, fire_pad = pl.pallas_call(
        shd_jscc_kernel,
        grid=grid,
        in_specs=[
            pl.BlockSpec((T, B_TILE, D_IN), lambda i: (0, i, 0)),     # x (K = 64, un-padded)
            pl.BlockSpec((T, B_TILE, LANE), lambda i: (0, i, 0)),     # noise (bf16)
            pl.BlockSpec((D_IN, LANE), lambda i: (0, 0)),             # w_enc
            pl.BlockSpec((1, LANE), lambda i: (0, 0)),                # b_enc
            pl.BlockSpec((LANE, LANE), lambda i: (0, 0)),             # w_d1
            pl.BlockSpec((1, LANE), lambda i: (0, 0)),                # b_d1
            pl.BlockSpec((LANE, LANE), lambda i: (0, 0)),             # w_d2
            pl.BlockSpec((1, LANE), lambda i: (0, 0)),                # b_d2
        ],
        out_specs=(
            pl.BlockSpec((B_TILE, LANE), lambda i: (i, 0)),           # logits
            pl.BlockSpec((B_TILE, T, LANE), lambda i: (i, 0, 0)),     # fire (batch-major)
        ),
        out_shape=(
            jax.ShapeDtypeStruct((B, LANE), jnp.float32),
            jax.ShapeDtypeStruct((B, T, LANE), jnp.bfloat16),
        ),
        compiler_params=pltpu.CompilerParams(
            dimension_semantics=("parallel",)),                       # 2x on v7x megacore
    )(x_tbd, noise_pad, w_enc, b_enc, w_d1, b_d1, w_d2, b_d2)

    # slice padded lanes back off outside the kernel (no output transpose needed)
    classification = logits_pad[:, :N_CLS]                            # [B, N_CLS]
    fire_out = fire_pad[:, :, :LAT].astype(jnp.float32)               # [B, T, LAT]
    return classification, fire_out


def init_params(key):
    """Deterministic init mimicking torch.nn.Linear defaults (U[-1/sqrt(fan_in), ...])."""
    k1, k2, k3, k4, k5, k6 = jax.random.split(key, 6)

    def lin(kw, kb, fan_in, fan_out):
        bound = 1.0 / jnp.sqrt(jnp.float32(fan_in))
        w = jax.random.uniform(kw, (fan_in, fan_out), jnp.float32, -bound, bound)
        b = jax.random.uniform(kb, (1, fan_out), jnp.float32, -bound, bound)
        return w, b

    w_enc, b_enc = lin(k1, k2, D_IN, LAT)
    w_d1, b_d1 = lin(k3, k4, LAT, HID)
    w_d2, b_d2 = lin(k5, k6, HID, N_CLS)
    return dict(w_enc=w_enc, b_enc=b_enc, w_d1=w_d1, b_d1=b_d1,
                w_d2=w_d2, b_d2=b_d2)


if __name__ == "__main__":
    key = jax.random.PRNGKey(0)
    k_params, k_x, k_noise = jax.random.split(key, 3)

    params = init_params(k_params)

    # SHD-style binary spike input: [B, T, D_IN]
    x = jax.random.bernoulli(k_x, p=0.2, shape=(B, T, D_IN)).astype(jnp.float32)

    # AWGN noise pre-scaled by sigma = sqrt(1 / (2 * 10^(SNR/10))), time-major.
    snr_lin = 10.0 ** (SNR_DB / 10.0)
    sigma = jnp.sqrt(1.0 / (2.0 * snr_lin)).astype(jnp.float32)
    noise = sigma * jax.random.normal(k_noise, (T, B, LAT), jnp.float32)

    classification, fire_out = shd_jscc_forward(x, params, noise)
    jax.block_until_ready((classification, fire_out))

    assert classification.shape == (B, N_CLS)
    assert fire_out.shape == (B, T, LAT)
    print("KERNEL_OK")
</pallas_src>

<mosaic_0001>
module attributes {stable_mosaic.version = 11 : i64} {
  func.func @shd_jscc_kernel(%arg0: i32, %arg1: memref<8x64x64xbf16, #tpu.memory_space<vmem>>, %arg2: memref<8x64x128xbf16, #tpu.memory_space<vmem>>, %arg3: memref<64x128xbf16, #tpu.memory_space<vmem>>, %arg4: memref<1x128xf32, #tpu.memory_space<vmem>>, %arg5: memref<128x128xbf16, #tpu.memory_space<vmem>>, %arg6: memref<1x128xf32, #tpu.memory_space<vmem>>, %arg7: memref<128x128xbf16, #tpu.memory_space<vmem>>, %arg8: memref<1x128xf32, #tpu.memory_space<vmem>>, %arg9: memref<64x128xf32, #tpu.memory_space<vmem>>, %arg10: memref<64x8x128xbf16, #tpu.memory_space<vmem>>) attributes {dimension_semantics = [#tpu.dimension_semantics<parallel>], iteration_bounds = array<i64: 2>, scalar_prefetch = 0 : i64, scratch_operands = 0 : i64, tpu.core_type = #tpu.core_type<tc>, window_params = [{transform_indices = @transform_0, window_bounds = array<i64: 8, 64, 64>}, {transform_indices = @transform_1, window_bounds = array<i64: 8, 64, 128>}, {pipeline_mode = #tpu.pipeline_mode<synchronous>, transform_indices = @transform_2, window_bounds = array<i64: 64, 128>}, {pipeline_mode = #tpu.pipeline_mode<synchronous>, transform_indices = @transform_3, window_bounds = array<i64: 1, 128>}, {pipeline_mode = #tpu.pipeline_mode<synchronous>, transform_indices = @transform_4, window_bounds = array<i64: 128, 128>}, {pipeline_mode = #tpu.pipeline_mode<synchronous>, transform_indices = @transform_5, window_bounds = array<i64: 1, 128>}, {pipeline_mode = #tpu.pipeline_mode<synchronous>, transform_indices = @transform_6, window_bounds = array<i64: 128, 128>}, {pipeline_mode = #tpu.pipeline_mode<synchronous>, transform_indices = @transform_7, window_bounds = array<i64: 1, 128>}, {transform_indices = @transform_8, window_bounds = array<i64: 64, 128>}, {transform_indices = @transform_9, window_bounds = array<i64: 64, 8, 128>}]} {
    %c0 = arith.constant 0 : index
    %c0_0 = arith.constant 0 : index
    %0 = vector.load %arg3[%c0, %c0_0] : memref<64x128xbf16, #tpu.memory_space<vmem>>, vector<64x128xbf16>
    %c0_1 = arith.constant 0 : index
    %c0_2 = arith.constant 0 : index
    %1 = vector.load %arg5[%c0_1, %c0_2] : memref<128x128xbf16, #tpu.memory_space<vmem>>, vector<128x128xbf16>
    %c0_3 = arith.constant 0 : index
    %c0_4 = arith.constant 0 : index
    %2 = vector.load %arg7[%c0_3, %c0_4] : memref<128x128xbf16, #tpu.memory_space<vmem>>, vector<128x128xbf16>
    %c0_5 = arith.constant 0 : index
    %c0_6 = arith.constant 0 : index
    %3 = vector.load %arg6[%c0_5, %c0_6] : memref<1x128xf32, #tpu.memory_space<vmem>>, vector<1x128xf32>
    %4 = vector.shape_cast %3 : vector<1x128xf32> to vector<1x128xf32>
    %5 = vector.broadcast %4 : vector<1x128xf32> to vector<64x128xf32>
    %c0_7 = arith.constant 0 : index
    %c0_8 = arith.constant 0 : index
    %c0_9 = arith.constant 0 : index
    %6 = vector.load %arg1[%c0_7, %c0_8, %c0_9] : memref<8x64x64xbf16, #tpu.memory_space<vmem>>, vector<8x64x64xbf16>
    %7 = vector.shape_cast %6 : vector<8x64x64xbf16> to vector<512x64xbf16>
    %cst = arith.constant dense<0.000000e+00> : vector<512x128xf32>
    %8 = tpu.matmul %7, %0, %cst {dimension_numbers = #tpu.dot_dimension_numbers<[1], [0], [0], [1], [0, 0, 1, 1], [], []>} : vector<512x64xbf16>, vector<64x128xbf16>, vector<512x128xf32> -> vector<512x128xf32>
    %c0_10 = arith.constant 0 : index
    %c0_11 = arith.constant 0 : index
    %9 = vector.load %arg4[%c0_10, %c0_11] : memref<1x128xf32, #tpu.memory_space<vmem>>, vector<1x128xf32>
    %10 = vector.broadcast %9 : vector<1x128xf32> to vector<512x128xf32>
    %11 = arith.addf %8, %10 : vector<512x128xf32>
    %cst_12 = arith.constant 0.000000e+00 : f32
    %12 = vector.broadcast %cst_12 : f32 to vector<64x128xf32>
    %cst_13 = arith.constant 0.000000e+00 : f32
    %13 = vector.broadcast %cst_13 : f32 to vector<64x128xf32>
    %cst_14 = arith.constant 0.000000e+00 : f32
    %14 = vector.broadcast %cst_14 : f32 to vector<64x128xf32>
    %15 = vector.extract_strided_slice %11 {offsets = [0, 0], sizes = [64, 128], strides = [1, 1]} : vector<512x128xf32> to vector<64x128xf32>
    %cst_15 = arith.constant 0.899999976 : f32
    %16 = vector.broadcast %cst_15 : f32 to vector<64x128xf32>
    %17 = arith.mulf %12, %16 : vector<64x128xf32>
    %18 = arith.addf %17, %15 : vector<64x128xf32>
    %cst_16 = arith.constant 5.000000e-01 : f32
    %19 = vector.broadcast %cst_16 : f32 to vector<64x128xf32>
    %20 = arith.cmpf oge, %18, %19 : vector<64x128xf32>
    %21 = arith.extui %20 : vector<64x128xi1> to vector<64x128xi32>
    %22 = arith.sitofp %21 : vector<64x128xi32> to vector<64x128xf32>
    %cst_17 = arith.constant 5.000000e-01 : f32
    %23 = vector.broadcast %cst_17 : f32 to vector<64x128xf32>
    %24 = arith.mulf %22, %23 : vector<64x128xf32>
    %25 = arith.subf %18, %24 : vector<64x128xf32>
    %26 = arith.truncf %22 : vector<64x128xf32> to vector<64x128xbf16>
    %c0_18 = arith.constant 0 : index
    %c0_19 = arith.constant 0 : index
    %c0_20 = arith.constant 0 : index
    %27 = vector.load %arg10[%c0_18, %c0_19, %c0_20] : memref<64x8x128xbf16, #tpu.memory_space<vmem>>, vector<64x1x128xbf16>
    %28 = vector.shape_cast %27 : vector<64x1x128xbf16> to vector<64x128xbf16>
    %29 = vector.shape_cast %26 : vector<64x128xbf16> to vector<64x1x128xbf16>
    tpu.vector_store %arg10[%c0_18, %c0_19, %c0_20], %29 {strides = array<i32>} : memref<64x8x128xbf16, #tpu.memory_space<vmem>>, vector<64x1x128xbf16>,
    %cst_21 = arith.constant dense<0.000000e+00> : vector<64xf32>
    %30 = vector.multi_reduction <add>, %22, %cst_21 [1] : vector<64x128xf32> to vector<64xf32>
    %31 = vector.shape_cast %30 : vector<64xf32> to vector<64x1xf32>
    %cst_22 = arith.constant 9.99999997E-7 : f32
    %32 = vector.broadcast %cst_22 : f32 to vector<64x1xf32>
    %33 = arith.addf %31, %32 : vector<64x1xf32>
    %34 = math.rsqrt %33 : vector<64x1xf32>
    %cst_23 = arith.constant 4.000000e+00 : f32
    %35 = vector.broadcast %cst_23 : f32 to vector<64x1xf32>
    %36 = arith.mulf %35, %34 : vector<64x1xf32>
    %37 = vector.broadcast %36 : vector<64x1xf32> to vector<64x128xf32>
    %38 = arith.mulf %22, %37 : vector<64x128xf32>
    %c0_24 = arith.constant 0 : index
    %c0_25 = arith.constant 0 : index
    %c0_26 = arith.constant 0 : index
    %39 = vector.load %arg2[%c0_24, %c0_25, %c0_26] : memref<8x64x128xbf16, #tpu.memory_space<vmem>>, vector<1x64x128xbf16>
    %40 = vector.shape_cast %39 : vector<1x64x128xbf16> to vector<64x128xbf16>
    %41 = arith.extf %40 : vector<64x128xbf16> to vector<64x128xf32>
    %42 = arith.addf %38, %41 : vector<64x128xf32>
    %43 = arith.truncf %42 : vector<64x128xf32> to vector<64x128xbf16>
    %cst_27 = arith.constant dense<0.000000e+00> : vector<64x128xf32>
    %44 = tpu.matmul %43, %1, %cst_27 {dimension_numbers = #tpu.dot_dimension_numbers<[1], [0], [0], [1], [0, 0, 1, 1], [], []>} : vector<64x128xbf16>, vector<128x128xbf16>, vector<64x128xf32> -> vector<64x128xf32>
    %45 = arith.addf %44, %5 : vector<64x128xf32>
    %cst_28 = arith.constant 0.899999976 : f32
    %46 = vector.broadcast %cst_28 : f32 to vector<64x128xf32>
    %47 = arith.mulf %13, %46 : vector<64x128xf32>
    %48 = arith.addf %47, %45 : vector<64x128xf32>
    %cst_29 = arith.constant 5.000000e-01 : f32
    %49 = vector.broadcast %cst_29 : f32 to vector<64x128xf32>
    %50 = arith.cmpf oge, %48, %49 : vector<64x128xf32>
    %51 = arith.extui %50 : vector<64x128xi1> to vector<64x128xi32>
    %52 = arith.sitofp %51 : vector<64x128xi32> to vector<64x128xf32>
    %cst_30 = arith.constant 5.000000e-01 : f32
    %53 = vector.broadcast %cst_30 : f32 to vector<64x128xf32>
    %54 = arith.mulf %52, %53 : vector<64x128xf32>
    %55 = arith.subf %48, %54 : vector<64x128xf32>
    %56 = arith.addf %14, %52 : vector<64x128xf32>
    %57 = vector.extract_strided_slice %11 {offsets = [64, 0], sizes = [64, 128], strides = [1, 1]} : vector<512x128xf32> to vector<64x128xf32>
    %cst_31 = arith.constant 0.899999976 : f32
    %58 = vector.broadcast %cst_31 : f32 to vector<64x128xf32>
    %59 = arith.mulf %25, %58 : vector<64x128xf32>
    %60 = arith.addf %59, %57 : vector<64x128xf32>
    %cst_32 = arith.constant 5.000000e-01 : f32
    %61 = vector.broadcast %cst_32 : f32 to vector<64x128xf32>
    %62 = arith.cmpf oge, %60, %61 : vector<64x128xf32>
    %63 = arith.extui %62 : vector<64x128xi1> to vector<64x128xi32>
    %64 = arith.sitofp %63 : vector<64x128xi32> to vector<64x128xf32>
    %cst_33 = arith.constant 5.000000e-01 : f32
    %65 = vector.broadcast %cst_33 : f32 to vector<64x128xf32>
    %66 = arith.mulf %64, %65 : vector<64x128xf32>
    %67 = arith.subf %60, %66 : vector<64x128xf32>
    %68 = arith.truncf %64 : vector<64x128xf32> to vector<64x128xbf16>
    %c0_34 = arith.constant 0 : index
    %c1 = arith.constant 1 : index
    %c0_35 = arith.constant 0 : index
    %69 = vector.load %arg10[%c0_34, %c1, %c0_35] : memref<64x8x128xbf16, #tpu.memory_space<vmem>>, vector<64x1x128xbf16>
    %70 = vector.shape_cast %69 : vector<64x1x128xbf16> to vector<64x128xbf16>
    %71 = vector.shape_cast %68 : vector<64x128xbf16> to vector<64x1x128xbf16>
    tpu.vector_store %arg10[%c0_34, %c1, %c0_35], %71 {strides = array<i32>} : memref<64x8x128xbf16, #tpu.memory_space<vmem>>, vector<64x1x128xbf16>,
    %cst_36 = arith.constant dense<0.000000e+00> : vector<64xf32>
    %72 = vector.multi_reduction <add>, %64, %cst_36 [1] : vector<64x128xf32> to vector<64xf32>
    %73 = vector.shape_cast %72 : vector<64xf32> to vector<64x1xf32>
    %cst_37 = arith.constant 9.99999997E-7 : f32
    %74 = vector.broadcast %cst_37 : f32 to vector<64x1xf32>
    %75 = arith.addf %73, %74 : vector<64x1xf32>
    %76 = math.rsqrt %75 : vector<64x1xf32>
    %cst_38 = arith.constant 4.000000e+00 : f32
    %77 = vector.broadcast %cst_38 : f32 to vector<64x1xf32>
    %78 = arith.mulf %77, %76 : vector<64x1xf32>
    %79 = vector.broadcast %78 : vector<64x1xf32> to vector<64x128xf32>
    %80 = arith.mulf %64, %79 : vector<64x128xf32>
    %c1_39 = arith.constant 1 : index
    %c0_40 = arith.constant 0 : index
    %c0_41 = arith.constant 0 : index
    %81 = vector.load %arg2[%c1_39, %c0_40, %c0_41] : memref<8x64x128xbf16, #tpu.memory_space<vmem>>, vector<1x64x128xbf16>
    %82 = vector.shape_cast %81 : vector<1x64x128xbf16> to vector<64x128xbf16>
    %83 = arith.extf %82 : vector<64x128xbf16> to vector<64x128xf32>
    %84 = arith.addf %80, %83 : vector<64x128xf32>
    %85 = arith.truncf %84 : vector<64x128xf32> to vector<64x128xbf16>
    %cst_42 = arith.constant dense<0.000000e+00> : vector<64x128xf32>
    %86 = tpu.matmul %85, %1, %cst_42 {dimension_numbers = #tpu.dot_dimension_numbers<[1], [0], [0], [1], [0, 0, 1, 1], [], []>} : vector<64x128xbf16>, vector<128x128xbf16>, vector<64x128xf32> -> vector<64x128xf32>
    %87 = arith.addf %86, %5 : vector<64x128xf32>
    %cst_43 = arith.constant 0.899999976 : f32
    %88 = vector.broadcast %cst_43 : f32 to vector<64x128xf32>
    %89 = arith.mulf %55, %88 : vector<64x128xf32>
    %90 = arith.addf %89, %87 : vector<64x128xf32>
    %cst_44 = arith.constant 5.000000e-01 : f32
    %91 = vector.broadcast %cst_44 : f32 to vector<64x128xf32>
    %92 = arith.cmpf oge, %90, %91 : vector<64x128xf32>
    %93 = arith.extui %92 : vector<64x128xi1> to vector<64x128xi32>
    %94 = arith.sitofp %93 : vector<64x128xi32> to vector<64x128xf32>
    %cst_45 = arith.constant 5.000000e-01 : f32
    %95 = vector.broadcast %cst_45 : f32 to vector<64x128xf32>
    %96 = arith.mulf %94, %95 : vector<64x128xf32>
    %97 = arith.subf %90, %96 : vector<64x128xf32>
    %98 = arith.addf %56, %94 : vector<64x128xf32>
    %99 = vector.extract_strided_slice %11 {offsets = [128, 0], sizes = [64, 128], strides = [1, 1]} : vector<512x128xf32> to vector<64x128xf32>
    %cst_46 = arith.constant 0.899999976 : f32
    %100 = vector.broadcast %cst_46 : f32 to vector<64x128xf32>
    %101 = arith.mulf %67, %100 : vector<64x128xf32>
    %102 = arith.addf %101, %99 : vector<64x128xf32>
    %cst_47 = arith.constant 5.000000e-01 : f32
    %103 = vector.broadcast %cst_47 : f32 to vector<64x128xf32>
    %104 = arith.cmpf oge, %102, %103 : vector<64x128xf32>
    %105 = arith.extui %104 : vector<64x128xi1> to vector<64x128xi32>
    %106 = arith.sitofp %105 : vector<64x128xi32> to vector<64x128xf32>
    %cst_48 = arith.constant 5.000000e-01 : f32
    %107 = vector.broadcast %cst_48 : f32 to vector<64x128xf32>
    %108 = arith.mulf %106, %107 : vector<64x128xf32>
    %109 = arith.subf %102, %108 : vector<64x128xf32>
    %110 = arith.truncf %106 : vector<64x128xf32> to vector<64x128xbf16>
    %c0_49 = arith.constant 0 : index
    %c2 = arith.constant 2 : index
    %c0_50 = arith.constant 0 : index
    %111 = vector.load %arg10[%c0_49, %c2, %c0_50] : memref<64x8x128xbf16, #tpu.memory_space<vmem>>, vector<64x1x128xbf16>
    %112 = vector.shape_cast %111 : vector<64x1x128xbf16> to vector<64x128xbf16>
    %113 = vector.shape_cast %110 : vector<64x128xbf16> to vector<64x1x128xbf16>
    tpu.vector_store %arg10[%c0_49, %c2, %c0_50], %113 {strides = array<i32>} : memref<64x8x128xbf16, #tpu.memory_space<vmem>>, vector<64x1x128xbf16>,
    %cst_51 = arith.constant dense<0.000000e+00> : vector<64xf32>
    %114 = vector.multi_reduction <add>, %106, %cst_51 [1] : vector<64x128xf32> to vector<64xf32>
    %115 = vector.shape_cast %114 : vector<64xf32> to vector<64x1xf32>
    %cst_52 = arith.constant 9.99999997E-7 : f32
    %116 = vector.broadcast %cst_52 : f32 to vector<64x1xf32>
    %117 = arith.addf %115, %116 : vector<64x1xf32>
    %118 = math.rsqrt %117 : vector<64x1xf32>
    %cst_53 = arith.constant 4.000000e+00 : f32
    %119 = vector.broadcast %cst_53 : f32 to vector<64x1xf32>
    %120 = arith.mulf %119, %118 : vector<64x1xf32>
    %121 = vector.broadcast %120 : vector<64x1xf32> to vector<64x128xf32>
    %122 = arith.mulf %106, %121 : vector<64x128xf32>
    %c2_54 = arith.constant 2 : index
    %c0_55 = arith.constant 0 : index
    %c0_56 = arith.constant 0 : index
    %123 = vector.load %arg2[%c2_54, %c0_55, %c0_56] : memref<8x64x128xbf16, #tpu.memory_space<vmem>>, vector<1x64x128xbf16>
    %124 = vector.shape_cast %123 : vector<1x64x128xbf16> to vector<64x128xbf16>
    %125 = arith.extf %124 : vector<64x128xbf16> to vector<64x128xf32>
    %126 = arith.addf %122, %125 : vector<64x128xf32>
    %127 = arith.truncf %126 : vector<64x128xf32> to vector<64x128xbf16>
    %cst_57 = arith.constant dense<0.000000e+00> : vector<64x128xf32>
    %128 = tpu.matmul %127, %1, %cst_57 {dimension_numbers = #tpu.dot_dimension_numbers<[1], [0], [0], [1], [0, 0, 1, 1], [], []>} : vector<64x128xbf16>, vector<128x128xbf16>, vector<64x128xf32> -> vector<64x128xf32>
    %129 = arith.addf %128, %5 : vector<64x128xf32>
    %cst_58 = arith.constant 0.899999976 : f32
    %130 = vector.broadcast %cst_58 : f32 to vector<64x128xf32>
    %131 = arith.mulf %97, %130 : vector<64x128xf32>
    %132 = arith.addf %131, %129 : vector<64x128xf32>
    %cst_59 = arith.constant 5.000000e-01 : f32
    %133 = vector.broadcast %cst_59 : f32 to vector<64x128xf32>
    %134 = arith.cmpf oge, %132, %133 : vector<64x128xf32>
    %135 = arith.extui %134 : vector<64x128xi1> to vector<64x128xi32>
    %136 = arith.sitofp %135 : vector<64x128xi32> to vector<64x128xf32>
    %cst_60 = arith.constant 5.000000e-01 : f32
    %137 = vector.broadcast %cst_60 : f32 to vector<64x128xf32>
    %138 = arith.mulf %136, %137 : vector<64x128xf32>
    %139 = arith.subf %132, %138 : vector<64x128xf32>
    %140 = arith.addf %98, %136 : vector<64x128xf32>
    %141 = vector.extract_strided_slice %11 {offsets = [192, 0], sizes = [64, 128], strides = [1, 1]} : vector<512x128xf32> to vector<64x128xf32>
    %cst_61 = arith.constant 0.899999976 : f32
    %142 = vector.broadcast %cst_61 : f32 to vector<64x128xf32>
    %143 = arith.mulf %109, %142 : vector<64x128xf32>
    %144 = arith.addf %143, %141 : vector<64x128xf32>
    %cst_62 = arith.constant 5.000000e-01 : f32
    %145 = vector.broadcast %cst_62 : f32 to vector<64x128xf32>
    %146 = arith.cmpf oge, %144, %145 : vector<64x128xf32>
    %147 = arith.extui %146 : vector<64x128xi1> to vector<64x128xi32>
    %148 = arith.sitofp %147 : vector<64x128xi32> to vector<64x128xf32>
    %cst_63 = arith.constant 5.000000e-01 : f32
    %149 = vector.broadcast %cst_63 : f32 to vector<64x128xf32>
    %150 = arith.mulf %148, %149 : vector<64x128xf32>
    %151 = arith.subf %144, %150 : vector<64x128xf32>
    %152 = arith.truncf %148 : vector<64x128xf32> to vector<64x128xbf16>
    %c0_64 = arith.constant 0 : index
    %c3 = arith.constant 3 : index
    %c0_65 = arith.constant 0 : index
    %153 = vector.load %arg10[%c0_64, %c3, %c0_65] : memref<64x8x128xbf16, #tpu.memory_space<vmem>>, vector<64x1x128xbf16>
    %154 = vector.shape_cast %153 : vector<64x1x128xbf16> to vector<64x128xbf16>
    %155 = vector.shape_cast %152 : vector<64x128xbf16> to vector<64x1x128xbf16>
    tpu.vector_store %arg10[%c0_64, %c3, %c0_65], %155 {strides = array<i32>} : memref<64x8x128xbf16, #tpu.memory_space<vmem>>, vector<64x1x128xbf16>,
    %cst_66 = arith.constant dense<0.000000e+00> : vector<64xf32>
    %156 = vector.multi_reduction <add>, %148, %cst_66 [1] : vector<64x128xf32> to vector<64xf32>
    %157 = vector.shape_cast %156 : vector<64xf32> to vector<64x1xf32>
    %cst_67 = arith.constant 9.99999997E-7 : f32
    %158 = vector.broadcast %cst_67 : f32 to vector<64x1xf32>
    %159 = arith.addf %157, %158 : vector<64x1xf32>
    %160 = math.rsqrt %159 : vector<64x1xf32>
    %cst_68 = arith.constant 4.000000e+00 : f32
    %161 = vector.broadcast %cst_68 : f32 to vector<64x1xf32>
    %162 = arith.mulf %161, %160 : vector<64x1xf32>
    %163 = vector.broadcast %162 : vector<64x1xf32> to vector<64x128xf32>
    %164 = arith.mulf %148, %163 : vector<64x128xf32>
    %c3_69 = arith.constant 3 : index
    %c0_70 = arith.constant 0 : index
    %c0_71 = arith.constant 0 : index
    %165 = vector.load %arg2[%c3_69, %c0_70, %c0_71] : memref<8x64x128xbf16, #tpu.memory_space<vmem>>, vector<1x64x128xbf16>
    %166 = vector.shape_cast %165 : vector<1x64x128xbf16> to vector<64x128xbf16>
    %167 = arith.extf %166 : vector<64x128xbf16> to vector<64x128xf32>
    %168 = arith.addf %164, %167 : vector<64x128xf32>
    %169 = arith.truncf %168 : vector<64x128xf32> to vector<64x128xbf16>
    %cst_72 = arith.constant dense<0.000000e+00> : vector<64x128xf32>
    %170 = tpu.matmul %169, %1, %cst_72 {dimension_numbers = #tpu.dot_dimension_numbers<[1], [0], [0], [1], [0, 0, 1, 1], [], []>} : vector<64x128xbf16>, vector<128x128xbf16>, vector<64x128xf32> -> vector<64x128xf32>
    %171 = arith.addf %170, %5 : vector<64x128xf32>
    %cst_73 = arith.constant 0.899999976 : f32
    %172 = vector.broadcast %cst_73 : f32 to vector<64x128xf32>
    %173 = arith.mulf %139, %172 : vector<64x128xf32>
    %174 = arith.addf %173, %171 : vector<64x128xf32>
    %cst_74 = arith.constant 5.000000e-01 : f32
    %175 = vector.broadcast %cst_74 : f32 to vector<64x128xf32>
    %176 = arith.cmpf oge, %174, %175 : vector<64x128xf32>
    %177 = arith.extui %176 : vector<64x128xi1> to vector<64x128xi32>
    %178 = arith.sitofp %177 : vector<64x128xi32> to vector<64x128xf32>
    %cst_75 = arith.constant 5.000000e-01 : f32
    %179 = vector.broadcast %cst_75 : f32 to vector<64x128xf32>
    %180 = arith.mulf %178, %179 : vector<64x128xf32>
    %181 = arith.subf %174, %180 : vector<64x128xf32>
    %182 = arith.addf %140, %178 : vector<64x128xf32>
    %183 = vector.extract_strided_slice %11 {offsets = [256, 0], sizes = [64, 128], strides = [1, 1]} : vector<512x128xf32> to vector<64x128xf32>
    %cst_76 = arith.constant 0.899999976 : f32
    %184 = vector.broadcast %cst_76 : f32 to vector<64x128xf32>
    %185 = arith.mulf %151, %184 : vector<64x128xf32>
    %186 = arith.addf %185, %183 : vector<64x128xf32>
    %cst_77 = arith.constant 5.000000e-01 : f32
    %187 = vector.broadcast %cst_77 : f32 to vector<64x128xf32>
    %188 = arith.cmpf oge, %186, %187 : vector<64x128xf32>
    %189 = arith.extui %188 : vector<64x128xi1> to vector<64x128xi32>
    %190 = arith.sitofp %189 : vector<64x128xi32> to vector<64x128xf32>
    %cst_78 = arith.constant 5.000000e-01 : f32
    %191 = vector.broadcast %cst_78 : f32 to vector<64x128xf32>
    %192 = arith.mulf %190, %191 : vector<64x128xf32>
    %193 = arith.subf %186, %192 : vector<64x128xf32>
    %194 = arith.truncf %190 : vector<64x128xf32> to vector<64x128xbf16>
    %c0_79 = arith.constant 0 : index
    %c4 = arith.constant 4 : index
    %c0_80 = arith.constant 0 : index
    %195 = vector.load %arg10[%c0_79, %c4, %c0_80] : memref<64x8x128xbf16, #tpu.memory_space<vmem>>, vector<64x1x128xbf16>
    %196 = vector.shape_cast %195 : vector<64x1x128xbf16> to vector<64x128xbf16>
    %197 = vector.shape_cast %194 : vector<64x128xbf16> to vector<64x1x128xbf16>
    tpu.vector_store %arg10[%c0_79, %c4, %c0_80], %197 {strides = array<i32>} : memref<64x8x128xbf16, #tpu.memory_space<vmem>>, vector<64x1x128xbf16>,
    %cst_81 = arith.constant dense<0.000000e+00> : vector<64xf32>
    %198 = vector.multi_reduction <add>, %190, %cst_81 [1] : vector<64x128xf32> to vector<64xf32>
    %199 = vector.shape_cast %198 : vector<64xf32> to vector<64x1xf32>
    %cst_82 = arith.constant 9.99999997E-7 : f32
    %200 = vector.broadcast %cst_82 : f32 to vector<64x1xf32>
    %201 = arith.addf %199, %200 : vector<64x1xf32>
    %202 = math.rsqrt %201 : vector<64x1xf32>
    %cst_83 = arith.constant 4.000000e+00 : f32
    %203 = vector.broadcast %cst_83 : f32 to vector<64x1xf32>
    %204 = arith.mulf %203, %202 : vector<64x1xf32>
    %205 = vector.broadcast %204 : vector<64x1xf32> to vector<64x128xf32>
    %206 = arith.mulf %190, %205 : vector<64x128xf32>
    %c4_84 = arith.constant 4 : index
    %c0_85 = arith.constant 0 : index
    %c0_86 = arith.constant 0 : index
    %207 = vector.load %arg2[%c4_84, %c0_85, %c0_86] : memref<8x64x128xbf16, #tpu.memory_space<vmem>>, vector<1x64x128xbf16>
    %208 = vector.shape_cast %207 : vector<1x64x128xbf16> to vector<64x128xbf16>
    %209 = arith.extf %208 : vector<64x128xbf16> to vector<64x128xf32>
    %210 = arith.addf %206, %209 : vector<64x128xf32>
    %211 = arith.truncf %210 : vector<64x128xf32> to vector<64x128xbf16>
    %cst_87 = arith.constant dense<0.000000e+00> : vector<64x128xf32>
    %212 = tpu.matmul %211, %1, %cst_87 {dimension_numbers = #tpu.dot_dimension_numbers<[1], [0], [0], [1], [0, 0, 1, 1], [], []>} : vector<64x128xbf16>, vector<128x128xbf16>, vector<64x128xf32> -> vector<64x128xf32>
    %213 = arith.addf %212, %5 : vector<64x128xf32>
    %cst_88 = arith.constant 0.899999976 : f32
    %214 = vector.broadcast %cst_88 : f32 to vector<64x128xf32>
    %215 = arith.mulf %181, %214 : vector<64x128xf32>
    %216 = arith.addf %215, %213 : vector<64x128xf32>
    %cst_89 = arith.constant 5.000000e-01 : f32
    %217 = vector.broadcast %cst_89 : f32 to vector<64x128xf32>
    %218 = arith.cmpf oge, %216, %217 : vector<64x128xf32>
    %219 = arith.extui %218 : vector<64x128xi1> to vector<64x128xi32>
    %220 = arith.sitofp %219 : vector<64x128xi32> to vector<64x128xf32>
    %cst_90 = arith.constant 5.000000e-01 : f32
    %221 = vector.broadcast %cst_90 : f32 to vector<64x128xf32>
    %222 = arith.mulf %220, %221 : vector<64x128xf32>
    %223 = arith.subf %216, %222 : vector<64x128xf32>
    %224 = arith.addf %182, %220 : vector<64x128xf32>
    %225 = vector.extract_strided_slice %11 {offsets = [320, 0], sizes = [64, 128], strides = [1, 1]} : vector<512x128xf32> to vector<64x128xf32>
    %cst_91 = arith.constant 0.899999976 : f32
    %226 = vector.broadcast %cst_91 : f32 to vector<64x128xf32>
    %227 = arith.mulf %193, %226 : vector<64x128xf32>
    %228 = arith.addf %227, %225 : vector<64x128xf32>
    %cst_92 = arith.constant 5.000000e-01 : f32
    %229 = vector.broadcast %cst_92 : f32 to vector<64x128xf32>
    %230 = arith.cmpf oge, %228, %229 : vector<64x128xf32>
    %231 = arith.extui %230 : vector<64x128xi1> to vector<64x128xi32>
    %232 = arith.sitofp %231 : vector<64x128xi32> to vector<64x128xf32>
    %cst_93 = arith.constant 5.000000e-01 : f32
    %233 = vector.broadcast %cst_93 : f32 to vector<64x128xf32>
    %234 = arith.mulf %232, %233 : vector<64x128xf32>
    %235 = arith.subf %228, %234 : vector<64x128xf32>
    %236 = arith.truncf %232 : vector<64x128xf32> to vector<64x128xbf16>
    %c0_94 = arith.constant 0 : index
    %c5 = arith.constant 5 : index
    %c0_95 = arith.constant 0 : index
    %237 = vector.load %arg10[%c0_94, %c5, %c0_95] : memref<64x8x128xbf16, #tpu.memory_space<vmem>>, vector<64x1x128xbf16>
    %238 = vector.shape_cast %237 : vector<64x1x128xbf16> to vector<64x128xbf16>
    %239 = vector.shape_cast %236 : vector<64x128xbf16> to vector<64x1x128xbf16>
    tpu.vector_store %arg10[%c0_94, %c5, %c0_95], %239 {strides = array<i32>} : memref<64x8x128xbf16, #tpu.memory_space<vmem>>, vector<64x1x128xbf16>,
    %cst_96 = arith.constant dense<0.000000e+00> : vector<64xf32>
    %240 = vector.multi_reduction <add>, %232, %cst_96 [1] : vector<64x128xf32> to vector<64xf32>
    %241 = vector.shape_cast %240 : vector<64xf32> to vector<64x1xf32>
    %cst_97 = arith.constant 9.99999997E-7 : f32
    %242 = vector.broadcast %cst_97 : f32 to vector<64x1xf32>
    %243 = arith.addf %241, %242 : vector<64x1xf32>
    %244 = math.rsqrt %243 : vector<64x1xf32>
    %cst_98 = arith.constant 4.000000e+00 : f32
    %245 = vector.broadcast %cst_98 : f32 to vector<64x1xf32>
    %246 = arith.mulf %245, %244 : vector<64x1xf32>
    %247 = vector.broadcast %246 : vector<64x1xf32> to vector<64x128xf32>
    %248 = arith.mulf %232, %247 : vector<64x128xf32>
    %c5_99 = arith.constant 5 : index
    %c0_100 = arith.constant 0 : index
    %c0_101 = arith.constant 0 : index
    %249 = vector.load %arg2[%c5_99, %c0_100, %c0_101] : memref<8x64x128xbf16, #tpu.memory_space<vmem>>, vector<1x64x128xbf16>
    %250 = vector.shape_cast %249 : vector<1x64x128xbf16> to vector<64x128xbf16>
    %251 = arith.extf %250 : vector<64x128xbf16> to vector<64x128xf32>
    %252 = arith.addf %248, %251 : vector<64x128xf32>
    %253 = arith.truncf %252 : vector<64x128xf32> to vector<64x128xbf16>
    %cst_102 = arith.constant dense<0.000000e+00> : vector<64x128xf32>
    %254 = tpu.matmul %253, %1, %cst_102 {dimension_numbers = #tpu.dot_dimension_numbers<[1], [0], [0], [1], [0, 0, 1, 1], [], []>} : vector<64x128xbf16>, vector<128x128xbf16>, vector<64x128xf32> -> vector<64x128xf32>
    %255 = arith.addf %254, %5 : vector<64x128xf32>
    %cst_103 = arith.constant 0.899999976 : f32
    %256 = vector.broadcast %cst_103 : f32 to vector<64x128xf32>
    %257 = arith.mulf %223, %256 : vector<64x128xf32>
    %258 = arith.addf %257, %255 : vector<64x128xf32>
    %cst_104 = arith.constant 5.000000e-01 : f32
    %259 = vector.broadcast %cst_104 : f32 to vector<64x128xf32>
    %260 = arith.cmpf oge, %258, %259 : vector<64x128xf32>
    %261 = arith.extui %260 : vector<64x128xi1> to vector<64x128xi32>
    %262 = arith.sitofp %261 : vector<64x128xi32> to vector<64x128xf32>
    %cst_105 = arith.constant 5.000000e-01 : f32
    %263 = vector.broadcast %cst_105 : f32 to vector<64x128xf32>
    %264 = arith.mulf %262, %263 : vector<64x128xf32>
    %265 = arith.subf %258, %264 : vector<64x128xf32>
    %266 = arith.addf %224, %262 : vector<64x128xf32>
    %267 = vector.extract_strided_slice %11 {offsets = [384, 0], sizes = [64, 128], strides = [1, 1]} : vector<512x128xf32> to vector<64x128xf32>
    %cst_106 = arith.constant 0.899999976 : f32
    %268 = vector.broadcast %cst_106 : f32 to vector<64x128xf32>
    %269 = arith.mulf %235, %268 : vector<64x128xf32>
    %270 = arith.addf %269, %267 : vector<64x128xf32>
    %cst_107 = arith.constant 5.000000e-01 : f32
    %271 = vector.broadcast %cst_107 : f32 to vector<64x128xf32>
    %272 = arith.cmpf oge, %270, %271 : vector<64x128xf32>
    %273 = arith.extui %272 : vector<64x128xi1> to vector<64x128xi32>
    %274 = arith.sitofp %273 : vector<64x128xi32> to vector<64x128xf32>
    %cst_108 = arith.constant 5.000000e-01 : f32
    %275 = vector.broadcast %cst_108 : f32 to vector<64x128xf32>
    %276 = arith.mulf %274, %275 : vector<64x128xf32>
    %277 = arith.subf %270, %276 : vector<64x128xf32>
    %278 = arith.truncf %274 : vector<64x128xf32> to vector<64x128xbf16>
    %c0_109 = arith.constant 0 : index
    %c6 = arith.constant 6 : index
    %c0_110 = arith.constant 0 : index
    %279 = vector.load %arg10[%c0_109, %c6, %c0_110] : memref<64x8x128xbf16, #tpu.memory_space<vmem>>, vector<64x1x128xbf16>
    %280 = vector.shape_cast %279 : vector<64x1x128xbf16> to vector<64x128xbf16>
    %281 = vector.shape_cast %278 : vector<64x128xbf16> to vector<64x1x128xbf16>
    tpu.vector_store %arg10[%c0_109, %c6, %c0_110], %281 {strides = array<i32>} : memref<64x8x128xbf16, #tpu.memory_space<vmem>>, vector<64x1x128xbf16>,
    %cst_111 = arith.constant dense<0.000000e+00> : vector<64xf32>
    %282 = vector.multi_reduction <add>, %274, %cst_111 [1] : vector<64x128xf32> to vector<64xf32>
    %283 = vector.shape_cast %282 : vector<64xf32> to vector<64x1xf32>
    %cst_112 = arith.constant 9.99999997E-7 : f32
    %284 = vector.broadcast %cst_112 : f32 to vector<64x1xf32>
    %285 = arith.addf %283, %284 : vector<64x1xf32>
    %286 = math.rsqrt %285 : vector<64x1xf32>
    %cst_113 = arith.constant 4.000000e+00 : f32
    %287 = vector.broadcast %cst_113 : f32 to vector<64x1xf32>
    %288 = arith.mulf %287, %286 : vector<64x1xf32>
    %289 = vector.broadcast %288 : vector<64x1xf32> to vector<64x128xf32>
    %290 = arith.mulf %274, %289 : vector<64x128xf32>
    %c6_114 = arith.constant 6 : index
    %c0_115 = arith.constant 0 : index
    %c0_116 = arith.constant 0 : index
    %291 = vector.load %arg2[%c6_114, %c0_115, %c0_116] : memref<8x64x128xbf16, #tpu.memory_space<vmem>>, vector<1x64x128xbf16>
    %292 = vector.shape_cast %291 : vector<1x64x128xbf16> to vector<64x128xbf16>
    %293 = arith.extf %292 : vector<64x128xbf16> to vector<64x128xf32>
    %294 = arith.addf %290, %293 : vector<64x128xf32>
    %295 = arith.truncf %294 : vector<64x128xf32> to vector<64x128xbf16>
    %cst_117 = arith.constant dense<0.000000e+00> : vector<64x128xf32>
    %296 = tpu.matmul %295, %1, %cst_117 {dimension_numbers = #tpu.dot_dimension_numbers<[1], [0], [0], [1], [0, 0, 1, 1], [], []>} : vector<64x128xbf16>, vector<128x128xbf16>, vector<64x128xf32> -> vector<64x128xf32>
    %297 = arith.addf %296, %5 : vector<64x128xf32>
    %cst_118 = arith.constant 0.899999976 : f32
    %298 = vector.broadcast %cst_118 : f32 to vector<64x128xf32>
    %299 = arith.mulf %265, %298 : vector<64x128xf32>
    %300 = arith.addf %299, %297 : vector<64x128xf32>
    %cst_119 = arith.constant 5.000000e-01 : f32
    %301 = vector.broadcast %cst_119 : f32 to vector<64x128xf32>
    %302 = arith.cmpf oge, %300, %301 : vector<64x128xf32>
    %303 = arith.extui %302 : vector<64x128xi1> to vector<64x128xi32>
    %304 = arith.sitofp %303 : vector<64x128xi32> to vector<64x128xf32>
    %cst_120 = arith.constant 5.000000e-01 : f32
    %305 = vector.broadcast %cst_120 : f32 to vector<64x128xf32>
    %306 = arith.mulf %304, %305 : vector<64x128xf32>
    %307 = arith.subf %300, %306 : vector<64x128xf32>
    %308 = arith.addf %266, %304 : vector<64x128xf32>
    %309 = vector.extract_strided_slice %11 {offsets = [448, 0], sizes = [64, 128], strides = [1, 1]} : vector<512x128xf32> to vector<64x128xf32>
    %cst_121 = arith.constant 0.899999976 : f32
    %310 = vector.broadcast %cst_121 : f32 to vector<64x128xf32>
    %311 = arith.mulf %277, %310 : vector<64x128xf32>
    %312 = arith.addf %311, %309 : vector<64x128xf32>
    %cst_122 = arith.constant 5.000000e-01 : f32
    %313 = vector.broadcast %cst_122 : f32 to vector<64x128xf32>
    %314 = arith.cmpf oge, %312, %313 : vector<64x128xf32>
    %315 = arith.extui %314 : vector<64x128xi1> to vector<64x128xi32>
    %316 = arith.sitofp %315 : vector<64x128xi32> to vector<64x128xf32>
    %317 = arith.truncf %316 : vector<64x128xf32> to vector<64x128xbf16>
    %c0_123 = arith.constant 0 : index
    %c7 = arith.constant 7 : index
    %c0_124 = arith.constant 0 : index
    %318 = vector.load %arg10[%c0_123, %c7, %c0_124] : memref<64x8x128xbf16, #tpu.memory_space<vmem>>, vector<64x1x128xbf16>
    %319 = vector.shape_cast %318 : vector<64x1x128xbf16> to vector<64x128xbf16>
    %320 = vector.shape_cast %317 : vector<64x128xbf16> to vector<64x1x128xbf16>
    tpu.vector_store %arg10[%c0_123, %c7, %c0_124], %320 {strides = array<i32>} : memref<64x8x128xbf16, #tpu.memory_space<vmem>>, vector<64x1x128xbf16>,
    %cst_125 = arith.constant dense<0.000000e+00> : vector<64xf32>
    %321 = vector.multi_reduction <add>, %316, %cst_125 [1] : vector<64x128xf32> to vector<64xf32>
    %322 = vector.shape_cast %321 : vector<64xf32> to vector<64x1xf32>
    %cst_126 = arith.constant 9.99999997E-7 : f32
    %323 = vector.broadcast %cst_126 : f32 to vector<64x1xf32>
    %324 = arith.addf %322, %323 : vector<64x1xf32>
    %325 = math.rsqrt %324 : vector<64x1xf32>
    %cst_127 = arith.constant 4.000000e+00 : f32
    %326 = vector.broadcast %cst_127 : f32 to vector<64x1xf32>
    %327 = arith.mulf %326, %325 : vector<64x1xf32>
    %328 = vector.broadcast %327 : vector<64x1xf32> to vector<64x128xf32>
    %329 = arith.mulf %316, %328 : vector<64x128xf32>
    %c7_128 = arith.constant 7 : index
    %c0_129 = arith.constant 0 : index
    %c0_130 = arith.constant 0 : index
    %330 = vector.load %arg2[%c7_128, %c0_129, %c0_130] : memref<8x64x128xbf16, #tpu.memory_space<vmem>>, vector<1x64x128xbf16>
    %331 = vector.shape_cast %330 : vector<1x64x128xbf16> to vector<64x128xbf16>
    %332 = arith.extf %331 : vector<64x128xbf16> to vector<64x128xf32>
    %333 = arith.addf %329, %332 : vector<64x128xf32>
    %334 = arith.truncf %333 : vector<64x128xf32> to vector<64x128xbf16>
    %cst_131 = arith.constant dense<0.000000e+00> : vector<64x128xf32>
    %335 = tpu.matmul %334, %1, %cst_131 {dimension_numbers = #tpu.dot_dimension_numbers<[1], [0], [0], [1], [0, 0, 1, 1], [], []>} : vector<64x128xbf16>, vector<128x128xbf16>, vector<64x128xf32> -> vector<64x128xf32>
    %336 = arith.addf %335, %5 : vector<64x128xf32>
    %cst_132 = arith.constant 0.899999976 : f32
    %337 = vector.broadcast %cst_132 : f32 to vector<64x128xf32>
    %338 = arith.mulf %307, %337 : vector<64x128xf32>
    %339 = arith.addf %338, %336 : vector<64x128xf32>
    %cst_133 = arith.constant 5.000000e-01 : f32
    %340 = vector.broadcast %cst_133 : f32 to vector<64x128xf32>
    %341 = arith.cmpf oge, %339, %340 : vector<64x128xf32>
    %342 = arith.extui %341 : vector<64x128xi1> to vector<64x128xi32>
    %343 = arith.sitofp %342 : vector<64x128xi32> to vector<64x128xf32>
    %344 = arith.addf %308, %343 : vector<64x128xf32>
    %345 = arith.truncf %344 : vector<64x128xf32> to vector<64x128xbf16>
    %cst_134 = arith.constant dense<0.000000e+00> : vector<64x128xf32>
    %346 = tpu.matmul %345, %2, %cst_134 {dimension_numbers = #tpu.dot_dimension_numbers<[1], [0], [0], [1], [0, 0, 1, 1], [], []>} : vector<64x128xbf16>, vector<128x128xbf16>, vector<64x128xf32> -> vector<64x128xf32>
    %cst_135 = arith.constant 1.250000e-01 : f32
    %347 = vector.broadcast %cst_135 : f32 to vector<64x128xf32>
    %348 = arith.mulf %346, %347 : vector<64x128xf32>
    %c0_136 = arith.constant 0 : index
    %c0_137 = arith.constant 0 : index
    %349 = vector.load %arg8[%c0_136, %c0_137] : memref<1x128xf32, #tpu.memory_space<vmem>>, vector<1x128xf32>
    %350 = vector.broadcast %349 : vector<1x128xf32> to vector<64x128xf32>
    %351 = arith.addf %348, %350 : vector<64x128xf32>
    %c0_138 = arith.constant 0 : index
    %c0_139 = arith.constant 0 : index
    %352 = vector.load %arg9[%c0_138, %c0_139] : memref<64x128xf32, #tpu.memory_space<vmem>>, vector<64x128xf32>
    tpu.vector_store %arg9[%c0_138, %c0_139], %351 {strides = array<i32>} : memref<64x128xf32, #tpu.memory_space<vmem>>, vector<64x128xf32>,
    return
  }
  func.func @transform_0(%arg0: i32) -> (i32, i32, i32) {
    %c0_i32 = arith.constant 0 : i32
    %c0_i32_0 = arith.constant 0 : i32
    %c0_i32_1 = arith.constant 0 : i32
    return %c0_i32, %arg0, %c0_i32_0 : i32, i32, i32
  }
  func.func @transform_1(%arg0: i32) -> (i32, i32, i32) {
    %c0_i32 = arith.constant 0 : i32
    %c0_i32_0 = arith.constant 0 : i32
    %c0_i32_1 = arith.constant 0 : i32
    return %c0_i32, %arg0, %c0_i32_0 : i32, i32, i32
  }
  func.func @transform_2(%arg0: i32) -> (i32, i32) {
    %c0_i32 = arith.constant 0 : i32
    %c0_i32_0 = arith.constant 0 : i32
    %c0_i32_1 = arith.constant 0 : i32
    return %c0_i32, %c0_i32_0 : i32, i32
  }
  func.func @transform_3(%arg0: i32) -> (i32, i32) {
    %c0_i32 = arith.constant 0 : i32
    %c0_i32_0 = arith.constant 0 : i32
    %c0_i32_1 = arith.constant 0 : i32
    return %c0_i32, %c0_i32_0 : i32, i32
  }
  func.func @transform_4(%arg0: i32) -> (i32, i32) {
    %c0_i32 = arith.constant 0 : i32
    %c0_i32_0 = arith.constant 0 : i32
    %c0_i32_1 = arith.constant 0 : i32
    return %c0_i32, %c0_i32_0 : i32, i32
  }
  func.func @transform_5(%arg0: i32) -> (i32, i32) {
    %c0_i32 = arith.constant 0 : i32
    %c0_i32_0 = arith.constant 0 : i32
    %c0_i32_1 = arith.constant 0 : i32
    return %c0_i32, %c0_i32_0 : i32, i32
  }
  func.func @transform_6(%arg0: i32) -> (i32, i32) {
    %c0_i32 = arith.constant 0 : i32
    %c0_i32_0 = arith.constant 0 : i32
    %c0_i32_1 = arith.constant 0 : i32
    return %c0_i32, %c0_i32_0 : i32, i32
  }
  func.func @transform_7(%arg0: i32) -> (i32, i32) {
    %c0_i32 = arith.constant 0 : i32
    %c0_i32_0 = arith.constant 0 : i32
    %c0_i32_1 = arith.constant 0 : i32
    return %c0_i32, %c0_i32_0 : i32, i32
  }
  func.func @transform_8(%arg0: i32) -> (i32, i32) {
    %c0_i32 = arith.constant 0 : i32
    %c0_i32_0 = arith.constant 0 : i32
    return %arg0, %c0_i32 : i32, i32
  }
  func.func @transform_9(%arg0: i32) -> (i32, i32, i32) {
    %c0_i32 = arith.constant 0 : i32
    %c0_i32_0 = arith.constant 0 : i32
    %c0_i32_1 = arith.constant 0 : i32
    return %arg0, %c0_i32, %c0_i32_0 : i32, i32, i32
  }
}

</mosaic_0001>

<llo_original>
// kernel: shd_jscc_forward.1
$region0: #{shd_jscc_forward.1}
  #allocation0 [shape = 'u32[]', space=smem, size = 0x4, offset = 0x4, fixed_abs, tag = 'smem constant byte address 0x4 - core index']
  #allocation1 [shape = 'u32[72,128]{1,0:T(1,128)}', space=vmem, size = 0x9000, scoped, tag = 'internal scratch']
  %s0 = inlined_call_operand.vmem [shape: bf16[8,128,64], index: 0, kind: input, shape index: {}]
  %s1 = inlined_call_operand.vmem [shape: bf16[8,128,128], index: 1, kind: input, shape index: {}]
  %s2 = inlined_call_operand.vmem [shape: bf16[64,128], index: 2, kind: input, shape index: {}]
  %s3 = inlined_call_operand.vmem [shape: f32[1,128], index: 3, kind: input, shape index: {}]
  %s4 = inlined_call_operand.vmem [shape: bf16[128,128], index: 4, kind: input, shape index: {}]
  %s5 = inlined_call_operand.vmem [shape: f32[1,128], index: 5, kind: input, shape index: {}]
  %s6 = inlined_call_operand.vmem [shape: bf16[128,128], index: 6, kind: input, shape index: {}]
  %s7 = inlined_call_operand.vmem [shape: f32[1,128], index: 7, kind: input, shape index: {}]
  %s8 = inlined_call_operand.vmem [shape: f32[128,128], index: 8, kind: output, shape index: {0}]
  %s9 = inlined_call_operand.vmem [shape: bf16[128,8,128], index: 9, kind: output, shape index: {1}]
  %10 = xla_tuple %s8, %s9
  %s11 = sld [smem:[#allocation0]]
  $region155: #{shd_jscc_forward.1} parent=0
    _
  %s13 = ssub.s32 1, %s11
  %s14 = scalar_select 0, %s13, %s11
  $region1: #{shd_jscc_forward.1} parent=0
    #allocation2 [shape = 'u8[262144]{0}', space=vmem, size = 0x40000, scoped, tag = 'input window, operand 0']
    #allocation3 [shape = 'u8[262144]{0}', space=vmem, size = 0x40000, scoped, tag = 'input window, operand 1']
    loop: start=0, step=1, limit=4
    $region2: #{shd_jscc_forward.1} parent=1 // loop_pre_header
      _
    $region3: #{shd_jscc_forward.1} parent=1 // loop_header
      %s16 = sphi 0, %s20
      %p17 = scmp.ge.s32.totalorder %s16, 4
      %s26 = sphi 0, %s28
      %s29 = sphi 0, %s26
      %s30 = sphi 0, %s29
      %s46 = sphi 0, %s30
      %s52 = sphi 0, %s54
      %s55 = sphi 0, %s52
      %s56 = sphi 0, %s55
      %s72 = sphi 0, %s56
      %s76 = sphi 0, %s76
      %s78 = sphi 0, %s76
      %s79 = sphi 0, %s78
      %s93 = sphi 0, %s79
      %s97 = sphi 0, %s97
      %s99 = sphi 0, %s97
      %s100 = sphi 0, %s99
      %s114 = sphi 0, %s100
      %s118 = sphi 0, %s118
      %s120 = sphi 0, %s118
      %s121 = sphi 0, %s120
      %s135 = sphi 0, %s121
      %s139 = sphi 0, %s139
      %s141 = sphi 0, %s139
      %s142 = sphi 0, %s141
      %s156 = sphi 0, %s142
      %s160 = sphi 0, %s160
      %s162 = sphi 0, %s160
      %s163 = sphi 0, %s162
      %s177 = sphi 0, %s163
      %s181 = sphi 0, %s181
      %s183 = sphi 0, %s181
      %s184 = sphi 0, %s183
      %s198 = sphi 0, %s184
      %s204 = sphi 0, %s206
      %s207 = sphi 0, %s204
      %s208 = sphi 0, %s207
      %s224 = sphi 0, %s208
      %s230 = sphi 0, %s232
      %s233 = sphi 0, %s230
      %s234 = sphi 0, %s233
      %s250 = sphi 0, %s234
    $region4: #{shd_jscc_forward.1} parent=1 // loop_header_branch
      %19 = sbr.rel (%p17) target = $region8
    $region5: #{shd_jscc_forward.1} parent=1 // loop_body
      %s21 = ssub.s32 %s16, 1
      %s22 = ssub.s32 %s16, 2
      %s23 = sadd.s32 %s16, 1
      %s24 = ssub.s32 %s16, %s23
      %p25 = scmp.eq.s32.totalorder %s24, 0
      %s27 = sadd.s32 %s26, 1
      %s28 = scalar_select %p25, %s26, %s27
      %p31 = pneg %p25
      %p32 = scmp.eq.s32.totalorder %s16, 1
      %p33 = por %p31, %p32
      %p34 = scmp.ne.s32.totalorder %s26, %s29
      %p35 = scmp.eq.s32.totalorder %s16, 0
      %p36 = por %p34, %p35
      %p37 = scmp.ne.s32.totalorder %s26, %s29
      %p38 = scmp.eq.s32.totalorder %s21, 1
      %p39 = por %p37, %p38
      %p40 = scmp.ne.s32.totalorder %s29, %s30
      %p41 = scmp.eq.s32.totalorder %s21, 0
      %p42 = por %p40, %p41
      %p43 = scmp.ne.s32.totalorder %s29, %s30
      %p44 = scmp.eq.s32.totalorder %s22, 1
      %p45 = por %p43, %p44
      %p47 = scmp.ne.s32.totalorder %s30, %s46
      %p48 = scmp.eq.s32.totalorder %s22, 0
      %p49 = por %p47, %p48
      %s50 = ssub.s32 %s16, %s23
      %p51 = scmp.eq.s32.totalorder %s50, 0
      %s53 = sadd.s32 %s52, 1
      %s54 = scalar_select %p51, %s52, %s53
      %p57 = pneg %p51
      %p58 = scmp.eq.s32.totalorder %s16, 1
      %p59 = por %p57, %p58
      %p60 = scmp.ne.s32.totalorder %s52, %s55
      %p61 = scmp.eq.s32.totalorder %s16, 0
      %p62 = por %p60, %p61
      %p63 = scmp.ne.s32.totalorder %s52, %s55
      %p64 = scmp.eq.s32.totalorder %s21, 1
      %p65 = por %p63, %p64
      %p66 = scmp.ne.s32.totalorder %s55, %s56
      %p67 = scmp.eq.s32.totalorder %s21, 0
      %p68 = por %p66, %p67
      %p69 = scmp.ne.s32.totalorder %s55, %s56
      %p70 = scmp.eq.s32.totalorder %s22, 1
      %p71 = por %p69, %p70
      %p73 = scmp.ne.s32.totalorder %s56, %s72
      %p74 = scmp.eq.s32.totalorder %s22, 0
      %p75 = por %p73, %p74
      %s77 = sadd.s32 %s76, 1
      %p80 = scmp.eq.s32.totalorder %s16, 1
      %p81 = scmp.ne.s32.totalorder %s76, %s78
      %p82 = scmp.eq.s32.totalorder %s16, 0
      %p83 = por %p81, %p82
      %p84 = scmp.ne.s32.totalorder %s76, %s78
      %p85 = scmp.eq.s32.totalorder %s21, 1
      %p86 = por %p84, %p85
      %p87 = scmp.ne.s32.totalorder %s78, %s79
      %p88 = scmp.eq.s32.totalorder %s21, 0
      %p89 = por %p87, %p88
      %p90 = scmp.ne.s32.totalorder %s78, %s79
      %p91 = scmp.eq.s32.totalorder %s22, 1
      %p92 = por %p90, %p91
      %p94 = scmp.ne.s32.totalorder %s79, %s93
      %p95 = scmp.eq.s32.totalorder %s22, 0
      %p96 = por %p94, %p95
      %s98 = sadd.s32 %s97, 1
      %p101 = scmp.eq.s32.totalorder %s16, 1
      %p102 = scmp.ne.s32.totalorder %s97, %s99
      %p103 = scmp.eq.s32.totalorder %s16, 0
      %p104 = por %p102, %p103
      %p105 = scmp.ne.s32.totalorder %s97, %s99
      %p106 = scmp.eq.s32.totalorder %s21, 1
      %p107 = por %p105, %p106
      %p108 = scmp.ne.s32.totalorder %s99, %s100
      %p109 = scmp.eq.s32.totalorder %s21, 0
      %p110 = por %p108, %p109
      %p111 = scmp.ne.s32.totalorder %s99, %s100
      %p112 = scmp.eq.s32.totalorder %s22, 1
      %p113 = por %p111, %p112
      %p115 = scmp.ne.s32.totalorder %s100, %s114
      %p116 = scmp.eq.s32.totalorder %s22, 0
      %p117 = por %p115, %p116
      %s119 = sadd.s32 %s118, 1
      %p122 = scmp.eq.s32.totalorder %s16, 1
      %p123 = scmp.ne.s32.totalorder %s118, %s120
      %p124 = scmp.eq.s32.totalorder %s16, 0
      %p125 = por %p123, %p124
      %p126 = scmp.ne.s32.totalorder %s118, %s120
      %p127 = scmp.eq.s32.totalorder %s21, 1
      %p128 = por %p126, %p127
      %p129 = scmp.ne.s32.totalorder %s120, %s121
      %p130 = scmp.eq.s32.totalorder %s21, 0
      %p131 = por %p129, %p130
      %p132 = scmp.ne.s32.totalorder %s120, %s121
      %p133 = scmp.eq.s32.totalorder %s22, 1
      %p134 = por %p132, %p133
      %p136 = scmp.ne.s32.totalorder %s121, %s135
      %p137 = scmp.eq.s32.totalorder %s22, 0
      %p138 = por %p136, %p137
      %s140 = sadd.s32 %s139, 1
      %p143 = scmp.eq.s32.totalorder %s16, 1
      %p144 = scmp.ne.s32.totalorder %s139, %s141
      %p145 = scmp.eq.s32.totalorder %s16, 0
      %p146 = por %p144, %p145
      %p147 = scmp.ne.s32.totalorder %s139, %s141
      %p148 = scmp.eq.s32.totalorder %s21, 1
      %p149 = por %p147, %p148
      %p150 = scmp.ne.s32.totalorder %s141, %s142
      %p151 = scmp.eq.s32.totalorder %s21, 0
      %p152 = por %p150, %p151
      %p153 = scmp.ne.s32.totalorder %s141, %s142
      %p154 = scmp.eq.s32.totalorder %s22, 1
      %p155 = por %p153, %p154
      %p157 = scmp.ne.s32.totalorder %s142, %s156
      %p158 = scmp.eq.s32.totalorder %s22, 0
      %p159 = por %p157, %p158
      %s161 = sadd.s32 %s160, 1
      %p164 = scmp.eq.s32.totalorder %s16, 1
      %p165 = scmp.ne.s32.totalorder %s160, %s162
      %p166 = scmp.eq.s32.totalorder %s16, 0
      %p167 = por %p165, %p166
      %p168 = scmp.ne.s32.totalorder %s160, %s162
      %p169 = scmp.eq.s32.totalorder %s21, 1
      %p170 = por %p168, %p169
      %p171 = scmp.ne.s32.totalorder %s162, %s163
      %p172 = scmp.eq.s32.totalorder %s21, 0
      %p173 = por %p171, %p172
      %p174 = scmp.ne.s32.totalorder %s162, %s163
      %p175 = scmp.eq.s32.totalorder %s22, 1
      %p176 = por %p174, %p175
      %p178 = scmp.ne.s32.totalorder %s163, %s177
      %p179 = scmp.eq.s32.totalorder %s22, 0
      %p180 = por %p178, %p179
      %s182 = sadd.s32 %s181, 1
      %p185 = scmp.eq.s32.totalorder %s16, 1
      %p186 = scmp.ne.s32.totalorder %s181, %s183
      %p187 = scmp.eq.s32.totalorder %s16, 0
      %p188 = por %p186, %p187
      %p189 = scmp.ne.s32.totalorder %s181, %s183
      %p190 = scmp.eq.s32.totalorder %s21, 1
      %p191 = por %p189, %p190
      %p192 = scmp.ne.s32.totalorder %s183, %s184
      %p193 = scmp.eq.s32.totalorder %s21, 0
      %p194 = por %p192, %p193
      %p195 = scmp.ne.s32.totalorder %s183, %s184
      %p196 = scmp.eq.s32.totalorder %s22, 1
      %p197 = por %p195, %p196
      %p199 = scmp.ne.s32.totalorder %s184, %s198
      %p200 = scmp.eq.s32.totalorder %s22, 0
      %p201 = por %p199, %p200
      %s202 = ssub.s32 %s16, %s23
      %p203 = scmp.eq.s32.totalorder %s202, 0
      %s205 = sadd.s32 %s204, 1
      %s206 = scalar_select %p203, %s204, %s205
      %p209 = pneg %p203
      %p210 = scmp.eq.s32.totalorder %s16, 1
      %p211 = por %p209, %p210
      %p212 = scmp.ne.s32.totalorder %s204, %s207
      %p213 = scmp.eq.s32.totalorder %s16, 0
      %p214 = por %p212, %p213
      %p215 = scmp.ne.s32.totalorder %s204, %s207
      %p216 = scmp.eq.s32.totalorder %s21, 1
      %p217 = por %p215, %p216
      %p218 = scmp.ne.s32.totalorder %s207, %s208
      %p219 = scmp.eq.s32.totalorder %s21, 0
      %p220 = por %p218, %p219
      %p221 = scmp.ne.s32.totalorder %s207, %s208
      %p222 = scmp.eq.s32.totalorder %s22, 1
      %p223 = por %p221, %p222
      %p225 = scmp.ne.s32.totalorder %s208, %s224
      %p226 = scmp.eq.s32.totalorder %s22, 0
      %p227 = por %p225, %p226
      %s228 = ssub.s32 %s16, %s23
      %p229 = scmp.eq.s32.totalorder %s228, 0
      %s231 = sadd.s32 %s230, 1
      %s232 = scalar_select %p229, %s230, %s231
      %p235 = pneg %p229
      %p236 = scmp.eq.s32.totalorder %s16, 1
      %p237 = por %p235, %p236
      %p238 = scmp.ne.s32.totalorder %s230, %s233
      %p239 = scmp.eq.s32.totalorder %s16, 0
      %p240 = por %p238, %p239
      %p241 = scmp.ne.s32.totalorder %s230, %s233
      %p242 = scmp.eq.s32.totalorder %s21, 1
      %p243 = por %p241, %p242
      %p244 = scmp.ne.s32.totalorder %s233, %s234
      %p245 = scmp.eq.s32.totalorder %s21, 0
      %p246 = por %p244, %p245
      %p247 = scmp.ne.s32.totalorder %s233, %s234
      %p248 = scmp.eq.s32.totalorder %s22, 1
      %p249 = por %p247, %p248
      %p251 = scmp.ne.s32.totalorder %s234, %s250
      %p252 = scmp.eq.s32.totalorder %s22, 0
      %p253 = por %p251, %p252
      %p254 = scmp.le.s32.totalorder 1, %s16
      %p255 = scmp.lt.s32.totalorder %s16, 3
      %p256 = pnand %p254, %p255
      %p257 = pneg %p256
      // Predicated region
      $region9: #{shd_jscc_forward.1} parent=5 // pred_check
        _
      $region10: #{shd_jscc_forward.1} parent=5 // pred_check_branch
        %259 = sbr.rel (%p256) target = $region12
      $region11: #{shd_jscc_forward.1} parent=5 // pred_region
        %s260 = ssub.s32 %s16, 1
        // Predicated region
        $region13: #{shd_jscc_forward.1} parent=11 // pred_check
          %p261 = pneg %p89
        $region14: #{shd_jscc_forward.1} parent=11 // pred_check_branch
          %263 = sbr.rel (%p261) target = $region16
        $region15: #{shd_jscc_forward.1} parent=11 // pred_region
          _
        $region16: #{shd_jscc_forward.1} parent=11 // pred_fallthru
          _
        // Predicated region
        $region17: #{shd_jscc_forward.1} parent=11 // pred_check
          %p264 = pneg %p110
        $region18: #{shd_jscc_forward.1} parent=11 // pred_check_branch
          %266 = sbr.rel (%p264) target = $region20
        $region19: #{shd_jscc_forward.1} parent=11 // pred_region
          _
        $region20: #{shd_jscc_forward.1} parent=11 // pred_fallthru
          _
        // Predicated region
        $region21: #{shd_jscc_forward.1} parent=11 // pred_check
          %p267 = pneg %p131
        $region22: #{shd_jscc_forward.1} parent=11 // pred_check_branch
          %269 = sbr.rel (%p267) target = $region24
        $region23: #{shd_jscc_forward.1} parent=11 // pred_region
          _
        $region24: #{shd_jscc_forward.1} parent=11 // pred_fallthru
          _
        // Predicated region
        $region25: #{shd_jscc_forward.1} parent=11 // pred_check
          %p270 = pneg %p152
        $region26: #{shd_jscc_forward.1} parent=11 // pred_check_branch
          %272 = sbr.rel (%p270) target = $region28
        $region27: #{shd_jscc_forward.1} parent=11 // pred_region
          _
        $region28: #{shd_jscc_forward.1} parent=11 // pred_fallthru
          _
        // Predicated region
        $region29: #{shd_jscc_forward.1} parent=11 // pred_check
          %p273 = pneg %p173
        $region30: #{shd_jscc_forward.1} parent=11 // pred_check_branch
          %275 = sbr.rel (%p273) target = $region32
        $region31: #{shd_jscc_forward.1} parent=11 // pred_region
          _
        $region32: #{shd_jscc_forward.1} parent=11 // pred_fallthru
          _
        // Predicated region
        $region33: #{shd_jscc_forward.1} parent=11 // pred_check
          %p276 = pneg %p194
        $region34: #{shd_jscc_forward.1} parent=11 // pred_check_branch
          %278 = sbr.rel (%p276) target = $region36
        $region35: #{shd_jscc_forward.1} parent=11 // pred_region
          _
        $region36: #{shd_jscc_forward.1} parent=11 // pred_fallthru
          _
      $region12: #{shd_jscc_forward.1} parent=5 // pred_fallthru
        _
      %p279 = scmp.lt.s32.totalorder %s16, 2
      // Predicated region
      $region37: #{shd_jscc_forward.1} parent=5 // pred_check
        %p280 = pneg %p279
      $region38: #{shd_jscc_forward.1} parent=5 // pred_check_branch
        %282 = sbr.rel (%p280) target = $region40
      $region39: #{shd_jscc_forward.1} parent=5 // pred_region
        // Predicated region
        $region41: #{shd_jscc_forward.1} parent=39 // pred_check
          %p283 = pneg %p36
        $region42: #{shd_jscc_forward.1} parent=39 // pred_check_branch
          %285 = sbr.rel (%p283) target = $region44
        $region43: #{shd_jscc_forward.1} parent=39 // pred_region
          %s286 = sand.u32 %s26, 1
          %s287 = sand.u32 %s26, 1
          %s288 = smul.addr %s287, 256
          %s289 = scalar_lea.vmem [#allocation2], %s288
          %s290 = smul.u32 8, %s16
          %s291 = smul.addr %s290, 4
          %s292 = scalar_lea.vmem %s0, %s291
          // Predicated region
          $region45: #{shd_jscc_forward.1} parent=43 // pred_check
            _
          $region46: #{shd_jscc_forward.1} parent=43 // pred_check_branch
            %294 = sbr.rel (0) target = $region48
          $region47: #{shd_jscc_forward.1} parent=43 // pred_region
            // Predicated region
            $region49: #{shd_jscc_forward.1} parent=47 // pred_check
              _
            $region50: #{shd_jscc_forward.1} parent=47 // pred_check_branch
              %296 = sbr.rel target = $region52
            $region51: #{shd_jscc_forward.1} parent=47 // pred_region
              // Predicated region
              $region64: #{shd_jscc_forward.1} parent=51 // pred_check
                _
              $region65: #{shd_jscc_forward.1} parent=51 // pred_check_branch
                %438 = sbr.rel (0) target = $region67
              $region66: #{shd_jscc_forward.1} parent=51 // pred_region
                loop: start=0, step=1, limit=1
                $region68: #{shd_jscc_forward.1} parent=66 // loop_pre_header
                  _
                $region69: #{shd_jscc_forward.1} parent=66 // loop_header
                  %s440 = sphi 0, %s444
                  %p441 = scmp.ge.s32.totalorder %s440, 1
                  %s445 = sphi %s292, %s292
                  %s446 = sphi %s289, %s289
                $region70: #{shd_jscc_forward.1} parent=66 // loop_header_branch
                  %443 = sbr.rel (%p441) target = $region74
                $region71: #{shd_jscc_forward.1} parent=66 // loop_body
                  _
                $region72: #{shd_jscc_forward.1} parent=66 // loop_footer
                  %s444 = sadd.s32 1, %s440
                $region73: #{shd_jscc_forward.1} parent=66 // loop_footer_branch
                  %439 = sbr.rel target = $region69
                $region74: #{shd_jscc_forward.1} parent=66 // loop_exit
                  _
                %s448 = ssub.s32 16, 1
                loop: start=0, step=1, limit=1
                $region75: #{shd_jscc_forward.1} parent=66 // loop_pre_header
                  _
                $region76: #{shd_jscc_forward.1} parent=66 // loop_header
                  %s450 = sphi 0, %s454
                  %p451 = scmp.ge.s32.totalorder %s450, 1
                  %s455 = sphi %s292, %s292
                  %s456 = sphi %s289, %s289
                $region77: #{shd_jscc_forward.1} parent=66 // loop_header_branch
                  %453 = sbr.rel (%p451) target = $region81
                $region78: #{shd_jscc_forward.1} parent=66 // loop_body
                  %v457 = vld [vmem:[%s455] sm:%s448]
                  %458 = vst [vmem:[%s456] sm:%s448] %v457
                  %v459 = vld [vmem:[%s455 + $0x4] sm:%s448]
                  %460 = vst [vmem:[%s456 + $0x4] sm:%s448] %v459
                  %v461 = vld [vmem:[%s455 + $0x8] sm:%s448]
                  %462 = vst [vmem:[%s456 + $0x8] sm:%s448] %v461
                  %v463 = vld [vmem:[%s455 + $0xc] sm:%s448]
                  %464 = vst [vmem:[%s456 + $0xc] sm:%s448] %v463
                  %v465 = vld [vmem:[%s455 + $0x10] sm:%s448]
                  %466 = vst [vmem:[%s456 + $0x10] sm:%s448] %v465
                  %v467 = vld [vmem:[%s455 + $0x14] sm:%s448]
                  %468 = vst [vmem:[%s456 + $0x14] sm:%s448] %v467
                  %v469 = vld [vmem:[%s455 + $0x18] sm:%s448]
                  %470 = vst [vmem:[%s456 + $0x18] sm:%s448] %v469
                  %v471 = vld [vmem:[%s455 + $0x1c] sm:%s448]
                  %472 = vst [vmem:[%s456 + $0x1c] sm:%s448] %v471
                  %v473 = vld [vmem:[%s455 + $0x40] sm:%s448]
                  %474 = vst [vmem:[%s456 + $0x20] sm:%s448] %v473
                  %v475 = vld [vmem:[%s455 + $0x44] sm:%s448]
                  %476 = vst [vmem:[%s456 + $0x24] sm:%s448] %v475
                  %v477 = vld [vmem:[%s455 + $0x48] sm:%s448]
                  %478 = vst [vmem:[%s456 + $0x28] sm:%s448] %v477
                  %v479 = vld [vmem:[%s455 + $0x4c] sm:%s448]
                  %480 = vst [vmem:[%s456 + $0x2c] sm:%s448] %v479
                  %v481 = vld [vmem:[%s455 + $0x50] sm:%s448]
                  %482 = vst [vmem:[%s456 + $0x30] sm:%s448] %v481
                  %v483 = vld [vmem:[%s455 + $0x54] sm:%s448]
                  %484 = vst [vmem:[%s456 + $0x34] sm:%s448] %v483
                  %v485 = vld [vmem:[%s455 + $0x58] sm:%s448]
                  %486 = vst [vmem:[%s456 + $0x38] sm:%s448] %v485
                  %v487 = vld [vmem:[%s455 + $0x5c] sm:%s448]
                  %488 = vst [vmem:[%s456 + $0x3c] sm:%s448] %v487
                  %v489 = vld [vmem:[%s455 + $0x80] sm:%s448]
                  %490 = vst [vmem:[%s456 + $0x40] sm:%s448] %v489
                  %v491 = vld [vmem:[%s455 + $0x84] sm:%s448]
                  %492 = vst [vmem:[%s456 + $0x44] sm:%s448] %v491
                  %v493 = vld [vmem:[%s455 + $0x88] sm:%s448]
                  %494 = vst [vmem:[%s456 + $0x48] sm:%s448] %v493
                  %v495 = vld [vmem:[%s455 + $0x8c] sm:%s448]
                  %496 = vst [vmem:[%s456 + $0x4c] sm:%s448] %v495
                  %v497 = vld [vmem:[%s455 + $0x90] sm:%s448]
                  %498 = vst [vmem:[%s456 + $0x50] sm:%s448] %v497
                  %v499 = vld [vmem:[%s455 + $0x94] sm:%s448]
                  %500 = vst [vmem:[%s456 + $0x54] sm:%s448] %v499
                  %v501 = vld [vmem:[%s455 + $0x98] sm:%s448]
                  %502 = vst [vmem:[%s456 + $0x58] sm:%s448] %v501
                  %v503 = vld [vmem:[%s455 + $0x9c] sm:%s448]
                  %504 = vst [vmem:[%s456 + $0x5c] sm:%s448] %v503
                  %v505 = vld [vmem:[%s455 + $0xc0] sm:%s448]
                  %506 = vst [vmem:[%s456 + $0x60] sm:%s448] %v505
                  %v507 = vld [vmem:[%s455 + $0xc4] sm:%s448]
                  %508 = vst [vmem:[%s456 + $0x64] sm:%s448] %v507
                  %v509 = vld [vmem:[%s455 + $0xc8] sm:%s448]
                  %510 = vst [vmem:[%s456 + $0x68] sm:%s448] %v509
                  %v511 = vld [vmem:[%s455 + $0xcc] sm:%s448]
                  %512 = vst [vmem:[%s456 + $0x6c] sm:%s448] %v511
                  %v513 = vld [vmem:[%s455 + $0xd0] sm:%s448]
                  %514 = vst [vmem:[%s456 + $0x70] sm:%s448] %v513
                  %v515 = vld [vmem:[%s455 + $0xd4] sm:%s448]
                  %516 = vst [vmem:[%s456 + $0x74] sm:%s448] %v515
                  %v517 = vld [vmem:[%s455 + $0xd8] sm:%s448]
                  %518 = vst [vmem:[%s456 + $0x78] sm:%s448] %v517
                  %v519 = vld [vmem:[%s455 + $0xdc] sm:%s448]
                  %520 = vst [vmem:[%s456 + $0x7c] sm:%s448] %v519
                  %v521 = vld [vmem:[%s455 + $0x100] sm:%s448]
                  %522 = vst [vmem:[%s456 + $0x80] sm:%s448] %v521
                  %v523 = vld [vmem:[%s455 + $0x104] sm:%s448]
                  %524 = vst [vmem:[%s456 + $0x84] sm:%s448] %v523
                  %v525 = vld [vmem:[%s455 + $0x108] sm:%s448]
                  %526 = vst [vmem:[%s456 + $0x88] sm:%s448] %v525
                  %v527 = vld [vmem:[%s455 + $0x10c] sm:%s448]
                  %528 = vst [vmem:[%s456 + $0x8c] sm:%s448] %v527
                  %v529 = vld [vmem:[%s455 + $0x110] sm:%s448]
                  %530 = vst [vmem:[%s456 + $0x90] sm:%s448] %v529
                  %v531 = vld [vmem:[%s455 + $0x114] sm:%s448]
                  %532 = vst [vmem:[%s456 + $0x94] sm:%s448] %v531
                  %v533 = vld [vmem:[%s455 + $0x118] sm:%s448]
                  %534 = vst [vmem:[%s456 + $0x98] sm:%s448] %v533
                  %v535 = vld [vmem:[%s455 + $0x11c] sm:%s448]
                  %536 = vst [vmem:[%s456 + $0x9c] sm:%s448] %v535
                  %v537 = vld [vmem:[%s455 + $0x140] sm:%s448]
                  %538 = vst [vmem:[%s456 + $0xa0] sm:%s448] %v537
                  %v539 = vld [vmem:[%s455 + $0x144] sm:%s448]
                  %540 = vst [vmem:[%s456 + $0xa4] sm:%s448] %v539
                  %v541 = vld [vmem:[%s455 + $0x148] sm:%s448]
                  %542 = vst [vmem:[%s456 + $0xa8] sm:%s448] %v541
                  %v543 = vld [vmem:[%s455 + $0x14c] sm:%s448]
                  %544 = vst [vmem:[%s456 + $0xac] sm:%s448] %v543
                  %v545 = vld [vmem:[%s455 + $0x150] sm:%s448]
                  %546 = vst [vmem:[%s456 + $0xb0] sm:%s448] %v545
                  %v547 = vld [vmem:[%s455 + $0x154] sm:%s448]
                  %548 = vst [vmem:[%s456 + $0xb4] sm:%s448] %v547
                  %v549 = vld [vmem:[%s455 + $0x158] sm:%s448]
                  %550 = vst [vmem:[%s456 + $0xb8] sm:%s448] %v549
                  %v551 = vld [vmem:[%s455 + $0x15c] sm:%s448]
                  %552 = vst [vmem:[%s456 + $0xbc] sm:%s448] %v551
                  %v553 = vld [vmem:[%s455 + $0x180] sm:%s448]
                  %554 = vst [vmem:[%s456 + $0xc0] sm:%s448] %v553
                  %v555 = vld [vmem:[%s455 + $0x184] sm:%s448]
                  %556 = vst [vmem:[%s456 + $0xc4] sm:%s448] %v555
                  %v557 = vld [vmem:[%s455 + $0x188] sm:%s448]
                  %558 = vst [vmem:[%s456 + $0xc8] sm:%s448] %v557
                  %v559 = vld [vmem:[%s455 + $0x18c] sm:%s448]
                  %560 = vst [vmem:[%s456 + $0xcc] sm:%s448] %v559
                  %v561 = vld [vmem:[%s455 + $0x190] sm:%s448]
                  %562 = vst [vmem:[%s456 + $0xd0] sm:%s448] %v561
                  %v563 = vld [vmem:[%s455 + $0x194] sm:%s448]
                  %564 = vst [vmem:[%s456 + $0xd4] sm:%s448] %v563
                  %v565 = vld [vmem:[%s455 + $0x198] sm:%s448]
                  %566 = vst [vmem:[%s456 + $0xd8] sm:%s448] %v565
                  %v567 = vld [vmem:[%s455 + $0x19c] sm:%s448]
                  %568 = vst [vmem:[%s456 + $0xdc] sm:%s448] %v567
                  %v569 = vld [vmem:[%s455 + $0x1c0] sm:%s448]
                  %570 = vst [vmem:[%s456 + $0xe0] sm:%s448] %v569
                  %v571 = vld [vmem:[%s455 + $0x1c4] sm:%s448]
                  %572 = vst [vmem:[%s456 + $0xe4] sm:%s448] %v571
                  %v573 = vld [vmem:[%s455 + $0x1c8] sm:%s448]
                  %574 = vst [vmem:[%s456 + $0xe8] sm:%s448] %v573
                  %v575 = vld [vmem:[%s455 + $0x1cc] sm:%s448]
                  %576 = vst [vmem:[%s456 + $0xec] sm:%s448] %v575
                  %v577 = vld [vmem:[%s455 + $0x1d0] sm:%s448]
                  %578 = vst [vmem:[%s456 + $0xf0] sm:%s448] %v577
                  %v579 = vld [vmem:[%s455 + $0x1d4] sm:%s448]
                  %580 = vst [vmem:[%s456 + $0xf4] sm:%s448] %v579
                  %v581 = vld [vmem:[%s455 + $0x1d8] sm:%s448]
                  %582 = vst [vmem:[%s456 + $0xf8] sm:%s448] %v581
                  %v583 = vld [vmem:[%s455 + $0x1dc] sm:%s448]
                  %584 = vst [vmem:[%s456 + $0xfc] sm:%s448] %v583
                $region79: #{shd_jscc_forward.1} parent=66 // loop_footer
                  %s454 = sadd.s32 1, %s450
                $region80: #{shd_jscc_forward.1} parent=66 // loop_footer_branch
                  %449 = sbr.rel target = $region76
                $region81: #{shd_jscc_forward.1} parent=66 // loop_exit
                  _
              $region67: #{shd_jscc_forward.1} parent=51 // pred_fallthru
                _
            $region52: #{shd_jscc_forward.1} parent=47 // pred_fallthru
              _
            // Predicated region
            $region53: #{shd_jscc_forward.1} parent=47 // pred_check
              _
            $region54: #{shd_jscc_forward.1} parent=47 // pred_check_branch
              %298 = sbr.rel (0) target = $region56
            $region55: #{shd_jscc_forward.1} parent=47 // pred_region
              %s300 = ssub.s32 16, 1
              loop: start=0, step=1, limit=1
              $region57: #{shd_jscc_forward.1} parent=55 // loop_pre_header
                _
              $region58: #{shd_jscc_forward.1} parent=55 // loop_header
                %s302 = sphi 0, %s306
                %p303 = scmp.ge.s32.totalorder %s302, 1
                %s307 = sphi %s292, %s292
                %s308 = sphi %s289, %s289
              $region59: #{shd_jscc_forward.1} parent=55 // loop_header_branch
                %305 = sbr.rel (%p303) target = $region63
              $region60: #{shd_jscc_forward.1} parent=55 // loop_body
                %v309 = vld [vmem:[%s307] sm:%s300]
                %310 = vst [vmem:[%s308] sm:%s300] %v309
                %v311 = vld [vmem:[%s307 + $0x4] sm:%s300]
                %312 = vst [vmem:[%s308 + $0x4] sm:%s300] %v311
                %v313 = vld [vmem:[%s307 + $0x8] sm:%s300]
                %314 = vst [vmem:[%s308 + $0x8] sm:%s300] %v313
                %v315 = vld [vmem:[%s307 + $0xc] sm:%s300]
                %316 = vst [vmem:[%s308 + $0xc] sm:%s300] %v315
                %v317 = vld [vmem:[%s307 + $0x10] sm:%s300]
                %318 = vst [vmem:[%s308 + $0x10] sm:%s300] %v317
                %v319 = vld [vmem:[%s307 + $0x14] sm:%s300]
                %320 = vst [vmem:[%s308 + $0x14] sm:%s300] %v319
                %v321 = vld [vmem:[%s307 + $0x18] sm:%s300]
                %322 = vst [vmem:[%s308 + $0x18] sm:%s300] %v321
                %v323 = vld [vmem:[%s307 + $0x1c] sm:%s300]
                %324 = vst [vmem:[%s308 + $0x1c] sm:%s300] %v323
                %v325 = vld [vmem:[%s307 + $0x40] sm:%s300]
                %326 = vst [vmem:[%s308 + $0x20] sm:%s300] %v325
                %v327 = vld [vmem:[%s307 + $0x44] sm:%s300]
                %328 = vst [vmem:[%s308 + $0x24] sm:%s300] %v327
                %v329 = vld [vmem:[%s307 + $0x48] sm:%s300]
                %330 = vst [vmem:[%s308 + $0x28] sm:%s300] %v329
                %v331 = vld [vmem:[%s307 + $0x4c] sm:%s300]
                %332 = vst [vmem:[%s308 + $0x2c] sm:%s300] %v331
                %v333 = vld [vmem:[%s307 + $0x50] sm:%s300]
                %334 = vst [vmem:[%s308 + $0x30] sm:%s300] %v333
                %v335 = vld [vmem:[%s307 + $0x54] sm:%s300]
                %336 = vst [vmem:[%s308 + $0x34] sm:%s300] %v335
                %v337 = vld [vmem:[%s307 + $0x58] sm:%s300]
                %338 = vst [vmem:[%s308 + $0x38] sm:%s300] %v337
                %v339 = vld [vmem:[%s307 + $0x5c] sm:%s300]
                %340 = vst [vmem:[%s308 + $0x3c] sm:%s300] %v339
                %v341 = vld [vmem:[%s307 + $0x80] sm:%s300]
                %342 = vst [vmem:[%s308 + $0x40] sm:%s300] %v341
                %v343 = vld [vmem:[%s307 + $0x84] sm:%s300]
                %344 = vst [vmem:[%s308 + $0x44] sm:%s300] %v343
                %v345 = vld [vmem:[%s307 + $0x88] sm:%s300]
                %346 = vst [vmem:[%s308 + $0x48] sm:%s300] %v345
                %v347 = vld [vmem:[%s307 + $0x8c] sm:%s300]
                %348 = vst [vmem:[%s308 + $0x4c] sm:%s300] %v347
                %v349 = vld [vmem:[%s307 + $0x90] sm:%s300]
                %350 = vst [vmem:[%s308 + $0x50] sm:%s300] %v349
                %v351 = vld [vmem:[%s307 + $0x94] sm:%s300]
                %352 = vst [vmem:[%s308 + $0x54] sm:%s300] %v351
                %v353 = vld [vmem:[%s307 + $0x98] sm:%s300]
                %354 = vst [vmem:[%s308 + $0x58] sm:%s300] %v353
                %v355 = vld [vmem:[%s307 + $0x9c] sm:%s300]
                %356 = vst [vmem:[%s308 + $0x5c] sm:%s300] %v355
                %v357 = vld [vmem:[%s307 + $0xc0] sm:%s300]
                %358 = vst [vmem:[%s308 + $0x60] sm:%s300] %v357
                %v359 = vld [vmem:[%s307 + $0xc4] sm:%s300]
                %360 = vst [vmem:[%s308 + $0x64] sm:%s300] %v359
                %v361 = vld [vmem:[%s307 + $0xc8] sm:%s300]
                %362 = vst [vmem:[%s308 + $0x68] sm:%s300] %v361
                %v363 = vld [vmem:[%s307 + $0xcc] sm:%s300]
                %364 = vst [vmem:[%s308 + $0x6c] sm:%s300] %v363
                %v365 = vld [vmem:[%s307 + $0xd0] sm:%s300]
                %366 = vst [vmem:[%s308 + $0x70] sm:%s300] %v365
                %v367 = vld [vmem:[%s307 + $0xd4] sm:%s300]
                %368 = vst [vmem:[%s308 + $0x74] sm:%s300] %v367
                %v369 = vld [vmem:[%s307 + $0xd8] sm:%s300]
                %370 = vst [vmem:[%s308 + $0x78] sm:%s300] %v369
                %v371 = vld [vmem:[%s307 + $0xdc] sm:%s300]
                %372 = vst [vmem:[%s308 + $0x7c] sm:%s300] %v371
                %v373 = vld [vmem:[%s307 + $0x100] sm:%s300]
                %374 = vst [vmem:[%s308 + $0x80] sm:%s300] %v373
                %v375 = vld [vmem:[%s307 + $0x104] sm:%s300]
                %376 = vst [vmem:[%s308 + $0x84] sm:%s300] %v375
                %v377 = vld [vmem:[%s307 + $0x108] sm:%s300]
                %378 = vst [vmem:[%s308 + $0x88] sm:%s300] %v377
                %v379 = vld [vmem:[%s307 + $0x10c] sm:%s300]
                %380 = vst [vmem:[%s308 + $0x8c] sm:%s300] %v379
                %v381 = vld [vmem:[%s307 + $0x110] sm:%s300]
                %382 = vst [vmem:[%s308 + $0x90] sm:%s300] %v381
                %v383 = vld [vmem:[%s307 + $0x114] sm:%s300]
                %384 = vst [vmem:[%s308 + $0x94] sm:%s300] %v383
                %v385 = vld [vmem:[%s307 + $0x118] sm:%s300]
                %386 = vst [vmem:[%s308 + $0x98] sm:%s300] %v385
                %v387 = vld [vmem:[%s307 + $0x11c] sm:%s300]
                %388 = vst [vmem:[%s308 + $0x9c] sm:%s300] %v387
                %v389 = vld [vmem:[%s307 + $0x140] sm:%s300]
                %390 = vst [vmem:[%s308 + $0xa0] sm:%s300] %v389
                %v391 = vld [vmem:[%s307 + $0x144] sm:%s300]
                %392 = vst [vmem:[%s308 + $0xa4] sm:%s300] %v391
                %v393 = vld [vmem:[%s307 + $0x148] sm:%s300]
                %394 = vst [vmem:[%s308 + $0xa8] sm:%s300] %v393
                %v395 = vld [vmem:[%s307 + $0x14c] sm:%s300]
                %396 = vst [vmem:[%s308 + $0xac] sm:%s300] %v395
                %v397 = vld [vmem:[%s307 + $0x150] sm:%s300]
                %398 = vst [vmem:[%s308 + $0xb0] sm:%s300] %v397
                %v399 = vld [vmem:[%s307 + $0x154] sm:%s300]
                %400 = vst [vmem:[%s308 + $0xb4] sm:%s300] %v399
                %v401 = vld [vmem:[%s307 + $0x158] sm:%s300]
                %402 = vst [vmem:[%s308 + $0xb8] sm:%s300] %v401
                %v403 = vld [vmem:[%s307 + $0x15c] sm:%s300]
                %404 = vst [vmem:[%s308 + $0xbc] sm:%s300] %v403
                %v405 = vld [vmem:[%s307 + $0x180] sm:%s300]
                %406 = vst [vmem:[%s308 + $0xc0] sm:%s300] %v405
                %v407 = vld [vmem:[%s307 + $0x184] sm:%s300]
                %408 = vst [vmem:[%s308 + $0xc4] sm:%s300] %v407
                %v409 = vld [vmem:[%s307 + $0x188] sm:%s300]
                %410 = vst [vmem:[%s308 + $0xc8] sm:%s300] %v409
                %v411 = vld [vmem:[%s307 + $0x18c] sm:%s300]
                %412 = vst [vmem:[%s308 + $0xcc] sm:%s300] %v411
                %v413 = vld [vmem:[%s307 + $0x190] sm:%s300]
                %414 = vst [vmem:[%s308 + $0xd0] sm:%s300] %v413
                %v415 = vld [vmem:[%s307 + $0x194] sm:%s300]
                %416 = vst [vmem:[%s308 + $0xd4] sm:%s300] %v415
                %v417 = vld [vmem:[%s307 + $0x198] sm:%s300]
                %418 = vst [vmem:[%s308 + $0xd8] sm:%s300] %v417
                %v419 = vld [vmem:[%s307 + $0x19c] sm:%s300]
                %420 = vst [vmem:[%s308 + $0xdc] sm:%s300] %v419
                %v421 = vld [vmem:[%s307 + $0x1c0] sm:%s300]
                %422 = vst [vmem:[%s308 + $0xe0] sm:%s300] %v421
                %v423 = vld [vmem:[%s307 + $0x1c4] sm:%s300]
                %424 = vst [vmem:[%s308 + $0xe4] sm:%s300] %v423
                %v425 = vld [vmem:[%s307 + $0x1c8] sm:%s300]
                %426 = vst [vmem:[%s308 + $0xe8] sm:%s300] %v425
                %v427 = vld [vmem:[%s307 + $0x1cc] sm:%s300]
                %428 = vst [vmem:[%s308 + $0xec] sm:%s300] %v427
                %v429 = vld [vmem:[%s307 + $0x1d0] sm:%s300]
                %430 = vst [vmem:[%s308 + $0xf0] sm:%s300] %v429
                %v431 = vld [vmem:[%s307 + $0x1d4] sm:%s300]
                %432 = vst [vmem:[%s308 + $0xf4] sm:%s300] %v431
                %v433 = vld [vmem:[%s307 + $0x1d8] sm:%s300]
                %434 = vst [vmem:[%s308 + $0xf8] sm:%s300] %v433
                %v435 = vld [vmem:[%s307 + $0x1dc] sm:%s300]
                %436 = vst [vmem:[%s308 + $0xfc] sm:%s300] %v435
              $region61: #{shd_jscc_forward.1} parent=55 // loop_footer
                %s306 = sadd.s32 1, %s302
              $region62: #{shd_jscc_forward.1} parent=55 // loop_footer_branch
                %301 = sbr.rel target = $region58
              $region63: #{shd_jscc_forward.1} parent=55 // loop_exit
                _
            $region56: #{shd_jscc_forward.1} parent=47 // pred_fallthru
              _
          $region48: #{shd_jscc_forward.1} parent=43 // pred_fallthru
            _
          %585 = vnop
        $region44: #{shd_jscc_forward.1} parent=39 // pred_fallthru
          _
        // Predicated region
        $region82: #{shd_jscc_forward.1} parent=39 // pred_check
          %p586 = pneg %p62
        $region83: #{shd_jscc_forward.1} parent=39 // pred_check_branch
          %588 = sbr.rel (%p586) target = $region85
        $region84: #{shd_jscc_forward.1} parent=39 // pred_region
          %s589 = sand.u32 %s52, 1
          %s590 = sand.u32 %s52, 1
          %s591 = smul.addr %s590, 256
          %s592 = scalar_lea.vmem [#allocation3], %s591
          %s593 = smul.u32 8, %s16
          %s594 = smul.addr %s593, 4
          %s595 = scalar_lea.vmem %s1, %s594
          // Predicated region
          $region86: #{shd_jscc_forward.1} parent=84 // pred_check
            _
          $region87: #{shd_jscc_forward.1} parent=84 // pred_check_branch
            %597 = sbr.rel (0) target = $region89
          $region88: #{shd_jscc_forward.1} parent=84 // pred_region
            // Predicated region
            $region90: #{shd_jscc_forward.1} parent=88 // pred_check
              _
            $region91: #{shd_jscc_forward.1} parent=88 // pred_check_branch
              %599 = sbr.rel target = $region93
            $region92: #{shd_jscc_forward.1} parent=88 // pred_region
              // Predicated region
              $region105: #{shd_jscc_forward.1} parent=92 // pred_check
                _
              $region106: #{shd_jscc_forward.1} parent=92 // pred_check_branch
                %741 = sbr.rel (0) target = $region108
              $region107: #{shd_jscc_forward.1} parent=92 // pred_region
                loop: start=0, step=1, limit=1
                $region109: #{shd_jscc_forward.1} parent=107 // loop_pre_header
                  _
                $region110: #{shd_jscc_forward.1} parent=107 // loop_header
                  %s743 = sphi 0, %s747
                  %p744 = scmp.ge.s32.totalorder %s743, 1
                  %s748 = sphi %s595, %s595
                  %s749 = sphi %s592, %s592
                $region111: #{shd_jscc_forward.1} parent=107 // loop_header_branch
                  %746 = sbr.rel (%p744) target = $region115
                $region112: #{shd_jscc_forward.1} parent=107 // loop_body
                  _
                $region113: #{shd_jscc_forward.1} parent=107 // loop_footer
                  %s747 = sadd.s32 1, %s743
                $region114: #{shd_jscc_forward.1} parent=107 // loop_footer_branch
                  %742 = sbr.rel target = $region110
                $region115: #{shd_jscc_forward.1} parent=107 // loop_exit
                  _
                %s751 = ssub.s32 16, 1
                loop: start=0, step=1, limit=1
                $region116: #{shd_jscc_forward.1} parent=107 // loop_pre_header
                  _
                $region117: #{shd_jscc_forward.1} parent=107 // loop_header
                  %s753 = sphi 0, %s757
                  %p754 = scmp.ge.s32.totalorder %s753, 1
                  %s758 = sphi %s595, %s595
                  %s759 = sphi %s592, %s592
                $region118: #{shd_jscc_forward.1} parent=107 // loop_header_branch
                  %756 = sbr.rel (%p754) target = $region122
                $region119: #{shd_jscc_forward.1} parent=107 // loop_body
                  %v760 = vld [vmem:[%s758] sm:%s751]
                  %761 = vst [vmem:[%s759] sm:%s751] %v760
                  %v762 = vld [vmem:[%s758 + $0x4] sm:%s751]
                  %763 = vst [vmem:[%s759 + $0x4] sm:%s751] %v762
                  %v764 = vld [vmem:[%s758 + $0x8] sm:%s751]
                  %765 = vst [vmem:[%s759 + $0x8] sm:%s751] %v764
                  %v766 = vld [vmem:[%s758 + $0xc] sm:%s751]
                  %767 = vst [vmem:[%s759 + $0xc] sm:%s751] %v766
                  %v768 = vld [vmem:[%s758 + $0x10] sm:%s751]
                  %769 = vst [vmem:[%s759 + $0x10] sm:%s751] %v768
                  %v770 = vld [vmem:[%s758 + $0x14] sm:%s751]
                  %771 = vst [vmem:[%s759 + $0x14] sm:%s751] %v770
                  %v772 = vld [vmem:[%s758 + $0x18] sm:%s751]
                  %773 = vst [vmem:[%s759 + $0x18] sm:%s751] %v772
                  %v774 = vld [vmem:[%s758 + $0x1c] sm:%s751]
                  %775 = vst [vmem:[%s759 + $0x1c] sm:%s751] %v774
                  %v776 = vld [vmem:[%s758 + $0x40] sm:%s751]
                  %777 = vst [vmem:[%s759 + $0x20] sm:%s751] %v776
                  %v778 = vld [vmem:[%s758 + $0x44] sm:%s751]
                  %779 = vst [vmem:[%s759 + $0x24] sm:%s751] %v778
                  %v780 = vld [vmem:[%s758 + $0x48] sm:%s751]
                  %781 = vst [vmem:[%s759 + $0x28] sm:%s751] %v780
                  %v782 = vld [vmem:[%s758 + $0x4c] sm:%s751]
                  %783 = vst [vmem:[%s759 + $0x2c] sm:%s751] %v782
                  %v784 = vld [vmem:[%s758 + $0x50] sm:%s751]
                  %785 = vst [vmem:[%s759 + $0x30] sm:%s751] %v784
                  %v786 = vld [vmem:[%s758 + $0x54] sm:%s751]
                  %787 = vst [vmem:[%s759 + $0x34] sm:%s751] %v786
                  %v788 = vld [vmem:[%s758 + $0x58] sm:%s751]
                  %789 = vst [vmem:[%s759 + $0x38] sm:%s751] %v788
                  %v790 = vld [vmem:[%s758 + $0x5c] sm:%s751]
                  %791 = vst [vmem:[%s759 + $0x3c] sm:%s751] %v790
                  %v792 = vld [vmem:[%s758 + $0x80] sm:%s751]
                  %793 = vst [vmem:[%s759 + $0x40] sm:%s751] %v792
                  %v794 = vld [vmem:[%s758 + $0x84] sm:%s751]
                  %795 = vst [vmem:[%s759 + $0x44] sm:%s751] %v794
                  %v796 = vld [vmem:[%s758 + $0x88] sm:%s751]
                  %797 = vst [vmem:[%s759 + $0x48] sm:%s751] %v796
                  %v798 = vld [vmem:[%s758 + $0x8c] sm:%s751]
                  %799 = vst [vmem:[%s759 + $0x4c] sm:%s751] %v798
                  %v800 = vld [vmem:[%s758 + $0x90] sm:%s751]
                  %801 = vst [vmem:[%s759 + $0x50] sm:%s751] %v800
                  %v802 = vld [vmem:[%s758 + $0x94] sm:%s751]
                  %803 = vst [vmem:[%s759 + $0x54] sm:%s751] %v802
                  %v804 = vld [vmem:[%s758 + $0x98] sm:%s751]
                  %805 = vst [vmem:[%s759 + $0x58] sm:%s751] %v804
                  %v806 = vld [vmem:[%s758 + $0x9c] sm:%s751]
                  %807 = vst [vmem:[%s759 + $0x5c] sm:%s751] %v806
                  %v808 = vld [vmem:[%s758 + $0xc0] sm:%s751]
                  %809 = vst [vmem:[%s759 + $0x60] sm:%s751] %v808
                  %v810 = vld [vmem:[%s758 + $0xc4] sm:%s751]
                  %811 = vst [vmem:[%s759 + $0x64] sm:%s751] %v810
                  %v812 = vld [vmem:[%s758 + $0xc8] sm:%s751]
                  %813 = vst [vmem:[%s759 + $0x68] sm:%s751] %v812
                  %v814 = vld [vmem:[%s758 + $0xcc] sm:%s751]
                  %815 = vst [vmem:[%s759 + $0x6c] sm:%s751] %v814
                  %v816 = vld [vmem:[%s758 + $0xd0] sm:%s751]
                  %817 = vst [vmem:[%s759 + $0x70] sm:%s751] %v816
                  %v818 = vld [vmem:[%s758 + $0xd4] sm:%s751]
                  %819 = vst [vmem:[%s759 + $0x74] sm:%s751] %v818
                  %v820 = vld [vmem:[%s758 + $0xd8] sm:%s751]
                  %821 = vst [vmem:[%s759 + $0x78] sm:%s751] %v820
                  %v822 = vld [vmem:[%s758 + $0xdc] sm:%s751]
                  %823 = vst [vmem:[%s759 + $0x7c] sm:%s751] %v822
                  %v824 = vld [vmem:[%s758 + $0x100] sm:%s751]
                  %825 = vst [vmem:[%s759 + $0x80] sm:%s751] %v824
                  %v826 = vld [vmem:[%s758 + $0x104] sm:%s751]
                  %827 = vst [vmem:[%s759 + $0x84] sm:%s751] %v826
                  %v828 = vld [vmem:[%s758 + $0x108] sm:%s751]
                  %829 = vst [vmem:[%s759 + $0x88] sm:%s751] %v828
                  %v830 = vld [vmem:[%s758 + $0x10c] sm:%s751]
                  %831 = vst [vmem:[%s759 + $0x8c] sm:%s751] %v830
                  %v832 = vld [vmem:[%s758 + $0x110] sm:%s751]
                  %833 = vst [vmem:[%s759 + $0x90] sm:%s751] %v832
                  %v834 = vld [vmem:[%s758 + $0x114] sm:%s751]
                  %835 = vst [vmem:[%s759 + $0x94] sm:%s751] %v834
                  %v836 = vld [vmem:[%s758 + $0x118] sm:%s751]
                  %837 = vst [vmem:[%s759 + $0x98] sm:%s751] %v836
                  %v838 = vld [vmem:[%s758 + $0x11c] sm:%s751]
                  %839 = vst [vmem:[%s759 + $0x9c] sm:%s751] %v838
                  %v840 = vld [vmem:[%s758 + $0x140] sm:%s751]
                  %841 = vst [vmem:[%s759 + $0xa0] sm:%s751] %v840
                  %v842 = vld [vmem:[%s758 + $0x144] sm:%s751]
                  %843 = vst [vmem:[%s759 + $0xa4] sm:%s751] %v842
                  %v844 = vld [vmem:[%s758 + $0x148] sm:%s751]
                  %845 = vst [vmem:[%s759 + $0xa8] sm:%s751] %v844
                  %v846 = vld [vmem:[%s758 + $0x14c] sm:%s751]
                  %847 = vst [vmem:[%s759 + $0xac] sm:%s751] %v846
                  %v848 = vld [vmem:[%s758 + $0x150] sm:%s751]
                  %849 = vst [vmem:[%s759 + $0xb0] sm:%s751] %v848
                  %v850 = vld [vmem:[%s758 + $0x154] sm:%s751]
                  %851 = vst [vmem:[%s759 + $0xb4] sm:%s751] %v850
                  %v852 = vld [vmem:[%s758 + $0x158] sm:%s751]
                  %853 = vst [vmem:[%s759 + $0xb8] sm:%s751] %v852
                  %v854 = vld [vmem:[%s758 + $0x15c] sm:%s751]
                  %855 = vst [vmem:[%s759 + $0xbc] sm:%s751] %v854
                  %v856 = vld [vmem:[%s758 + $0x180] sm:%s751]
                  %857 = vst [vmem:[%s759 + $0xc0] sm:%s751] %v856
                  %v858 = vld [vmem:[%s758 + $0x184] sm:%s751]
                  %859 = vst [vmem:[%s759 + $0xc4] sm:%s751] %v858
                  %v860 = vld [vmem:[%s758 + $0x188] sm:%s751]
                  %861 = vst [vmem:[%s759 + $0xc8] sm:%s751] %v860
                  %v862 = vld [vmem:[%s758 + $0x18c] sm:%s751]
                  %863 = vst [vmem:[%s759 + $0xcc] sm:%s751] %v862
                  %v864 = vld [vmem:[%s758 + $0x190] sm:%s751]
                  %865 = vst [vmem:[%s759 + $0xd0] sm:%s751] %v864
                  %v866 = vld [vmem:[%s758 + $0x194] sm:%s751]
                  %867 = vst [vmem:[%s759 + $0xd4] sm:%s751] %v866
                  %v868 = vld [vmem:[%s758 + $0x198] sm:%s751]
                  %869 = vst [vmem:[%s759 + $0xd8] sm:%s751] %v868
                  %v870 = vld [vmem:[%s758 + $0x19c] sm:%s751]
                  %871 = vst [vmem:[%s759 + $0xdc] sm:%s751] %v870
                  %v872 = vld [vmem:[%s758 + $0x1c0] sm:%s751]
                  %873 = vst [vmem:[%s759 + $0xe0] sm:%s751] %v872
                  %v874 = vld [vmem:[%s758 + $0x1c4] sm:%s751]
                  %875 = vst [vmem:[%s759 + $0xe4] sm:%s751] %v874
                  %v876 = vld [vmem:[%s758 + $0x1c8] sm:%s751]
                  %877 = vst [vmem:[%s759 + $0xe8] sm:%s751] %v876
                  %v878 = vld [vmem:[%s758 + $0x1cc] sm:%s751]
                  %879 = vst [vmem:[%s759 + $0xec] sm:%s751] %v878
                  %v880 = vld [vmem:[%s758 + $0x1d0] sm:%s751]
                  %881 = vst [vmem:[%s759 + $0xf0] sm:%s751] %v880
                  %v882 = vld [vmem:[%s758 + $0x1d4] sm:%s751]
                  %883 = vst [vmem:[%s759 + $0xf4] sm:%s751] %v882
                  %v884 = vld [vmem:[%s758 + $0x1d8] sm:%s751]
                  %885 = vst [vmem:[%s759 + $0xf8] sm:%s751] %v884
                  %v886 = vld [vmem:[%s758 + $0x1dc] sm:%s751]
                  %887 = vst [vmem:[%s759 + $0xfc] sm:%s751] %v886
                $region120: #{shd_jscc_forward.1} parent=107 // loop_footer
                  %s757 = sadd.s32 1, %s753
                $region121: #{shd_jscc_forward.1} parent=107 // loop_footer_branch
                  %752 = sbr.rel target = $region117
                $region122: #{shd_jscc_forward.1} parent=107 // loop_exit
                  _
              $region108: #{shd_jscc_forward.1} parent=92 // pred_fallthru
                _
            $region93: #{shd_jscc_forward.1} parent=88 // pred_fallthru
              _
            // Predicated region
            $region94: #{shd_jscc_forward.1} parent=88 // pred_check
              _
            $region95: #{shd_jscc_forward.1} parent=88 // pred_check_branch
              %601 = sbr.rel (0) target = $region97
            $region96: #{shd_jscc_forward.1} parent=88 // pred_region
              %s603 = ssub.s32 16, 1
              loop: start=0, step=1, limit=1
              $region98: #{shd_jscc_forward.1} parent=96 // loop_pre_header
                _
              $region99: #{shd_jscc_forward.1} parent=96 // loop_header
                %s605 = sphi 0, %s609
                %p606 = scmp.ge.s32.totalorder %s605, 1
                %s610 = sphi %s595, %s595
                %s611 = sphi %s592, %s592
              $region100: #{shd_jscc_forward.1} parent=96 // loop_header_branch
                %608 = sbr.rel (%p606) target = $region104
              $region101: #{shd_jscc_forward.1} parent=96 // loop_body
                %v612 = vld [vmem:[%s610] sm:%s603]
                %613 = vst [vmem:[%s611] sm:%s603] %v612
                %v614 = vld [vmem:[%s610 + $0x4] sm:%s603]
                %615 = vst [vmem:[%s611 + $0x4] sm:%s603] %v614
                %v616 = vld [vmem:[%s610 + $0x8] sm:%s603]
                %617 = vst [vmem:[%s611 + $0x8] sm:%s603] %v616
                %v618 = vld [vmem:[%s610 + $0xc] sm:%s603]
                %619 = vst [vmem:[%s611 + $0xc] sm:%s603] %v618
                %v620 = vld [vmem:[%s610 + $0x10] sm:%s603]
                %621 = vst [vmem:[%s611 + $0x10] sm:%s603] %v620
                %v622 = vld [vmem:[%s610 + $0x14] sm:%s603]
                %623 = vst [vmem:[%s611 + $0x14] sm:%s603] %v622
                %v624 = vld [vmem:[%s610 + $0x18] sm:%s603]
                %625 = vst [vmem:[%s611 + $0x18] sm:%s603] %v624
                %v626 = vld [vmem:[%s610 + $0x1c] sm:%s603]
                %627 = vst [vmem:[%s611 + $0x1c] sm:%s603] %v626
                %v628 = vld [vmem:[%s610 + $0x40] sm:%s603]
                %629 = vst [vmem:[%s611 + $0x20] sm:%s603] %v628
                %v630 = vld [vmem:[%s610 + $0x44] sm:%s603]
                %631 = vst [vmem:[%s611 + $0x24] sm:%s603] %v630
                %v632 = vld [vmem:[%s610 + $0x48] sm:%s603]
                %633 = vst [vmem:[%s611 + $0x28] sm:%s603] %v632
                %v634 = vld [vmem:[%s610 + $0x4c] sm:%s603]
                %635 = vst [vmem:[%s611 + $0x2c] sm:%s603] %v634
                %v636 = vld [vmem:[%s610 + $0x50] sm:%s603]
                %637 = vst [vmem:[%s611 + $0x30] sm:%s603] %v636
                %v638 = vld [vmem:[%s610 + $0x54] sm:%s603]
                %639 = vst [vmem:[%s611 + $0x34] sm:%s603] %v638
                %v640 = vld [vmem:[%s610 + $0x58] sm:%s603]
                %641 = vst [vmem:[%s611 + $0x38] sm:%s603] %v640
                %v642 = vld [vmem:[%s610 + $0x5c] sm:%s603]
                %643 = vst [vmem:[%s611 + $0x3c] sm:%s603] %v642
                %v644 = vld [vmem:[%s610 + $0x80] sm:%s603]
                %645 = vst [vmem:[%s611 + $0x40] sm:%s603] %v644
                %v646 = vld [vmem:[%s610 + $0x84] sm:%s603]
                %647 = vst [vmem:[%s611 + $0x44] sm:%s603] %v646
                %v648 = vld [vmem:[%s610 + $0x88] sm:%s603]
                %649 = vst [vmem:[%s611 + $0x48] sm:%s603] %v648
                %v650 = vld [vmem:[%s610 + $0x8c] sm:%s603]
                %651 = vst [vmem:[%s611 + $0x4c] sm:%s603] %v650
                %v652 = vld [vmem:[%s610 + $0x90] sm:%s603]
                %653 = vst [vmem:[%s611 + $0x50] sm:%s603] %v652
                %v654 = vld [vmem:[%s610 + $0x94] sm:%s603]
                %655 = vst [vmem:[%s611 + $0x54] sm:%s603] %v654
                %v656 = vld [vmem:[%s610 + $0x98] sm:%s603]
                %657 = vst [vmem:[%s611 + $0x58] sm:%s603] %v656
                %v658 = vld [vmem:[%s610 + $0x9c] sm:%s603]
                %659 = vst [vmem:[%s611 + $0x5c] sm:%s603] %v658
                %v660 = vld [vmem:[%s610 + $0xc0] sm:%s603]
                %661 = vst [vmem:[%s611 + $0x60] sm:%s603] %v660
                %v662 = vld [vmem:[%s610 + $0xc4] sm:%s603]
                %663 = vst [vmem:[%s611 + $0x64] sm:%s603] %v662
                %v664 = vld [vmem:[%s610 + $0xc8] sm:%s603]
                %665 = vst [vmem:[%s611 + $0x68] sm:%s603] %v664
                %v666 = vld [vmem:[%s610 + $0xcc] sm:%s603]
                %667 = vst [vmem:[%s611 + $0x6c] sm:%s603] %v666
                %v668 = vld [vmem:[%s610 + $0xd0] sm:%s603]
                %669 = vst [vmem:[%s611 + $0x70] sm:%s603] %v668
                %v670 = vld [vmem:[%s610 + $0xd4] sm:%s603]
                %671 = vst [vmem:[%s611 + $0x74] sm:%s603] %v670
                %v672 = vld [vmem:[%s610 + $0xd8] sm:%s603]
                %673 = vst [vmem:[%s611 + $0x78] sm:%s603] %v672
                %v674 = vld [vmem:[%s610 + $0xdc] sm:%s603]
                %675 = vst [vmem:[%s611 + $0x7c] sm:%s603] %v674
                %v676 = vld [vmem:[%s610 + $0x100] sm:%s603]
                %677 = vst [vmem:[%s611 + $0x80] sm:%s603] %v676
                %v678 = vld [vmem:[%s610 + $0x104] sm:%s603]
                %679 = vst [vmem:[%s611 + $0x84] sm:%s603] %v678
                %v680 = vld [vmem:[%s610 + $0x108] sm:%s603]
                %681 = vst [vmem:[%s611 + $0x88] sm:%s603] %v680
                %v682 = vld [vmem:[%s610 + $0x10c] sm:%s603]
                %683 = vst [vmem:[%s611 + $0x8c] sm:%s603] %v682
                %v684 = vld [vmem:[%s610 + $0x110] sm:%s603]
                %685 = vst [vmem:[%s611 + $0x90] sm:%s603] %v684
                %v686 = vld [vmem:[%s610 + $0x114] sm:%s603]
                %687 = vst [vmem:[%s611 + $0x94] sm:%s603] %v686
                %v688 = vld [vmem:[%s610 + $0x118] sm:%s603]
                %689 = vst [vmem:[%s611 + $0x98] sm:%s603] %v688
                %v690 = vld [vmem:[%s610 + $0x11c] sm:%s603]
                %691 = vst [vmem:[%s611 + $0x9c] sm:%s603] %v690
                %v692 = vld [vmem:[%s610 + $0x140] sm:%s603]
                %693 = vst [vmem:[%s611 + $0xa0] sm:%s603] %v692
                %v694 = vld [vmem:[%s610 + $0x144] sm:%s603]
                %695 = vst [vmem:[%s611 + $0xa4] sm:%s603] %v694
                %v696 = vld [vmem:[%s610 + $0x148] sm:%s603]
                %697 = vst [vmem:[%s611 + $0xa8] sm:%s603] %v696
                %v698 = vld [vmem:[%s610 + $0x14c] sm:%s603]
                %699 = vst [vmem:[%s611 + $0xac] sm:%s603] %v698
                %v700 = vld [vmem:[%s610 + $0x150] sm:%s603]
                %701 = vst [vmem:[%s611 + $0xb0] sm:%s603] %v700
                %v702 = vld [vmem:[%s610 + $0x154] sm:%s603]
                %703 = vst [vmem:[%s611 + $0xb4] sm:%s603] %v702
                %v704 = vld [vmem:[%s610 + $0x158] sm:%s603]
                %705 = vst [vmem:[%s611 + $0xb8] sm:%s603] %v704
                %v706 = vld [vmem:[%s610 + $0x15c] sm:%s603]
                %707 = vst [vmem:[%s611 + $0xbc] sm:%s603] %v706
                %v708 = vld [vmem:[%s610 + $0x180] sm:%s603]
                %709 = vst [vmem:[%s611 + $0xc0] sm:%s603] %v708
                %v710 = vld [vmem:[%s610 + $0x184] sm:%s603]
                %711 = vst [vmem:[%s611 + $0xc4] sm:%s603] %v710
                %v712 = vld [vmem:[%s610 + $0x188] sm:%s603]
                %713 = vst [vmem:[%s611 + $0xc8] sm:%s603] %v712
                %v714 = vld [vmem:[%s610 + $0x18c] sm:%s603]
                %715 = vst [vmem:[%s611 + $0xcc] sm:%s603] %v714
                %v716 = vld [vmem:[%s610 + $0x190] sm:%s603]
                %717 = vst [vmem:[%s611 + $0xd0] sm:%s603] %v716
                %v718 = vld [vmem:[%s610 + $0x194] sm:%s603]
                %719 = vst [vmem:[%s611 + $0xd4] sm:%s603] %v718
                %v720 = vld [vmem:[%s610 + $0x198] sm:%s603]
                %721 = vst [vmem:[%s611 + $0xd8] sm:%s603] %v720
                %v722 = vld [vmem:[%s610 + $0x19c] sm:%s603]
                %723 = vst [vmem:[%s611 + $0xdc] sm:%s603] %v722
                %v724 = vld [vmem:[%s610 + $0x1c0] sm:%s603]
                %725 = vst [vmem:[%s611 + $0xe0] sm:%s603] %v724
                %v726 = vld [vmem:[%s610 + $0x1c4] sm:%s603]
                %727 = vst [vmem:[%s611 + $0xe4] sm:%s603] %v726
                %v728 = vld [vmem:[%s610 + $0x1c8] sm:%s603]
                %729 = vst [vmem:[%s611 + $0xe8] sm:%s603] %v728
                %v730 = vld [vmem:[%s610 + $0x1cc] sm:%s603]
                %731 = vst [vmem:[%s611 + $0xec] sm:%s603] %v730
                %v732 = vld [vmem:[%s610 + $0x1d0] sm:%s603]
                %733 = vst [vmem:[%s611 + $0xf0] sm:%s603] %v732
                %v734 = vld [vmem:[%s610 + $0x1d4] sm:%s603]
                %735 = vst [vmem:[%s611 + $0xf4] sm:%s603] %v734
                %v736 = vld [vmem:[%s610 + $0x1d8] sm:%s603]
                %737 = vst [vmem:[%s611 + $0xf8] sm:%s603] %v736
                %v738 = vld [vmem:[%s610 + $0x1dc] sm:%s603]
                %739 = vst [vmem:[%s611 + $0xfc] sm:%s603] %v738
              $region102: #{shd_jscc_forward.1} parent=96 // loop_footer
                %s609 = sadd.s32 1, %s605
              $region103: #{shd_jscc_forward.1} parent=96 // loop_footer_branch
                %604 = sbr.rel target = $region99
              $region104: #{shd_jscc_forward.1} parent=96 // loop_exit
                _
            $region97: #{shd_jscc_forward.1} parent=88 // pred_fallthru
              _
          $region89: #{shd_jscc_forward.1} parent=84 // pred_fallthru
            _
          %888 = vnop
        $region85: #{shd_jscc_forward.1} parent=39 // pred_fallthru
          _
      $region40: #{shd_jscc_forward.1} parent=5 // pred_fallthru
        _
      %p889 = scmp.le.s32.totalorder 1, %s16
      %p890 = scmp.lt.s32.totalorder %s16, 3
      %p891 = pnand %p889, %p890
      %p892 = pneg %p891
      // Predicated region
      $region123: #{shd_jscc_forward.1} parent=5 // pred_check
        _
      $region124: #{shd_jscc_forward.1} parent=5 // pred_check_branch
        %894 = sbr.rel (%p891) target = $region126
      $region125: #{shd_jscc_forward.1} parent=5 // pred_region
        %s895 = ssub.s32 %s16, 1
        %s896 = sand.u32 %s29, 1
        %s897 = sand.u32 %s29, 1
        %s898 = smul.addr %s897, 256
        %s899 = scalar_lea.vmem [#allocation2], %s898
        // Predicated region
        $region127: #{shd_jscc_forward.1} parent=125 // pred_check
          %p900 = pneg %p42
        $region128: #{shd_jscc_forward.1} parent=125 // pred_check_branch
          %902 = sbr.rel (%p900) target = $region130
        $region129: #{shd_jscc_forward.1} parent=125 // pred_region
          _
        $region130: #{shd_jscc_forward.1} parent=125 // pred_fallthru
          _
        %s903 = sand.u32 %s55, 1
        %s904 = sand.u32 %s55, 1
        %s905 = smul.addr %s904, 256
        %s906 = scalar_lea.vmem [#allocation3], %s905
        // Predicated region
        $region131: #{shd_jscc_forward.1} parent=125 // pred_check
          %p907 = pneg %p68
        $region132: #{shd_jscc_forward.1} parent=125 // pred_check_branch
          %909 = sbr.rel (%p907) target = $region134
        $region133: #{shd_jscc_forward.1} parent=125 // pred_region
          _
        $region134: #{shd_jscc_forward.1} parent=125 // pred_fallthru
          _
        %s910 = sand.u32 %s29, 1
        %s911 = sand.u32 %s29, 1
        %s912 = smul.addr %s911, 256
        %s913 = scalar_lea.vmem [#allocation2], %s912
        %p914 = pneg %p42
        %p915 = pneg %p39
        %s916 = sand.u32 %s55, 1
        %s917 = sand.u32 %s55, 1
        %s918 = smul.addr %s917, 256
        %s919 = scalar_lea.vmem [#allocation3], %s918
        %p920 = pneg %p68
        %p921 = pneg %p65
        %p922 = pneg %p89
        %p923 = pneg %p86
        %p924 = pneg %p110
        %p925 = pneg %p107
        %p926 = pneg %p131
        %p927 = pneg %p128
        %p928 = pneg %p152
        %p929 = pneg %p149
        %p930 = pneg %p173
        %p931 = pneg %p170
        %p932 = pneg %p194
        %p933 = pneg %p191
        %p934 = pneg %p220
        %p935 = pneg %p217
        %s936 = smul.u32 8, %s21
        %p937 = scmp.lt.s32.totalorder %s936, 15
        %s938 = scalar_select %p937, %s936, 15
        %s939 = smul.addr %s938, 8
        %s940 = scalar_lea.vmem %s8, %s939
        %p941 = pneg %p246
        %p942 = pneg %p243
        %s943 = smul.u32 64, %s21
        %p944 = scmp.lt.s32.totalorder %s943, 127
        %s945 = scalar_select %p944, %s943, 127
        %s946 = smul.addr %s945, 4
        %s947 = scalar_lea.vmem %s9, %s946
        %s948 = smul.u32 8, %s21
        %s949 = smul.u32 8, %s21
        %s950 = smul.u32 8, %s21
        %p951 = scmp.lt.s32.totalorder %s950, 15
        %s952 = scalar_select %p951, %s950, 15
        %s953 = smul.addr %s952, 8
        %s954 = scalar_lea.vmem %s8, %s953
        %s955 = smul.u32 8, %s21
        %s956 = smul.u32 64, %s21
        %p957 = scmp.lt.s32.totalorder %s956, 127
        %s958 = scalar_select %p957, %s956, 127
        %s959 = smul.addr %s958, 4
        %s960 = scalar_lea.vmem %s9, %s959
        %s961 = smul.u32 64, %s21
        %v963 = vld [vmem:[%s2] sm:$0xf]
        %v964 = vld [vmem:[%s2 + $0x4] sm:$0xf]
        %v965 = vld [vmem:[%s2 + $0x8] sm:$0xf]
        %v966 = vld [vmem:[%s2 + $0xc] sm:$0xf]
        %v967 = vld [vmem:[%s2 + $0x10] sm:$0xf]
        %v968 = vld [vmem:[%s2 + $0x14] sm:$0xf]
        %v969 = vld [vmem:[%s2 + $0x18] sm:$0xf]
        %v970 = vld [vmem:[%s2 + $0x1c] sm:$0xf]
        %v971 = vld [vmem:[%s4] sm:$0xf]
        %v972 = vld [vmem:[%s4 + $0x4] sm:$0xf]
        %v973 = vld [vmem:[%s4 + $0x8] sm:$0xf]
        %v974 = vld [vmem:[%s4 + $0xc] sm:$0xf]
        %v975 = vld [vmem:[%s4 + $0x10] sm:$0xf]
        %v976 = vld [vmem:[%s4 + $0x14] sm:$0xf]
        %v977 = vld [vmem:[%s4 + $0x18] sm:$0xf]
        %v978 = vld [vmem:[%s4 + $0x1c] sm:$0xf]
        %v979 = vld [vmem:[%s4 + $0x20] sm:$0xf]
        %v980 = vld [vmem:[%s4 + $0x24] sm:$0xf]
        %v981 = vld [vmem:[%s4 + $0x28] sm:$0xf]
        %v982 = vld [vmem:[%s4 + $0x2c] sm:$0xf]
        %v983 = vld [vmem:[%s4 + $0x30] sm:$0xf]
        %v984 = vld [vmem:[%s4 + $0x34] sm:$0xf]
        %v985 = vld [vmem:[%s4 + $0x38] sm:$0xf]
        %v986 = vld [vmem:[%s4 + $0x3c] sm:$0xf]
        %v987 = vld [vmem:[%s6] sm:$0xf]
        %v988 = vld [vmem:[%s6 + $0x4] sm:$0xf]
        %v989 = vld [vmem:[%s6 + $0x8] sm:$0xf]
        %v990 = vld [vmem:[%s6 + $0xc] sm:$0xf]
        %v991 = vld [vmem:[%s6 + $0x10] sm:$0xf]
        %v992 = vld [vmem:[%s6 + $0x14] sm:$0xf]
        %v993 = vld [vmem:[%s6 + $0x18] sm:$0xf]
        %v994 = vld [vmem:[%s6 + $0x1c] sm:$0xf]
        %v995 = vld [vmem:[%s6 + $0x20] sm:$0xf]
        %v996 = vld [vmem:[%s6 + $0x24] sm:$0xf]
        %v997 = vld [vmem:[%s6 + $0x28] sm:$0xf]
        %v998 = vld [vmem:[%s6 + $0x2c] sm:$0xf]
        %v999 = vld [vmem:[%s6 + $0x30] sm:$0xf]
        %v1000 = vld [vmem:[%s6 + $0x34] sm:$0xf]
        %v1001 = vld [vmem:[%s6 + $0x38] sm:$0xf]
        %v1002 = vld [vmem:[%s6 + $0x3c] sm:$0xf]
        %v1003 = vld [vmem:[%s5] sm:$0x1]
        %v1005 = vperm.slane %v1003, 0
        %v1007 = vld [vmem:[%s899] sm:$0xf]
        %v1008 = vld [vmem:[%s899 + $0x4] sm:$0xf]
        %v1009 = vld [vmem:[%s899 + $0x8] sm:$0xf]
        %v1010 = vld [vmem:[%s899 + $0xc] sm:$0xf]
        %v1011 = vld [vmem:[%s899 + $0x10] sm:$0xf]
        %v1012 = vld [vmem:[%s899 + $0x14] sm:$0xf]
        %v1013 = vld [vmem:[%s899 + $0x18] sm:$0xf]
        %v1014 = vld [vmem:[%s899 + $0x1c] sm:$0xf]
        %v1015 = vld [vmem:[%s899 + $0x20] sm:$0xf]
        %v1016 = vld [vmem:[%s899 + $0x24] sm:$0xf]
        %v1017 = vld [vmem:[%s899 + $0x28] sm:$0xf]
        %v1018 = vld [vmem:[%s899 + $0x2c] sm:$0xf]
        %v1019 = vld [vmem:[%s899 + $0x30] sm:$0xf]
        %v1020 = vld [vmem:[%s899 + $0x34] sm:$0xf]
        %v1021 = vld [vmem:[%s899 + $0x38] sm:$0xf]
        %v1022 = vld [vmem:[%s899 + $0x3c] sm:$0xf]
        %v1023 = vld [vmem:[%s899 + $0x40] sm:$0xf]
        %v1024 = vld [vmem:[%s899 + $0x44] sm:$0xf]
        %v1025 = vld [vmem:[%s899 + $0x48] sm:$0xf]
        %v1026 = vld [vmem:[%s899 + $0x4c] sm:$0xf]
        %v1027 = vld [vmem:[%s899 + $0x50] sm:$0xf]
        %v1028 = vld [vmem:[%s899 + $0x54] sm:$0xf]
        %v1029 = vld [vmem:[%s899 + $0x58] sm:$0xf]
        %v1030 = vld [vmem:[%s899 + $0x5c] sm:$0xf]
        %v1031 = vld [vmem:[%s899 + $0x60] sm:$0xf]
        %v1032 = vld [vmem:[%s899 + $0x64] sm:$0xf]
        %v1033 = vld [vmem:[%s899 + $0x68] sm:$0xf]
        %v1034 = vld [vmem:[%s899 + $0x6c] sm:$0xf]
        %v1035 = vld [vmem:[%s899 + $0x70] sm:$0xf]
        %v1036 = vld [vmem:[%s899 + $0x74] sm:$0xf]
        %v1037 = vld [vmem:[%s899 + $0x78] sm:$0xf]
        %v1038 = vld [vmem:[%s899 + $0x7c] sm:$0xf]
        %v1039 = vld [vmem:[%s899 + $0x80] sm:$0xf]
        %v1040 = vld [vmem:[%s899 + $0x84] sm:$0xf]
        %v1041 = vld [vmem:[%s899 + $0x88] sm:$0xf]
        %v1042 = vld [vmem:[%s899 + $0x8c] sm:$0xf]
        %v1043 = vld [vmem:[%s899 + $0x90] sm:$0xf]
        %v1044 = vld [vmem:[%s899 + $0x94] sm:$0xf]
        %v1045 = vld [vmem:[%s899 + $0x98] sm:$0xf]
        %v1046 = vld [vmem:[%s899 + $0x9c] sm:$0xf]
        %v1047 = vld [vmem:[%s899 + $0xa0] sm:$0xf]
        %v1048 = vld [vmem:[%s899 + $0xa4] sm:$0xf]
        %v1049 = vld [vmem:[%s899 + $0xa8] sm:$0xf]
        %v1050 = vld [vmem:[%s899 + $0xac] sm:$0xf]
        %v1051 = vld [vmem:[%s899 + $0xb0] sm:$0xf]
        %v1052 = vld [vmem:[%s899 + $0xb4] sm:$0xf]
        %v1053 = vld [vmem:[%s899 + $0xb8] sm:$0xf]
        %v1054 = vld [vmem:[%s899 + $0xbc] sm:$0xf]
        %v1055 = vld [vmem:[%s899 + $0xc0] sm:$0xf]
        %v1056 = vld [vmem:[%s899 + $0xc4] sm:$0xf]
        %v1057 = vld [vmem:[%s899 + $0xc8] sm:$0xf]
        %v1058 = vld [vmem:[%s899 + $0xcc] sm:$0xf]
        %v1059 = vld [vmem:[%s899 + $0xd0] sm:$0xf]
        %v1060 = vld [vmem:[%s899 + $0xd4] sm:$0xf]
        %v1061 = vld [vmem:[%s899 + $0xd8] sm:$0xf]
        %v1062 = vld [vmem:[%s899 + $0xdc] sm:$0xf]
        %v1063 = vld [vmem:[%s899 + $0xe0] sm:$0xf]
        %v1064 = vld [vmem:[%s899 + $0xe4] sm:$0xf]
        %v1065 = vld [vmem:[%s899 + $0xe8] sm:$0xf]
        %v1066 = vld [vmem:[%s899 + $0xec] sm:$0xf]
        %v1067 = vld [vmem:[%s899 + $0xf0] sm:$0xf]
        %v1068 = vld [vmem:[%s899 + $0xf4] sm:$0xf]
        %v1069 = vld [vmem:[%s899 + $0xf8] sm:$0xf]
        %v1070 = vld [vmem:[%s899 + $0xfc] sm:$0xf]
        %v1071 = vld [vmem:[%s3] sm:$0x1]
        %v1073 = vperm.slane %v1071, 0
        %v1139 = vunpack.c.l.b16 %v1007
        %v1140 = vunpack.c.l.b16 %v1008
        %v1141 = vunpack.c.l.b16 %v1009
        %v1142 = vunpack.c.l.b16 %v1010
        %v1143 = vunpack.c.l.b16 %v1011
        %v1144 = vunpack.c.l.b16 %v1012
        %v1145 = vunpack.c.l.b16 %v1013
        %v1146 = vunpack.c.l.b16 %v1014
        %v1147 = vunpack.c.l.b16 %v1015
        %v1148 = vunpack.c.l.b16 %v1016
        %v1149 = vunpack.c.l.b16 %v1017
        %v1150 = vunpack.c.l.b16 %v1018
        %v1151 = vunpack.c.l.b16 %v1019
        %v1152 = vunpack.c.l.b16 %v1020
        %v1153 = vunpack.c.l.b16 %v1021
        %v1154 = vunpack.c.l.b16 %v1022
        %v1155 = vunpack.c.l.b16 %v1023
        %v1156 = vunpack.c.l.b16 %v1024
        %v1157 = vunpack.c.l.b16 %v1025
        %v1158 = vunpack.c.l.b16 %v1026
        %v1159 = vunpack.c.l.b16 %v1027
        %v1160 = vunpack.c.l.b16 %v1028
        %v1161 = vunpack.c.l.b16 %v1029
        %v1162 = vunpack.c.l.b16 %v1030
        %v1163 = vunpack.c.l.b16 %v1031
        %v1164 = vunpack.c.l.b16 %v1032
        %v1165 = vunpack.c.l.b16 %v1033
        %v1166 = vunpack.c.l.b16 %v1034
        %v1167 = vunpack.c.l.b16 %v1035
        %v1168 = vunpack.c.l.b16 %v1036
        %v1169 = vunpack.c.l.b16 %v1037
        %v1170 = vunpack.c.l.b16 %v1038
        %v1171 = vunpack.c.l.b16 %v1039
        %v1172 = vunpack.c.l.b16 %v1040
        %v1173 = vunpack.c.l.b16 %v1041
        %v1174 = vunpack.c.l.b16 %v1042
        %v1175 = vunpack.c.l.b16 %v1043
        %v1176 = vunpack.c.l.b16 %v1044
        %v1177 = vunpack.c.l.b16 %v1045
        %v1178 = vunpack.c.l.b16 %v1046
        %v1179 = vunpack.c.l.b16 %v1047
        %v1180 = vunpack.c.l.b16 %v1048
        %v1181 = vunpack.c.l.b16 %v1049
        %v1182 = vunpack.c.l.b16 %v1050
        %v1183 = vunpack.c.l.b16 %v1051
        %v1184 = vunpack.c.l.b16 %v1052
        %v1185 = vunpack.c.l.b16 %v1053
        %v1186 = vunpack.c.l.b16 %v1054
        %v1187 = vunpack.c.l.b16 %v1055
        %v1188 = vunpack.c.l.b16 %v1056
        %v1189 = vunpack.c.l.b16 %v1057
        %v1190 = vunpack.c.l.b16 %v1058
        %v1191 = vunpack.c.l.b16 %v1059
        %v1192 = vunpack.c.l.b16 %v1060
        %v1193 = vunpack.c.l.b16 %v1061
        %v1194 = vunpack.c.l.b16 %v1062
        %v1195 = vunpack.c.l.b16 %v1063
        %v1196 = vunpack.c.l.b16 %v1064
        %v1197 = vunpack.c.l.b16 %v1065
        %v1198 = vunpack.c.l.b16 %v1066
        %v1199 = vunpack.c.l.b16 %v1067
        %v1200 = vunpack.c.l.b16 %v1068
        %v1201 = vunpack.c.l.b16 %v1069
        %v1202 = vunpack.c.l.b16 %v1070
        %v1203 = vpack.c.b16 %v1140, %v1139
        %v1204 = vpack.c.b16 %v1142, %v1141
        %v1205 = vpack.c.b16 %v1144, %v1143
        %v1206 = vpack.c.b16 %v1146, %v1145
        %v1207 = vpack.c.b16 %v1148, %v1147
        %v1208 = vpack.c.b16 %v1150, %v1149
        %v1209 = vpack.c.b16 %v1152, %v1151
        %v1210 = vpack.c.b16 %v1154, %v1153
        %v1211 = vpack.c.b16 %v1156, %v1155
        %v1212 = vpack.c.b16 %v1158, %v1157
        %v1213 = vpack.c.b16 %v1160, %v1159
        %v1214 = vpack.c.b16 %v1162, %v1161
        %v1215 = vpack.c.b16 %v1164, %v1163
        %v1216 = vpack.c.b16 %v1166, %v1165
        %v1217 = vpack.c.b16 %v1168, %v1167
        %v1218 = vpack.c.b16 %v1170, %v1169
        %v1219 = vpack.c.b16 %v1172, %v1171
        %v1220 = vpack.c.b16 %v1174, %v1173
        %v1221 = vpack.c.b16 %v1176, %v1175
        %v1222 = vpack.c.b16 %v1178, %v1177
        %v1223 = vpack.c.b16 %v1180, %v1179
        %v1224 = vpack.c.b16 %v1182, %v1181
        %v1225 = vpack.c.b16 %v1184, %v1183
        %v1226 = vpack.c.b16 %v1186, %v1185
        %v1227 = vpack.c.b16 %v1188, %v1187
        %v1228 = vpack.c.b16 %v1190, %v1189
        %v1229 = vpack.c.b16 %v1192, %v1191
        %v1230 = vpack.c.b16 %v1194, %v1193
        %v1231 = vpack.c.b16 %v1196, %v1195
        %v1232 = vpack.c.b16 %v1198, %v1197
        %v1233 = vpack.c.b16 %v1200, %v1199
        %v1234 = vpack.c.b16 %v1202, %v1201
        %v1243 = vunpack.c.l.b16 %v963
        %v1244 = vunpack.c.l.b16 %v964
        %v1245 = vunpack.c.l.b16 %v965
        %v1246 = vunpack.c.l.b16 %v966
        %v1247 = vunpack.c.l.b16 %v967
        %v1248 = vunpack.c.l.b16 %v968
        %v1249 = vunpack.c.l.b16 %v969
        %v1250 = vunpack.c.l.b16 %v970
        %v1251 = vpack.c.b16 %v1244, %v1243
        %v1252 = vpack.c.b16 %v1246, %v1245
        %v1253 = vpack.c.b16 %v1248, %v1247
        %v1254 = vpack.c.b16 %v1250, %v1249
        %vm1259 = vcmask 523264
        %v1261 = vsel %vm1259, %v1203, 0
        %v1264 = vsel %vm1259, %v1204, 0
        %v1267 = vsel %vm1259, %v1205, 0
        %v1270 = vsel %vm1259, %v1206, 0
        %v1273 = vsel %vm1259, %v1207, 0
        %v1276 = vsel %vm1259, %v1208, 0
        %v1279 = vsel %vm1259, %v1209, 0
        %v1282 = vsel %vm1259, %v1210, 0
        %v1285 = vsel %vm1259, %v1211, 0
        %v1288 = vsel %vm1259, %v1212, 0
        %v1291 = vsel %vm1259, %v1213, 0
        %v1294 = vsel %vm1259, %v1214, 0
        %v1297 = vsel %vm1259, %v1215, 0
        %v1300 = vsel %vm1259, %v1216, 0
        %v1303 = vsel %vm1259, %v1217, 0
        %v1306 = vsel %vm1259, %v1218, 0
        %v1309 = vsel %vm1259, %v1219, 0
        %v1312 = vsel %vm1259, %v1220, 0
        %v1315 = vsel %vm1259, %v1221, 0
        %v1318 = vsel %vm1259, %v1222, 0
        %v1321 = vsel %vm1259, %v1223, 0
        %v1324 = vsel %vm1259, %v1224, 0
        %v1327 = vsel %vm1259, %v1225, 0
        %v1330 = vsel %vm1259, %v1226, 0
        %v1333 = vsel %vm1259, %v1227, 0
        %v1336 = vsel %vm1259, %v1228, 0
        %v1339 = vsel %vm1259, %v1229, 0
        %v1342 = vsel %vm1259, %v1230, 0
        %v1345 = vsel %vm1259, %v1231, 0
        %v1348 = vsel %vm1259, %v1232, 0
        %v1351 = vsel %vm1259, %v1233, 0
        %v1354 = vsel %vm1259, %v1234, 0
        %1356 = vmatpush.bf16.msra.mxu0 0
        %1357 = vmatpush.bf16.msra.mxu0 0
        %1358 = vmatpush.bf16.msra.mxu0 0
        %1359 = vmatpush.bf16.msra.mxu0 0
        %1360 = vmatpush.bf16.msra.mxu0 %v1254
        %1361 = vmatpush.bf16.msra.mxu0 %v1253
        %1362 = vmatpush.bf16.msra.mxu0 %v1252
        %1363 = vmatpush.bf16.msra.mxu0 %v1251
        %1364 = vmatmul.bf16.gmra.mxu0 %v1261
        %v1365 = vpop.f32.mrf.mxu0
        %v1366 = vadd.f32 %v1073, %v1365
        %v1367 = vpop.f32.mrf.mxu0
        %v1368 = vadd.f32 %v1073, %v1367
        %1369 = vmatmul.bf16.gmra.mxu0 %v1264
        %v1370 = vpop.f32.mrf.mxu0
        %v1371 = vadd.f32 %v1073, %v1370
        %v1372 = vpop.f32.mrf.mxu0
        %v1373 = vadd.f32 %v1073, %v1372
        %1374 = vmatmul.bf16.gmra.mxu0 %v1267
        %v1375 = vpop.f32.mrf.mxu0
        %v1376 = vadd.f32 %v1073, %v1375
        %v1377 = vpop.f32.mrf.mxu0
        %v1378 = vadd.f32 %v1073, %v1377
        %1379 = vmatmul.bf16.gmra.mxu0 %v1270
        %v1380 = vpop.f32.mrf.mxu0
        %v1381 = vadd.f32 %v1073, %v1380
        %v1382 = vpop.f32.mrf.mxu0
        %v1383 = vadd.f32 %v1073, %v1382
        %1384 = vmatmul.bf16.gmra.mxu0 %v1273
        %v1385 = vpop.f32.mrf.mxu0
        %v1386 = vadd.f32 %v1073, %v1385
        %v1387 = vpop.f32.mrf.mxu0
        %v1388 = vadd.f32 %v1073, %v1387
        %1389 = vmatmul.bf16.gmra.mxu0 %v1276
        %v1390 = vpop.f32.mrf.mxu0
        %v1391 = vadd.f32 %v1073, %v1390
        %v1392 = vpop.f32.mrf.mxu0
        %v1393 = vadd.f32 %v1073, %v1392
        %1394 = vmatmul.bf16.gmra.mxu0 %v1279
        %v1395 = vpop.f32.mrf.mxu0
        %v1396 = vadd.f32 %v1073, %v1395
        %v1397 = vpop.f32.mrf.mxu0
        %v1398 = vadd.f32 %v1073, %v1397
        %1399 = vmatmul.bf16.gmra.mxu0 %v1282
        %v1400 = vpop.f32.mrf.mxu0
        %v1401 = vadd.f32 %v1073, %v1400
        %v1402 = vpop.f32.mrf.mxu0
        %v1403 = vadd.f32 %v1073, %v1402
        %1404 = vmatmul.bf16.gmra.mxu0 %v1285
        %v1405 = vpop.f32.mrf.mxu0
        %v1406 = vadd.f32 %v1073, %v1405
        %v1407 = vpop.f32.mrf.mxu0
        %v1408 = vadd.f32 %v1073, %v1407
        %1409 = vmatmul.bf16.gmra.mxu0 %v1288
        %v1410 = vpop.f32.mrf.mxu0
        %v1411 = vadd.f32 %v1073, %v1410
        %v1412 = vpop.f32.mrf.mxu0
        %v1413 = vadd.f32 %v1073, %v1412
        %1414 = vmatmul.bf16.gmra.mxu0 %v1291
        %v1415 = vpop.f32.mrf.mxu0
        %v1416 = vadd.f32 %v1073, %v1415
        %v1417 = vpop.f32.mrf.mxu0
        %v1418 = vadd.f32 %v1073, %v1417
        %1419 = vmatmul.bf16.gmra.mxu0 %v1294
        %v1420 = vpop.f32.mrf.mxu0
        %v1421 = vadd.f32 %v1073, %v1420
        %v1422 = vpop.f32.mrf.mxu0
        %v1423 = vadd.f32 %v1073, %v1422
        %1424 = vmatmul.bf16.gmra.mxu0 %v1297
        %v1425 = vpop.f32.mrf.mxu0
        %v1426 = vadd.f32 %v1073, %v1425
        %v1427 = vpop.f32.mrf.mxu0
        %v1428 = vadd.f32 %v1073, %v1427
        %1429 = vmatmul.bf16.gmra.mxu0 %v1300
        %v1430 = vpop.f32.mrf.mxu0
        %v1431 = vadd.f32 %v1073, %v1430
        %v1432 = vpop.f32.mrf.mxu0
        %v1433 = vadd.f32 %v1073, %v1432
        %1434 = vmatmul.bf16.gmra.mxu0 %v1303
        %v1435 = vpop.f32.mrf.mxu0
        %v1436 = vadd.f32 %v1073, %v1435
        %v1437 = vpop.f32.mrf.mxu0
        %v1438 = vadd.f32 %v1073, %v1437
        %1439 = vmatmul.bf16.gmra.mxu0 %v1306
        %v1440 = vpop.f32.mrf.mxu0
        %v1441 = vadd.f32 %v1073, %v1440
        %v1442 = vpop.f32.mrf.mxu0
        %v1443 = vadd.f32 %v1073, %v1442
        %1444 = vmatmul.bf16.gmra.mxu0 %v1309
        %v1445 = vpop.f32.mrf.mxu0
        %v1446 = vadd.f32 %v1073, %v1445
        %v1447 = vpop.f32.mrf.mxu0
        %v1448 = vadd.f32 %v1073, %v1447
        %1449 = vmatmul.bf16.gmra.mxu0 %v1312
        %v1450 = vpop.f32.mrf.mxu0
        %v1451 = vadd.f32 %v1073, %v1450
        %v1452 = vpop.f32.mrf.mxu0
        %v1453 = vadd.f32 %v1073, %v1452
        %1454 = vmatmul.bf16.gmra.mxu0 %v1315
        %v1455 = vpop.f32.mrf.mxu0
        %v1456 = vadd.f32 %v1073, %v1455
        %v1457 = vpop.f32.mrf.mxu0
        %v1458 = vadd.f32 %v1073, %v1457
        %1459 = vmatmul.bf16.gmra.mxu0 %v1318
        %v1460 = vpop.f32.mrf.mxu0
        %v1461 = vadd.f32 %v1073, %v1460
        %v1462 = vpop.f32.mrf.mxu0
        %v1463 = vadd.f32 %v1073, %v1462
        %1464 = vmatmul.bf16.gmra.mxu0 %v1321
        %v1465 = vpop.f32.mrf.mxu0
        %v1466 = vadd.f32 %v1073, %v1465
        %v1467 = vpop.f32.mrf.mxu0
        %v1468 = vadd.f32 %v1073, %v1467
        %1469 = vmatmul.bf16.gmra.mxu0 %v1324
        %v1470 = vpop.f32.mrf.mxu0
        %v1471 = vadd.f32 %v1073, %v1470
        %v1472 = vpop.f32.mrf.mxu0
        %v1473 = vadd.f32 %v1073, %v1472
        %1474 = vmatmul.bf16.gmra.mxu0 %v1327
        %v1475 = vpop.f32.mrf.mxu0
        %v1476 = vadd.f32 %v1073, %v1475
        %v1477 = vpop.f32.mrf.mxu0
        %v1478 = vadd.f32 %v1073, %v1477
        %1479 = vmatmul.bf16.gmra.mxu0 %v1330
        %v1480 = vpop.f32.mrf.mxu0
        %v1481 = vadd.f32 %v1073, %v1480
        %v1482 = vpop.f32.mrf.mxu0
        %v1483 = vadd.f32 %v1073, %v1482
        %1484 = vmatmul.bf16.gmra.mxu0 %v1333
        %v1485 = vpop.f32.mrf.mxu0
        %v1486 = vadd.f32 %v1073, %v1485
        %v1487 = vpop.f32.mrf.mxu0
        %v1488 = vadd.f32 %v1073, %v1487
        %1489 = vmatmul.bf16.gmra.mxu0 %v1336
        %v1490 = vpop.f32.mrf.mxu0
        %v1491 = vadd.f32 %v1073, %v1490
        %v1492 = vpop.f32.mrf.mxu0
        %v1493 = vadd.f32 %v1073, %v1492
        %1494 = vmatmul.bf16.gmra.mxu0 %v1339
        %v1495 = vpop.f32.mrf.mxu0
        %v1496 = vadd.f32 %v1073, %v1495
        %v1497 = vpop.f32.mrf.mxu0
        %v1498 = vadd.f32 %v1073, %v1497
        %1499 = vmatmul.bf16.gmra.mxu0 %v1342
        %v1500 = vpop.f32.mrf.mxu0
        %v1501 = vadd.f32 %v1073, %v1500
        %v1502 = vpop.f32.mrf.mxu0
        %v1503 = vadd.f32 %v1073, %v1502
        %1504 = vmatmul.bf16.gmra.mxu0 %v1345
        %v1505 = vpop.f32.mrf.mxu0
        %v1506 = vadd.f32 %v1073, %v1505
        %v1507 = vpop.f32.mrf.mxu0
        %v1508 = vadd.f32 %v1073, %v1507
        %1509 = vmatmul.bf16.gmra.mxu0 %v1348
        %v1510 = vpop.f32.mrf.mxu0
        %v1511 = vadd.f32 %v1073, %v1510
        %v1512 = vpop.f32.mrf.mxu0
        %v1513 = vadd.f32 %v1073, %v1512
        %1514 = vmatmul.bf16.gmra.mxu0 %v1351
        %v1515 = vpop.f32.mrf.mxu0
        %v1516 = vadd.f32 %v1073, %v1515
        %v1517 = vpop.f32.mrf.mxu0
        %v1518 = vadd.f32 %v1073, %v1517
        %1519 = vmatmul.bf16.gmra.mxu0 %v1354
        %v1520 = vpop.f32.mrf.mxu0
        %v1521 = vadd.f32 %v1073, %v1520
        %v1522 = vpop.f32.mrf.mxu0
        %v1523 = vadd.f32 %v1073, %v1522
        %1524 = vdwg.mxu0
        %v1525 = vadd.f32 %v1366, 0.0
        %v1526 = vadd.f32 %v1368, 0.0
        %v1527 = vadd.f32 %v1371, 0.0
        %v1528 = vadd.f32 %v1373, 0.0
        %v1529 = vadd.f32 %v1376, 0.0
        %v1530 = vadd.f32 %v1378, 0.0
        %v1531 = vadd.f32 %v1381, 0.0
        %v1532 = vadd.f32 %v1383, 0.0
        %vm1533 = vcmp.ge.f32.partialorder %v1525, 0.5
        %vm1534 = vcmp.ge.f32.partialorder %v1526, 0.5
        %vm1535 = vcmp.ge.f32.partialorder %v1527, 0.5
        %vm1536 = vcmp.ge.f32.partialorder %v1528, 0.5
        %vm1537 = vcmp.ge.f32.partialorder %v1529, 0.5
        %vm1538 = vcmp.ge.f32.partialorder %v1530, 0.5
        %vm1539 = vcmp.ge.f32.partialorder %v1531, 0.5
        %vm1540 = vcmp.ge.f32.partialorder %v1532, 0.5
        %v1541 = vsel %vm1533, 1, 0
        %v1542 = vsel %vm1534, 1, 0
        %v1543 = vsel %vm1535, 1, 0
        %v1544 = vsel %vm1536, 1, 0
        %v1545 = vsel %vm1537, 1, 0
        %v1546 = vsel %vm1538, 1, 0
        %v1547 = vsel %vm1539, 1, 0
        %v1548 = vsel %vm1540, 1, 0
        %v1549 = vcvt.s32.f32 %v1541
        %v1550 = vcvt.s32.f32 %v1542
        %v1551 = vcvt.s32.f32 %v1543
        %v1552 = vcvt.s32.f32 %v1544
        %v1553 = vcvt.s32.f32 %v1545
        %v1554 = vcvt.s32.f32 %v1546
        %v1555 = vcvt.s32.f32 %v1547
        %v1556 = vcvt.s32.f32 %v1548
        %v1557 = vmul.f32 %v1549, 0.5
        %v1558 = vmul.f32 %v1550, 0.5
        %v1559 = vmul.f32 %v1551, 0.5
        %v1560 = vmul.f32 %v1552, 0.5
        %v1561 = vmul.f32 %v1553, 0.5
        %v1562 = vmul.f32 %v1554, 0.5
        %v1563 = vmul.f32 %v1555, 0.5
        %v1564 = vmul.f32 %v1556, 0.5
        %v1565 = vsub.f32 %v1525, %v1557
        %v1566 = vsub.f32 %v1526, %v1558
        %v1567 = vsub.f32 %v1527, %v1559
        %v1568 = vsub.f32 %v1528, %v1560
        %v1569 = vsub.f32 %v1529, %v1561
        %v1570 = vsub.f32 %v1530, %v1562
        %v1571 = vsub.f32 %v1531, %v1563
        %v1572 = vsub.f32 %v1532, %v1564
        %v1573 = vpack.c.bf16 %v1549, %v1549
        %v1574 = vpack.c.bf16 %v1550, %v1550
        %v1575 = vpack.c.bf16 %v1551, %v1551
        %v1576 = vpack.c.bf16 %v1552, %v1552
        %v1577 = vpack.c.bf16 %v1553, %v1553
        %v1578 = vpack.c.bf16 %v1554, %v1554
        %v1579 = vpack.c.bf16 %v1555, %v1555
        %v1580 = vpack.c.bf16 %v1556, %v1556
        %v1589 = vrot.slane %v1573, 3
        %v1590 = vrot.slane %v1574, 3
        %v1591 = vrot.slane %v1575, 3
        %v1592 = vrot.slane %v1576, 3
        %v1593 = vrot.slane %v1577, 3
        %v1594 = vrot.slane %v1578, 3
        %v1595 = vrot.slane %v1579, 3
        %v1596 = vrot.slane %v1580, 3
        %vm1597 = vcmask 1040384
        %v1600 = vsel %vm1597, %v1573, %v1589
        %vm1602 = vcmask 1041409
        %v1603 = vsel %vm1602, %v1573, %v1589
        %v1605 = vrot.slane %v1603, 1
        %vm1606 = vcmask 1042434
        %v1607 = vsel %vm1606, %v1573, %v1589
        %v1609 = vrot.slane %v1607, 2
        %vm1610 = vcmask 1043459
        %v1611 = vsel %vm1610, %v1573, %v1589
        %v1613 = vrot.slane %v1611, 3
        %v1616 = vsel %vm1597, %v1574, %v1590
        %v1618 = vsel %vm1602, %v1574, %v1590
        %v1620 = vrot.slane %v1618, 1
        %v1621 = vsel %vm1606, %v1574, %v1590
        %v1623 = vrot.slane %v1621, 2
        %v1624 = vsel %vm1610, %v1574, %v1590
        %v1626 = vrot.slane %v1624, 3
        %v1629 = vsel %vm1597, %v1575, %v1591
        %v1631 = vsel %vm1602, %v1575, %v1591
        %v1633 = vrot.slane %v1631, 1
        %v1634 = vsel %vm1606, %v1575, %v1591
        %v1636 = vrot.slane %v1634, 2
        %v1637 = vsel %vm1610, %v1575, %v1591
        %v1639 = vrot.slane %v1637, 3
        %v1642 = vsel %vm1597, %v1576, %v1592
        %v1644 = vsel %vm1602, %v1576, %v1592
        %v1646 = vrot.slane %v1644, 1
        %v1647 = vsel %vm1606, %v1576, %v1592
        %v1649 = vrot.slane %v1647, 2
        %v1650 = vsel %vm1610, %v1576, %v1592
        %v1652 = vrot.slane %v1650, 3
        %v1655 = vsel %vm1597, %v1577, %v1593
        %v1657 = vsel %vm1602, %v1577, %v1593
        %v1659 = vrot.slane %v1657, 1
        %v1660 = vsel %vm1606, %v1577, %v1593
        %v1662 = vrot.slane %v1660, 2
        %v1663 = vsel %vm1610, %v1577, %v1593
        %v1665 = vrot.slane %v1663, 3
        %v1668 = vsel %vm1597, %v1578, %v1594
        %v1670 = vsel %vm1602, %v1578, %v1594
        %v1672 = vrot.slane %v1670, 1
        %v1673 = vsel %vm1606, %v1578, %v1594
        %v1675 = vrot.slane %v1673, 2
        %v1676 = vsel %vm1610, %v1578, %v1594
        %v1678 = vrot.slane %v1676, 3
        %v1681 = vsel %vm1597, %v1579, %v1595
        %v1683 = vsel %vm1602, %v1579, %v1595
        %v1685 = vrot.slane %v1683, 1
        %v1686 = vsel %vm1606, %v1579, %v1595
        %v1688 = vrot.slane %v1686, 2
        %v1689 = vsel %vm1610, %v1579, %v1595
        %v1691 = vrot.slane %v1689, 3
        %v1694 = vsel %vm1597, %v1580, %v1596
        %v1696 = vsel %vm1602, %v1580, %v1596
        %v1698 = vrot.slane %v1696, 1
        %v1699 = vsel %vm1606, %v1580, %v1596
        %v1701 = vrot.slane %v1699, 2
        %v1702 = vsel %vm1610, %v1580, %v1596
        %v1704 = vrot.slane %v1702, 3
        %v1705 = vunpack.i.l.s16 %v1600
        %v1706 = vunpack.i.h.s16 %v1600
        %v1707 = vunpack.i.l.s16 %v1605
        %v1708 = vunpack.i.h.s16 %v1605
        %v1709 = vunpack.i.l.s16 %v1609
        %v1710 = vunpack.i.h.s16 %v1609
        %v1711 = vunpack.i.l.s16 %v1613
        %v1712 = vunpack.i.h.s16 %v1613
        %v1713 = vunpack.i.l.s16 %v1616
        %v1714 = vunpack.i.h.s16 %v1616
        %v1715 = vunpack.i.l.s16 %v1620
        %v1716 = vunpack.i.h.s16 %v1620
        %v1717 = vunpack.i.l.s16 %v1623
        %v1718 = vunpack.i.h.s16 %v1623
        %v1719 = vunpack.i.l.s16 %v1626
        %v1720 = vunpack.i.h.s16 %v1626
        %v1721 = vunpack.i.l.s16 %v1629
        %v1722 = vunpack.i.h.s16 %v1629
        %v1723 = vunpack.i.l.s16 %v1633
        %v1724 = vunpack.i.h.s16 %v1633
        %v1725 = vunpack.i.l.s16 %v1636
        %v1726 = vunpack.i.h.s16 %v1636
        %v1727 = vunpack.i.l.s16 %v1639
        %v1728 = vunpack.i.h.s16 %v1639
        %v1729 = vunpack.i.l.s16 %v1642
        %v1730 = vunpack.i.h.s16 %v1642
        %v1731 = vunpack.i.l.s16 %v1646
        %v1732 = vunpack.i.h.s16 %v1646
        %v1733 = vunpack.i.l.s16 %v1649
        %v1734 = vunpack.i.h.s16 %v1649
        %v1735 = vunpack.i.l.s16 %v1652
        %v1736 = vunpack.i.h.s16 %v1652
        %v1737 = vunpack.i.l.s16 %v1655
        %v1738 = vunpack.i.h.s16 %v1655
        %v1739 = vunpack.i.l.s16 %v1659
        %v1740 = vunpack.i.h.s16 %v1659
        %v1741 = vunpack.i.l.s16 %v1662
        %v1742 = vunpack.i.h.s16 %v1662
        %v1743 = vunpack.i.l.s16 %v1665
        %v1744 = vunpack.i.h.s16 %v1665
        %v1745 = vunpack.i.l.s16 %v1668
        %v1746 = vunpack.i.h.s16 %v1668
        %v1747 = vunpack.i.l.s16 %v1672
        %v1748 = vunpack.i.h.s16 %v1672
        %v1749 = vunpack.i.l.s16 %v1675
        %v1750 = vunpack.i.h.s16 %v1675
        %v1751 = vunpack.i.l.s16 %v1678
        %v1752 = vunpack.i.h.s16 %v1678
        %v1753 = vunpack.i.l.s16 %v1681
        %v1754 = vunpack.i.h.s16 %v1681
        %v1755 = vunpack.i.l.s16 %v1685
        %v1756 = vunpack.i.h.s16 %v1685
        %v1757 = vunpack.i.l.s16 %v1688
        %v1758 = vunpack.i.h.s16 %v1688
        %v1759 = vunpack.i.l.s16 %v1691
        %v1760 = vunpack.i.h.s16 %v1691
        %v1761 = vunpack.i.l.s16 %v1694
        %v1762 = vunpack.i.h.s16 %v1694
        %v1763 = vunpack.i.l.s16 %v1698
        %v1764 = vunpack.i.h.s16 %v1698
        %v1765 = vunpack.i.l.s16 %v1701
        %v1766 = vunpack.i.h.s16 %v1701
        %v1767 = vunpack.i.l.s16 %v1704
        %v1768 = vunpack.i.h.s16 %v1704
        %v1769 = vpack.i.b16 %v1705, %v1705
        %v1770 = vpack.i.b16 %v1706, %v1706
        %v1771 = vpack.i.b16 %v1707, %v1707
        %v1772 = vpack.i.b16 %v1708, %v1708
        %v1773 = vpack.i.b16 %v1709, %v1709
        %v1774 = vpack.i.b16 %v1710, %v1710
        %v1775 = vpack.i.b16 %v1711, %v1711
        %v1776 = vpack.i.b16 %v1712, %v1712
        %v1777 = vpack.i.b16 %v1713, %v1713
        %v1778 = vpack.i.b16 %v1714, %v1714
        %v1779 = vpack.i.b16 %v1715, %v1715
        %v1780 = vpack.i.b16 %v1716, %v1716
        %v1781 = vpack.i.b16 %v1717, %v1717
        %v1782 = vpack.i.b16 %v1718, %v1718
        %v1783 = vpack.i.b16 %v1719, %v1719
        %v1784 = vpack.i.b16 %v1720, %v1720
        %v1785 = vpack.i.b16 %v1721, %v1721
        %v1786 = vpack.i.b16 %v1722, %v1722
        %v1787 = vpack.i.b16 %v1723, %v1723
        %v1788 = vpack.i.b16 %v1724, %v1724
        %v1789 = vpack.i.b16 %v1725, %v1725
        %v1790 = vpack.i.b16 %v1726, %v1726
        %v1791 = vpack.i.b16 %v1727, %v1727
        %v1792 = vpack.i.b16 %v1728, %v1728
        %v1793 = vpack.i.b16 %v1729, %v1729
        %v1794 = vpack.i.b16 %v1730, %v1730
        %v1795 = vpack.i.b16 %v1731, %v1731
        %v1796 = vpack.i.b16 %v1732, %v1732
        %v1797 = vpack.i.b16 %v1733, %v1733
        %v1798 = vpack.i.b16 %v1734, %v1734
        %v1799 = vpack.i.b16 %v1735, %v1735
        %v1800 = vpack.i.b16 %v1736, %v1736
        %v1801 = vpack.i.b16 %v1737, %v1737
        %v1802 = vpack.i.b16 %v1738, %v1738
        %v1803 = vpack.i.b16 %v1739, %v1739
        %v1804 = vpack.i.b16 %v1740, %v1740
        %v1805 = vpack.i.b16 %v1741, %v1741
        %v1806 = vpack.i.b16 %v1742, %v1742
        %v1807 = vpack.i.b16 %v1743, %v1743
        %v1808 = vpack.i.b16 %v1744, %v1744
        %v1809 = vpack.i.b16 %v1745, %v1745
        %v1810 = vpack.i.b16 %v1746, %v1746
        %v1811 = vpack.i.b16 %v1747, %v1747
        %v1812 = vpack.i.b16 %v1748, %v1748
        %v1813 = vpack.i.b16 %v1749, %v1749
        %v1814 = vpack.i.b16 %v1750, %v1750
        %v1815 = vpack.i.b16 %v1751, %v1751
        %v1816 = vpack.i.b16 %v1752, %v1752
        %v1817 = vpack.i.b16 %v1753, %v1753
        %v1818 = vpack.i.b16 %v1754, %v1754
        %v1819 = vpack.i.b16 %v1755, %v1755
        %v1820 = vpack.i.b16 %v1756, %v1756
        %v1821 = vpack.i.b16 %v1757, %v1757
        %v1822 = vpack.i.b16 %v1758, %v1758
        %v1823 = vpack.i.b16 %v1759, %v1759
        %v1824 = vpack.i.b16 %v1760, %v1760
        %v1825 = vpack.i.b16 %v1761, %v1761
        %v1826 = vpack.i.b16 %v1762, %v1762
        %v1827 = vpack.i.b16 %v1763, %v1763
        %v1828 = vpack.i.b16 %v1764, %v1764
        %v1829 = vpack.i.b16 %v1765, %v1765
        %v1830 = vpack.i.b16 %v1766, %v1766
        %v1831 = vpack.i.b16 %v1767, %v1767
        %v1832 = vpack.i.b16 %v1768, %v1768
        %v1834 = vunpack.c.l.s4 286326784
        %v1835 = vunpack.c.0.s8 %v1834
        %v1836 = vperm.slane %v1769, %v1835
        %v1838 = vunpack.c.l.s4 286326784
        %v1839 = vunpack.c.0.s8 %v1838
        %v1840 = vperm.slane %v1770, %v1839
        %v1842 = vunpack.c.l.s4 286326784
        %v1843 = vunpack.c.0.s8 %v1842
        %v1844 = vperm.slane %v1771, %v1843
        %v1846 = vunpack.c.l.s4 286326784
        %v1847 = vunpack.c.0.s8 %v1846
        %v1848 = vperm.slane %v1772, %v1847
        %v1850 = vunpack.c.l.s4 286326784
        %v1851 = vunpack.c.0.s8 %v1850
        %v1852 = vperm.slane %v1773, %v1851
        %v1854 = vunpack.c.l.s4 286326784
        %v1855 = vunpack.c.0.s8 %v1854
        %v1856 = vperm.slane %v1774, %v1855
        %v1858 = vunpack.c.l.s4 286326784
        %v1859 = vunpack.c.0.s8 %v1858
        %v1860 = vperm.slane %v1775, %v1859
        %v1862 = vunpack.c.l.s4 286326784
        %v1863 = vunpack.c.0.s8 %v1862
        %v1864 = vperm.slane %v1776, %v1863
        %v1866 = vunpack.c.l.s4 286326784
        %v1867 = vunpack.c.0.s8 %v1866
        %v1868 = vperm.slane %v1777, %v1867
        %v1870 = vunpack.c.l.s4 286326784
        %v1871 = vunpack.c.0.s8 %v1870
        %v1872 = vperm.slane %v1778, %v1871
        %v1874 = vunpack.c.l.s4 286326784
        %v1875 = vunpack.c.0.s8 %v1874
        %v1876 = vperm.slane %v1779, %v1875
        %v1878 = vunpack.c.l.s4 286326784
        %v1879 = vunpack.c.0.s8 %v1878
        %v1880 = vperm.slane %v1780, %v1879
        %v1882 = vunpack.c.l.s4 286326784
        %v1883 = vunpack.c.0.s8 %v1882
        %v1884 = vperm.slane %v1781, %v1883
        %v1886 = vunpack.c.l.s4 286326784
        %v1887 = vunpack.c.0.s8 %v1886
        %v1888 = vperm.slane %v1782, %v1887
        %v1890 = vunpack.c.l.s4 286326784
        %v1891 = vunpack.c.0.s8 %v1890
        %v1892 = vperm.slane %v1783, %v1891
        %v1894 = vunpack.c.l.s4 286326784
        %v1895 = vunpack.c.0.s8 %v1894
        %v1896 = vperm.slane %v1784, %v1895
        %v1898 = vunpack.c.l.s4 286326784
        %v1899 = vunpack.c.0.s8 %v1898
        %v1900 = vperm.slane %v1785, %v1899
        %v1902 = vunpack.c.l.s4 286326784
        %v1903 = vunpack.c.0.s8 %v1902
        %v1904 = vperm.slane %v1786, %v1903
        %v1906 = vunpack.c.l.s4 286326784
        %v1907 = vunpack.c.0.s8 %v1906
        %v1908 = vperm.slane %v1787, %v1907
        %v1910 = vunpack.c.l.s4 286326784
        %v1911 = vunpack.c.0.s8 %v1910
        %v1912 = vperm.slane %v1788, %v1911
        %v1914 = vunpack.c.l.s4 286326784
        %v1915 = vunpack.c.0.s8 %v1914
        %v1916 = vperm.slane %v1789, %v1915
        %v1918 = vunpack.c.l.s4 286326784
        %v1919 = vunpack.c.0.s8 %v1918
        %v1920 = vperm.slane %v1790, %v1919
        %v1922 = vunpack.c.l.s4 286326784
        %v1923 = vunpack.c.0.s8 %v1922
        %v1924 = vperm.slane %v1791, %v1923
        %v1926 = vunpack.c.l.s4 286326784
        %v1927 = vunpack.c.0.s8 %v1926
        %v1928 = vperm.slane %v1792, %v1927
        %v1930 = vunpack.c.l.s4 286326784
        %v1931 = vunpack.c.0.s8 %v1930
        %v1932 = vperm.slane %v1793, %v1931
        %v1934 = vunpack.c.l.s4 286326784
        %v1935 = vunpack.c.0.s8 %v1934
        %v1936 = vperm.slane %v1794, %v1935
        %v1938 = vunpack.c.l.s4 286326784
        %v1939 = vunpack.c.0.s8 %v1938
        %v1940 = vperm.slane %v1795, %v1939
        %v1942 = vunpack.c.l.s4 286326784
        %v1943 = vunpack.c.0.s8 %v1942
        %v1944 = vperm.slane %v1796, %v1943
        %v1946 = vunpack.c.l.s4 286326784
        %v1947 = vunpack.c.0.s8 %v1946
        %v1948 = vperm.slane %v1797, %v1947
        %v1950 = vunpack.c.l.s4 286326784
        %v1951 = vunpack.c.0.s8 %v1950
        %v1952 = vperm.slane %v1798, %v1951
        %v1954 = vunpack.c.l.s4 286326784
        %v1955 = vunpack.c.0.s8 %v1954
        %v1956 = vperm.slane %v1799, %v1955
        %v1958 = vunpack.c.l.s4 286326784
        %v1959 = vunpack.c.0.s8 %v1958
        %v1960 = vperm.slane %v1800, %v1959
        %v1962 = vunpack.c.l.s4 286326784
        %v1963 = vunpack.c.0.s8 %v1962
        %v1964 = vperm.slane %v1801, %v1963
        %v1966 = vunpack.c.l.s4 286326784
        %v1967 = vunpack.c.0.s8 %v1966
        %v1968 = vperm.slane %v1802, %v1967
        %v1970 = vunpack.c.l.s4 286326784
        %v1971 = vunpack.c.0.s8 %v1970
        %v1972 = vperm.slane %v1803, %v1971
        %v1974 = vunpack.c.l.s4 286326784
        %v1975 = vunpack.c.0.s8 %v1974
        %v1976 = vperm.slane %v1804, %v1975
        %v1978 = vunpack.c.l.s4 286326784
        %v1979 = vunpack.c.0.s8 %v1978
        %v1980 = vperm.slane %v1805, %v1979
        %v1982 = vunpack.c.l.s4 286326784
        %v1983 = vunpack.c.0.s8 %v1982
        %v1984 = vperm.slane %v1806, %v1983
        %v1986 = vunpack.c.l.s4 286326784
        %v1987 = vunpack.c.0.s8 %v1986
        %v1988 = vperm.slane %v1807, %v1987
        %v1990 = vunpack.c.l.s4 286326784
        %v1991 = vunpack.c.0.s8 %v1990
        %v1992 = vperm.slane %v1808, %v1991
        %v1994 = vunpack.c.l.s4 286326784
        %v1995 = vunpack.c.0.s8 %v1994
        %v1996 = vperm.slane %v1809, %v1995
        %v1998 = vunpack.c.l.s4 286326784
        %v1999 = vunpack.c.0.s8 %v1998
        %v2000 = vperm.slane %v1810, %v1999
        %v2002 = vunpack.c.l.s4 286326784
        %v2003 = vunpack.c.0.s8 %v2002
        %v2004 = vperm.slane %v1811, %v2003
        %v2006 = vunpack.c.l.s4 286326784
        %v2007 = vunpack.c.0.s8 %v2006
        %v2008 = vperm.slane %v1812, %v2007
        %v2010 = vunpack.c.l.s4 286326784
        %v2011 = vunpack.c.0.s8 %v2010
        %v2012 = vperm.slane %v1813, %v2011
        %v2014 = vunpack.c.l.s4 286326784
        %v2015 = vunpack.c.0.s8 %v2014
        %v2016 = vperm.slane %v1814, %v2015
        %v2018 = vunpack.c.l.s4 286326784
        %v2019 = vunpack.c.0.s8 %v2018
        %v2020 = vperm.slane %v1815, %v2019
        %v2022 = vunpack.c.l.s4 286326784
        %v2023 = vunpack.c.0.s8 %v2022
        %v2024 = vperm.slane %v1816, %v2023
        %v2026 = vunpack.c.l.s4 286326784
        %v2027 = vunpack.c.0.s8 %v2026
        %v2028 = vperm.slane %v1817, %v2027
        %v2030 = vunpack.c.l.s4 286326784
        %v2031 = vunpack.c.0.s8 %v2030
        %v2032 = vperm.slane %v1818, %v2031
        %v2034 = vunpack.c.l.s4 286326784
        %v2035 = vunpack.c.0.s8 %v2034
        %v2036 = vperm.slane %v1819, %v2035
        %v2038 = vunpack.c.l.s4 286326784
        %v2039 = vunpack.c.0.s8 %v2038
        %v2040 = vperm.slane %v1820, %v2039
        %v2042 = vunpack.c.l.s4 286326784
        %v2043 = vunpack.c.0.s8 %v2042
        %v2044 = vperm.slane %v1821, %v2043
        %v2046 = vunpack.c.l.s4 286326784
        %v2047 = vunpack.c.0.s8 %v2046
        %v2048 = vperm.slane %v1822, %v2047
        %v2050 = vunpack.c.l.s4 286326784
        %v2051 = vunpack.c.0.s8 %v2050
        %v2052 = vperm.slane %v1823, %v2051
        %v2054 = vunpack.c.l.s4 286326784
        %v2055 = vunpack.c.0.s8 %v2054
        %v2056 = vperm.slane %v1824, %v2055
        %v2058 = vunpack.c.l.s4 286326784
        %v2059 = vunpack.c.0.s8 %v2058
        %v2060 = vperm.slane %v1825, %v2059
        %v2062 = vunpack.c.l.s4 286326784
        %v2063 = vunpack.c.0.s8 %v2062
        %v2064 = vperm.slane %v1826, %v2063
        %v2066 = vunpack.c.l.s4 286326784
        %v2067 = vunpack.c.0.s8 %v2066
        %v2068 = vperm.slane %v1827, %v2067
        %v2070 = vunpack.c.l.s4 286326784
        %v2071 = vunpack.c.0.s8 %v2070
        %v2072 = vperm.slane %v1828, %v2071
        %v2074 = vunpack.c.l.s4 286326784
        %v2075 = vunpack.c.0.s8 %v2074
        %v2076 = vperm.slane %v1829, %v2075
        %v2078 = vunpack.c.l.s4 286326784
        %v2079 = vunpack.c.0.s8 %v2078
        %v2080 = vperm.slane %v1830, %v2079
        %v2082 = vunpack.c.l.s4 286326784
        %v2083 = vunpack.c.0.s8 %v2082
        %v2084 = vperm.slane %v1831, %v2083
        %v2086 = vunpack.c.l.s4 286326784
        %v2087 = vunpack.c.0.s8 %v2086
        %v2088 = vperm.slane %v1832, %v2087
        %vm2153 = vcmask 1040384
        %vm2154 = vsmask.f32 256
        %vm2155 = vmand %vm2153, %vm2154
        %v2156 = vld [vmem:[%s960] sm:$0x1]
        %v2157 = vsel %vm2155, %v1836, %v2156
        %2158 = vst [vmem:[%s960] sm:$0x1] %v2157
        %v2159 = vld [vmem:[%s960 + $0x4] sm:$0x1]
        %v2160 = vsel %vm2155, %v1840, %v2159
        %2161 = vst [vmem:[%s960 + $0x4] sm:$0x1] %v2160
        %v2162 = vld [vmem:[%s960 + $0x8] sm:$0x1]
        %v2163 = vsel %vm2155, %v1844, %v2162
        %2164 = vst [vmem:[%s960 + $0x8] sm:$0x1] %v2163
        %v2165 = vld [vmem:[%s960 + $0xc] sm:$0x1]
        %v2166 = vsel %vm2155, %v1848, %v2165
        %2167 = vst [vmem:[%s960 + $0xc] sm:$0x1] %v2166
        %v2168 = vld [vmem:[%s960 + $0x10] sm:$0x1]
        %v2169 = vsel %vm2155, %v1852, %v2168
        %2170 = vst [vmem:[%s960 + $0x10] sm:$0x1] %v2169
        %v2171 = vld [vmem:[%s960 + $0x14] sm:$0x1]
        %v2172 = vsel %vm2155, %v1856, %v2171
        %2173 = vst [vmem:[%s960 + $0x14] sm:$0x1] %v2172
        %v2174 = vld [vmem:[%s960 + $0x18] sm:$0x1]
        %v2175 = vsel %vm2155, %v1860, %v2174
        %2176 = vst [vmem:[%s960 + $0x18] sm:$0x1] %v2175
        %v2177 = vld [vmem:[%s960 + $0x1c] sm:$0x1]
        %v2178 = vsel %vm2155, %v1864, %v2177
        %2179 = vst [vmem:[%s960 + $0x1c] sm:$0x1] %v2178
        %v2180 = vld [vmem:[%s960 + $0x20] sm:$0x1]
        %v2181 = vsel %vm2155, %v1868, %v2180
        %2182 = vst [vmem:[%s960 + $0x20] sm:$0x1] %v2181
        %v2183 = vld [vmem:[%s960 + $0x24] sm:$0x1]
        %v2184 = vsel %vm2155, %v1872, %v2183
        %2185 = vst [vmem:[%s960 + $0x24] sm:$0x1] %v2184
        %v2186 = vld [vmem:[%s960 + $0x28] sm:$0x1]
        %v2187 = vsel %vm2155, %v1876, %v2186
        %2188 = vst [vmem:[%s960 + $0x28] sm:$0x1] %v2187
        %v2189 = vld [vmem:[%s960 + $0x2c] sm:$0x1]
        %v2190 = vsel %vm2155, %v1880, %v2189
        %2191 = vst [vmem:[%s960 + $0x2c] sm:$0x1] %v2190
        %v2192 = vld [vmem:[%s960 + $0x30] sm:$0x1]
        %v2193 = vsel %vm2155, %v1884, %v2192
        %2194 = vst [vmem:[%s960 + $0x30] sm:$0x1] %v2193
        %v2195 = vld [vmem:[%s960 + $0x34] sm:$0x1]
        %v2196 = vsel %vm2155, %v1888, %v2195
        %2197 = vst [vmem:[%s960 + $0x34] sm:$0x1] %v2196
        %v2198 = vld [vmem:[%s960 + $0x38] sm:$0x1]
        %v2199 = vsel %vm2155, %v1892, %v2198
        %2200 = vst [vmem:[%s960 + $0x38] sm:$0x1] %v2199
        %v2201 = vld [vmem:[%s960 + $0x3c] sm:$0x1]
        %v2202 = vsel %vm2155, %v1896, %v2201
        %2203 = vst [vmem:[%s960 + $0x3c] sm:$0x1] %v2202
        %v2204 = vld [vmem:[%s960 + $0x40] sm:$0x1]
        %v2205 = vsel %vm2155, %v1900, %v2204
        %2206 = vst [vmem:[%s960 + $0x40] sm:$0x1] %v2205
        %v2207 = vld [vmem:[%s960 + $0x44] sm:$0x1]
        %v2208 = vsel %vm2155, %v1904, %v2207
        %2209 = vst [vmem:[%s960 + $0x44] sm:$0x1] %v2208
        %v2210 = vld [vmem:[%s960 + $0x48] sm:$0x1]
        %v2211 = vsel %vm2155, %v1908, %v2210
        %2212 = vst [vmem:[%s960 + $0x48] sm:$0x1] %v2211
        %v2213 = vld [vmem:[%s960 + $0x4c] sm:$0x1]
        %v2214 = vsel %vm2155, %v1912, %v2213
        %2215 = vst [vmem:[%s960 + $0x4c] sm:$0x1] %v2214
        %v2216 = vld [vmem:[%s960 + $0x50] sm:$0x1]
        %v2217 = vsel %vm2155, %v1916, %v2216
        %2218 = vst [vmem:[%s960 + $0x50] sm:$0x1] %v2217
        %v2219 = vld [vmem:[%s960 + $0x54] sm:$0x1]
        %v2220 = vsel %vm2155, %v1920, %v2219
        %2221 = vst [vmem:[%s960 + $0x54] sm:$0x1] %v2220
        %v2222 = vld [vmem:[%s960 + $0x58] sm:$0x1]
        %v2223 = vsel %vm2155, %v1924, %v2222
        %2224 = vst [vmem:[%s960 + $0x58] sm:$0x1] %v2223
        %v2225 = vld [vmem:[%s960 + $0x5c] sm:$0x1]
        %v2226 = vsel %vm2155, %v1928, %v2225
        %2227 = vst [vmem:[%s960 + $0x5c] sm:$0x1] %v2226
        %v2228 = vld [vmem:[%s960 + $0x60] sm:$0x1]
        %v2229 = vsel %vm2155, %v1932, %v2228
        %2230 = vst [vmem:[%s960 + $0x60] sm:$0x1] %v2229
        %v2231 = vld [vmem:[%s960 + $0x64] sm:$0x1]
        %v2232 = vsel %vm2155, %v1936, %v2231
        %2233 = vst [vmem:[%s960 + $0x64] sm:$0x1] %v2232
        %v2234 = vld [vmem:[%s960 + $0x68] sm:$0x1]
        %v2235 = vsel %vm2155, %v1940, %v2234
        %2236 = vst [vmem:[%s960 + $0x68] sm:$0x1] %v2235
        %v2237 = vld [vmem:[%s960 + $0x6c] sm:$0x1]
        %v2238 = vsel %vm2155, %v1944, %v2237
        %2239 = vst [vmem:[%s960 + $0x6c] sm:$0x1] %v2238
        %v2240 = vld [vmem:[%s960 + $0x70] sm:$0x1]
        %v2241 = vsel %vm2155, %v1948, %v2240
        %2242 = vst [vmem:[%s960 + $0x70] sm:$0x1] %v2241
        %v2243 = vld [vmem:[%s960 + $0x74] sm:$0x1]
        %v2244 = vsel %vm2155, %v1952, %v2243
        %2245 = vst [vmem:[%s960 + $0x74] sm:$0x1] %v2244
        %v2246 = vld [vmem:[%s960 + $0x78] sm:$0x1]
        %v2247 = vsel %vm2155, %v1956, %v2246
        %2248 = vst [vmem:[%s960 + $0x78] sm:$0x1] %v2247
        %v2249 = vld [vmem:[%s960 + $0x7c] sm:$0x1]
        %v2250 = vsel %vm2155, %v1960, %v2249
        %2251 = vst [vmem:[%s960 + $0x7c] sm:$0x1] %v2250
        %v2252 = vld [vmem:[%s960 + $0x80] sm:$0x1]
        %v2253 = vsel %vm2155, %v1964, %v2252
        %2254 = vst [vmem:[%s960 + $0x80] sm:$0x1] %v2253
        %v2255 = vld [vmem:[%s960 + $0x84] sm:$0x1]
        %v2256 = vsel %vm2155, %v1968, %v2255
        %2257 = vst [vmem:[%s960 + $0x84] sm:$0x1] %v2256
        %v2258 = vld [vmem:[%s960 + $0x88] sm:$0x1]
        %v2259 = vsel %vm2155, %v1972, %v2258
        %2260 = vst [vmem:[%s960 + $0x88] sm:$0x1] %v2259
        %v2261 = vld [vmem:[%s960 + $0x8c] sm:$0x1]
        %v2262 = vsel %vm2155, %v1976, %v2261
        %2263 = vst [vmem:[%s960 + $0x8c] sm:$0x1] %v2262
        %v2264 = vld [vmem:[%s960 + $0x90] sm:$0x1]
        %v2265 = vsel %vm2155, %v1980, %v2264
        %2266 = vst [vmem:[%s960 + $0x90] sm:$0x1] %v2265
        %v2267 = vld [vmem:[%s960 + $0x94] sm:$0x1]
        %v2268 = vsel %vm2155, %v1984, %v2267
        %2269 = vst [vmem:[%s960 + $0x94] sm:$0x1] %v2268
        %v2270 = vld [vmem:[%s960 + $0x98] sm:$0x1]
        %v2271 = vsel %vm2155, %v1988, %v2270
        %2272 = vst [vmem:[%s960 + $0x98] sm:$0x1] %v2271
        %v2273 = vld [vmem:[%s960 + $0x9c] sm:$0x1]
        %v2274 = vsel %vm2155, %v1992, %v2273
        %2275 = vst [vmem:[%s960 + $0x9c] sm:$0x1] %v2274
        %v2276 = vld [vmem:[%s960 + $0xa0] sm:$0x1]
        %v2277 = vsel %vm2155, %v1996, %v2276
        %2278 = vst [vmem:[%s960 + $0xa0] sm:$0x1] %v2277
        %v2279 = vld [vmem:[%s960 + $0xa4] sm:$0x1]
        %v2280 = vsel %vm2155, %v2000, %v2279
        %2281 = vst [vmem:[%s960 + $0xa4] sm:$0x1] %v2280
        %v2282 = vld [vmem:[%s960 + $0xa8] sm:$0x1]
        %v2283 = vsel %vm2155, %v2004, %v2282
        %2284 = vst [vmem:[%s960 + $0xa8] sm:$0x1] %v2283
        %v2285 = vld [vmem:[%s960 + $0xac] sm:$0x1]
        %v2286 = vsel %vm2155, %v2008, %v2285
        %2287 = vst [vmem:[%s960 + $0xac] sm:$0x1] %v2286
        %v2288 = vld [vmem:[%s960 + $0xb0] sm:$0x1]
        %v2289 = vsel %vm2155, %v2012, %v2288
        %2290 = vst [vmem:[%s960 + $0xb0] sm:$0x1] %v2289
        %v2291 = vld [vmem:[%s960 + $0xb4] sm:$0x1]
        %v2292 = vsel %vm2155, %v2016, %v2291
        %2293 = vst [vmem:[%s960 + $0xb4] sm:$0x1] %v2292
        %v2294 = vld [vmem:[%s960 + $0xb8] sm:$0x1]
        %v2295 = vsel %vm2155, %v2020, %v2294
        %2296 = vst [vmem:[%s960 + $0xb8] sm:$0x1] %v2295
        %v2297 = vld [vmem:[%s960 + $0xbc] sm:$0x1]
        %v2298 = vsel %vm2155, %v2024, %v2297
        %2299 = vst [vmem:[%s960 + $0xbc] sm:$0x1] %v2298
        %v2300 = vld [vmem:[%s960 + $0xc0] sm:$0x1]
        %v2301 = vsel %vm2155, %v2028, %v2300
        %2302 = vst [vmem:[%s960 + $0xc0] sm:$0x1] %v2301
        %v2303 = vld [vmem:[%s960 + $0xc4] sm:$0x1]
        %v2304 = vsel %vm2155, %v2032, %v2303
        %2305 = vst [vmem:[%s960 + $0xc4] sm:$0x1] %v2304
        %v2306 = vld [vmem:[%s960 + $0xc8] sm:$0x1]
        %v2307 = vsel %vm2155, %v2036, %v2306
        %2308 = vst [vmem:[%s960 + $0xc8] sm:$0x1] %v2307
        %v2309 = vld [vmem:[%s960 + $0xcc] sm:$0x1]
        %v2310 = vsel %vm2155, %v2040, %v2309
        %2311 = vst [vmem:[%s960 + $0xcc] sm:$0x1] %v2310
        %v2312 = vld [vmem:[%s960 + $0xd0] sm:$0x1]
        %v2313 = vsel %vm2155, %v2044, %v2312
        %2314 = vst [vmem:[%s960 + $0xd0] sm:$0x1] %v2313
        %v2315 = vld [vmem:[%s960 + $0xd4] sm:$0x1]
        %v2316 = vsel %vm2155, %v2048, %v2315
        %2317 = vst [vmem:[%s960 + $0xd4] sm:$0x1] %v2316
        %v2318 = vld [vmem:[%s960 + $0xd8] sm:$0x1]
        %v2319 = vsel %vm2155, %v2052, %v2318
        %2320 = vst [vmem:[%s960 + $0xd8] sm:$0x1] %v2319
        %v2321 = vld [vmem:[%s960 + $0xdc] sm:$0x1]
        %v2322 = vsel %vm2155, %v2056, %v2321
        %2323 = vst [vmem:[%s960 + $0xdc] sm:$0x1] %v2322
        %v2324 = vld [vmem:[%s960 + $0xe0] sm:$0x1]
        %v2325 = vsel %vm2155, %v2060, %v2324
        %2326 = vst [vmem:[%s960 + $0xe0] sm:$0x1] %v2325
        %v2327 = vld [vmem:[%s960 + $0xe4] sm:$0x1]
        %v2328 = vsel %vm2155, %v2064, %v2327
        %2329 = vst [vmem:[%s960 + $0xe4] sm:$0x1] %v2328
        %v2330 = vld [vmem:[%s960 + $0xe8] sm:$0x1]
        %v2331 = vsel %vm2155, %v2068, %v2330
        %2332 = vst [vmem:[%s960 + $0xe8] sm:$0x1] %v2331
        %v2333 = vld [vmem:[%s960 + $0xec] sm:$0x1]
        %v2334 = vsel %vm2155, %v2072, %v2333
        %2335 = vst [vmem:[%s960 + $0xec] sm:$0x1] %v2334
        %v2336 = vld [vmem:[%s960 + $0xf0] sm:$0x1]
        %v2337 = vsel %vm2155, %v2076, %v2336
        %2338 = vst [vmem:[%s960 + $0xf0] sm:$0x1] %v2337
        %v2339 = vld [vmem:[%s960 + $0xf4] sm:$0x1]
        %v2340 = vsel %vm2155, %v2080, %v2339
        %2341 = vst [vmem:[%s960 + $0xf4] sm:$0x1] %v2340
        %v2342 = vld [vmem:[%s960 + $0xf8] sm:$0x1]
        %v2343 = vsel %vm2155, %v2084, %v2342
        %2344 = vst [vmem:[%s960 + $0xf8] sm:$0x1] %v2343
        %v2345 = vld [vmem:[%s960 + $0xfc] sm:$0x1]
        %v2346 = vsel %vm2155, %v2088, %v2345
        %2347 = vst [vmem:[%s960 + $0xfc] sm:$0x1] %v2346
        %2348 = vadd.xlane.f32.xlu0 %v1549
        %v2349 = vpop.xlane.xlu0 %2348
        %2350 = vadd.xlane.f32.xlu0 %v1550
        %v2351 = vpop.xlane.xlu0 %2350
        %2352 = vadd.xlane.f32.xlu0 %v1551
        %v2353 = vpop.xlane.xlu0 %2352
        %2354 = vadd.xlane.f32.xlu0 %v1552
        %v2355 = vpop.xlane.xlu0 %2354
        %2356 = vadd.xlane.f32.xlu0 %v1553
        %v2357 = vpop.xlane.xlu0 %2356
        %2358 = vadd.xlane.f32.xlu0 %v1554
        %v2359 = vpop.xlane.xlu0 %2358
        %2360 = vadd.xlane.f32.xlu0 %v1555
        %v2361 = vpop.xlane.xlu0 %2360
        %2362 = vadd.xlane.f32.xlu0 %v1556
        %v2363 = vpop.xlane.xlu0 %2362
        %v2364 = vadd.f32 %v2349, 1e-06
        %v2365 = vadd.f32 %v2351, 1e-06
        %v2366 = vadd.f32 %v2353, 1e-06
        %v2367 = vadd.f32 %v2355, 1e-06
        %v2368 = vadd.f32 %v2357, 1e-06
        %v2369 = vadd.f32 %v2359, 1e-06
        %v2370 = vadd.f32 %v2361, 1e-06
        %v2371 = vadd.f32 %v2363, 1e-06
        %v2372 = vrsqrt.pop %v2364
        %v2373 = vmul.f32 %v2372, %v2364
        %v2374 = vmul.f32 %v2373, %v2372
        %v2375 = vmul.f32 0.5, %v2374
        %v2376 = vsub.f32 1.5, %v2375
        %v2377 = vmul.f32 %v2372, %v2376
        %vm2378 = vweird.f32 %v2364
        %vm2379 = vweird.f32 %v2372
        %vm2380 = vmor %vm2378, %vm2379
        %v2381 = vsel %vm2380, %v2372, %v2377
        %v2382 = vrsqrt.pop %v2365
        %v2383 = vmul.f32 %v2382, %v2365
        %v2384 = vmul.f32 %v2383, %v2382
        %v2385 = vmul.f32 0.5, %v2384
        %v2386 = vsub.f32 1.5, %v2385
        %v2387 = vmul.f32 %v2382, %v2386
        %vm2388 = vweird.f32 %v2365
        %vm2389 = vweird.f32 %v2382
        %vm2390 = vmor %vm2388, %vm2389
        %v2391 = vsel %vm2390, %v2382, %v2387
        %v2392 = vrsqrt.pop %v2366
        %v2393 = vmul.f32 %v2392, %v2366
        %v2394 = vmul.f32 %v2393, %v2392
        %v2395 = vmul.f32 0.5, %v2394
        %v2396 = vsub.f32 1.5, %v2395
        %v2397 = vmul.f32 %v2392, %v2396
        %vm2398 = vweird.f32 %v2366
        %vm2399 = vweird.f32 %v2392
        %vm2400 = vmor %vm2398, %vm2399
        %v2401 = vsel %vm2400, %v2392, %v2397
        %v2402 = vrsqrt.pop %v2367
        %v2403 = vmul.f32 %v2402, %v2367
        %v2404 = vmul.f32 %v2403, %v2402
        %v2405 = vmul.f32 0.5, %v2404
        %v2406 = vsub.f32 1.5, %v2405
        %v2407 = vmul.f32 %v2402, %v2406
        %vm2408 = vweird.f32 %v2367
        %vm2409 = vweird.f32 %v2402
        %vm2410 = vmor %vm2408, %vm2409
        %v2411 = vsel %vm2410, %v2402, %v2407
        %v2412 = vrsqrt.pop %v2368
        %v2413 = vmul.f32 %v2412, %v2368
        %v2414 = vmul.f32 %v2413, %v2412
        %v2415 = vmul.f32 0.5, %v2414
        %v2416 = vsub.f32 1.5, %v2415
        %v2417 = vmul.f32 %v2412, %v2416
        %vm2418 = vweird.f32 %v2368
        %vm2419 = vweird.f32 %v2412
        %vm2420 = vmor %vm2418, %vm2419
        %v2421 = vsel %vm2420, %v2412, %v2417
        %v2422 = vrsqrt.pop %v2369
        %v2423 = vmul.f32 %v2422, %v2369
        %v2424 = vmul.f32 %v2423, %v2422
        %v2425 = vmul.f32 0.5, %v2424
        %v2426 = vsub.f32 1.5, %v2425
        %v2427 = vmul.f32 %v2422, %v2426
        %vm2428 = vweird.f32 %v2369
        %vm2429 = vweird.f32 %v2422
        %vm2430 = vmor %vm2428, %vm2429
        %v2431 = vsel %vm2430, %v2422, %v2427
        %v2432 = vrsqrt.pop %v2370
        %v2433 = vmul.f32 %v2432, %v2370
        %v2434 = vmul.f32 %v2433, %v2432
        %v2435 = vmul.f32 0.5, %v2434
        %v2436 = vsub.f32 1.5, %v2435
        %v2437 = vmul.f32 %v2432, %v2436
        %vm2438 = vweird.f32 %v2370
        %vm2439 = vweird.f32 %v2432
        %vm2440 = vmor %vm2438, %vm2439
        %v2441 = vsel %vm2440, %v2432, %v2437
        %v2442 = vrsqrt.pop %v2371
        %v2443 = vmul.f32 %v2442, %v2371
        %v2444 = vmul.f32 %v2443, %v2442
        %v2445 = vmul.f32 0.5, %v2444
        %v2446 = vsub.f32 1.5, %v2445
        %v2447 = vmul.f32 %v2442, %v2446
        %vm2448 = vweird.f32 %v2371
        %vm2449 = vweird.f32 %v2442
        %vm2450 = vmor %vm2448, %vm2449
        %v2451 = vsel %vm2450, %v2442, %v2447
        %v2452 = vmul.f32 %v2381, 4.0
        %v2453 = vmul.f32 %v2391, 4.0
        %v2454 = vmul.f32 %v2401, 4.0
        %v2455 = vmul.f32 %v2411, 4.0
        %v2456 = vmul.f32 %v2421, 4.0
        %v2457 = vmul.f32 %v2431, 4.0
        %v2458 = vmul.f32 %v2441, 4.0
        %v2459 = vmul.f32 %v2451, 4.0
        %v2460 = vmul.f32 %v1549, %v2452
        %v2461 = vmul.f32 %v1550, %v2453
        %v2462 = vmul.f32 %v1551, %v2454
        %v2463 = vmul.f32 %v1552, %v2455
        %v2464 = vmul.f32 %v1553, %v2456
        %v2465 = vmul.f32 %v1554, %v2457
        %v2466 = vmul.f32 %v1555, %v2458
        %v2467 = vmul.f32 %v1556, %v2459
        %v2468 = vld [vmem:[%s906] sm:$0xf]
        %v2469 = vld [vmem:[%s906 + $0x4] sm:$0xf]
        %v2470 = vld [vmem:[%s906 + $0x8] sm:$0xf]
        %v2471 = vld [vmem:[%s906 + $0xc] sm:$0xf]
        %v2472 = vld [vmem:[%s906 + $0x10] sm:$0xf]
        %v2473 = vld [vmem:[%s906 + $0x14] sm:$0xf]
        %v2474 = vld [vmem:[%s906 + $0x18] sm:$0xf]
        %v2475 = vld [vmem:[%s906 + $0x1c] sm:$0xf]
        %v2476 = vunpack.c.l.bf16 %v2468
        %v2477 = vunpack.c.l.bf16 %v2469
        %v2478 = vunpack.c.l.bf16 %v2470
        %v2479 = vunpack.c.l.bf16 %v2471
        %v2480 = vunpack.c.l.bf16 %v2472
        %v2481 = vunpack.c.l.bf16 %v2473
        %v2482 = vunpack.c.l.bf16 %v2474
        %v2483 = vunpack.c.l.bf16 %v2475
        %v2484 = vadd.f32 %v2460, %v2476
        %v2485 = vadd.f32 %v2461, %v2477
        %v2486 = vadd.f32 %v2462, %v2478
        %v2487 = vadd.f32 %v2463, %v2479
        %v2488 = vadd.f32 %v2464, %v2480
        %v2489 = vadd.f32 %v2465, %v2481
        %v2490 = vadd.f32 %v2466, %v2482
        %v2491 = vadd.f32 %v2467, %v2483
        %v2492 = vpack.c.bf16 %v2485, %v2484
        %v2493 = vpack.c.bf16 %v2487, %v2486
        %v2494 = vpack.c.bf16 %v2489, %v2488
        %v2495 = vpack.c.bf16 %v2491, %v2490
        %v2512 = vunpack.c.l.b16 %v971
        %v2513 = vunpack.c.l.b16 %v972
        %v2514 = vunpack.c.l.b16 %v973
        %v2515 = vunpack.c.l.b16 %v974
        %v2516 = vunpack.c.l.b16 %v975
        %v2517 = vunpack.c.l.b16 %v976
        %v2518 = vunpack.c.l.b16 %v977
        %v2519 = vunpack.c.l.b16 %v978
        %v2520 = vunpack.c.l.b16 %v979
        %v2521 = vunpack.c.l.b16 %v980
        %v2522 = vunpack.c.l.b16 %v981
        %v2523 = vunpack.c.l.b16 %v982
        %v2524 = vunpack.c.l.b16 %v983
        %v2525 = vunpack.c.l.b16 %v984
        %v2526 = vunpack.c.l.b16 %v985
        %v2527 = vunpack.c.l.b16 %v986
        %v2528 = vpack.c.b16 %v2513, %v2512
        %v2529 = vpack.c.b16 %v2515, %v2514
        %v2530 = vpack.c.b16 %v2517, %v2516
        %v2531 = vpack.c.b16 %v2519, %v2518
        %v2532 = vpack.c.b16 %v2521, %v2520
        %v2533 = vpack.c.b16 %v2523, %v2522
        %v2534 = vpack.c.b16 %v2525, %v2524
        %v2535 = vpack.c.b16 %v2527, %v2526
        %2544 = vmatpush.bf16.msra.mxu0 %v2535
        %2545 = vmatpush.bf16.msra.mxu0 %v2534
        %2546 = vmatpush.bf16.msra.mxu0 %v2533
        %2547 = vmatpush.bf16.msra.mxu0 %v2532
        %2548 = vmatpush.bf16.msra.mxu0 %v2531
        %2549 = vmatpush.bf16.msra.mxu0 %v2530
        %2550 = vmatpush.bf16.msra.mxu0 %v2529
        %2551 = vmatpush.bf16.msra.mxu0 %v2528
        %2552 = vmatmul.bf16.gmra.mxu0 %v2492
        %v2553 = vpop.f32.mrf.mxu0
        %v2554 = vadd.f32 %v1005, %v2553
        %v2555 = vpop.f32.mrf.mxu0
        %v2556 = vadd.f32 %v1005, %v2555
        %2557 = vmatmul.bf16.gmra.mxu0 %v2493
        %v2558 = vpop.f32.mrf.mxu0
        %v2559 = vadd.f32 %v1005, %v2558
        %v2560 = vpop.f32.mrf.mxu0
        %v2561 = vadd.f32 %v1005, %v2560
        %2562 = vmatmul.bf16.gmra.mxu0 %v2494
        %v2563 = vpop.f32.mrf.mxu0
        %v2564 = vadd.f32 %v1005, %v2563
        %v2565 = vpop.f32.mrf.mxu0
        %v2566 = vadd.f32 %v1005, %v2565
        %2567 = vmatmul.bf16.gmra.mxu0 %v2495
        %v2568 = vpop.f32.mrf.mxu0
        %v2569 = vadd.f32 %v1005, %v2568
        %v2570 = vpop.f32.mrf.mxu0
        %v2571 = vadd.f32 %v1005, %v2570
        %2572 = vdwg.mxu0
        %v2573 = vadd.f32 %v2554, 0.0
        %v2574 = vadd.f32 %v2556, 0.0
        %v2575 = vadd.f32 %v2559, 0.0
        %v2576 = vadd.f32 %v2561, 0.0
        %v2577 = vadd.f32 %v2564, 0.0
        %v2578 = vadd.f32 %v2566, 0.0
        %v2579 = vadd.f32 %v2569, 0.0
        %v2580 = vadd.f32 %v2571, 0.0
        %vm2581 = vcmp.ge.f32.partialorder %v2573, 0.5
        %vm2582 = vcmp.ge.f32.partialorder %v2574, 0.5
        %vm2583 = vcmp.ge.f32.partialorder %v2575, 0.5
        %vm2584 = vcmp.ge.f32.partialorder %v2576, 0.5
        %vm2585 = vcmp.ge.f32.partialorder %v2577, 0.5
        %vm2586 = vcmp.ge.f32.partialorder %v2578, 0.5
        %vm2587 = vcmp.ge.f32.partialorder %v2579, 0.5
        %vm2588 = vcmp.ge.f32.partialorder %v2580, 0.5
        %v2589 = vsel %vm2581, 1, 0
        %v2590 = vsel %vm2582, 1, 0
        %v2591 = vsel %vm2583, 1, 0
        %v2592 = vsel %vm2584, 1, 0
        %v2593 = vsel %vm2585, 1, 0
        %v2594 = vsel %vm2586, 1, 0
        %v2595 = vsel %vm2587, 1, 0
        %v2596 = vsel %vm2588, 1, 0
        %v2597 = vcvt.s32.f32 %v2589
        %v2598 = vcvt.s32.f32 %v2590
        %v2599 = vcvt.s32.f32 %v2591
        %v2600 = vcvt.s32.f32 %v2592
        %v2601 = vcvt.s32.f32 %v2593
        %v2602 = vcvt.s32.f32 %v2594
        %v2603 = vcvt.s32.f32 %v2595
        %v2604 = vcvt.s32.f32 %v2596
        %v2605 = vmul.f32 %v2597, 0.5
        %v2606 = vmul.f32 %v2598, 0.5
        %v2607 = vmul.f32 %v2599, 0.5
        %v2608 = vmul.f32 %v2600, 0.5
        %v2609 = vmul.f32 %v2601, 0.5
        %v2610 = vmul.f32 %v2602, 0.5
        %v2611 = vmul.f32 %v2603, 0.5
        %v2612 = vmul.f32 %v2604, 0.5
        %v2613 = vsub.f32 %v2573, %v2605
        %v2614 = vsub.f32 %v2574, %v2606
        %v2615 = vsub.f32 %v2575, %v2607
        %v2616 = vsub.f32 %v2576, %v2608
        %v2617 = vsub.f32 %v2577, %v2609
        %v2618 = vsub.f32 %v2578, %v2610
        %v2619 = vsub.f32 %v2579, %v2611
        %v2620 = vsub.f32 %v2580, %v2612
        %v2621 = vadd.f32 %v2597, 0.0
        %v2622 = vadd.f32 %v2598, 0.0
        %v2623 = vadd.f32 %v2599, 0.0
        %v2624 = vadd.f32 %v2600, 0.0
        %v2625 = vadd.f32 %v2601, 0.0
        %v2626 = vadd.f32 %v2602, 0.0
        %v2627 = vadd.f32 %v2603, 0.0
        %v2628 = vadd.f32 %v2604, 0.0
        %v2629 = vmul.f32 %v1565, 0.9
        %v2630 = vmul.f32 %v1566, 0.9
        %v2631 = vmul.f32 %v1567, 0.9
        %v2632 = vmul.f32 %v1568, 0.9
        %v2633 = vmul.f32 %v1569, 0.9
        %v2634 = vmul.f32 %v1570, 0.9
        %v2635 = vmul.f32 %v1571, 0.9
        %v2636 = vmul.f32 %v1572, 0.9
        %v2637 = vadd.f32 %v2629, %v1386
        %v2638 = vadd.f32 %v2630, %v1388
        %v2639 = vadd.f32 %v2631, %v1391
        %v2640 = vadd.f32 %v2632, %v1393
        %v2641 = vadd.f32 %v2633, %v1396
        %v2642 = vadd.f32 %v2634, %v1398
        %v2643 = vadd.f32 %v2635, %v1401
        %v2644 = vadd.f32 %v2636, %v1403
        %vm2645 = vcmp.ge.f32.partialorder %v2637, 0.5
        %vm2646 = vcmp.ge.f32.partialorder %v2638, 0.5
        %vm2647 = vcmp.ge.f32.partialorder %v2639, 0.5
        %vm2648 = vcmp.ge.f32.partialorder %v2640, 0.5
        %vm2649 = vcmp.ge.f32.partialorder %v2641, 0.5
        %vm2650 = vcmp.ge.f32.partialorder %v2642, 0.5
        %vm2651 = vcmp.ge.f32.partialorder %v2643, 0.5
        %vm2652 = vcmp.ge.f32.partialorder %v2644, 0.5
        %v2653 = vsel %vm2645, 1, 0
        %v2654 = vsel %vm2646, 1, 0
        %v2655 = vsel %vm2647, 1, 0
        %v2656 = vsel %vm2648, 1, 0
        %v2657 = vsel %vm2649, 1, 0
        %v2658 = vsel %vm2650, 1, 0
        %v2659 = vsel %vm2651, 1, 0
        %v2660 = vsel %vm2652, 1, 0
        %v2661 = vcvt.s32.f32 %v2653
        %v2662 = vcvt.s32.f32 %v2654
        %v2663 = vcvt.s32.f32 %v2655
        %v2664 = vcvt.s32.f32 %v2656
        %v2665 = vcvt.s32.f32 %v2657
        %v2666 = vcvt.s32.f32 %v2658
        %v2667 = vcvt.s32.f32 %v2659
        %v2668 = vcvt.s32.f32 %v2660
        %v2669 = vmul.f32 %v2661, 0.5
        %v2670 = vmul.f32 %v2662, 0.5
        %v2671 = vmul.f32 %v2663, 0.5
        %v2672 = vmul.f32 %v2664, 0.5
        %v2673 = vmul.f32 %v2665, 0.5
        %v2674 = vmul.f32 %v2666, 0.5
        %v2675 = vmul.f32 %v2667, 0.5
        %v2676 = vmul.f32 %v2668, 0.5
        %v2677 = vsub.f32 %v2637, %v2669
        %v2678 = vsub.f32 %v2638, %v2670
        %v2679 = vsub.f32 %v2639, %v2671
        %v2680 = vsub.f32 %v2640, %v2672
        %v2681 = vsub.f32 %v2641, %v2673
        %v2682 = vsub.f32 %v2642, %v2674
        %v2683 = vsub.f32 %v2643, %v2675
        %v2684 = vsub.f32 %v2644, %v2676
        %v2685 = vpack.c.bf16 %v2661, %v2661
        %v2686 = vpack.c.bf16 %v2662, %v2662
        %v2687 = vpack.c.bf16 %v2663, %v2663
        %v2688 = vpack.c.bf16 %v2664, %v2664
        %v2689 = vpack.c.bf16 %v2665, %v2665
        %v2690 = vpack.c.bf16 %v2666, %v2666
        %v2691 = vpack.c.bf16 %v2667, %v2667
        %v2692 = vpack.c.bf16 %v2668, %v2668
        %v2701 = vrot.slane %v2685, 3
        %v2702 = vrot.slane %v2686, 3
        %v2703 = vrot.slane %v2687, 3
        %v2704 = vrot.slane %v2688, 3
        %v2705 = vrot.slane %v2689, 3
        %v2706 = vrot.slane %v2690, 3
        %v2707 = vrot.slane %v2691, 3
        %v2708 = vrot.slane %v2692, 3
        %v2711 = vsel %vm1597, %v2685, %v2701
        %v2713 = vsel %vm1602, %v2685, %v2701
        %v2715 = vrot.slane %v2713, 1
        %v2716 = vsel %vm1606, %v2685, %v2701
        %v2718 = vrot.slane %v2716, 2
        %v2719 = vsel %vm1610, %v2685, %v2701
        %v2721 = vrot.slane %v2719, 3
        %v2724 = vsel %vm1597, %v2686, %v2702
        %v2726 = vsel %vm1602, %v2686, %v2702
        %v2728 = vrot.slane %v2726, 1
        %v2729 = vsel %vm1606, %v2686, %v2702
        %v2731 = vrot.slane %v2729, 2
        %v2732 = vsel %vm1610, %v2686, %v2702
        %v2734 = vrot.slane %v2732, 3
        %v2737 = vsel %vm1597, %v2687, %v2703
        %v2739 = vsel %vm1602, %v2687, %v2703
        %v2741 = vrot.slane %v2739, 1
        %v2742 = vsel %vm1606, %v2687, %v2703
        %v2744 = vrot.slane %v2742, 2
        %v2745 = vsel %vm1610, %v2687, %v2703
        %v2747 = vrot.slane %v2745, 3
        %v2750 = vsel %vm1597, %v2688, %v2704
        %v2752 = vsel %vm1602, %v2688, %v2704
        %v2754 = vrot.slane %v2752, 1
        %v2755 = vsel %vm1606, %v2688, %v2704
        %v2757 = vrot.slane %v2755, 2
        %v2758 = vsel %vm1610, %v2688, %v2704
        %v2760 = vrot.slane %v2758, 3
        %v2763 = vsel %vm1597, %v2689, %v2705
        %v2765 = vsel %vm1602, %v2689, %v2705
        %v2767 = vrot.slane %v2765, 1
        %v2768 = vsel %vm1606, %v2689, %v2705
        %v2770 = vrot.slane %v2768, 2
        %v2771 = vsel %vm1610, %v2689, %v2705
        %v2773 = vrot.slane %v2771, 3
        %v2776 = vsel %vm1597, %v2690, %v2706
        %v2778 = vsel %vm1602, %v2690, %v2706
        %v2780 = vrot.slane %v2778, 1
        %v2781 = vsel %vm1606, %v2690, %v2706
        %v2783 = vrot.slane %v2781, 2
        %v2784 = vsel %vm1610, %v2690, %v2706
        %v2786 = vrot.slane %v2784, 3
        %v2789 = vsel %vm1597, %v2691, %v2707
        %v2791 = vsel %vm1602, %v2691, %v2707
        %v2793 = vrot.slane %v2791, 1
        %v2794 = vsel %vm1606, %v2691, %v2707
        %v2796 = vrot.slane %v2794, 2
        %v2797 = vsel %vm1610, %v2691, %v2707
        %v2799 = vrot.slane %v2797, 3
        %v2802 = vsel %vm1597, %v2692, %v2708
        %v2804 = vsel %vm1602, %v2692, %v2708
        %v2806 = vrot.slane %v2804, 1
        %v2807 = vsel %vm1606, %v2692, %v2708
        %v2809 = vrot.slane %v2807, 2
        %v2810 = vsel %vm1610, %v2692, %v2708
        %v2812 = vrot.slane %v2810, 3
        %v2813 = vunpack.i.l.s16 %v2711
        %v2814 = vunpack.i.h.s16 %v2711
        %v2815 = vunpack.i.l.s16 %v2715
        %v2816 = vunpack.i.h.s16 %v2715
        %v2817 = vunpack.i.l.s16 %v2718
        %v2818 = vunpack.i.h.s16 %v2718
        %v2819 = vunpack.i.l.s16 %v2721
        %v2820 = vunpack.i.h.s16 %v2721
        %v2821 = vunpack.i.l.s16 %v2724
        %v2822 = vunpack.i.h.s16 %v2724
        %v2823 = vunpack.i.l.s16 %v2728
        %v2824 = vunpack.i.h.s16 %v2728
        %v2825 = vunpack.i.l.s16 %v2731
        %v2826 = vunpack.i.h.s16 %v2731
        %v2827 = vunpack.i.l.s16 %v2734
        %v2828 = vunpack.i.h.s16 %v2734
        %v2829 = vunpack.i.l.s16 %v2737
        %v2830 = vunpack.i.h.s16 %v2737
        %v2831 = vunpack.i.l.s16 %v2741
        %v2832 = vunpack.i.h.s16 %v2741
        %v2833 = vunpack.i.l.s16 %v2744
        %v2834 = vunpack.i.h.s16 %v2744
        %v2835 = vunpack.i.l.s16 %v2747
        %v2836 = vunpack.i.h.s16 %v2747
        %v2837 = vunpack.i.l.s16 %v2750
        %v2838 = vunpack.i.h.s16 %v2750
        %v2839 = vunpack.i.l.s16 %v2754
        %v2840 = vunpack.i.h.s16 %v2754
        %v2841 = vunpack.i.l.s16 %v2757
        %v2842 = vunpack.i.h.s16 %v2757
        %v2843 = vunpack.i.l.s16 %v2760
        %v2844 = vunpack.i.h.s16 %v2760
        %v2845 = vunpack.i.l.s16 %v2763
        %v2846 = vunpack.i.h.s16 %v2763
        %v2847 = vunpack.i.l.s16 %v2767
        %v2848 = vunpack.i.h.s16 %v2767
        %v2849 = vunpack.i.l.s16 %v2770
        %v2850 = vunpack.i.h.s16 %v2770
        %v2851 = vunpack.i.l.s16 %v2773
        %v2852 = vunpack.i.h.s16 %v2773
        %v2853 = vunpack.i.l.s16 %v2776
        %v2854 = vunpack.i.h.s16 %v2776
        %v2855 = vunpack.i.l.s16 %v2780
        %v2856 = vunpack.i.h.s16 %v2780
        %v2857 = vunpack.i.l.s16 %v2783
        %v2858 = vunpack.i.h.s16 %v2783
        %v2859 = vunpack.i.l.s16 %v2786
        %v2860 = vunpack.i.h.s16 %v2786
        %v2861 = vunpack.i.l.s16 %v2789
        %v2862 = vunpack.i.h.s16 %v2789
        %v2863 = vunpack.i.l.s16 %v2793
        %v2864 = vunpack.i.h.s16 %v2793
        %v2865 = vunpack.i.l.s16 %v2796
        %v2866 = vunpack.i.h.s16 %v2796
        %v2867 = vunpack.i.l.s16 %v2799
        %v2868 = vunpack.i.h.s16 %v2799
        %v2869 = vunpack.i.l.s16 %v2802
        %v2870 = vunpack.i.h.s16 %v2802
        %v2871 = vunpack.i.l.s16 %v2806
        %v2872 = vunpack.i.h.s16 %v2806
        %v2873 = vunpack.i.l.s16 %v2809
        %v2874 = vunpack.i.h.s16 %v2809
        %v2875 = vunpack.i.l.s16 %v2812
        %v2876 = vunpack.i.h.s16 %v2812
        %v2877 = vpack.i.b16 %v2813, %v2813
        %v2878 = vpack.i.b16 %v2814, %v2814
        %v2879 = vpack.i.b16 %v2815, %v2815
        %v2880 = vpack.i.b16 %v2816, %v2816
        %v2881 = vpack.i.b16 %v2817, %v2817
        %v2882 = vpack.i.b16 %v2818, %v2818
        %v2883 = vpack.i.b16 %v2819, %v2819
        %v2884 = vpack.i.b16 %v2820, %v2820
        %v2885 = vpack.i.b16 %v2821, %v2821
        %v2886 = vpack.i.b16 %v2822, %v2822
        %v2887 = vpack.i.b16 %v2823, %v2823
        %v2888 = vpack.i.b16 %v2824, %v2824
        %v2889 = vpack.i.b16 %v2825, %v2825
        %v2890 = vpack.i.b16 %v2826, %v2826
        %v2891 = vpack.i.b16 %v2827, %v2827
        %v2892 = vpack.i.b16 %v2828, %v2828
        %v2893 = vpack.i.b16 %v2829, %v2829
        %v2894 = vpack.i.b16 %v2830, %v2830
        %v2895 = vpack.i.b16 %v2831, %v2831
        %v2896 = vpack.i.b16 %v2832, %v2832
        %v2897 = vpack.i.b16 %v2833, %v2833
        %v2898 = vpack.i.b16 %v2834, %v2834
        %v2899 = vpack.i.b16 %v2835, %v2835
        %v2900 = vpack.i.b16 %v2836, %v2836
        %v2901 = vpack.i.b16 %v2837, %v2837
        %v2902 = vpack.i.b16 %v2838, %v2838
        %v2903 = vpack.i.b16 %v2839, %v2839
        %v2904 = vpack.i.b16 %v2840, %v2840
        %v2905 = vpack.i.b16 %v2841, %v2841
        %v2906 = vpack.i.b16 %v2842, %v2842
        %v2907 = vpack.i.b16 %v2843, %v2843
        %v2908 = vpack.i.b16 %v2844, %v2844
        %v2909 = vpack.i.b16 %v2845, %v2845
        %v2910 = vpack.i.b16 %v2846, %v2846
        %v2911 = vpack.i.b16 %v2847, %v2847
        %v2912 = vpack.i.b16 %v2848, %v2848
        %v2913 = vpack.i.b16 %v2849, %v2849
        %v2914 = vpack.i.b16 %v2850, %v2850
        %v2915 = vpack.i.b16 %v2851, %v2851
        %v2916 = vpack.i.b16 %v2852, %v2852
        %v2917 = vpack.i.b16 %v2853, %v2853
        %v2918 = vpack.i.b16 %v2854, %v2854
        %v2919 = vpack.i.b16 %v2855, %v2855
        %v2920 = vpack.i.b16 %v2856, %v2856
        %v2921 = vpack.i.b16 %v2857, %v2857
        %v2922 = vpack.i.b16 %v2858, %v2858
        %v2923 = vpack.i.b16 %v2859, %v2859
        %v2924 = vpack.i.b16 %v2860, %v2860
        %v2925 = vpack.i.b16 %v2861, %v2861
        %v2926 = vpack.i.b16 %v2862, %v2862
        %v2927 = vpack.i.b16 %v2863, %v2863
        %v2928 = vpack.i.b16 %v2864, %v2864
        %v2929 = vpack.i.b16 %v2865, %v2865
        %v2930 = vpack.i.b16 %v2866, %v2866
        %v2931 = vpack.i.b16 %v2867, %v2867
        %v2932 = vpack.i.b16 %v2868, %v2868
        %v2933 = vpack.i.b16 %v2869, %v2869
        %v2934 = vpack.i.b16 %v2870, %v2870
        %v2935 = vpack.i.b16 %v2871, %v2871
        %v2936 = vpack.i.b16 %v2872, %v2872
        %v2937 = vpack.i.b16 %v2873, %v2873
        %v2938 = vpack.i.b16 %v2874, %v2874
        %v2939 = vpack.i.b16 %v2875, %v2875
        %v2940 = vpack.i.b16 %v2876, %v2876
        %v2942 = vunpack.c.l.s4 286326784
        %v2943 = vunpack.c.0.s8 %v2942
        %v2944 = vperm.slane %v2877, %v2943
        %v2946 = vunpack.c.l.s4 286326784
        %v2947 = vunpack.c.0.s8 %v2946
        %v2948 = vperm.slane %v2878, %v2947
        %v2950 = vunpack.c.l.s4 286326784
        %v2951 = vunpack.c.0.s8 %v2950
        %v2952 = vperm.slane %v2879, %v2951
        %v2954 = vunpack.c.l.s4 286326784
        %v2955 = vunpack.c.0.s8 %v2954
        %v2956 = vperm.slane %v2880, %v2955
        %v2958 = vunpack.c.l.s4 286326784
        %v2959 = vunpack.c.0.s8 %v2958
        %v2960 = vperm.slane %v2881, %v2959
        %v2962 = vunpack.c.l.s4 286326784
        %v2963 = vunpack.c.0.s8 %v2962
        %v2964 = vperm.slane %v2882, %v2963
        %v2966 = vunpack.c.l.s4 286326784
        %v2967 = vunpack.c.0.s8 %v2966
        %v2968 = vperm.slane %v2883, %v2967
        %v2970 = vunpack.c.l.s4 286326784
        %v2971 = vunpack.c.0.s8 %v2970
        %v2972 = vperm.slane %v2884, %v2971
        %v2974 = vunpack.c.l.s4 286326784
        %v2975 = vunpack.c.0.s8 %v2974
        %v2976 = vperm.slane %v2885, %v2975
        %v2978 = vunpack.c.l.s4 286326784
        %v2979 = vunpack.c.0.s8 %v2978
        %v2980 = vperm.slane %v2886, %v2979
        %v2982 = vunpack.c.l.s4 286326784
        %v2983 = vunpack.c.0.s8 %v2982
        %v2984 = vperm.slane %v2887, %v2983
        %v2986 = vunpack.c.l.s4 286326784
        %v2987 = vunpack.c.0.s8 %v2986
        %v2988 = vperm.slane %v2888, %v2987
        %v2990 = vunpack.c.l.s4 286326784
        %v2991 = vunpack.c.0.s8 %v2990
        %v2992 = vperm.slane %v2889, %v2991
        %v2994 = vunpack.c.l.s4 286326784
        %v2995 = vunpack.c.0.s8 %v2994
        %v2996 = vperm.slane %v2890, %v2995
        %v2998 = vunpack.c.l.s4 286326784
        %v2999 = vunpack.c.0.s8 %v2998
        %v3000 = vperm.slane %v2891, %v2999
        %v3002 = vunpack.c.l.s4 286326784
        %v3003 = vunpack.c.0.s8 %v3002
        %v3004 = vperm.slane %v2892, %v3003
        %v3006 = vunpack.c.l.s4 286326784
        %v3007 = vunpack.c.0.s8 %v3006
        %v3008 = vperm.slane %v2893, %v3007
        %v3010 = vunpack.c.l.s4 286326784
        %v3011 = vunpack.c.0.s8 %v3010
        %v3012 = vperm.slane %v2894, %v3011
        %v3014 = vunpack.c.l.s4 286326784
        %v3015 = vunpack.c.0.s8 %v3014
        %v3016 = vperm.slane %v2895, %v3015
        %v3018 = vunpack.c.l.s4 286326784
        %v3019 = vunpack.c.0.s8 %v3018
        %v3020 = vperm.slane %v2896, %v3019
        %v3022 = vunpack.c.l.s4 286326784
        %v3023 = vunpack.c.0.s8 %v3022
        %v3024 = vperm.slane %v2897, %v3023
        %v3026 = vunpack.c.l.s4 286326784
        %v3027 = vunpack.c.0.s8 %v3026
        %v3028 = vperm.slane %v2898, %v3027
        %v3030 = vunpack.c.l.s4 286326784
        %v3031 = vunpack.c.0.s8 %v3030
        %v3032 = vperm.slane %v2899, %v3031
        %v3034 = vunpack.c.l.s4 286326784
        %v3035 = vunpack.c.0.s8 %v3034
        %v3036 = vperm.slane %v2900, %v3035
        %v3038 = vunpack.c.l.s4 286326784
        %v3039 = vunpack.c.0.s8 %v3038
        %v3040 = vperm.slane %v2901, %v3039
        %v3042 = vunpack.c.l.s4 286326784
        %v3043 = vunpack.c.0.s8 %v3042
        %v3044 = vperm.slane %v2902, %v3043
        %v3046 = vunpack.c.l.s4 286326784
        %v3047 = vunpack.c.0.s8 %v3046
        %v3048 = vperm.slane %v2903, %v3047
        %v3050 = vunpack.c.l.s4 286326784
        %v3051 = vunpack.c.0.s8 %v3050
        %v3052 = vperm.slane %v2904, %v3051
        %v3054 = vunpack.c.l.s4 286326784
        %v3055 = vunpack.c.0.s8 %v3054
        %v3056 = vperm.slane %v2905, %v3055
        %v3058 = vunpack.c.l.s4 286326784
        %v3059 = vunpack.c.0.s8 %v3058
        %v3060 = vperm.slane %v2906, %v3059
        %v3062 = vunpack.c.l.s4 286326784
        %v3063 = vunpack.c.0.s8 %v3062
        %v3064 = vperm.slane %v2907, %v3063
        %v3066 = vunpack.c.l.s4 286326784
        %v3067 = vunpack.c.0.s8 %v3066
        %v3068 = vperm.slane %v2908, %v3067
        %v3070 = vunpack.c.l.s4 286326784
        %v3071 = vunpack.c.0.s8 %v3070
        %v3072 = vperm.slane %v2909, %v3071
        %v3074 = vunpack.c.l.s4 286326784
        %v3075 = vunpack.c.0.s8 %v3074
        %v3076 = vperm.slane %v2910, %v3075
        %v3078 = vunpack.c.l.s4 286326784
        %v3079 = vunpack.c.0.s8 %v3078
        %v3080 = vperm.slane %v2911, %v3079
        %v3082 = vunpack.c.l.s4 286326784
        %v3083 = vunpack.c.0.s8 %v3082
        %v3084 = vperm.slane %v2912, %v3083
        %v3086 = vunpack.c.l.s4 286326784
        %v3087 = vunpack.c.0.s8 %v3086
        %v3088 = vperm.slane %v2913, %v3087
        %v3090 = vunpack.c.l.s4 286326784
        %v3091 = vunpack.c.0.s8 %v3090
        %v3092 = vperm.slane %v2914, %v3091
        %v3094 = vunpack.c.l.s4 286326784
        %v3095 = vunpack.c.0.s8 %v3094
        %v3096 = vperm.slane %v2915, %v3095
        %v3098 = vunpack.c.l.s4 286326784
        %v3099 = vunpack.c.0.s8 %v3098
        %v3100 = vperm.slane %v2916, %v3099
        %v3102 = vunpack.c.l.s4 286326784
        %v3103 = vunpack.c.0.s8 %v3102
        %v3104 = vperm.slane %v2917, %v3103
        %v3106 = vunpack.c.l.s4 286326784
        %v3107 = vunpack.c.0.s8 %v3106
        %v3108 = vperm.slane %v2918, %v3107
        %v3110 = vunpack.c.l.s4 286326784
        %v3111 = vunpack.c.0.s8 %v3110
        %v3112 = vperm.slane %v2919, %v3111
        %v3114 = vunpack.c.l.s4 286326784
        %v3115 = vunpack.c.0.s8 %v3114
        %v3116 = vperm.slane %v2920, %v3115
        %v3118 = vunpack.c.l.s4 286326784
        %v3119 = vunpack.c.0.s8 %v3118
        %v3120 = vperm.slane %v2921, %v3119
        %v3122 = vunpack.c.l.s4 286326784
        %v3123 = vunpack.c.0.s8 %v3122
        %v3124 = vperm.slane %v2922, %v3123
        %v3126 = vunpack.c.l.s4 286326784
        %v3127 = vunpack.c.0.s8 %v3126
        %v3128 = vperm.slane %v2923, %v3127
        %v3130 = vunpack.c.l.s4 286326784
        %v3131 = vunpack.c.0.s8 %v3130
        %v3132 = vperm.slane %v2924, %v3131
        %v3134 = vunpack.c.l.s4 286326784
        %v3135 = vunpack.c.0.s8 %v3134
        %v3136 = vperm.slane %v2925, %v3135
        %v3138 = vunpack.c.l.s4 286326784
        %v3139 = vunpack.c.0.s8 %v3138
        %v3140 = vperm.slane %v2926, %v3139
        %v3142 = vunpack.c.l.s4 286326784
        %v3143 = vunpack.c.0.s8 %v3142
        %v3144 = vperm.slane %v2927, %v3143
        %v3146 = vunpack.c.l.s4 286326784
        %v3147 = vunpack.c.0.s8 %v3146
        %v3148 = vperm.slane %v2928, %v3147
        %v3150 = vunpack.c.l.s4 286326784
        %v3151 = vunpack.c.0.s8 %v3150
        %v3152 = vperm.slane %v2929, %v3151
        %v3154 = vunpack.c.l.s4 286326784
        %v3155 = vunpack.c.0.s8 %v3154
        %v3156 = vperm.slane %v2930, %v3155
        %v3158 = vunpack.c.l.s4 286326784
        %v3159 = vunpack.c.0.s8 %v3158
        %v3160 = vperm.slane %v2931, %v3159
        %v3162 = vunpack.c.l.s4 286326784
        %v3163 = vunpack.c.0.s8 %v3162
        %v3164 = vperm.slane %v2932, %v3163
        %v3166 = vunpack.c.l.s4 286326784
        %v3167 = vunpack.c.0.s8 %v3166
        %v3168 = vperm.slane %v2933, %v3167
        %v3170 = vunpack.c.l.s4 286326784
        %v3171 = vunpack.c.0.s8 %v3170
        %v3172 = vperm.slane %v2934, %v3171
        %v3174 = vunpack.c.l.s4 286326784
        %v3175 = vunpack.c.0.s8 %v3174
        %v3176 = vperm.slane %v2935, %v3175
        %v3178 = vunpack.c.l.s4 286326784
        %v3179 = vunpack.c.0.s8 %v3178
        %v3180 = vperm.slane %v2936, %v3179
        %v3182 = vunpack.c.l.s4 286326784
        %v3183 = vunpack.c.0.s8 %v3182
        %v3184 = vperm.slane %v2937, %v3183
        %v3186 = vunpack.c.l.s4 286326784
        %v3187 = vunpack.c.0.s8 %v3186
        %v3188 = vperm.slane %v2938, %v3187
        %v3190 = vunpack.c.l.s4 286326784
        %v3191 = vunpack.c.0.s8 %v3190
        %v3192 = vperm.slane %v2939, %v3191
        %v3194 = vunpack.c.l.s4 286326784
        %v3195 = vunpack.c.0.s8 %v3194
        %v3196 = vperm.slane %v2940, %v3195
        %vm3261 = vsmask.f32 7938
        %vm3262 = vmand %vm2153, %vm3261
        %v3263 = vld [vmem:[%s960] sm:$0x1]
        %v3264 = vsel %vm3262, %v2944, %v3263
        %3265 = vst [vmem:[%s960] sm:$0x1] %v3264
        %v3266 = vld [vmem:[%s960 + $0x4] sm:$0x1]
        %v3267 = vsel %vm3262, %v2948, %v3266
        %3268 = vst [vmem:[%s960 + $0x4] sm:$0x1] %v3267
        %v3269 = vld [vmem:[%s960 + $0x8] sm:$0x1]
        %v3270 = vsel %vm3262, %v2952, %v3269
        %3271 = vst [vmem:[%s960 + $0x8] sm:$0x1] %v3270
        %v3272 = vld [vmem:[%s960 + $0xc] sm:$0x1]
        %v3273 = vsel %vm3262, %v2956, %v3272
        %3274 = vst [vmem:[%s960 + $0xc] sm:$0x1] %v3273
        %v3275 = vld [vmem:[%s960 + $0x10] sm:$0x1]
        %v3276 = vsel %vm3262, %v2960, %v3275
        %3277 = vst [vmem:[%s960 + $0x10] sm:$0x1] %v3276
        %v3278 = vld [vmem:[%s960 + $0x14] sm:$0x1]
        %v3279 = vsel %vm3262, %v2964, %v3278
        %3280 = vst [vmem:[%s960 + $0x14] sm:$0x1] %v3279
        %v3281 = vld [vmem:[%s960 + $0x18] sm:$0x1]
        %v3282 = vsel %vm3262, %v2968, %v3281
        %3283 = vst [vmem:[%s960 + $0x18] sm:$0x1] %v3282
        %v3284 = vld [vmem:[%s960 + $0x1c] sm:$0x1]
        %v3285 = vsel %vm3262, %v2972, %v3284
        %3286 = vst [vmem:[%s960 + $0x1c] sm:$0x1] %v3285
        %v3287 = vld [vmem:[%s960 + $0x20] sm:$0x1]
        %v3288 = vsel %vm3262, %v2976, %v3287
        %3289 = vst [vmem:[%s960 + $0x20] sm:$0x1] %v3288
        %v3290 = vld [vmem:[%s960 + $0x24] sm:$0x1]
        %v3291 = vsel %vm3262, %v2980, %v3290
        %3292 = vst [vmem:[%s960 + $0x24] sm:$0x1] %v3291
        %v3293 = vld [vmem:[%s960 + $0x28] sm:$0x1]
        %v3294 = vsel %vm3262, %v2984, %v3293
        %3295 = vst [vmem:[%s960 + $0x28] sm:$0x1] %v3294
        %v3296 = vld [vmem:[%s960 + $0x2c] sm:$0x1]
        %v3297 = vsel %vm3262, %v2988, %v3296
        %3298 = vst [vmem:[%s960 + $0x2c] sm:$0x1] %v3297
        %v3299 = vld [vmem:[%s960 + $0x30] sm:$0x1]
        %v3300 = vsel %vm3262, %v2992, %v3299
        %3301 = vst [vmem:[%s960 + $0x30] sm:$0x1] %v3300
        %v3302 = vld [vmem:[%s960 + $0x34] sm:$0x1]
        %v3303 = vsel %vm3262, %v2996, %v3302
        %3304 = vst [vmem:[%s960 + $0x34] sm:$0x1] %v3303
        %v3305 = vld [vmem:[%s960 + $0x38] sm:$0x1]
        %v3306 = vsel %vm3262, %v3000, %v3305
        %3307 = vst [vmem:[%s960 + $0x38] sm:$0x1] %v3306
        %v3308 = vld [vmem:[%s960 + $0x3c] sm:$0x1]
        %v3309 = vsel %vm3262, %v3004, %v3308
        %3310 = vst [vmem:[%s960 + $0x3c] sm:$0x1] %v3309
        %v3311 = vld [vmem:[%s960 + $0x40] sm:$0x1]
        %v3312 = vsel %vm3262, %v3008, %v3311
        %3313 = vst [vmem:[%s960 + $0x40] sm:$0x1] %v3312
        %v3314 = vld [vmem:[%s960 + $0x44] sm:$0x1]
        %v3315 = vsel %vm3262, %v3012, %v3314
        %3316 = vst [vmem:[%s960 + $0x44] sm:$0x1] %v3315
        %v3317 = vld [vmem:[%s960 + $0x48] sm:$0x1]
        %v3318 = vsel %vm3262, %v3016, %v3317
        %3319 = vst [vmem:[%s960 + $0x48] sm:$0x1] %v3318
        %v3320 = vld [vmem:[%s960 + $0x4c] sm:$0x1]
        %v3321 = vsel %vm3262, %v3020, %v3320
        %3322 = vst [vmem:[%s960 + $0x4c] sm:$0x1] %v3321
        %v3323 = vld [vmem:[%s960 + $0x50] sm:$0x1]
        %v3324 = vsel %vm3262, %v3024, %v3323
        %3325 = vst [vmem:[%s960 + $0x50] sm:$0x1] %v3324
        %v3326 = vld [vmem:[%s960 + $0x54] sm:$0x1]
        %v3327 = vsel %vm3262, %v3028, %v3326
        %3328 = vst [vmem:[%s960 + $0x54] sm:$0x1] %v3327
        %v3329 = vld [vmem:[%s960 + $0x58] sm:$0x1]
        %v3330 = vsel %vm3262, %v3032, %v3329
        %3331 = vst [vmem:[%s960 + $0x58] sm:$0x1] %v3330
        %v3332 = vld [vmem:[%s960 + $0x5c] sm:$0x1]
        %v3333 = vsel %vm3262, %v3036, %v3332
        %3334 = vst [vmem:[%s960 + $0x5c] sm:$0x1] %v3333
        %v3335 = vld [vmem:[%s960 + $0x60] sm:$0x1]
        %v3336 = vsel %vm3262, %v3040, %v3335
        %3337 = vst [vmem:[%s960 + $0x60] sm:$0x1] %v3336
        %v3338 = vld [vmem:[%s960 + $0x64] sm:$0x1]
        %v3339 = vsel %vm3262, %v3044, %v3338
        %3340 = vst [vmem:[%s960 + $0x64] sm:$0x1] %v3339
        %v3341 = vld [vmem:[%s960 + $0x68] sm:$0x1]
        %v3342 = vsel %vm3262, %v3048, %v3341
        %3343 = vst [vmem:[%s960 + $0x68] sm:$0x1] %v3342
        %v3344 = vld [vmem:[%s960 + $0x6c] sm:$0x1]
        %v3345 = vsel %vm3262, %v3052, %v3344
        %3346 = vst [vmem:[%s960 + $0x6c] sm:$0x1] %v3345
        %v3347 = vld [vmem:[%s960 + $0x70] sm:$0x1]
        %v3348 = vsel %vm3262, %v3056, %v3347
        %3349 = vst [vmem:[%s960 + $0x70] sm:$0x1] %v3348
        %v3350 = vld [vmem:[%s960 + $0x74] sm:$0x1]
        %v3351 = vsel %vm3262, %v3060, %v3350
        %3352 = vst [vmem:[%s960 + $0x74] sm:$0x1] %v3351
        %v3353 = vld [vmem:[%s960 + $0x78] sm:$0x1]
        %v3354 = vsel %vm3262, %v3064, %v3353
        %3355 = vst [vmem:[%s960 + $0x78] sm:$0x1] %v3354
        %v3356 = vld [vmem:[%s960 + $0x7c] sm:$0x1]
        %v3357 = vsel %vm3262, %v3068, %v3356
        %3358 = vst [vmem:[%s960 + $0x7c] sm:$0x1] %v3357
        %v3359 = vld [vmem:[%s960 + $0x80] sm:$0x1]
        %v3360 = vsel %vm3262, %v3072, %v3359
        %3361 = vst [vmem:[%s960 + $0x80] sm:$0x1] %v3360
        %v3362 = vld [vmem:[%s960 + $0x84] sm:$0x1]
        %v3363 = vsel %vm3262, %v3076, %v3362
        %3364 = vst [vmem:[%s960 + $0x84] sm:$0x1] %v3363
        %v3365 = vld [vmem:[%s960 + $0x88] sm:$0x1]
        %v3366 = vsel %vm3262, %v3080, %v3365
        %3367 = vst [vmem:[%s960 + $0x88] sm:$0x1] %v3366
        %v3368 = vld [vmem:[%s960 + $0x8c] sm:$0x1]
        %v3369 = vsel %vm3262, %v3084, %v3368
        %3370 = vst [vmem:[%s960 + $0x8c] sm:$0x1] %v3369
        %v3371 = vld [vmem:[%s960 + $0x90] sm:$0x1]
        %v3372 = vsel %vm3262, %v3088, %v3371
        %3373 = vst [vmem:[%s960 + $0x90] sm:$0x1] %v3372
        %v3374 = vld [vmem:[%s960 + $0x94] sm:$0x1]
        %v3375 = vsel %vm3262, %v3092, %v3374
        %3376 = vst [vmem:[%s960 + $0x94] sm:$0x1] %v3375
        %v3377 = vld [vmem:[%s960 + $0x98] sm:$0x1]
        %v3378 = vsel %vm3262, %v3096, %v3377
        %3379 = vst [vmem:[%s960 + $0x98] sm:$0x1] %v3378
        %v3380 = vld [vmem:[%s960 + $0x9c] sm:$0x1]
        %v3381 = vsel %vm3262, %v3100, %v3380
        %3382 = vst [vmem:[%s960 + $0x9c] sm:$0x1] %v3381
        %v3383 = vld [vmem:[%s960 + $0xa0] sm:$0x1]
        %v3384 = vsel %vm3262, %v3104, %v3383
        %3385 = vst [vmem:[%s960 + $0xa0] sm:$0x1] %v3384
        %v3386 = vld [vmem:[%s960 + $0xa4] sm:$0x1]
        %v3387 = vsel %vm3262, %v3108, %v3386
        %3388 = vst [vmem:[%s960 + $0xa4] sm:$0x1] %v3387
        %v3389 = vld [vmem:[%s960 + $0xa8] sm:$0x1]
        %v3390 = vsel %vm3262, %v3112, %v3389
        %3391 = vst [vmem:[%s960 + $0xa8] sm:$0x1] %v3390
        %v3392 = vld [vmem:[%s960 + $0xac] sm:$0x1]
        %v3393 = vsel %vm3262, %v3116, %v3392
        %3394 = vst [vmem:[%s960 + $0xac] sm:$0x1] %v3393
        %v3395 = vld [vmem:[%s960 + $0xb0] sm:$0x1]
        %v3396 = vsel %vm3262, %v3120, %v3395
        %3397 = vst [vmem:[%s960 + $0xb0] sm:$0x1] %v3396
        %v3398 = vld [vmem:[%s960 + $0xb4] sm:$0x1]
        %v3399 = vsel %vm3262, %v3124, %v3398
        %3400 = vst [vmem:[%s960 + $0xb4] sm:$0x1] %v3399
        %v3401 = vld [vmem:[%s960 + $0xb8] sm:$0x1]
        %v3402 = vsel %vm3262, %v3128, %v3401
        %3403 = vst [vmem:[%s960 + $0xb8] sm:$0x1] %v3402
        %v3404 = vld [vmem:[%s960 + $0xbc] sm:$0x1]
        %v3405 = vsel %vm3262, %v3132, %v3404
        %3406 = vst [vmem:[%s960 + $0xbc] sm:$0x1] %v3405
        %v3407 = vld [vmem:[%s960 + $0xc0] sm:$0x1]
        %v3408 = vsel %vm3262, %v3136, %v3407
        %3409 = vst [vmem:[%s960 + $0xc0] sm:$0x1] %v3408
        %v3410 = vld [vmem:[%s960 + $0xc4] sm:$0x1]
        %v3411 = vsel %vm3262, %v3140, %v3410
        %3412 = vst [vmem:[%s960 + $0xc4] sm:$0x1] %v3411
        %v3413 = vld [vmem:[%s960 + $0xc8] sm:$0x1]
        %v3414 = vsel %vm3262, %v3144, %v3413
        %3415 = vst [vmem:[%s960 + $0xc8] sm:$0x1] %v3414
        %v3416 = vld [vmem:[%s960 + $0xcc] sm:$0x1]
        %v3417 = vsel %vm3262, %v3148, %v3416
        %3418 = vst [vmem:[%s960 + $0xcc] sm:$0x1] %v3417
        %v3419 = vld [vmem:[%s960 + $0xd0] sm:$0x1]
        %v3420 = vsel %vm3262, %v3152, %v3419
        %3421 = vst [vmem:[%s960 + $0xd0] sm:$0x1] %v3420
        %v3422 = vld [vmem:[%s960 + $0xd4] sm:$0x1]
        %v3423 = vsel %vm3262, %v3156, %v3422
        %3424 = vst [vmem:[%s960 + $0xd4] sm:$0x1] %v3423
        %v3425 = vld [vmem:[%s960 + $0xd8] sm:$0x1]
        %v3426 = vsel %vm3262, %v3160, %v3425
        %3427 = vst [vmem:[%s960 + $0xd8] sm:$0x1] %v3426
        %v3428 = vld [vmem:[%s960 + $0xdc] sm:$0x1]
        %v3429 = vsel %vm3262, %v3164, %v3428
        %3430 = vst [vmem:[%s960 + $0xdc] sm:$0x1] %v3429
        %v3431 = vld [vmem:[%s960 + $0xe0] sm:$0x1]
        %v3432 = vsel %vm3262, %v3168, %v3431
        %3433 = vst [vmem:[%s960 + $0xe0] sm:$0x1] %v3432
        %v3434 = vld [vmem:[%s960 + $0xe4] sm:$0x1]
        %v3435 = vsel %vm3262, %v3172, %v3434
        %3436 = vst [vmem:[%s960 + $0xe4] sm:$0x1] %v3435
        %v3437 = vld [vmem:[%s960 + $0xe8] sm:$0x1]
        %v3438 = vsel %vm3262, %v3176, %v3437
        %3439 = vst [vmem:[%s960 + $0xe8] sm:$0x1] %v3438
        %v3440 = vld [vmem:[%s960 + $0xec] sm:$0x1]
        %v3441 = vsel %vm3262, %v3180, %v3440
        %3442 = vst [vmem:[%s960 + $0xec] sm:$0x1] %v3441
        %v3443 = vld [vmem:[%s960 + $0xf0] sm:$0x1]
        %v3444 = vsel %vm3262, %v3184, %v3443
        %3445 = vst [vmem:[%s960 + $0xf0] sm:$0x1] %v3444
        %v3446 = vld [vmem:[%s960 + $0xf4] sm:$0x1]
        %v3447 = vsel %vm3262, %v3188, %v3446
        %3448 = vst [vmem:[%s960 + $0xf4] sm:$0x1] %v3447
        %v3449 = vld [vmem:[%s960 + $0xf8] sm:$0x1]
        %v3450 = vsel %vm3262, %v3192, %v3449
        %3451 = vst [vmem:[%s960 + $0xf8] sm:$0x1] %v3450
        %v3452 = vld [vmem:[%s960 + $0xfc] sm:$0x1]
        %v3453 = vsel %vm3262, %v3196, %v3452
        %3454 = vst [vmem:[%s960 + $0xfc] sm:$0x1] %v3453
        %3455 = vadd.xlane.f32.xlu0 %v2661
        %v3456 = vpop.xlane.xlu0 %3455
        %3457 = vadd.xlane.f32.xlu0 %v2662
        %v3458 = vpop.xlane.xlu0 %3457
        %3459 = vadd.xlane.f32.xlu0 %v2663
        %v3460 = vpop.xlane.xlu0 %3459
        %3461 = vadd.xlane.f32.xlu0 %v2664
        %v3462 = vpop.xlane.xlu0 %3461
        %3463 = vadd.xlane.f32.xlu0 %v2665
        %v3464 = vpop.xlane.xlu0 %3463
        %3465 = vadd.xlane.f32.xlu0 %v2666
        %v3466 = vpop.xlane.xlu0 %3465
        %3467 = vadd.xlane.f32.xlu0 %v2667
        %v3468 = vpop.xlane.xlu0 %3467
        %3469 = vadd.xlane.f32.xlu0 %v2668
        %v3470 = vpop.xlane.xlu0 %3469
        %v3471 = vadd.f32 %v3456, 1e-06
        %v3472 = vadd.f32 %v3458, 1e-06
        %v3473 = vadd.f32 %v3460, 1e-06
        %v3474 = vadd.f32 %v3462, 1e-06
        %v3475 = vadd.f32 %v3464, 1e-06
        %v3476 = vadd.f32 %v3466, 1e-06
        %v3477 = vadd.f32 %v3468, 1e-06
        %v3478 = vadd.f32 %v3470, 1e-06
        %v3479 = vrsqrt.pop %v3471
        %v3480 = vmul.f32 %v3479, %v3471
        %v3481 = vmul.f32 %v3480, %v3479
        %v3482 = vmul.f32 0.5, %v3481
        %v3483 = vsub.f32 1.5, %v3482
        %v3484 = vmul.f32 %v3479, %v3483
        %vm3485 = vweird.f32 %v3471
        %vm3486 = vweird.f32 %v3479
        %vm3487 = vmor %vm3485, %vm3486
        %v3488 = vsel %vm3487, %v3479, %v3484
        %v3489 = vrsqrt.pop %v3472
        %v3490 = vmul.f32 %v3489, %v3472
        %v3491 = vmul.f32 %v3490, %v3489
        %v3492 = vmul.f32 0.5, %v3491
        %v3493 = vsub.f32 1.5, %v3492
        %v3494 = vmul.f32 %v3489, %v3493
        %vm3495 = vweird.f32 %v3472
        %vm3496 = vweird.f32 %v3489
        %vm3497 = vmor %vm3495, %vm3496
        %v3498 = vsel %vm3497, %v3489, %v3494
        %v3499 = vrsqrt.pop %v3473
        %v3500 = vmul.f32 %v3499, %v3473
        %v3501 = vmul.f32 %v3500, %v3499
        %v3502 = vmul.f32 0.5, %v3501
        %v3503 = vsub.f32 1.5, %v3502
        %v3504 = vmul.f32 %v3499, %v3503
        %vm3505 = vweird.f32 %v3473
        %vm3506 = vweird.f32 %v3499
        %vm3507 = vmor %vm3505, %vm3506
        %v3508 = vsel %vm3507, %v3499, %v3504
        %v3509 = vrsqrt.pop %v3474
        %v3510 = vmul.f32 %v3509, %v3474
        %v3511 = vmul.f32 %v3510, %v3509
        %v3512 = vmul.f32 0.5, %v3511
        %v3513 = vsub.f32 1.5, %v3512
        %v3514 = vmul.f32 %v3509, %v3513
        %vm3515 = vweird.f32 %v3474
        %vm3516 = vweird.f32 %v3509
        %vm3517 = vmor %vm3515, %vm3516
        %v3518 = vsel %vm3517, %v3509, %v3514
        %v3519 = vrsqrt.pop %v3475
        %v3520 = vmul.f32 %v3519, %v3475
        %v3521 = vmul.f32 %v3520, %v3519
        %v3522 = vmul.f32 0.5, %v3521
        %v3523 = vsub.f32 1.5, %v3522
        %v3524 = vmul.f32 %v3519, %v3523
        %vm3525 = vweird.f32 %v3475
        %vm3526 = vweird.f32 %v3519
        %vm3527 = vmor %vm3525, %vm3526
        %v3528 = vsel %vm3527, %v3519, %v3524
        %v3529 = vrsqrt.pop %v3476
        %v3530 = vmul.f32 %v3529, %v3476
        %v3531 = vmul.f32 %v3530, %v3529
        %v3532 = vmul.f32 0.5, %v3531
        %v3533 = vsub.f32 1.5, %v3532
        %v3534 = vmul.f32 %v3529, %v3533
        %vm3535 = vweird.f32 %v3476
        %vm3536 = vweird.f32 %v3529
        %vm3537 = vmor %vm3535, %vm3536
        %v3538 = vsel %vm3537, %v3529, %v3534
        %v3539 = vrsqrt.pop %v3477
        %v3540 = vmul.f32 %v3539, %v3477
        %v3541 = vmul.f32 %v3540, %v3539
        %v3542 = vmul.f32 0.5, %v3541
        %v3543 = vsub.f32 1.5, %v3542
        %v3544 = vmul.f32 %v3539, %v3543
        %vm3545 = vweird.f32 %v3477
        %vm3546 = vweird.f32 %v3539
        %vm3547 = vmor %vm3545, %vm3546
        %v3548 = vsel %vm3547, %v3539, %v3544
        %v3549 = vrsqrt.pop %v3478
        %v3550 = vmul.f32 %v3549, %v3478
        %v3551 = vmul.f32 %v3550, %v3549
        %v3552 = vmul.f32 0.5, %v3551
        %v3553 = vsub.f32 1.5, %v3552
        %v3554 = vmul.f32 %v3549, %v3553
        %vm3555 = vweird.f32 %v3478
        %vm3556 = vweird.f32 %v3549
        %vm3557 = vmor %vm3555, %vm3556
        %v3558 = vsel %vm3557, %v3549, %v3554
        %v3559 = vmul.f32 %v3488, 4.0
        %v3560 = vmul.f32 %v3498, 4.0
        %v3561 = vmul.f32 %v3508, 4.0
        %v3562 = vmul.f32 %v3518, 4.0
        %v3563 = vmul.f32 %v3528, 4.0
        %v3564 = vmul.f32 %v3538, 4.0
        %v3565 = vmul.f32 %v3548, 4.0
        %v3566 = vmul.f32 %v3558, 4.0
        %v3567 = vmul.f32 %v2661, %v3559
        %v3568 = vmul.f32 %v2662, %v3560
        %v3569 = vmul.f32 %v2663, %v3561
        %v3570 = vmul.f32 %v2664, %v3562
        %v3571 = vmul.f32 %v2665, %v3563
        %v3572 = vmul.f32 %v2666, %v3564
        %v3573 = vmul.f32 %v2667, %v3565
        %v3574 = vmul.f32 %v2668, %v3566
        %s3575 = scalar_lea.vmem %s906, 32 [#allocation3]
        %v3576 = vld [vmem:[%s3575] sm:$0xf]
        %v3577 = vld [vmem:[%s3575 + $0x4] sm:$0xf]
        %v3578 = vld [vmem:[%s3575 + $0x8] sm:$0xf]
        %v3579 = vld [vmem:[%s3575 + $0xc] sm:$0xf]
        %v3580 = vld [vmem:[%s3575 + $0x10] sm:$0xf]
        %v3581 = vld [vmem:[%s3575 + $0x14] sm:$0xf]
        %v3582 = vld [vmem:[%s3575 + $0x18] sm:$0xf]
        %v3583 = vld [vmem:[%s3575 + $0x1c] sm:$0xf]
        %v3584 = vunpack.c.l.bf16 %v3576
        %v3585 = vunpack.c.l.bf16 %v3577
        %v3586 = vunpack.c.l.bf16 %v3578
        %v3587 = vunpack.c.l.bf16 %v3579
        %v3588 = vunpack.c.l.bf16 %v3580
        %v3589 = vunpack.c.l.bf16 %v3581
        %v3590 = vunpack.c.l.bf16 %v3582
        %v3591 = vunpack.c.l.bf16 %v3583
        %v3592 = vadd.f32 %v3567, %v3584
        %v3593 = vadd.f32 %v3568, %v3585
        %v3594 = vadd.f32 %v3569, %v3586
        %v3595 = vadd.f32 %v3570, %v3587
        %v3596 = vadd.f32 %v3571, %v3588
        %v3597 = vadd.f32 %v3572, %v3589
        %v3598 = vadd.f32 %v3573, %v3590
        %v3599 = vadd.f32 %v3574, %v3591
        %v3600 = vpack.c.bf16 %v3593, %v3592
        %v3601 = vpack.c.bf16 %v3595, %v3594
        %v3602 = vpack.c.bf16 %v3597, %v3596
        %v3603 = vpack.c.bf16 %v3599, %v3598
        %3604 = vmatpush.bf16.msra.mxu0 %v2535
        %3605 = vmatpush.bf16.msra.mxu0 %v2534
        %3606 = vmatpush.bf16.msra.mxu0 %v2533
        %3607 = vmatpush.bf16.msra.mxu0 %v2532
        %3608 = vmatpush.bf16.msra.mxu0 %v2531
        %3609 = vmatpush.bf16.msra.mxu0 %v2530
        %3610 = vmatpush.bf16.msra.mxu0 %v2529
        %3611 = vmatpush.bf16.msra.mxu0 %v2528
        %3612 = vmatmul.bf16.gmra.mxu0 %v3600
        %v3613 = vpop.f32.mrf.mxu0
        %v3614 = vadd.f32 %v1005, %v3613
        %v3615 = vpop.f32.mrf.mxu0
        %v3616 = vadd.f32 %v1005, %v3615
        %3617 = vmatmul.bf16.gmra.mxu0 %v3601
        %v3618 = vpop.f32.mrf.mxu0
        %v3619 = vadd.f32 %v1005, %v3618
        %v3620 = vpop.f32.mrf.mxu0
        %v3621 = vadd.f32 %v1005, %v3620
        %3622 = vmatmul.bf16.gmra.mxu0 %v3602
        %v3623 = vpop.f32.mrf.mxu0
        %v3624 = vadd.f32 %v1005, %v3623
        %v3625 = vpop.f32.mrf.mxu0
        %v3626 = vadd.f32 %v1005, %v3625
        %3627 = vmatmul.bf16.gmra.mxu0 %v3603
        %v3628 = vpop.f32.mrf.mxu0
        %v3629 = vadd.f32 %v1005, %v3628
        %v3630 = vpop.f32.mrf.mxu0
        %v3631 = vadd.f32 %v1005, %v3630
        %3632 = vdwg.mxu0
        %v3633 = vmul.f32 %v2613, 0.9
        %v3634 = vmul.f32 %v2614, 0.9
        %v3635 = vmul.f32 %v2615, 0.9
        %v3636 = vmul.f32 %v2616, 0.9
        %v3637 = vmul.f32 %v2617, 0.9
        %v3638 = vmul.f32 %v2618, 0.9
        %v3639 = vmul.f32 %v2619, 0.9
        %v3640 = vmul.f32 %v2620, 0.9
        %v3641 = vadd.f32 %v3633, %v3614
        %v3642 = vadd.f32 %v3634, %v3616
        %v3643 = vadd.f32 %v3635, %v3619
        %v3644 = vadd.f32 %v3636, %v3621
        %v3645 = vadd.f32 %v3637, %v3624
        %v3646 = vadd.f32 %v3638, %v3626
        %v3647 = vadd.f32 %v3639, %v3629
        %v3648 = vadd.f32 %v3640, %v3631
        %vm3649 = vcmp.ge.f32.partialorder %v3641, 0.5
        %vm3650 = vcmp.ge.f32.partialorder %v3642, 0.5
        %vm3651 = vcmp.ge.f32.partialorder %v3643, 0.5
        %vm3652 = vcmp.ge.f32.partialorder %v3644, 0.5
        %vm3653 = vcmp.ge.f32.partialorder %v3645, 0.5
        %vm3654 = vcmp.ge.f32.partialorder %v3646, 0.5
        %vm3655 = vcmp.ge.f32.partialorder %v3647, 0.5
        %vm3656 = vcmp.ge.f32.partialorder %v3648, 0.5
        %v3657 = vsel %vm3649, 1, 0
        %v3658 = vsel %vm3650, 1, 0
        %v3659 = vsel %vm3651, 1, 0
        %v3660 = vsel %vm3652, 1, 0
        %v3661 = vsel %vm3653, 1, 0
        %v3662 = vsel %vm3654, 1, 0
        %v3663 = vsel %vm3655, 1, 0
        %v3664 = vsel %vm3656, 1, 0
        %v3665 = vcvt.s32.f32 %v3657
        %v3666 = vcvt.s32.f32 %v3658
        %v3667 = vcvt.s32.f32 %v3659
        %v3668 = vcvt.s32.f32 %v3660
        %v3669 = vcvt.s32.f32 %v3661
        %v3670 = vcvt.s32.f32 %v3662
        %v3671 = vcvt.s32.f32 %v3663
        %v3672 = vcvt.s32.f32 %v3664
        %v3673 = vmul.f32 %v3665, 0.5
        %v3674 = vmul.f32 %v3666, 0.5
        %v3675 = vmul.f32 %v3667, 0.5
        %v3676 = vmul.f32 %v3668, 0.5
        %v3677 = vmul.f32 %v3669, 0.5
        %v3678 = vmul.f32 %v3670, 0.5
        %v3679 = vmul.f32 %v3671, 0.5
        %v3680 = vmul.f32 %v3672, 0.5
        %v3681 = vsub.f32 %v3641, %v3673
        %v3682 = vsub.f32 %v3642, %v3674
        %v3683 = vsub.f32 %v3643, %v3675
        %v3684 = vsub.f32 %v3644, %v3676
        %v3685 = vsub.f32 %v3645, %v3677
        %v3686 = vsub.f32 %v3646, %v3678
        %v3687 = vsub.f32 %v3647, %v3679
        %v3688 = vsub.f32 %v3648, %v3680
        %v3689 = vadd.f32 %v2621, %v3665
        %v3690 = vadd.f32 %v2622, %v3666
        %v3691 = vadd.f32 %v2623, %v3667
        %v3692 = vadd.f32 %v2624, %v3668
        %v3693 = vadd.f32 %v2625, %v3669
        %v3694 = vadd.f32 %v2626, %v3670
        %v3695 = vadd.f32 %v2627, %v3671
        %v3696 = vadd.f32 %v2628, %v3672
        %v3697 = vmul.f32 %v2677, 0.9
        %v3698 = vmul.f32 %v2678, 0.9
        %v3699 = vmul.f32 %v2679, 0.9
        %v3700 = vmul.f32 %v2680, 0.9
        %v3701 = vmul.f32 %v2681, 0.9
        %v3702 = vmul.f32 %v2682, 0.9
        %v3703 = vmul.f32 %v2683, 0.9
        %v3704 = vmul.f32 %v2684, 0.9
        %v3705 = vadd.f32 %v3697, %v1406
        %v3706 = vadd.f32 %v3698, %v1408
        %v3707 = vadd.f32 %v3699, %v1411
        %v3708 = vadd.f32 %v3700, %v1413
        %v3709 = vadd.f32 %v3701, %v1416
        %v3710 = vadd.f32 %v3702, %v1418
        %v3711 = vadd.f32 %v3703, %v1421
        %v3712 = vadd.f32 %v3704, %v1423
        %vm3713 = vcmp.ge.f32.partialorder %v3705, 0.5
        %vm3714 = vcmp.ge.f32.partialorder %v3706, 0.5
        %vm3715 = vcmp.ge.f32.partialorder %v3707, 0.5
        %vm3716 = vcmp.ge.f32.partialorder %v3708, 0.5
        %vm3717 = vcmp.ge.f32.partialorder %v3709, 0.5
        %vm3718 = vcmp.ge.f32.partialorder %v3710, 0.5
        %vm3719 = vcmp.ge.f32.partialorder %v3711, 0.5
        %vm3720 = vcmp.ge.f32.partialorder %v3712, 0.5
        %v3721 = vsel %vm3713, 1, 0
        %v3722 = vsel %vm3714, 1, 0
        %v3723 = vsel %vm3715, 1, 0
        %v3724 = vsel %vm3716, 1, 0
        %v3725 = vsel %vm3717, 1, 0
        %v3726 = vsel %vm3718, 1, 0
        %v3727 = vsel %vm3719, 1, 0
        %v3728 = vsel %vm3720, 1, 0
        %v3729 = vcvt.s32.f32 %v3721
        %v3730 = vcvt.s32.f32 %v3722
        %v3731 = vcvt.s32.f32 %v3723
        %v3732 = vcvt.s32.f32 %v3724
        %v3733 = vcvt.s32.f32 %v3725
        %v3734 = vcvt.s32.f32 %v3726
        %v3735 = vcvt.s32.f32 %v3727
        %v3736 = vcvt.s32.f32 %v3728
        %v3737 = vmul.f32 %v3729, 0.5
        %v3738 = vmul.f32 %v3730, 0.5
        %v3739 = vmul.f32 %v3731, 0.5
        %v3740 = vmul.f32 %v3732, 0.5
        %v3741 = vmul.f32 %v3733, 0.5
        %v3742 = vmul.f32 %v3734, 0.5
        %v3743 = vmul.f32 %v3735, 0.5
        %v3744 = vmul.f32 %v3736, 0.5
        %v3745 = vsub.f32 %v3705, %v3737
        %v3746 = vsub.f32 %v3706, %v3738
        %v3747 = vsub.f32 %v3707, %v3739
        %v3748 = vsub.f32 %v3708, %v3740
        %v3749 = vsub.f32 %v3709, %v3741
        %v3750 = vsub.f32 %v3710, %v3742
        %v3751 = vsub.f32 %v3711, %v3743
        %v3752 = vsub.f32 %v3712, %v3744
        %v3753 = vpack.c.bf16 %v3729, %v3729
        %v3754 = vpack.c.bf16 %v3730, %v3730
        %v3755 = vpack.c.bf16 %v3731, %v3731
        %v3756 = vpack.c.bf16 %v3732, %v3732
        %v3757 = vpack.c.bf16 %v3733, %v3733
        %v3758 = vpack.c.bf16 %v3734, %v3734
        %v3759 = vpack.c.bf16 %v3735, %v3735
        %v3760 = vpack.c.bf16 %v3736, %v3736
        %v3769 = vrot.slane %v3753, 3
        %v3770 = vrot.slane %v3754, 3
        %v3771 = vrot.slane %v3755, 3
        %v3772 = vrot.slane %v3756, 3
        %v3773 = vrot.slane %v3757, 3
        %v3774 = vrot.slane %v3758, 3
        %v3775 = vrot.slane %v3759, 3
        %v3776 = vrot.slane %v3760, 3
        %v3779 = vsel %vm1597, %v3753, %v3769
        %v3781 = vsel %vm1602, %v3753, %v3769
        %v3783 = vrot.slane %v3781, 1
        %v3784 = vsel %vm1606, %v3753, %v3769
        %v3786 = vrot.slane %v3784, 2
        %v3787 = vsel %vm1610, %v3753, %v3769
        %v3789 = vrot.slane %v3787, 3
        %v3792 = vsel %vm1597, %v3754, %v3770
        %v3794 = vsel %vm1602, %v3754, %v3770
        %v3796 = vrot.slane %v3794, 1
        %v3797 = vsel %vm1606, %v3754, %v3770
        %v3799 = vrot.slane %v3797, 2
        %v3800 = vsel %vm1610, %v3754, %v3770
        %v3802 = vrot.slane %v3800, 3
        %v3805 = vsel %vm1597, %v3755, %v3771
        %v3807 = vsel %vm1602, %v3755, %v3771
        %v3809 = vrot.slane %v3807, 1
        %v3810 = vsel %vm1606, %v3755, %v3771
        %v3812 = vrot.slane %v3810, 2
        %v3813 = vsel %vm1610, %v3755, %v3771
        %v3815 = vrot.slane %v3813, 3
        %v3818 = vsel %vm1597, %v3756, %v3772
        %v3820 = vsel %vm1602, %v3756, %v3772
        %v3822 = vrot.slane %v3820, 1
        %v3823 = vsel %vm1606, %v3756, %v3772
        %v3825 = vrot.slane %v3823, 2
        %v3826 = vsel %vm1610, %v3756, %v3772
        %v3828 = vrot.slane %v3826, 3
        %v3831 = vsel %vm1597, %v3757, %v3773
        %v3833 = vsel %vm1602, %v3757, %v3773
        %v3835 = vrot.slane %v3833, 1
        %v3836 = vsel %vm1606, %v3757, %v3773
        %v3838 = vrot.slane %v3836, 2
        %v3839 = vsel %vm1610, %v3757, %v3773
        %v3841 = vrot.slane %v3839, 3
        %v3844 = vsel %vm1597, %v3758, %v3774
        %v3846 = vsel %vm1602, %v3758, %v3774
        %v3848 = vrot.slane %v3846, 1
        %v3849 = vsel %vm1606, %v3758, %v3774
        %v3851 = vrot.slane %v3849, 2
        %v3852 = vsel %vm1610, %v3758, %v3774
        %v3854 = vrot.slane %v3852, 3
        %v3857 = vsel %vm1597, %v3759, %v3775
        %v3859 = vsel %vm1602, %v3759, %v3775
        %v3861 = vrot.slane %v3859, 1
        %v3862 = vsel %vm1606, %v3759, %v3775
        %v3864 = vrot.slane %v3862, 2
        %v3865 = vsel %vm1610, %v3759, %v3775
        %v3867 = vrot.slane %v3865, 3
        %v3870 = vsel %vm1597, %v3760, %v3776
        %v3872 = vsel %vm1602, %v3760, %v3776
        %v3874 = vrot.slane %v3872, 1
        %v3875 = vsel %vm1606, %v3760, %v3776
        %v3877 = vrot.slane %v3875, 2
        %v3878 = vsel %vm1610, %v3760, %v3776
        %v3880 = vrot.slane %v3878, 3
        %v3881 = vunpack.i.l.s16 %v3779
        %v3882 = vunpack.i.h.s16 %v3779
        %v3883 = vunpack.i.l.s16 %v3783
        %v3884 = vunpack.i.h.s16 %v3783
        %v3885 = vunpack.i.l.s16 %v3786
        %v3886 = vunpack.i.h.s16 %v3786
        %v3887 = vunpack.i.l.s16 %v3789
        %v3888 = vunpack.i.h.s16 %v3789
        %v3889 = vunpack.i.l.s16 %v3792
        %v3890 = vunpack.i.h.s16 %v3792
        %v3891 = vunpack.i.l.s16 %v3796
        %v3892 = vunpack.i.h.s16 %v3796
        %v3893 = vunpack.i.l.s16 %v3799
        %v3894 = vunpack.i.h.s16 %v3799
        %v3895 = vunpack.i.l.s16 %v3802
        %v3896 = vunpack.i.h.s16 %v3802
        %v3897 = vunpack.i.l.s16 %v3805
        %v3898 = vunpack.i.h.s16 %v3805
        %v3899 = vunpack.i.l.s16 %v3809
        %v3900 = vunpack.i.h.s16 %v3809
        %v3901 = vunpack.i.l.s16 %v3812
        %v3902 = vunpack.i.h.s16 %v3812
        %v3903 = vunpack.i.l.s16 %v3815
        %v3904 = vunpack.i.h.s16 %v3815
        %v3905 = vunpack.i.l.s16 %v3818
        %v3906 = vunpack.i.h.s16 %v3818
        %v3907 = vunpack.i.l.s16 %v3822
        %v3908 = vunpack.i.h.s16 %v3822
        %v3909 = vunpack.i.l.s16 %v3825
        %v3910 = vunpack.i.h.s16 %v3825
        %v3911 = vunpack.i.l.s16 %v3828
        %v3912 = vunpack.i.h.s16 %v3828
        %v3913 = vunpack.i.l.s16 %v3831
        %v3914 = vunpack.i.h.s16 %v3831
        %v3915 = vunpack.i.l.s16 %v3835
        %v3916 = vunpack.i.h.s16 %v3835
        %v3917 = vunpack.i.l.s16 %v3838
        %v3918 = vunpack.i.h.s16 %v3838
        %v3919 = vunpack.i.l.s16 %v3841
        %v3920 = vunpack.i.h.s16 %v3841
        %v3921 = vunpack.i.l.s16 %v3844
        %v3922 = vunpack.i.h.s16 %v3844
        %v3923 = vunpack.i.l.s16 %v3848
        %v3924 = vunpack.i.h.s16 %v3848
        %v3925 = vunpack.i.l.s16 %v3851
        %v3926 = vunpack.i.h.s16 %v3851
        %v3927 = vunpack.i.l.s16 %v3854
        %v3928 = vunpack.i.h.s16 %v3854
        %v3929 = vunpack.i.l.s16 %v3857
        %v3930 = vunpack.i.h.s16 %v3857
        %v3931 = vunpack.i.l.s16 %v3861
        %v3932 = vunpack.i.h.s16 %v3861
        %v3933 = vunpack.i.l.s16 %v3864
        %v3934 = vunpack.i.h.s16 %v3864
        %v3935 = vunpack.i.l.s16 %v3867
        %v3936 = vunpack.i.h.s16 %v3867
        %v3937 = vunpack.i.l.s16 %v3870
        %v3938 = vunpack.i.h.s16 %v3870
        %v3939 = vunpack.i.l.s16 %v3874
        %v3940 = vunpack.i.h.s16 %v3874
        %v3941 = vunpack.i.l.s16 %v3877
        %v3942 = vunpack.i.h.s16 %v3877
        %v3943 = vunpack.i.l.s16 %v3880
        %v3944 = vunpack.i.h.s16 %v3880
        %v3945 = vpack.i.b16 %v3881, %v3881
        %v3946 = vpack.i.b16 %v3882, %v3882
        %v3947 = vpack.i.b16 %v3883, %v3883
        %v3948 = vpack.i.b16 %v3884, %v3884
        %v3949 = vpack.i.b16 %v3885, %v3885
        %v3950 = vpack.i.b16 %v3886, %v3886
        %v3951 = vpack.i.b16 %v3887, %v3887
        %v3952 = vpack.i.b16 %v3888, %v3888
        %v3953 = vpack.i.b16 %v3889, %v3889
        %v3954 = vpack.i.b16 %v3890, %v3890
        %v3955 = vpack.i.b16 %v3891, %v3891
        %v3956 = vpack.i.b16 %v3892, %v3892
        %v3957 = vpack.i.b16 %v3893, %v3893
        %v3958 = vpack.i.b16 %v3894, %v3894
        %v3959 = vpack.i.b16 %v3895, %v3895
        %v3960 = vpack.i.b16 %v3896, %v3896
        %v3961 = vpack.i.b16 %v3897, %v3897
        %v3962 = vpack.i.b16 %v3898, %v3898
        %v3963 = vpack.i.b16 %v3899, %v3899
        %v3964 = vpack.i.b16 %v3900, %v3900
        %v3965 = vpack.i.b16 %v3901, %v3901
        %v3966 = vpack.i.b16 %v3902, %v3902
        %v3967 = vpack.i.b16 %v3903, %v3903
        %v3968 = vpack.i.b16 %v3904, %v3904
        %v3969 = vpack.i.b16 %v3905, %v3905
        %v3970 = vpack.i.b16 %v3906, %v3906
        %v3971 = vpack.i.b16 %v3907, %v3907
        %v3972 = vpack.i.b16 %v3908, %v3908
        %v3973 = vpack.i.b16 %v3909, %v3909
        %v3974 = vpack.i.b16 %v3910, %v3910
        %v3975 = vpack.i.b16 %v3911, %v3911
        %v3976 = vpack.i.b16 %v3912, %v3912
        %v3977 = vpack.i.b16 %v3913, %v3913
        %v3978 = vpack.i.b16 %v3914, %v3914
        %v3979 = vpack.i.b16 %v3915, %v3915
        %v3980 = vpack.i.b16 %v3916, %v3916
        %v3981 = vpack.i.b16 %v3917, %v3917
        %v3982 = vpack.i.b16 %v3918, %v3918
        %v3983 = vpack.i.b16 %v3919, %v3919
        %v3984 = vpack.i.b16 %v3920, %v3920
        %v3985 = vpack.i.b16 %v3921, %v3921
        %v3986 = vpack.i.b16 %v3922, %v3922
        %v3987 = vpack.i.b16 %v3923, %v3923
        %v3988 = vpack.i.b16 %v3924, %v3924
        %v3989 = vpack.i.b16 %v3925, %v3925
        %v3990 = vpack.i.b16 %v3926, %v3926
        %v3991 = vpack.i.b16 %v3927, %v3927
        %v3992 = vpack.i.b16 %v3928, %v3928
        %v3993 = vpack.i.b16 %v3929, %v3929
        %v3994 = vpack.i.b16 %v3930, %v3930
        %v3995 = vpack.i.b16 %v3931, %v3931
        %v3996 = vpack.i.b16 %v3932, %v3932
        %v3997 = vpack.i.b16 %v3933, %v3933
        %v3998 = vpack.i.b16 %v3934, %v3934
        %v3999 = vpack.i.b16 %v3935, %v3935
        %v4000 = vpack.i.b16 %v3936, %v3936
        %v4001 = vpack.i.b16 %v3937, %v3937
        %v4002 = vpack.i.b16 %v3938, %v3938
        %v4003 = vpack.i.b16 %v3939, %v3939
        %v4004 = vpack.i.b16 %v3940, %v3940
        %v4005 = vpack.i.b16 %v3941, %v3941
        %v4006 = vpack.i.b16 %v3942, %v3942
        %v4007 = vpack.i.b16 %v3943, %v3943
        %v4008 = vpack.i.b16 %v3944, %v3944
        %v4010 = vunpack.c.l.s4 286326784
        %v4011 = vunpack.c.0.s8 %v4010
        %v4012 = vperm.slane %v3945, %v4011
        %v4014 = vunpack.c.l.s4 286326784
        %v4015 = vunpack.c.0.s8 %v4014
        %v4016 = vperm.slane %v3946, %v4015
        %v4018 = vunpack.c.l.s4 286326784
        %v4019 = vunpack.c.0.s8 %v4018
        %v4020 = vperm.slane %v3947, %v4019
        %v4022 = vunpack.c.l.s4 286326784
        %v4023 = vunpack.c.0.s8 %v4022
        %v4024 = vperm.slane %v3948, %v4023
        %v4026 = vunpack.c.l.s4 286326784
        %v4027 = vunpack.c.0.s8 %v4026
        %v4028 = vperm.slane %v3949, %v4027
        %v4030 = vunpack.c.l.s4 286326784
        %v4031 = vunpack.c.0.s8 %v4030
        %v4032 = vperm.slane %v3950, %v4031
        %v4034 = vunpack.c.l.s4 286326784
        %v4035 = vunpack.c.0.s8 %v4034
        %v4036 = vperm.slane %v3951, %v4035
        %v4038 = vunpack.c.l.s4 286326784
        %v4039 = vunpack.c.0.s8 %v4038
        %v4040 = vperm.slane %v3952, %v4039
        %v4042 = vunpack.c.l.s4 286326784
        %v4043 = vunpack.c.0.s8 %v4042
        %v4044 = vperm.slane %v3953, %v4043
        %v4046 = vunpack.c.l.s4 286326784
        %v4047 = vunpack.c.0.s8 %v4046
        %v4048 = vperm.slane %v3954, %v4047
        %v4050 = vunpack.c.l.s4 286326784
        %v4051 = vunpack.c.0.s8 %v4050
        %v4052 = vperm.slane %v3955, %v4051
        %v4054 = vunpack.c.l.s4 286326784
        %v4055 = vunpack.c.0.s8 %v4054
        %v4056 = vperm.slane %v3956, %v4055
        %v4058 = vunpack.c.l.s4 286326784
        %v4059 = vunpack.c.0.s8 %v4058
        %v4060 = vperm.slane %v3957, %v4059
        %v4062 = vunpack.c.l.s4 286326784
        %v4063 = vunpack.c.0.s8 %v4062
        %v4064 = vperm.slane %v3958, %v4063
        %v4066 = vunpack.c.l.s4 286326784
        %v4067 = vunpack.c.0.s8 %v4066
        %v4068 = vperm.slane %v3959, %v4067
        %v4070 = vunpack.c.l.s4 286326784
        %v4071 = vunpack.c.0.s8 %v4070
        %v4072 = vperm.slane %v3960, %v4071
        %v4074 = vunpack.c.l.s4 286326784
        %v4075 = vunpack.c.0.s8 %v4074
        %v4076 = vperm.slane %v3961, %v4075
        %v4078 = vunpack.c.l.s4 286326784
        %v4079 = vunpack.c.0.s8 %v4078
        %v4080 = vperm.slane %v3962, %v4079
        %v4082 = vunpack.c.l.s4 286326784
        %v4083 = vunpack.c.0.s8 %v4082
        %v4084 = vperm.slane %v3963, %v4083
        %v4086 = vunpack.c.l.s4 286326784
        %v4087 = vunpack.c.0.s8 %v4086
        %v4088 = vperm.slane %v3964, %v4087
        %v4090 = vunpack.c.l.s4 286326784
        %v4091 = vunpack.c.0.s8 %v4090
        %v4092 = vperm.slane %v3965, %v4091
        %v4094 = vunpack.c.l.s4 286326784
        %v4095 = vunpack.c.0.s8 %v4094
        %v4096 = vperm.slane %v3966, %v4095
        %v4098 = vunpack.c.l.s4 286326784
        %v4099 = vunpack.c.0.s8 %v4098
        %v4100 = vperm.slane %v3967, %v4099
        %v4102 = vunpack.c.l.s4 286326784
        %v4103 = vunpack.c.0.s8 %v4102
        %v4104 = vperm.slane %v3968, %v4103
        %v4106 = vunpack.c.l.s4 286326784
        %v4107 = vunpack.c.0.s8 %v4106
        %v4108 = vperm.slane %v3969, %v4107
        %v4110 = vunpack.c.l.s4 286326784
        %v4111 = vunpack.c.0.s8 %v4110
        %v4112 = vperm.slane %v3970, %v4111
        %v4114 = vunpack.c.l.s4 286326784
        %v4115 = vunpack.c.0.s8 %v4114
        %v4116 = vperm.slane %v3971, %v4115
        %v4118 = vunpack.c.l.s4 286326784
        %v4119 = vunpack.c.0.s8 %v4118
        %v4120 = vperm.slane %v3972, %v4119
        %v4122 = vunpack.c.l.s4 286326784
        %v4123 = vunpack.c.0.s8 %v4122
        %v4124 = vperm.slane %v3973, %v4123
        %v4126 = vunpack.c.l.s4 286326784
        %v4127 = vunpack.c.0.s8 %v4126
        %v4128 = vperm.slane %v3974, %v4127
        %v4130 = vunpack.c.l.s4 286326784
        %v4131 = vunpack.c.0.s8 %v4130
        %v4132 = vperm.slane %v3975, %v4131
        %v4134 = vunpack.c.l.s4 286326784
        %v4135 = vunpack.c.0.s8 %v4134
        %v4136 = vperm.slane %v3976, %v4135
        %v4138 = vunpack.c.l.s4 286326784
        %v4139 = vunpack.c.0.s8 %v4138
        %v4140 = vperm.slane %v3977, %v4139
        %v4142 = vunpack.c.l.s4 286326784
        %v4143 = vunpack.c.0.s8 %v4142
        %v4144 = vperm.slane %v3978, %v4143
        %v4146 = vunpack.c.l.s4 286326784
        %v4147 = vunpack.c.0.s8 %v4146
        %v4148 = vperm.slane %v3979, %v4147
        %v4150 = vunpack.c.l.s4 286326784
        %v4151 = vunpack.c.0.s8 %v4150
        %v4152 = vperm.slane %v3980, %v4151
        %v4154 = vunpack.c.l.s4 286326784
        %v4155 = vunpack.c.0.s8 %v4154
        %v4156 = vperm.slane %v3981, %v4155
        %v4158 = vunpack.c.l.s4 286326784
        %v4159 = vunpack.c.0.s8 %v4158
        %v4160 = vperm.slane %v3982, %v4159
        %v4162 = vunpack.c.l.s4 286326784
        %v4163 = vunpack.c.0.s8 %v4162
        %v4164 = vperm.slane %v3983, %v4163
        %v4166 = vunpack.c.l.s4 286326784
        %v4167 = vunpack.c.0.s8 %v4166
        %v4168 = vperm.slane %v3984, %v4167
        %v4170 = vunpack.c.l.s4 286326784
        %v4171 = vunpack.c.0.s8 %v4170
        %v4172 = vperm.slane %v3985, %v4171
        %v4174 = vunpack.c.l.s4 286326784
        %v4175 = vunpack.c.0.s8 %v4174
        %v4176 = vperm.slane %v3986, %v4175
        %v4178 = vunpack.c.l.s4 286326784
        %v4179 = vunpack.c.0.s8 %v4178
        %v4180 = vperm.slane %v3987, %v4179
        %v4182 = vunpack.c.l.s4 286326784
        %v4183 = vunpack.c.0.s8 %v4182
        %v4184 = vperm.slane %v3988, %v4183
        %v4186 = vunpack.c.l.s4 286326784
        %v4187 = vunpack.c.0.s8 %v4186
        %v4188 = vperm.slane %v3989, %v4187
        %v4190 = vunpack.c.l.s4 286326784
        %v4191 = vunpack.c.0.s8 %v4190
        %v4192 = vperm.slane %v3990, %v4191
        %v4194 = vunpack.c.l.s4 286326784
        %v4195 = vunpack.c.0.s8 %v4194
        %v4196 = vperm.slane %v3991, %v4195
        %v4198 = vunpack.c.l.s4 286326784
        %v4199 = vunpack.c.0.s8 %v4198
        %v4200 = vperm.slane %v3992, %v4199
        %v4202 = vunpack.c.l.s4 286326784
        %v4203 = vunpack.c.0.s8 %v4202
        %v4204 = vperm.slane %v3993, %v4203
        %v4206 = vunpack.c.l.s4 286326784
        %v4207 = vunpack.c.0.s8 %v4206
        %v4208 = vperm.slane %v3994, %v4207
        %v4210 = vunpack.c.l.s4 286326784
        %v4211 = vunpack.c.0.s8 %v4210
        %v4212 = vperm.slane %v3995, %v4211
        %v4214 = vunpack.c.l.s4 286326784
        %v4215 = vunpack.c.0.s8 %v4214
        %v4216 = vperm.slane %v3996, %v4215
        %v4218 = vunpack.c.l.s4 286326784
        %v4219 = vunpack.c.0.s8 %v4218
        %v4220 = vperm.slane %v3997, %v4219
        %v4222 = vunpack.c.l.s4 286326784
        %v4223 = vunpack.c.0.s8 %v4222
        %v4224 = vperm.slane %v3998, %v4223
        %v4226 = vunpack.c.l.s4 286326784
        %v4227 = vunpack.c.0.s8 %v4226
        %v4228 = vperm.slane %v3999, %v4227
        %v4230 = vunpack.c.l.s4 286326784
        %v4231 = vunpack.c.0.s8 %v4230
        %v4232 = vperm.slane %v4000, %v4231
        %v4234 = vunpack.c.l.s4 286326784
        %v4235 = vunpack.c.0.s8 %v4234
        %v4236 = vperm.slane %v4001, %v4235
        %v4238 = vunpack.c.l.s4 286326784
        %v4239 = vunpack.c.0.s8 %v4238
        %v4240 = vperm.slane %v4002, %v4239
        %v4242 = vunpack.c.l.s4 286326784
        %v4243 = vunpack.c.0.s8 %v4242
        %v4244 = vperm.slane %v4003, %v4243
        %v4246 = vunpack.c.l.s4 286326784
        %v4247 = vunpack.c.0.s8 %v4246
        %v4248 = vperm.slane %v4004, %v4247
        %v4250 = vunpack.c.l.s4 286326784
        %v4251 = vunpack.c.0.s8 %v4250
        %v4252 = vperm.slane %v4005, %v4251
        %v4254 = vunpack.c.l.s4 286326784
        %v4255 = vunpack.c.0.s8 %v4254
        %v4256 = vperm.slane %v4006, %v4255
        %v4258 = vunpack.c.l.s4 286326784
        %v4259 = vunpack.c.0.s8 %v4258
        %v4260 = vperm.slane %v4007, %v4259
        %v4262 = vunpack.c.l.s4 286326784
        %v4263 = vunpack.c.0.s8 %v4262
        %v4264 = vperm.slane %v4008, %v4263
        %vm4329 = vcmask 1041409
        %vm4330 = vsmask.f32 1280
        %vm4331 = vmand %vm4329, %vm4330
        %v4332 = vld [vmem:[%s960] sm:$0x2]
        %v4333 = vsel %vm4331, %v4012, %v4332
        %4334 = vst [vmem:[%s960] sm:$0x2] %v4333
        %v4335 = vld [vmem:[%s960 + $0x4] sm:$0x2]
        %v4336 = vsel %vm4331, %v4016, %v4335
        %4337 = vst [vmem:[%s960 + $0x4] sm:$0x2] %v4336
        %v4338 = vld [vmem:[%s960 + $0x8] sm:$0x2]
        %v4339 = vsel %vm4331, %v4020, %v4338
        %4340 = vst [vmem:[%s960 + $0x8] sm:$0x2] %v4339
        %v4341 = vld [vmem:[%s960 + $0xc] sm:$0x2]
        %v4342 = vsel %vm4331, %v4024, %v4341
        %4343 = vst [vmem:[%s960 + $0xc] sm:$0x2] %v4342
        %v4344 = vld [vmem:[%s960 + $0x10] sm:$0x2]
        %v4345 = vsel %vm4331, %v4028, %v4344
        %4346 = vst [vmem:[%s960 + $0x10] sm:$0x2] %v4345
        %v4347 = vld [vmem:[%s960 + $0x14] sm:$0x2]
        %v4348 = vsel %vm4331, %v4032, %v4347
        %4349 = vst [vmem:[%s960 + $0x14] sm:$0x2] %v4348
        %v4350 = vld [vmem:[%s960 + $0x18] sm:$0x2]
        %v4351 = vsel %vm4331, %v4036, %v4350
        %4352 = vst [vmem:[%s960 + $0x18] sm:$0x2] %v4351
        %v4353 = vld [vmem:[%s960 + $0x1c] sm:$0x2]
        %v4354 = vsel %vm4331, %v4040, %v4353
        %4355 = vst [vmem:[%s960 + $0x1c] sm:$0x2] %v4354
        %v4356 = vld [vmem:[%s960 + $0x20] sm:$0x2]
        %v4357 = vsel %vm4331, %v4044, %v4356
        %4358 = vst [vmem:[%s960 + $0x20] sm:$0x2] %v4357
        %v4359 = vld [vmem:[%s960 + $0x24] sm:$0x2]
        %v4360 = vsel %vm4331, %v4048, %v4359
        %4361 = vst [vmem:[%s960 + $0x24] sm:$0x2] %v4360
        %v4362 = vld [vmem:[%s960 + $0x28] sm:$0x2]
        %v4363 = vsel %vm4331, %v4052, %v4362
        %4364 = vst [vmem:[%s960 + $0x28] sm:$0x2] %v4363
        %v4365 = vld [vmem:[%s960 + $0x2c] sm:$0x2]
        %v4366 = vsel %vm4331, %v4056, %v4365
        %4367 = vst [vmem:[%s960 + $0x2c] sm:$0x2] %v4366
        %v4368 = vld [vmem:[%s960 + $0x30] sm:$0x2]
        %v4369 = vsel %vm4331, %v4060, %v4368
        %4370 = vst [vmem:[%s960 + $0x30] sm:$0x2] %v4369
        %v4371 = vld [vmem:[%s960 + $0x34] sm:$0x2]
        %v4372 = vsel %vm4331, %v4064, %v4371
        %4373 = vst [vmem:[%s960 + $0x34] sm:$0x2] %v4372
        %v4374 = vld [vmem:[%s960 + $0x38] sm:$0x2]
        %v4375 = vsel %vm4331, %v4068, %v4374
        %4376 = vst [vmem:[%s960 + $0x38] sm:$0x2] %v4375
        %v4377 = vld [vmem:[%s960 + $0x3c] sm:$0x2]
        %v4378 = vsel %vm4331, %v4072, %v4377
        %4379 = vst [vmem:[%s960 + $0x3c] sm:$0x2] %v4378
        %v4380 = vld [vmem:[%s960 + $0x40] sm:$0x2]
        %v4381 = vsel %vm4331, %v4076, %v4380
        %4382 = vst [vmem:[%s960 + $0x40] sm:$0x2] %v4381
        %v4383 = vld [vmem:[%s960 + $0x44] sm:$0x2]
        %v4384 = vsel %vm4331, %v4080, %v4383
        %4385 = vst [vmem:[%s960 + $0x44] sm:$0x2] %v4384
        %v4386 = vld [vmem:[%s960 + $0x48] sm:$0x2]
        %v4387 = vsel %vm4331, %v4084, %v4386
        %4388 = vst [vmem:[%s960 + $0x48] sm:$0x2] %v4387
        %v4389 = vld [vmem:[%s960 + $0x4c] sm:$0x2]
        %v4390 = vsel %vm4331, %v4088, %v4389
        %4391 = vst [vmem:[%s960 + $0x4c] sm:$0x2] %v4390
        %v4392 = vld [vmem:[%s960 + $0x50] sm:$0x2]
        %v4393 = vsel %vm4331, %v4092, %v4392
        %4394 = vst [vmem:[%s960 + $0x50] sm:$0x2] %v4393
        %v4395 = vld [vmem:[%s960 + $0x54] sm:$0x2]
        %v4396 = vsel %vm4331, %v4096, %v4395
        %4397 = vst [vmem:[%s960 + $0x54] sm:$0x2] %v4396
        %v4398 = vld [vmem:[%s960 + $0x58] sm:$0x2]
        %v4399 = vsel %vm4331, %v4100, %v4398
        %4400 = vst [vmem:[%s960 + $0x58] sm:$0x2] %v4399
        %v4401 = vld [vmem:[%s960 + $0x5c] sm:$0x2]
        %v4402 = vsel %vm4331, %v4104, %v4401
        %4403 = vst [vmem:[%s960 + $0x5c] sm:$0x2] %v4402
        %v4404 = vld [vmem:[%s960 + $0x60] sm:$0x2]
        %v4405 = vsel %vm4331, %v4108, %v4404
        %4406 = vst [vmem:[%s960 + $0x60] sm:$0x2] %v4405
        %v4407 = vld [vmem:[%s960 + $0x64] sm:$0x2]
        %v4408 = vsel %vm4331, %v4112, %v4407
        %4409 = vst [vmem:[%s960 + $0x64] sm:$0x2] %v4408
        %v4410 = vld [vmem:[%s960 + $0x68] sm:$0x2]
        %v4411 = vsel %vm4331, %v4116, %v4410
        %4412 = vst [vmem:[%s960 + $0x68] sm:$0x2] %v4411
        %v4413 = vld [vmem:[%s960 + $0x6c] sm:$0x2]
        %v4414 = vsel %vm4331, %v4120, %v4413
        %4415 = vst [vmem:[%s960 + $0x6c] sm:$0x2] %v4414
        %v4416 = vld [vmem:[%s960 + $0x70] sm:$0x2]
        %v4417 = vsel %vm4331, %v4124, %v4416
        %4418 = vst [vmem:[%s960 + $0x70] sm:$0x2] %v4417
        %v4419 = vld [vmem:[%s960 + $0x74] sm:$0x2]
        %v4420 = vsel %vm4331, %v4128, %v4419
        %4421 = vst [vmem:[%s960 + $0x74] sm:$0x2] %v4420
        %v4422 = vld [vmem:[%s960 + $0x78] sm:$0x2]
        %v4423 = vsel %vm4331, %v4132, %v4422
        %4424 = vst [vmem:[%s960 + $0x78] sm:$0x2] %v4423
        %v4425 = vld [vmem:[%s960 + $0x7c] sm:$0x2]
        %v4426 = vsel %vm4331, %v4136, %v4425
        %4427 = vst [vmem:[%s960 + $0x7c] sm:$0x2] %v4426
        %v4428 = vld [vmem:[%s960 + $0x80] sm:$0x2]
        %v4429 = vsel %vm4331, %v4140, %v4428
        %4430 = vst [vmem:[%s960 + $0x80] sm:$0x2] %v4429
        %v4431 = vld [vmem:[%s960 + $0x84] sm:$0x2]
        %v4432 = vsel %vm4331, %v4144, %v4431
        %4433 = vst [vmem:[%s960 + $0x84] sm:$0x2] %v4432
        %v4434 = vld [vmem:[%s960 + $0x88] sm:$0x2]
        %v4435 = vsel %vm4331, %v4148, %v4434
        %4436 = vst [vmem:[%s960 + $0x88] sm:$0x2] %v4435
        %v4437 = vld [vmem:[%s960 + $0x8c] sm:$0x2]
        %v4438 = vsel %vm4331, %v4152, %v4437
        %4439 = vst [vmem:[%s960 + $0x8c] sm:$0x2] %v4438
        %v4440 = vld [vmem:[%s960 + $0x90] sm:$0x2]
        %v4441 = vsel %vm4331, %v4156, %v4440
        %4442 = vst [vmem:[%s960 + $0x90] sm:$0x2] %v4441
        %v4443 = vld [vmem:[%s960 + $0x94] sm:$0x2]
        %v4444 = vsel %vm4331, %v4160, %v4443
        %4445 = vst [vmem:[%s960 + $0x94] sm:$0x2] %v4444
        %v4446 = vld [vmem:[%s960 + $0x98] sm:$0x2]
        %v4447 = vsel %vm4331, %v4164, %v4446
        %4448 = vst [vmem:[%s960 + $0x98] sm:$0x2] %v4447
        %v4449 = vld [vmem:[%s960 + $0x9c] sm:$0x2]
        %v4450 = vsel %vm4331, %v4168, %v4449
        %4451 = vst [vmem:[%s960 + $0x9c] sm:$0x2] %v4450
        %v4452 = vld [vmem:[%s960 + $0xa0] sm:$0x2]
        %v4453 = vsel %vm4331, %v4172, %v4452
        %4454 = vst [vmem:[%s960 + $0xa0] sm:$0x2] %v4453
        %v4455 = vld [vmem:[%s960 + $0xa4] sm:$0x2]
        %v4456 = vsel %vm4331, %v4176, %v4455
        %4457 = vst [vmem:[%s960 + $0xa4] sm:$0x2] %v4456
        %v4458 = vld [vmem:[%s960 + $0xa8] sm:$0x2]
        %v4459 = vsel %vm4331, %v4180, %v4458
        %4460 = vst [vmem:[%s960 + $0xa8] sm:$0x2] %v4459
        %v4461 = vld [vmem:[%s960 + $0xac] sm:$0x2]
        %v4462 = vsel %vm4331, %v4184, %v4461
        %4463 = vst [vmem:[%s960 + $0xac] sm:$0x2] %v4462
        %v4464 = vld [vmem:[%s960 + $0xb0] sm:$0x2]
        %v4465 = vsel %vm4331, %v4188, %v4464
        %4466 = vst [vmem:[%s960 + $0xb0] sm:$0x2] %v4465
        %v4467 = vld [vmem:[%s960 + $0xb4] sm:$0x2]
        %v4468 = vsel %vm4331, %v4192, %v4467
        %4469 = vst [vmem:[%s960 + $0xb4] sm:$0x2] %v4468
        %v4470 = vld [vmem:[%s960 + $0xb8] sm:$0x2]
        %v4471 = vsel %vm4331, %v4196, %v4470
        %4472 = vst [vmem:[%s960 + $0xb8] sm:$0x2] %v4471
        %v4473 = vld [vmem:[%s960 + $0xbc] sm:$0x2]
        %v4474 = vsel %vm4331, %v4200, %v4473
        %4475 = vst [vmem:[%s960 + $0xbc] sm:$0x2] %v4474
        %v4476 = vld [vmem:[%s960 + $0xc0] sm:$0x2]
        %v4477 = vsel %vm4331, %v4204, %v4476
        %4478 = vst [vmem:[%s960 + $0xc0] sm:$0x2] %v4477
        %v4479 = vld [vmem:[%s960 + $0xc4] sm:$0x2]
        %v4480 = vsel %vm4331, %v4208, %v4479
        %4481 = vst [vmem:[%s960 + $0xc4] sm:$0x2] %v4480
        %v4482 = vld [vmem:[%s960 + $0xc8] sm:$0x2]
        %v4483 = vsel %vm4331, %v4212, %v4482
        %4484 = vst [vmem:[%s960 + $0xc8] sm:$0x2] %v4483
        %v4485 = vld [vmem:[%s960 + $0xcc] sm:$0x2]
        %v4486 = vsel %vm4331, %v4216, %v4485
        %4487 = vst [vmem:[%s960 + $0xcc] sm:$0x2] %v4486
        %v4488 = vld [vmem:[%s960 + $0xd0] sm:$0x2]
        %v4489 = vsel %vm4331, %v4220, %v4488
        %4490 = vst [vmem:[%s960 + $0xd0] sm:$0x2] %v4489
        %v4491 = vld [vmem:[%s960 + $0xd4] sm:$0x2]
        %v4492 = vsel %vm4331, %v4224, %v4491
        %4493 = vst [vmem:[%s960 + $0xd4] sm:$0x2] %v4492
        %v4494 = vld [vmem:[%s960 + $0xd8] sm:$0x2]
        %v4495 = vsel %vm4331, %v4228, %v4494
        %4496 = vst [vmem:[%s960 + $0xd8] sm:$0x2] %v4495
        %v4497 = vld [vmem:[%s960 + $0xdc] sm:$0x2]
        %v4498 = vsel %vm4331, %v4232, %v4497
        %4499 = vst [vmem:[%s960 + $0xdc] sm:$0x2] %v4498
        %v4500 = vld [vmem:[%s960 + $0xe0] sm:$0x2]
        %v4501 = vsel %vm4331, %v4236, %v4500
        %4502 = vst [vmem:[%s960 + $0xe0] sm:$0x2] %v4501
        %v4503 = vld [vmem:[%s960 + $0xe4] sm:$0x2]
        %v4504 = vsel %vm4331, %v4240, %v4503
        %4505 = vst [vmem:[%s960 + $0xe4] sm:$0x2] %v4504
        %v4506 = vld [vmem:[%s960 + $0xe8] sm:$0x2]
        %v4507 = vsel %vm4331, %v4244, %v4506
        %4508 = vst [vmem:[%s960 + $0xe8] sm:$0x2] %v4507
        %v4509 = vld [vmem:[%s960 + $0xec] sm:$0x2]
        %v4510 = vsel %vm4331, %v4248, %v4509
        %4511 = vst [vmem:[%s960 + $0xec] sm:$0x2] %v4510
        %v4512 = vld [vmem:[%s960 + $0xf0] sm:$0x2]
        %v4513 = vsel %vm4331, %v4252, %v4512
        %4514 = vst [vmem:[%s960 + $0xf0] sm:$0x2] %v4513
        %v4515 = vld [vmem:[%s960 + $0xf4] sm:$0x2]
        %v4516 = vsel %vm4331, %v4256, %v4515
        %4517 = vst [vmem:[%s960 + $0xf4] sm:$0x2] %v4516
        %v4518 = vld [vmem:[%s960 + $0xf8] sm:$0x2]
        %v4519 = vsel %vm4331, %v4260, %v4518
        %4520 = vst [vmem:[%s960 + $0xf8] sm:$0x2] %v4519
        %v4521 = vld [vmem:[%s960 + $0xfc] sm:$0x2]
        %v4522 = vsel %vm4331, %v4264, %v4521
        %4523 = vst [vmem:[%s960 + $0xfc] sm:$0x2] %v4522
        %4524 = vadd.xlane.f32.xlu0 %v3729
        %v4525 = vpop.xlane.xlu0 %4524
        %4526 = vadd.xlane.f32.xlu0 %v3730
        %v4527 = vpop.xlane.xlu0 %4526
        %4528 = vadd.xlane.f32.xlu0 %v3731
        %v4529 = vpop.xlane.xlu0 %4528
        %4530 = vadd.xlane.f32.xlu0 %v3732
        %v4531 = vpop.xlane.xlu0 %4530
        %4532 = vadd.xlane.f32.xlu0 %v3733
        %v4533 = vpop.xlane.xlu0 %4532
        %4534 = vadd.xlane.f32.xlu0 %v3734
        %v4535 = vpop.xlane.xlu0 %4534
        %4536 = vadd.xlane.f32.xlu0 %v3735
        %v4537 = vpop.xlane.xlu0 %4536
        %4538 = vadd.xlane.f32.xlu0 %v3736
        %v4539 = vpop.xlane.xlu0 %4538
        %v4540 = vadd.f32 %v4525, 1e-06
        %v4541 = vadd.f32 %v4527, 1e-06
        %v4542 = vadd.f32 %v4529, 1e-06
        %v4543 = vadd.f32 %v4531, 1e-06
        %v4544 = vadd.f32 %v4533, 1e-06
        %v4545 = vadd.f32 %v4535, 1e-06
        %v4546 = vadd.f32 %v4537, 1e-06
        %v4547 = vadd.f32 %v4539, 1e-06
        %v4548 = vrsqrt.pop %v4540
        %v4549 = vmul.f32 %v4548, %v4540
        %v4550 = vmul.f32 %v4549, %v4548
        %v4551 = vmul.f32 0.5, %v4550
        %v4552 = vsub.f32 1.5, %v4551
        %v4553 = vmul.f32 %v4548, %v4552
        %vm4554 = vweird.f32 %v4540
        %vm4555 = vweird.f32 %v4548
        %vm4556 = vmor %vm4554, %vm4555
        %v4557 = vsel %vm4556, %v4548, %v4553
        %v4558 = vrsqrt.pop %v4541
        %v4559 = vmul.f32 %v4558, %v4541
        %v4560 = vmul.f32 %v4559, %v4558
        %v4561 = vmul.f32 0.5, %v4560
        %v4562 = vsub.f32 1.5, %v4561
        %v4563 = vmul.f32 %v4558, %v4562
        %vm4564 = vweird.f32 %v4541
        %vm4565 = vweird.f32 %v4558
        %vm4566 = vmor %vm4564, %vm4565
        %v4567 = vsel %vm4566, %v4558, %v4563
        %v4568 = vrsqrt.pop %v4542
        %v4569 = vmul.f32 %v4568, %v4542
        %v4570 = vmul.f32 %v4569, %v4568
        %v4571 = vmul.f32 0.5, %v4570
        %v4572 = vsub.f32 1.5, %v4571
        %v4573 = vmul.f32 %v4568, %v4572
        %vm4574 = vweird.f32 %v4542
        %vm4575 = vweird.f32 %v4568
        %vm4576 = vmor %vm4574, %vm4575
        %v4577 = vsel %vm4576, %v4568, %v4573
        %v4578 = vrsqrt.pop %v4543
        %v4579 = vmul.f32 %v4578, %v4543
        %v4580 = vmul.f32 %v4579, %v4578
        %v4581 = vmul.f32 0.5, %v4580
        %v4582 = vsub.f32 1.5, %v4581
        %v4583 = vmul.f32 %v4578, %v4582
        %vm4584 = vweird.f32 %v4543
        %vm4585 = vweird.f32 %v4578
        %vm4586 = vmor %vm4584, %vm4585
        %v4587 = vsel %vm4586, %v4578, %v4583
        %v4588 = vrsqrt.pop %v4544
        %v4589 = vmul.f32 %v4588, %v4544
        %v4590 = vmul.f32 %v4589, %v4588
        %v4591 = vmul.f32 0.5, %v4590
        %v4592 = vsub.f32 1.5, %v4591
        %v4593 = vmul.f32 %v4588, %v4592
        %vm4594 = vweird.f32 %v4544
        %vm4595 = vweird.f32 %v4588
        %vm4596 = vmor %vm4594, %vm4595
        %v4597 = vsel %vm4596, %v4588, %v4593
        %v4598 = vrsqrt.pop %v4545
        %v4599 = vmul.f32 %v4598, %v4545
        %v4600 = vmul.f32 %v4599, %v4598
        %v4601 = vmul.f32 0.5, %v4600
        %v4602 = vsub.f32 1.5, %v4601
        %v4603 = vmul.f32 %v4598, %v4602
        %vm4604 = vweird.f32 %v4545
        %vm4605 = vweird.f32 %v4598
        %vm4606 = vmor %vm4604, %vm4605
        %v4607 = vsel %vm4606, %v4598, %v4603
        %v4608 = vrsqrt.pop %v4546
        %v4609 = vmul.f32 %v4608, %v4546
        %v4610 = vmul.f32 %v4609, %v4608
        %v4611 = vmul.f32 0.5, %v4610
        %v4612 = vsub.f32 1.5, %v4611
        %v4613 = vmul.f32 %v4608, %v4612
        %vm4614 = vweird.f32 %v4546
        %vm4615 = vweird.f32 %v4608
        %vm4616 = vmor %vm4614, %vm4615
        %v4617 = vsel %vm4616, %v4608, %v4613
        %v4618 = vrsqrt.pop %v4547
        %v4619 = vmul.f32 %v4618, %v4547
        %v4620 = vmul.f32 %v4619, %v4618
        %v4621 = vmul.f32 0.5, %v4620
        %v4622 = vsub.f32 1.5, %v4621
        %v4623 = vmul.f32 %v4618, %v4622
        %vm4624 = vweird.f32 %v4547
        %vm4625 = vweird.f32 %v4618
        %vm4626 = vmor %vm4624, %vm4625
        %v4627 = vsel %vm4626, %v4618, %v4623
        %v4628 = vmul.f32 %v4557, 4.0
        %v4629 = vmul.f32 %v4567, 4.0
        %v4630 = vmul.f32 %v4577, 4.0
        %v4631 = vmul.f32 %v4587, 4.0
        %v4632 = vmul.f32 %v4597, 4.0
        %v4633 = vmul.f32 %v4607, 4.0
        %v4634 = vmul.f32 %v4617, 4.0
        %v4635 = vmul.f32 %v4627, 4.0
        %v4636 = vmul.f32 %v3729, %v4628
        %v4637 = vmul.f32 %v3730, %v4629
        %v4638 = vmul.f32 %v3731, %v4630
        %v4639 = vmul.f32 %v3732, %v4631
        %v4640 = vmul.f32 %v3733, %v4632
        %v4641 = vmul.f32 %v3734, %v4633
        %v4642 = vmul.f32 %v3735, %v4634
        %v4643 = vmul.f32 %v3736, %v4635
        %s4644 = scalar_lea.vmem %s906, 64 [#allocation3]
        %v4645 = vld [vmem:[%s4644] sm:$0xf]
        %v4646 = vld [vmem:[%s4644 + $0x4] sm:$0xf]
        %v4647 = vld [vmem:[%s4644 + $0x8] sm:$0xf]
        %v4648 = vld [vmem:[%s4644 + $0xc] sm:$0xf]
        %v4649 = vld [vmem:[%s4644 + $0x10] sm:$0xf]
        %v4650 = vld [vmem:[%s4644 + $0x14] sm:$0xf]
        %v4651 = vld [vmem:[%s4644 + $0x18] sm:$0xf]
        %v4652 = vld [vmem:[%s4644 + $0x1c] sm:$0xf]
        %v4653 = vunpack.c.l.bf16 %v4645
        %v4654 = vunpack.c.l.bf16 %v4646
        %v4655 = vunpack.c.l.bf16 %v4647
        %v4656 = vunpack.c.l.bf16 %v4648
        %v4657 = vunpack.c.l.bf16 %v4649
        %v4658 = vunpack.c.l.bf16 %v4650
        %v4659 = vunpack.c.l.bf16 %v4651
        %v4660 = vunpack.c.l.bf16 %v4652
        %v4661 = vadd.f32 %v4636, %v4653
        %v4662 = vadd.f32 %v4637, %v4654
        %v4663 = vadd.f32 %v4638, %v4655
        %v4664 = vadd.f32 %v4639, %v4656
        %v4665 = vadd.f32 %v4640, %v4657
        %v4666 = vadd.f32 %v4641, %v4658
        %v4667 = vadd.f32 %v4642, %v4659
        %v4668 = vadd.f32 %v4643, %v4660
        %v4669 = vpack.c.bf16 %v4662, %v4661
        %v4670 = vpack.c.bf16 %v4664, %v4663
        %v4671 = vpack.c.bf16 %v4666, %v4665
        %v4672 = vpack.c.bf16 %v4668, %v4667
        %4673 = vmatpush.bf16.msra.mxu0 %v2535
        %4674 = vmatpush.bf16.msra.mxu0 %v2534
        %4675 = vmatpush.bf16.msra.mxu0 %v2533
        %4676 = vmatpush.bf16.msra.mxu0 %v2532
        %4677 = vmatpush.bf16.msra.mxu0 %v2531
        %4678 = vmatpush.bf16.msra.mxu0 %v2530
        %4679 = vmatpush.bf16.msra.mxu0 %v2529
        %4680 = vmatpush.bf16.msra.mxu0 %v2528
        %4681 = vmatmul.bf16.gmra.mxu0 %v4669
        %v4682 = vpop.f32.mrf.mxu0
        %v4683 = vadd.f32 %v1005, %v4682
        %v4684 = vpop.f32.mrf.mxu0
        %v4685 = vadd.f32 %v1005, %v4684
        %4686 = vmatmul.bf16.gmra.mxu0 %v4670
        %v4687 = vpop.f32.mrf.mxu0
        %v4688 = vadd.f32 %v1005, %v4687
        %v4689 = vpop.f32.mrf.mxu0
        %v4690 = vadd.f32 %v1005, %v4689
        %4691 = vmatmul.bf16.gmra.mxu0 %v4671
        %v4692 = vpop.f32.mrf.mxu0
        %v4693 = vadd.f32 %v1005, %v4692
        %v4694 = vpop.f32.mrf.mxu0
        %v4695 = vadd.f32 %v1005, %v4694
        %4696 = vmatmul.bf16.gmra.mxu0 %v4672
        %v4697 = vpop.f32.mrf.mxu0
        %v4698 = vadd.f32 %v1005, %v4697
        %v4699 = vpop.f32.mrf.mxu0
        %v4700 = vadd.f32 %v1005, %v4699
        %4701 = vdwg.mxu0
        %v4702 = vmul.f32 %v3681, 0.9
        %v4703 = vmul.f32 %v3682, 0.9
        %v4704 = vmul.f32 %v3683, 0.9
        %v4705 = vmul.f32 %v3684, 0.9
        %v4706 = vmul.f32 %v3685, 0.9
        %v4707 = vmul.f32 %v3686, 0.9
        %v4708 = vmul.f32 %v3687, 0.9
        %v4709 = vmul.f32 %v3688, 0.9
        %v4710 = vadd.f32 %v4702, %v4683
        %v4711 = vadd.f32 %v4703, %v4685
        %v4712 = vadd.f32 %v4704, %v4688
        %v4713 = vadd.f32 %v4705, %v4690
        %v4714 = vadd.f32 %v4706, %v4693
        %v4715 = vadd.f32 %v4707, %v4695
        %v4716 = vadd.f32 %v4708, %v4698
        %v4717 = vadd.f32 %v4709, %v4700
        %vm4718 = vcmp.ge.f32.partialorder %v4710, 0.5
        %vm4719 = vcmp.ge.f32.partialorder %v4711, 0.5
        %vm4720 = vcmp.ge.f32.partialorder %v4712, 0.5
        %vm4721 = vcmp.ge.f32.partialorder %v4713, 0.5
        %vm4722 = vcmp.ge.f32.partialorder %v4714, 0.5
        %vm4723 = vcmp.ge.f32.partialorder %v4715, 0.5
        %vm4724 = vcmp.ge.f32.partialorder %v4716, 0.5
        %vm4725 = vcmp.ge.f32.partialorder %v4717, 0.5
        %v4726 = vsel %vm4718, 1, 0
        %v4727 = vsel %vm4719, 1, 0
        %v4728 = vsel %vm4720, 1, 0
        %v4729 = vsel %vm4721, 1, 0
        %v4730 = vsel %vm4722, 1, 0
        %v4731 = vsel %vm4723, 1, 0
        %v4732 = vsel %vm4724, 1, 0
        %v4733 = vsel %vm4725, 1, 0
        %v4734 = vcvt.s32.f32 %v4726
        %v4735 = vcvt.s32.f32 %v4727
        %v4736 = vcvt.s32.f32 %v4728
        %v4737 = vcvt.s32.f32 %v4729
        %v4738 = vcvt.s32.f32 %v4730
        %v4739 = vcvt.s32.f32 %v4731
        %v4740 = vcvt.s32.f32 %v4732
        %v4741 = vcvt.s32.f32 %v4733
        %v4742 = vmul.f32 %v4734, 0.5
        %v4743 = vmul.f32 %v4735, 0.5
        %v4744 = vmul.f32 %v4736, 0.5
        %v4745 = vmul.f32 %v4737, 0.5
        %v4746 = vmul.f32 %v4738, 0.5
        %v4747 = vmul.f32 %v4739, 0.5
        %v4748 = vmul.f32 %v4740, 0.5
        %v4749 = vmul.f32 %v4741, 0.5
        %v4750 = vsub.f32 %v4710, %v4742
        %v4751 = vsub.f32 %v4711, %v4743
        %v4752 = vsub.f32 %v4712, %v4744
        %v4753 = vsub.f32 %v4713, %v4745
        %v4754 = vsub.f32 %v4714, %v4746
        %v4755 = vsub.f32 %v4715, %v4747
        %v4756 = vsub.f32 %v4716, %v4748
        %v4757 = vsub.f32 %v4717, %v4749
        %v4758 = vadd.f32 %v3689, %v4734
        %v4759 = vadd.f32 %v3690, %v4735
        %v4760 = vadd.f32 %v3691, %v4736
        %v4761 = vadd.f32 %v3692, %v4737
        %v4762 = vadd.f32 %v3693, %v4738
        %v4763 = vadd.f32 %v3694, %v4739
        %v4764 = vadd.f32 %v3695, %v4740
        %v4765 = vadd.f32 %v3696, %v4741
        %v4766 = vmul.f32 %v3745, 0.9
        %v4767 = vmul.f32 %v3746, 0.9
        %v4768 = vmul.f32 %v3747, 0.9
        %v4769 = vmul.f32 %v3748, 0.9
        %v4770 = vmul.f32 %v3749, 0.9
        %v4771 = vmul.f32 %v3750, 0.9
        %v4772 = vmul.f32 %v3751, 0.9
        %v4773 = vmul.f32 %v3752, 0.9
        %v4774 = vadd.f32 %v4766, %v1426
        %v4775 = vadd.f32 %v4767, %v1428
        %v4776 = vadd.f32 %v4768, %v1431
        %v4777 = vadd.f32 %v4769, %v1433
        %v4778 = vadd.f32 %v4770, %v1436
        %v4779 = vadd.f32 %v4771, %v1438
        %v4780 = vadd.f32 %v4772, %v1441
        %v4781 = vadd.f32 %v4773, %v1443
        %vm4782 = vcmp.ge.f32.partialorder %v4774, 0.5
        %vm4783 = vcmp.ge.f32.partialorder %v4775, 0.5
        %vm4784 = vcmp.ge.f32.partialorder %v4776, 0.5
        %vm4785 = vcmp.ge.f32.partialorder %v4777, 0.5
        %vm4786 = vcmp.ge.f32.partialorder %v4778, 0.5
        %vm4787 = vcmp.ge.f32.partialorder %v4779, 0.5
        %vm4788 = vcmp.ge.f32.partialorder %v4780, 0.5
        %vm4789 = vcmp.ge.f32.partialorder %v4781, 0.5
        %v4790 = vsel %vm4782, 1, 0
        %v4791 = vsel %vm4783, 1, 0
        %v4792 = vsel %vm4784, 1, 0
        %v4793 = vsel %vm4785, 1, 0
        %v4794 = vsel %vm4786, 1, 0
        %v4795 = vsel %vm4787, 1, 0
        %v4796 = vsel %vm4788, 1, 0
        %v4797 = vsel %vm4789, 1, 0
        %v4798 = vcvt.s32.f32 %v4790
        %v4799 = vcvt.s32.f32 %v4791
        %v4800 = vcvt.s32.f32 %v4792
        %v4801 = vcvt.s32.f32 %v4793
        %v4802 = vcvt.s32.f32 %v4794
        %v4803 = vcvt.s32.f32 %v4795
        %v4804 = vcvt.s32.f32 %v4796
        %v4805 = vcvt.s32.f32 %v4797
        %v4806 = vmul.f32 %v4798, 0.5
        %v4807 = vmul.f32 %v4799, 0.5
        %v4808 = vmul.f32 %v4800, 0.5
        %v4809 = vmul.f32 %v4801, 0.5
        %v4810 = vmul.f32 %v4802, 0.5
        %v4811 = vmul.f32 %v4803, 0.5
        %v4812 = vmul.f32 %v4804, 0.5
        %v4813 = vmul.f32 %v4805, 0.5
        %v4814 = vsub.f32 %v4774, %v4806
        %v4815 = vsub.f32 %v4775, %v4807
        %v4816 = vsub.f32 %v4776, %v4808
        %v4817 = vsub.f32 %v4777, %v4809
        %v4818 = vsub.f32 %v4778, %v4810
        %v4819 = vsub.f32 %v4779, %v4811
        %v4820 = vsub.f32 %v4780, %v4812
        %v4821 = vsub.f32 %v4781, %v4813
        %v4822 = vpack.c.bf16 %v4798, %v4798
        %v4823 = vpack.c.bf16 %v4799, %v4799
        %v4824 = vpack.c.bf16 %v4800, %v4800
        %v4825 = vpack.c.bf16 %v4801, %v4801
        %v4826 = vpack.c.bf16 %v4802, %v4802
        %v4827 = vpack.c.bf16 %v4803, %v4803
        %v4828 = vpack.c.bf16 %v4804, %v4804
        %v4829 = vpack.c.bf16 %v4805, %v4805
        %v4838 = vrot.slane %v4822, 3
        %v4839 = vrot.slane %v4823, 3
        %v4840 = vrot.slane %v4824, 3
        %v4841 = vrot.slane %v4825, 3
        %v4842 = vrot.slane %v4826, 3
        %v4843 = vrot.slane %v4827, 3
        %v4844 = vrot.slane %v4828, 3
        %v4845 = vrot.slane %v4829, 3
        %v4848 = vsel %vm1597, %v4822, %v4838
        %v4850 = vsel %vm1602, %v4822, %v4838
        %v4852 = vrot.slane %v4850, 1
        %v4853 = vsel %vm1606, %v4822, %v4838
        %v4855 = vrot.slane %v4853, 2
        %v4856 = vsel %vm1610, %v4822, %v4838
        %v4858 = vrot.slane %v4856, 3
        %v4861 = vsel %vm1597, %v4823, %v4839
        %v4863 = vsel %vm1602, %v4823, %v4839
        %v4865 = vrot.slane %v4863, 1
        %v4866 = vsel %vm1606, %v4823, %v4839
        %v4868 = vrot.slane %v4866, 2
        %v4869 = vsel %vm1610, %v4823, %v4839
        %v4871 = vrot.slane %v4869, 3
        %v4874 = vsel %vm1597, %v4824, %v4840
        %v4876 = vsel %vm1602, %v4824, %v4840
        %v4878 = vrot.slane %v4876, 1
        %v4879 = vsel %vm1606, %v4824, %v4840
        %v4881 = vrot.slane %v4879, 2
        %v4882 = vsel %vm1610, %v4824, %v4840
        %v4884 = vrot.slane %v4882, 3
        %v4887 = vsel %vm1597, %v4825, %v4841
        %v4889 = vsel %vm1602, %v4825, %v4841
        %v4891 = vrot.slane %v4889, 1
        %v4892 = vsel %vm1606, %v4825, %v4841
        %v4894 = vrot.slane %v4892, 2
        %v4895 = vsel %vm1610, %v4825, %v4841
        %v4897 = vrot.slane %v4895, 3
        %v4900 = vsel %vm1597, %v4826, %v4842
        %v4902 = vsel %vm1602, %v4826, %v4842
        %v4904 = vrot.slane %v4902, 1
        %v4905 = vsel %vm1606, %v4826, %v4842
        %v4907 = vrot.slane %v4905, 2
        %v4908 = vsel %vm1610, %v4826, %v4842
        %v4910 = vrot.slane %v4908, 3
        %v4913 = vsel %vm1597, %v4827, %v4843
        %v4915 = vsel %vm1602, %v4827, %v4843
        %v4917 = vrot.slane %v4915, 1
        %v4918 = vsel %vm1606, %v4827, %v4843
        %v4920 = vrot.slane %v4918, 2
        %v4921 = vsel %vm1610, %v4827, %v4843
        %v4923 = vrot.slane %v4921, 3
        %v4926 = vsel %vm1597, %v4828, %v4844
        %v4928 = vsel %vm1602, %v4828, %v4844
        %v4930 = vrot.slane %v4928, 1
        %v4931 = vsel %vm1606, %v4828, %v4844
        %v4933 = vrot.slane %v4931, 2
        %v4934 = vsel %vm1610, %v4828, %v4844
        %v4936 = vrot.slane %v4934, 3
        %v4939 = vsel %vm1597, %v4829, %v4845
        %v4941 = vsel %vm1602, %v4829, %v4845
        %v4943 = vrot.slane %v4941, 1
        %v4944 = vsel %vm1606, %v4829, %v4845
        %v4946 = vrot.slane %v4944, 2
        %v4947 = vsel %vm1610, %v4829, %v4845
        %v4949 = vrot.slane %v4947, 3
        %v4950 = vunpack.i.l.s16 %v4848
        %v4951 = vunpack.i.h.s16 %v4848
        %v4952 = vunpack.i.l.s16 %v4852
        %v4953 = vunpack.i.h.s16 %v4852
        %v4954 = vunpack.i.l.s16 %v4855
        %v4955 = vunpack.i.h.s16 %v4855
        %v4956 = vunpack.i.l.s16 %v4858
        %v4957 = vunpack.i.h.s16 %v4858
        %v4958 = vunpack.i.l.s16 %v4861
        %v4959 = vunpack.i.h.s16 %v4861
        %v4960 = vunpack.i.l.s16 %v4865
        %v4961 = vunpack.i.h.s16 %v4865
        %v4962 = vunpack.i.l.s16 %v4868
        %v4963 = vunpack.i.h.s16 %v4868
        %v4964 = vunpack.i.l.s16 %v4871
        %v4965 = vunpack.i.h.s16 %v4871
        %v4966 = vunpack.i.l.s16 %v4874
        %v4967 = vunpack.i.h.s16 %v4874
        %v4968 = vunpack.i.l.s16 %v4878
        %v4969 = vunpack.i.h.s16 %v4878
        %v4970 = vunpack.i.l.s16 %v4881
        %v4971 = vunpack.i.h.s16 %v4881
        %v4972 = vunpack.i.l.s16 %v4884
        %v4973 = vunpack.i.h.s16 %v4884
        %v4974 = vunpack.i.l.s16 %v4887
        %v4975 = vunpack.i.h.s16 %v4887
        %v4976 = vunpack.i.l.s16 %v4891
        %v4977 = vunpack.i.h.s16 %v4891
        %v4978 = vunpack.i.l.s16 %v4894
        %v4979 = vunpack.i.h.s16 %v4894
        %v4980 = vunpack.i.l.s16 %v4897
        %v4981 = vunpack.i.h.s16 %v4897
        %v4982 = vunpack.i.l.s16 %v4900
        %v4983 = vunpack.i.h.s16 %v4900
        %v4984 = vunpack.i.l.s16 %v4904
        %v4985 = vunpack.i.h.s16 %v4904
        %v4986 = vunpack.i.l.s16 %v4907
        %v4987 = vunpack.i.h.s16 %v4907
        %v4988 = vunpack.i.l.s16 %v4910
        %v4989 = vunpack.i.h.s16 %v4910
        %v4990 = vunpack.i.l.s16 %v4913
        %v4991 = vunpack.i.h.s16 %v4913
        %v4992 = vunpack.i.l.s16 %v4917
        %v4993 = vunpack.i.h.s16 %v4917
        %v4994 = vunpack.i.l.s16 %v4920
        %v4995 = vunpack.i.h.s16 %v4920
        %v4996 = vunpack.i.l.s16 %v4923
        %v4997 = vunpack.i.h.s16 %v4923
        %v4998 = vunpack.i.l.s16 %v4926
        %v4999 = vunpack.i.h.s16 %v4926
        %v5000 = vunpack.i.l.s16 %v4930
        %v5001 = vunpack.i.h.s16 %v4930
        %v5002 = vunpack.i.l.s16 %v4933
        %v5003 = vunpack.i.h.s16 %v4933
        %v5004 = vunpack.i.l.s16 %v4936
        %v5005 = vunpack.i.h.s16 %v4936
        %v5006 = vunpack.i.l.s16 %v4939
        %v5007 = vunpack.i.h.s16 %v4939
        %v5008 = vunpack.i.l.s16 %v4943
        %v5009 = vunpack.i.h.s16 %v4943
        %v5010 = vunpack.i.l.s16 %v4946
        %v5011 = vunpack.i.h.s16 %v4946
        %v5012 = vunpack.i.l.s16 %v4949
        %v5013 = vunpack.i.h.s16 %v4949
        %v5014 = vpack.i.b16 %v4950, %v4950
        %v5015 = vpack.i.b16 %v4951, %v4951
        %v5016 = vpack.i.b16 %v4952, %v4952
        %v5017 = vpack.i.b16 %v4953, %v4953
        %v5018 = vpack.i.b16 %v4954, %v4954
        %v5019 = vpack.i.b16 %v4955, %v4955
        %v5020 = vpack.i.b16 %v4956, %v4956
        %v5021 = vpack.i.b16 %v4957, %v4957
        %v5022 = vpack.i.b16 %v4958, %v4958
        %v5023 = vpack.i.b16 %v4959, %v4959
        %v5024 = vpack.i.b16 %v4960, %v4960
        %v5025 = vpack.i.b16 %v4961, %v4961
        %v5026 = vpack.i.b16 %v4962, %v4962
        %v5027 = vpack.i.b16 %v4963, %v4963
        %v5028 = vpack.i.b16 %v4964, %v4964
        %v5029 = vpack.i.b16 %v4965, %v4965
        %v5030 = vpack.i.b16 %v4966, %v4966
        %v5031 = vpack.i.b16 %v4967, %v4967
        %v5032 = vpack.i.b16 %v4968, %v4968
        %v5033 = vpack.i.b16 %v4969, %v4969
        %v5034 = vpack.i.b16 %v4970, %v4970
        %v5035 = vpack.i.b16 %v4971, %v4971
        %v5036 = vpack.i.b16 %v4972, %v4972
        %v5037 = vpack.i.b16 %v4973, %v4973
        %v5038 = vpack.i.b16 %v4974, %v4974
        %v5039 = vpack.i.b16 %v4975, %v4975
        %v5040 = vpack.i.b16 %v4976, %v4976
        %v5041 = vpack.i.b16 %v4977, %v4977
        %v5042 = vpack.i.b16 %v4978, %v4978
        %v5043 = vpack.i.b16 %v4979, %v4979
        %v5044 = vpack.i.b16 %v4980, %v4980
        %v5045 = vpack.i.b16 %v4981, %v4981
        %v5046 = vpack.i.b16 %v4982, %v4982
        %v5047 = vpack.i.b16 %v4983, %v4983
        %v5048 = vpack.i.b16 %v4984, %v4984
        %v5049 = vpack.i.b16 %v4985, %v4985
        %v5050 = vpack.i.b16 %v4986, %v4986
        %v5051 = vpack.i.b16 %v4987, %v4987
        %v5052 = vpack.i.b16 %v4988, %v4988
        %v5053 = vpack.i.b16 %v4989, %v4989
        %v5054 = vpack.i.b16 %v4990, %v4990
        %v5055 = vpack.i.b16 %v4991, %v4991
        %v5056 = vpack.i.b16 %v4992, %v4992
        %v5057 = vpack.i.b16 %v4993, %v4993
        %v5058 = vpack.i.b16 %v4994, %v4994
        %v5059 = vpack.i.b16 %v4995, %v4995
        %v5060 = vpack.i.b16 %v4996, %v4996
        %v5061 = vpack.i.b16 %v4997, %v4997
        %v5062 = vpack.i.b16 %v4998, %v4998
        %v5063 = vpack.i.b16 %v4999, %v4999
        %v5064 = vpack.i.b16 %v5000, %v5000
        %v5065 = vpack.i.b16 %v5001, %v5001
        %v5066 = vpack.i.b16 %v5002, %v5002
        %v5067 = vpack.i.b16 %v5003, %v5003
        %v5068 = vpack.i.b16 %v5004, %v5004
        %v5069 = vpack.i.b16 %v5005, %v5005
        %v5070 = vpack.i.b16 %v5006, %v5006
        %v5071 = vpack.i.b16 %v5007, %v5007
        %v5072 = vpack.i.b16 %v5008, %v5008
        %v5073 = vpack.i.b16 %v5009, %v5009
        %v5074 = vpack.i.b16 %v5010, %v5010
        %v5075 = vpack.i.b16 %v5011, %v5011
        %v5076 = vpack.i.b16 %v5012, %v5012
        %v5077 = vpack.i.b16 %v5013, %v5013
        %v5079 = vunpack.c.l.s4 286326784
        %v5080 = vunpack.c.0.s8 %v5079
        %v5081 = vperm.slane %v5014, %v5080
        %v5083 = vunpack.c.l.s4 286326784
        %v5084 = vunpack.c.0.s8 %v5083
        %v5085 = vperm.slane %v5015, %v5084
        %v5087 = vunpack.c.l.s4 286326784
        %v5088 = vunpack.c.0.s8 %v5087
        %v5089 = vperm.slane %v5016, %v5088
        %v5091 = vunpack.c.l.s4 286326784
        %v5092 = vunpack.c.0.s8 %v5091
        %v5093 = vperm.slane %v5017, %v5092
        %v5095 = vunpack.c.l.s4 286326784
        %v5096 = vunpack.c.0.s8 %v5095
        %v5097 = vperm.slane %v5018, %v5096
        %v5099 = vunpack.c.l.s4 286326784
        %v5100 = vunpack.c.0.s8 %v5099
        %v5101 = vperm.slane %v5019, %v5100
        %v5103 = vunpack.c.l.s4 286326784
        %v5104 = vunpack.c.0.s8 %v5103
        %v5105 = vperm.slane %v5020, %v5104
        %v5107 = vunpack.c.l.s4 286326784
        %v5108 = vunpack.c.0.s8 %v5107
        %v5109 = vperm.slane %v5021, %v5108
        %v5111 = vunpack.c.l.s4 286326784
        %v5112 = vunpack.c.0.s8 %v5111
        %v5113 = vperm.slane %v5022, %v5112
        %v5115 = vunpack.c.l.s4 286326784
        %v5116 = vunpack.c.0.s8 %v5115
        %v5117 = vperm.slane %v5023, %v5116
        %v5119 = vunpack.c.l.s4 286326784
        %v5120 = vunpack.c.0.s8 %v5119
        %v5121 = vperm.slane %v5024, %v5120
        %v5123 = vunpack.c.l.s4 286326784
        %v5124 = vunpack.c.0.s8 %v5123
        %v5125 = vperm.slane %v5025, %v5124
        %v5127 = vunpack.c.l.s4 286326784
        %v5128 = vunpack.c.0.s8 %v5127
        %v5129 = vperm.slane %v5026, %v5128
        %v5131 = vunpack.c.l.s4 286326784
        %v5132 = vunpack.c.0.s8 %v5131
        %v5133 = vperm.slane %v5027, %v5132
        %v5135 = vunpack.c.l.s4 286326784
        %v5136 = vunpack.c.0.s8 %v5135
        %v5137 = vperm.slane %v5028, %v5136
        %v5139 = vunpack.c.l.s4 286326784
        %v5140 = vunpack.c.0.s8 %v5139
        %v5141 = vperm.slane %v5029, %v5140
        %v5143 = vunpack.c.l.s4 286326784
        %v5144 = vunpack.c.0.s8 %v5143
        %v5145 = vperm.slane %v5030, %v5144
        %v5147 = vunpack.c.l.s4 286326784
        %v5148 = vunpack.c.0.s8 %v5147
        %v5149 = vperm.slane %v5031, %v5148
        %v5151 = vunpack.c.l.s4 286326784
        %v5152 = vunpack.c.0.s8 %v5151
        %v5153 = vperm.slane %v5032, %v5152
        %v5155 = vunpack.c.l.s4 286326784
        %v5156 = vunpack.c.0.s8 %v5155
        %v5157 = vperm.slane %v5033, %v5156
        %v5159 = vunpack.c.l.s4 286326784
        %v5160 = vunpack.c.0.s8 %v5159
        %v5161 = vperm.slane %v5034, %v5160
        %v5163 = vunpack.c.l.s4 286326784
        %v5164 = vunpack.c.0.s8 %v5163
        %v5165 = vperm.slane %v5035, %v5164
        %v5167 = vunpack.c.l.s4 286326784
        %v5168 = vunpack.c.0.s8 %v5167
        %v5169 = vperm.slane %v5036, %v5168
        %v5171 = vunpack.c.l.s4 286326784
        %v5172 = vunpack.c.0.s8 %v5171
        %v5173 = vperm.slane %v5037, %v5172
        %v5175 = vunpack.c.l.s4 286326784
        %v5176 = vunpack.c.0.s8 %v5175
        %v5177 = vperm.slane %v5038, %v5176
        %v5179 = vunpack.c.l.s4 286326784
        %v5180 = vunpack.c.0.s8 %v5179
        %v5181 = vperm.slane %v5039, %v5180
        %v5183 = vunpack.c.l.s4 286326784
        %v5184 = vunpack.c.0.s8 %v5183
        %v5185 = vperm.slane %v5040, %v5184
        %v5187 = vunpack.c.l.s4 286326784
        %v5188 = vunpack.c.0.s8 %v5187
        %v5189 = vperm.slane %v5041, %v5188
        %v5191 = vunpack.c.l.s4 286326784
        %v5192 = vunpack.c.0.s8 %v5191
        %v5193 = vperm.slane %v5042, %v5192
        %v5195 = vunpack.c.l.s4 286326784
        %v5196 = vunpack.c.0.s8 %v5195
        %v5197 = vperm.slane %v5043, %v5196
        %v5199 = vunpack.c.l.s4 286326784
        %v5200 = vunpack.c.0.s8 %v5199
        %v5201 = vperm.slane %v5044, %v5200
        %v5203 = vunpack.c.l.s4 286326784
        %v5204 = vunpack.c.0.s8 %v5203
        %v5205 = vperm.slane %v5045, %v5204
        %v5207 = vunpack.c.l.s4 286326784
        %v5208 = vunpack.c.0.s8 %v5207
        %v5209 = vperm.slane %v5046, %v5208
        %v5211 = vunpack.c.l.s4 286326784
        %v5212 = vunpack.c.0.s8 %v5211
        %v5213 = vperm.slane %v5047, %v5212
        %v5215 = vunpack.c.l.s4 286326784
        %v5216 = vunpack.c.0.s8 %v5215
        %v5217 = vperm.slane %v5048, %v5216
        %v5219 = vunpack.c.l.s4 286326784
        %v5220 = vunpack.c.0.s8 %v5219
        %v5221 = vperm.slane %v5049, %v5220
        %v5223 = vunpack.c.l.s4 286326784
        %v5224 = vunpack.c.0.s8 %v5223
        %v5225 = vperm.slane %v5050, %v5224
        %v5227 = vunpack.c.l.s4 286326784
        %v5228 = vunpack.c.0.s8 %v5227
        %v5229 = vperm.slane %v5051, %v5228
        %v5231 = vunpack.c.l.s4 286326784
        %v5232 = vunpack.c.0.s8 %v5231
        %v5233 = vperm.slane %v5052, %v5232
        %v5235 = vunpack.c.l.s4 286326784
        %v5236 = vunpack.c.0.s8 %v5235
        %v5237 = vperm.slane %v5053, %v5236
        %v5239 = vunpack.c.l.s4 286326784
        %v5240 = vunpack.c.0.s8 %v5239
        %v5241 = vperm.slane %v5054, %v5240
        %v5243 = vunpack.c.l.s4 286326784
        %v5244 = vunpack.c.0.s8 %v5243
        %v5245 = vperm.slane %v5055, %v5244
        %v5247 = vunpack.c.l.s4 286326784
        %v5248 = vunpack.c.0.s8 %v5247
        %v5249 = vperm.slane %v5056, %v5248
        %v5251 = vunpack.c.l.s4 286326784
        %v5252 = vunpack.c.0.s8 %v5251
        %v5253 = vperm.slane %v5057, %v5252
        %v5255 = vunpack.c.l.s4 286326784
        %v5256 = vunpack.c.0.s8 %v5255
        %v5257 = vperm.slane %v5058, %v5256
        %v5259 = vunpack.c.l.s4 286326784
        %v5260 = vunpack.c.0.s8 %v5259
        %v5261 = vperm.slane %v5059, %v5260
        %v5263 = vunpack.c.l.s4 286326784
        %v5264 = vunpack.c.0.s8 %v5263
        %v5265 = vperm.slane %v5060, %v5264
        %v5267 = vunpack.c.l.s4 286326784
        %v5268 = vunpack.c.0.s8 %v5267
        %v5269 = vperm.slane %v5061, %v5268
        %v5271 = vunpack.c.l.s4 286326784
        %v5272 = vunpack.c.0.s8 %v5271
        %v5273 = vperm.slane %v5062, %v5272
        %v5275 = vunpack.c.l.s4 286326784
        %v5276 = vunpack.c.0.s8 %v5275
        %v5277 = vperm.slane %v5063, %v5276
        %v5279 = vunpack.c.l.s4 286326784
        %v5280 = vunpack.c.0.s8 %v5279
        %v5281 = vperm.slane %v5064, %v5280
        %v5283 = vunpack.c.l.s4 286326784
        %v5284 = vunpack.c.0.s8 %v5283
        %v5285 = vperm.slane %v5065, %v5284
        %v5287 = vunpack.c.l.s4 286326784
        %v5288 = vunpack.c.0.s8 %v5287
        %v5289 = vperm.slane %v5066, %v5288
        %v5291 = vunpack.c.l.s4 286326784
        %v5292 = vunpack.c.0.s8 %v5291
        %v5293 = vperm.slane %v5067, %v5292
        %v5295 = vunpack.c.l.s4 286326784
        %v5296 = vunpack.c.0.s8 %v5295
        %v5297 = vperm.slane %v5068, %v5296
        %v5299 = vunpack.c.l.s4 286326784
        %v5300 = vunpack.c.0.s8 %v5299
        %v5301 = vperm.slane %v5069, %v5300
        %v5303 = vunpack.c.l.s4 286326784
        %v5304 = vunpack.c.0.s8 %v5303
        %v5305 = vperm.slane %v5070, %v5304
        %v5307 = vunpack.c.l.s4 286326784
        %v5308 = vunpack.c.0.s8 %v5307
        %v5309 = vperm.slane %v5071, %v5308
        %v5311 = vunpack.c.l.s4 286326784
        %v5312 = vunpack.c.0.s8 %v5311
        %v5313 = vperm.slane %v5072, %v5312
        %v5315 = vunpack.c.l.s4 286326784
        %v5316 = vunpack.c.0.s8 %v5315
        %v5317 = vperm.slane %v5073, %v5316
        %v5319 = vunpack.c.l.s4 286326784
        %v5320 = vunpack.c.0.s8 %v5319
        %v5321 = vperm.slane %v5074, %v5320
        %v5323 = vunpack.c.l.s4 286326784
        %v5324 = vunpack.c.0.s8 %v5323
        %v5325 = vperm.slane %v5075, %v5324
        %v5327 = vunpack.c.l.s4 286326784
        %v5328 = vunpack.c.0.s8 %v5327
        %v5329 = vperm.slane %v5076, %v5328
        %v5331 = vunpack.c.l.s4 286326784
        %v5332 = vunpack.c.0.s8 %v5331
        %v5333 = vperm.slane %v5077, %v5332
        %vm5398 = vsmask.f32 7942
        %vm5399 = vmand %vm4329, %vm5398
        %v5400 = vld [vmem:[%s960] sm:$0x2]
        %v5401 = vsel %vm5399, %v5081, %v5400
        %5402 = vst [vmem:[%s960] sm:$0x2] %v5401
        %v5403 = vld [vmem:[%s960 + $0x4] sm:$0x2]
        %v5404 = vsel %vm5399, %v5085, %v5403
        %5405 = vst [vmem:[%s960 + $0x4] sm:$0x2] %v5404
        %v5406 = vld [vmem:[%s960 + $0x8] sm:$0x2]
        %v5407 = vsel %vm5399, %v5089, %v5406
        %5408 = vst [vmem:[%s960 + $0x8] sm:$0x2] %v5407
        %v5409 = vld [vmem:[%s960 + $0xc] sm:$0x2]
        %v5410 = vsel %vm5399, %v5093, %v5409
        %5411 = vst [vmem:[%s960 + $0xc] sm:$0x2] %v5410
        %v5412 = vld [vmem:[%s960 + $0x10] sm:$0x2]
        %v5413 = vsel %vm5399, %v5097, %v5412
        %5414 = vst [vmem:[%s960 + $0x10] sm:$0x2] %v5413
        %v5415 = vld [vmem:[%s960 + $0x14] sm:$0x2]
        %v5416 = vsel %vm5399, %v5101, %v5415
        %5417 = vst [vmem:[%s960 + $0x14] sm:$0x2] %v5416
        %v5418 = vld [vmem:[%s960 + $0x18] sm:$0x2]
        %v5419 = vsel %vm5399, %v5105, %v5418
        %5420 = vst [vmem:[%s960 + $0x18] sm:$0x2] %v5419
        %v5421 = vld [vmem:[%s960 + $0x1c] sm:$0x2]
        %v5422 = vsel %vm5399, %v5109, %v5421
        %5423 = vst [vmem:[%s960 + $0x1c] sm:$0x2] %v5422
        %v5424 = vld [vmem:[%s960 + $0x20] sm:$0x2]
        %v5425 = vsel %vm5399, %v5113, %v5424
        %5426 = vst [vmem:[%s960 + $0x20] sm:$0x2] %v5425
        %v5427 = vld [vmem:[%s960 + $0x24] sm:$0x2]
        %v5428 = vsel %vm5399, %v5117, %v5427
        %5429 = vst [vmem:[%s960 + $0x24] sm:$0x2] %v5428
        %v5430 = vld [vmem:[%s960 + $0x28] sm:$0x2]
        %v5431 = vsel %vm5399, %v5121, %v5430
        %5432 = vst [vmem:[%s960 + $0x28] sm:$0x2] %v5431
        %v5433 = vld [vmem:[%s960 + $0x2c] sm:$0x2]
        %v5434 = vsel %vm5399, %v5125, %v5433
        %5435 = vst [vmem:[%s960 + $0x2c] sm:$0x2] %v5434
        %v5436 = vld [vmem:[%s960 + $0x30] sm:$0x2]
        %v5437 = vsel %vm5399, %v5129, %v5436
        %5438 = vst [vmem:[%s960 + $0x30] sm:$0x2] %v5437
        %v5439 = vld [vmem:[%s960 + $0x34] sm:$0x2]
        %v5440 = vsel %vm5399, %v5133, %v5439
        %5441 = vst [vmem:[%s960 + $0x34] sm:$0x2] %v5440
        %v5442 = vld [vmem:[%s960 + $0x38] sm:$0x2]
        %v5443 = vsel %vm5399, %v5137, %v5442
        %5444 = vst [vmem:[%s960 + $0x38] sm:$0x2] %v5443
        %v5445 = vld [vmem:[%s960 + $0x3c] sm:$0x2]
        %v5446 = vsel %vm5399, %v5141, %v5445
        %5447 = vst [vmem:[%s960 + $0x3c] sm:$0x2] %v5446
        %v5448 = vld [vmem:[%s960 + $0x40] sm:$0x2]
        %v5449 = vsel %vm5399, %v5145, %v5448
        %5450 = vst [vmem:[%s960 + $0x40] sm:$0x2] %v5449
        %v5451 = vld [vmem:[%s960 + $0x44] sm:$0x2]
        %v5452 = vsel %vm5399, %v5149, %v5451
        %5453 = vst [vmem:[%s960 + $0x44] sm:$0x2] %v5452
        %v5454 = vld [vmem:[%s960 + $0x48] sm:$0x2]
        %v5455 = vsel %vm5399, %v5153, %v5454
        %5456 = vst [vmem:[%s960 + $0x48] sm:$0x2] %v5455
        %v5457 = vld [vmem:[%s960 + $0x4c] sm:$0x2]
        %v5458 = vsel %vm5399, %v5157, %v5457
        %5459 = vst [vmem:[%s960 + $0x4c] sm:$0x2] %v5458
        %v5460 = vld [vmem:[%s960 + $0x50] sm:$0x2]
        %v5461 = vsel %vm5399, %v5161, %v5460
        %5462 = vst [vmem:[%s960 + $0x50] sm:$0x2] %v5461
        %v5463 = vld [vmem:[%s960 + $0x54] sm:$0x2]
        %v5464 = vsel %vm5399, %v5165, %v5463
        %5465 = vst [vmem:[%s960 + $0x54] sm:$0x2] %v5464
        %v5466 = vld [vmem:[%s960 + $0x58] sm:$0x2]
        %v5467 = vsel %vm5399, %v5169, %v5466
        %5468 = vst [vmem:[%s960 + $0x58] sm:$0x2] %v5467
        %v5469 = vld [vmem:[%s960 + $0x5c] sm:$0x2]
        %v5470 = vsel %vm5399, %v5173, %v5469
        %5471 = vst [vmem:[%s960 + $0x5c] sm:$0x2] %v5470
        %v5472 = vld [vmem:[%s960 + $0x60] sm:$0x2]
        %v5473 = vsel %vm5399, %v5177, %v5472
        %5474 = vst [vmem:[%s960 + $0x60] sm:$0x2] %v5473
        %v5475 = vld [vmem:[%s960 + $0x64] sm:$0x2]
        %v5476 = vsel %vm5399, %v5181, %v5475
        %5477 = vst [vmem:[%s960 + $0x64] sm:$0x2] %v5476
        %v5478 = vld [vmem:[%s960 + $0x68] sm:$0x2]
        %v5479 = vsel %vm5399, %v5185, %v5478
        %5480 = vst [vmem:[%s960 + $0x68] sm:$0x2] %v5479
        %v5481 = vld [vmem:[%s960 + $0x6c] sm:$0x2]
        %v5482 = vsel %vm5399, %v5189, %v5481
        %5483 = vst [vmem:[%s960 + $0x6c] sm:$0x2] %v5482
        %v5484 = vld [vmem:[%s960 + $0x70] sm:$0x2]
        %v5485 = vsel %vm5399, %v5193, %v5484
        %5486 = vst [vmem:[%s960 + $0x70] sm:$0x2] %v5485
        %v5487 = vld [vmem:[%s960 + $0x74] sm:$0x2]
        %v5488 = vsel %vm5399, %v5197, %v5487
        %5489 = vst [vmem:[%s960 + $0x74] sm:$0x2] %v5488
        %v5490 = vld [vmem:[%s960 + $0x78] sm:$0x2]
        %v5491 = vsel %vm5399, %v5201, %v5490
        %5492 = vst [vmem:[%s960 + $0x78] sm:$0x2] %v5491
        %v5493 = vld [vmem:[%s960 + $0x7c] sm:$0x2]
        %v5494 = vsel %vm5399, %v5205, %v5493
        %5495 = vst [vmem:[%s960 + $0x7c] sm:$0x2] %v5494
        %v5496 = vld [vmem:[%s960 + $0x80] sm:$0x2]
        %v5497 = vsel %vm5399, %v5209, %v5496
        %5498 = vst [vmem:[%s960 + $0x80] sm:$0x2] %v5497
        %v5499 = vld [vmem:[%s960 + $0x84] sm:$0x2]
        %v5500 = vsel %vm5399, %v5213, %v5499
        %5501 = vst [vmem:[%s960 + $0x84] sm:$0x2] %v5500
        %v5502 = vld [vmem:[%s960 + $0x88] sm:$0x2]
        %v5503 = vsel %vm5399, %v5217, %v5502
        %5504 = vst [vmem:[%s960 + $0x88] sm:$0x2] %v5503
        %v5505 = vld [vmem:[%s960 + $0x8c] sm:$0x2]
        %v5506 = vsel %vm5399, %v5221, %v5505
        %5507 = vst [vmem:[%s960 + $0x8c] sm:$0x2] %v5506
        %v5508 = vld [vmem:[%s960 + $0x90] sm:$0x2]
        %v5509 = vsel %vm5399, %v5225, %v5508
        %5510 = vst [vmem:[%s960 + $0x90] sm:$0x2] %v5509
        %v5511 = vld [vmem:[%s960 + $0x94] sm:$0x2]
        %v5512 = vsel %vm5399, %v5229, %v5511
        %5513 = vst [vmem:[%s960 + $0x94] sm:$0x2] %v5512
        %v5514 = vld [vmem:[%s960 + $0x98] sm:$0x2]
        %v5515 = vsel %vm5399, %v5233, %v5514
        %5516 = vst [vmem:[%s960 + $0x98] sm:$0x2] %v5515
        %v5517 = vld [vmem:[%s960 + $0x9c] sm:$0x2]
        %v5518 = vsel %vm5399, %v5237, %v5517
        %5519 = vst [vmem:[%s960 + $0x9c] sm:$0x2] %v5518
        %v5520 = vld [vmem:[%s960 + $0xa0] sm:$0x2]
        %v5521 = vsel %vm5399, %v5241, %v5520
        %5522 = vst [vmem:[%s960 + $0xa0] sm:$0x2] %v5521
        %v5523 = vld [vmem:[%s960 + $0xa4] sm:$0x2]
        %v5524 = vsel %vm5399, %v5245, %v5523
        %5525 = vst [vmem:[%s960 + $0xa4] sm:$0x2] %v5524
        %v5526 = vld [vmem:[%s960 + $0xa8] sm:$0x2]
        %v5527 = vsel %vm5399, %v5249, %v5526
        %5528 = vst [vmem:[%s960 + $0xa8] sm:$0x2] %v5527
        %v5529 = vld [vmem:[%s960 + $0xac] sm:$0x2]
        %v5530 = vsel %vm5399, %v5253, %v5529
        %5531 = vst [vmem:[%s960 + $0xac] sm:$0x2] %v5530
        %v5532 = vld [vmem:[%s960 + $0xb0] sm:$0x2]
        %v5533 = vsel %vm5399, %v5257, %v5532
        %5534 = vst [vmem:[%s960 + $0xb0] sm:$0x2] %v5533
        %v5535 = vld [vmem:[%s960 + $0xb4] sm:$0x2]
        %v5536 = vsel %vm5399, %v5261, %v5535
        %5537 = vst [vmem:[%s960 + $0xb4] sm:$0x2] %v5536
        %v5538 = vld [vmem:[%s960 + $0xb8] sm:$0x2]
        %v5539 = vsel %vm5399, %v5265, %v5538
        %5540 = vst [vmem:[%s960 + $0xb8] sm:$0x2] %v5539
        %v5541 = vld [vmem:[%s960 + $0xbc] sm:$0x2]
        %v5542 = vsel %vm5399, %v5269, %v5541
        %5543 = vst [vmem:[%s960 + $0xbc] sm:$0x2] %v5542
        %v5544 = vld [vmem:[%s960 + $0xc0] sm:$0x2]
        %v5545 = vsel %vm5399, %v5273, %v5544
        %5546 = vst [vmem:[%s960 + $0xc0] sm:$0x2] %v5545
        %v5547 = vld [vmem:[%s960 + $0xc4] sm:$0x2]
        %v5548 = vsel %vm5399, %v5277, %v5547
        %5549 = vst [vmem:[%s960 + $0xc4] sm:$0x2] %v5548
        %v5550 = vld [vmem:[%s960 + $0xc8] sm:$0x2]
        %v5551 = vsel %vm5399, %v5281, %v5550
        %5552 = vst [vmem:[%s960 + $0xc8] sm:$0x2] %v5551
        %v5553 = vld [vmem:[%s960 + $0xcc] sm:$0x2]
        %v5554 = vsel %vm5399, %v5285, %v5553
        %5555 = vst [vmem:[%s960 + $0xcc] sm:$0x2] %v5554
        %v5556 = vld [vmem:[%s960 + $0xd0] sm:$0x2]
        %v5557 = vsel %vm5399, %v5289, %v5556
        %5558 = vst [vmem:[%s960 + $0xd0] sm:$0x2] %v5557
        %v5559 = vld [vmem:[%s960 + $0xd4] sm:$0x2]
        %v5560 = vsel %vm5399, %v5293, %v5559
        %5561 = vst [vmem:[%s960 + $0xd4] sm:$0x2] %v5560
        %v5562 = vld [vmem:[%s960 + $0xd8] sm:$0x2]
        %v5563 = vsel %vm5399, %v5297, %v5562
        %5564 = vst [vmem:[%s960 + $0xd8] sm:$0x2] %v5563
        %v5565 = vld [vmem:[%s960 + $0xdc] sm:$0x2]
        %v5566 = vsel %vm5399, %v5301, %v5565
        %5567 = vst [vmem:[%s960 + $0xdc] sm:$0x2] %v5566
        %v5568 = vld [vmem:[%s960 + $0xe0] sm:$0x2]
        %v5569 = vsel %vm5399, %v5305, %v5568
        %5570 = vst [vmem:[%s960 + $0xe0] sm:$0x2] %v5569
        %v5571 = vld [vmem:[%s960 + $0xe4] sm:$0x2]
        %v5572 = vsel %vm5399, %v5309, %v5571
        %5573 = vst [vmem:[%s960 + $0xe4] sm:$0x2] %v5572
        %v5574 = vld [vmem:[%s960 + $0xe8] sm:$0x2]
        %v5575 = vsel %vm5399, %v5313, %v5574
        %5576 = vst [vmem:[%s960 + $0xe8] sm:$0x2] %v5575
        %v5577 = vld [vmem:[%s960 + $0xec] sm:$0x2]
        %v5578 = vsel %vm5399, %v5317, %v5577
        %5579 = vst [vmem:[%s960 + $0xec] sm:$0x2] %v5578
        %v5580 = vld [vmem:[%s960 + $0xf0] sm:$0x2]
        %v5581 = vsel %vm5399, %v5321, %v5580
        %5582 = vst [vmem:[%s960 + $0xf0] sm:$0x2] %v5581
        %v5583 = vld [vmem:[%s960 + $0xf4] sm:$0x2]
        %v5584 = vsel %vm5399, %v5325, %v5583
        %5585 = vst [vmem:[%s960 + $0xf4] sm:$0x2] %v5584
        %v5586 = vld [vmem:[%s960 + $0xf8] sm:$0x2]
        %v5587 = vsel %vm5399, %v5329, %v5586
        %5588 = vst [vmem:[%s960 + $0xf8] sm:$0x2] %v5587
        %v5589 = vld [vmem:[%s960 + $0xfc] sm:$0x2]
        %v5590 = vsel %vm5399, %v5333, %v5589
        %5591 = vst [vmem:[%s960 + $0xfc] sm:$0x2] %v5590
        %5592 = vadd.xlane.f32.xlu0 %v4798
        %v5593 = vpop.xlane.xlu0 %5592
        %5594 = vadd.xlane.f32.xlu0 %v4799
        %v5595 = vpop.xlane.xlu0 %5594
        %5596 = vadd.xlane.f32.xlu0 %v4800
        %v5597 = vpop.xlane.xlu0 %5596
        %5598 = vadd.xlane.f32.xlu0 %v4801
        %v5599 = vpop.xlane.xlu0 %5598
        %5600 = vadd.xlane.f32.xlu0 %v4802
        %v5601 = vpop.xlane.xlu0 %5600
        %5602 = vadd.xlane.f32.xlu0 %v4803
        %v5603 = vpop.xlane.xlu0 %5602
        %5604 = vadd.xlane.f32.xlu0 %v4804
        %v5605 = vpop.xlane.xlu0 %5604
        %5606 = vadd.xlane.f32.xlu0 %v4805
        %v5607 = vpop.xlane.xlu0 %5606
        %v5608 = vadd.f32 %v5593, 1e-06
        %v5609 = vadd.f32 %v5595, 1e-06
        %v5610 = vadd.f32 %v5597, 1e-06
        %v5611 = vadd.f32 %v5599, 1e-06
        %v5612 = vadd.f32 %v5601, 1e-06
        %v5613 = vadd.f32 %v5603, 1e-06
        %v5614 = vadd.f32 %v5605, 1e-06
        %v5615 = vadd.f32 %v5607, 1e-06
        %v5616 = vrsqrt.pop %v5608
        %v5617 = vmul.f32 %v5616, %v5608
        %v5618 = vmul.f32 %v5617, %v5616
        %v5619 = vmul.f32 0.5, %v5618
        %v5620 = vsub.f32 1.5, %v5619
        %v5621 = vmul.f32 %v5616, %v5620
        %vm5622 = vweird.f32 %v5608
        %vm5623 = vweird.f32 %v5616
        %vm5624 = vmor %vm5622, %vm5623
        %v5625 = vsel %vm5624, %v5616, %v5621
        %v5626 = vrsqrt.pop %v5609
        %v5627 = vmul.f32 %v5626, %v5609
        %v5628 = vmul.f32 %v5627, %v5626
        %v5629 = vmul.f32 0.5, %v5628
        %v5630 = vsub.f32 1.5, %v5629
        %v5631 = vmul.f32 %v5626, %v5630
        %vm5632 = vweird.f32 %v5609
        %vm5633 = vweird.f32 %v5626
        %vm5634 = vmor %vm5632, %vm5633
        %v5635 = vsel %vm5634, %v5626, %v5631
        %v5636 = vrsqrt.pop %v5610
        %v5637 = vmul.f32 %v5636, %v5610
        %v5638 = vmul.f32 %v5637, %v5636
        %v5639 = vmul.f32 0.5, %v5638
        %v5640 = vsub.f32 1.5, %v5639
        %v5641 = vmul.f32 %v5636, %v5640
        %vm5642 = vweird.f32 %v5610
        %vm5643 = vweird.f32 %v5636
        %vm5644 = vmor %vm5642, %vm5643
        %v5645 = vsel %vm5644, %v5636, %v5641
        %v5646 = vrsqrt.pop %v5611
        %v5647 = vmul.f32 %v5646, %v5611
        %v5648 = vmul.f32 %v5647, %v5646
        %v5649 = vmul.f32 0.5, %v5648
        %v5650 = vsub.f32 1.5, %v5649
        %v5651 = vmul.f32 %v5646, %v5650
        %vm5652 = vweird.f32 %v5611
        %vm5653 = vweird.f32 %v5646
        %vm5654 = vmor %vm5652, %vm5653
        %v5655 = vsel %vm5654, %v5646, %v5651
        %v5656 = vrsqrt.pop %v5612
        %v5657 = vmul.f32 %v5656, %v5612
        %v5658 = vmul.f32 %v5657, %v5656
        %v5659 = vmul.f32 0.5, %v5658
        %v5660 = vsub.f32 1.5, %v5659
        %v5661 = vmul.f32 %v5656, %v5660
        %vm5662 = vweird.f32 %v5612
        %vm5663 = vweird.f32 %v5656
        %vm5664 = vmor %vm5662, %vm5663
        %v5665 = vsel %vm5664, %v5656, %v5661
        %v5666 = vrsqrt.pop %v5613
        %v5667 = vmul.f32 %v5666, %v5613
        %v5668 = vmul.f32 %v5667, %v5666
        %v5669 = vmul.f32 0.5, %v5668
        %v5670 = vsub.f32 1.5, %v5669
        %v5671 = vmul.f32 %v5666, %v5670
        %vm5672 = vweird.f32 %v5613
        %vm5673 = vweird.f32 %v5666
        %vm5674 = vmor %vm5672, %vm5673
        %v5675 = vsel %vm5674, %v5666, %v5671
        %v5676 = vrsqrt.pop %v5614
        %v5677 = vmul.f32 %v5676, %v5614
        %v5678 = vmul.f32 %v5677, %v5676
        %v5679 = vmul.f32 0.5, %v5678
        %v5680 = vsub.f32 1.5, %v5679
        %v5681 = vmul.f32 %v5676, %v5680
        %vm5682 = vweird.f32 %v5614
        %vm5683 = vweird.f32 %v5676
        %vm5684 = vmor %vm5682, %vm5683
        %v5685 = vsel %vm5684, %v5676, %v5681
        %v5686 = vrsqrt.pop %v5615
        %v5687 = vmul.f32 %v5686, %v5615
        %v5688 = vmul.f32 %v5687, %v5686
        %v5689 = vmul.f32 0.5, %v5688
        %v5690 = vsub.f32 1.5, %v5689
        %v5691 = vmul.f32 %v5686, %v5690
        %vm5692 = vweird.f32 %v5615
        %vm5693 = vweird.f32 %v5686
        %vm5694 = vmor %vm5692, %vm5693
        %v5695 = vsel %vm5694, %v5686, %v5691
        %v5696 = vmul.f32 %v5625, 4.0
        %v5697 = vmul.f32 %v5635, 4.0
        %v5698 = vmul.f32 %v5645, 4.0
        %v5699 = vmul.f32 %v5655, 4.0
        %v5700 = vmul.f32 %v5665, 4.0
        %v5701 = vmul.f32 %v5675, 4.0
        %v5702 = vmul.f32 %v5685, 4.0
        %v5703 = vmul.f32 %v5695, 4.0
        %v5704 = vmul.f32 %v4798, %v5696
        %v5705 = vmul.f32 %v4799, %v5697
        %v5706 = vmul.f32 %v4800, %v5698
        %v5707 = vmul.f32 %v4801, %v5699
        %v5708 = vmul.f32 %v4802, %v5700
        %v5709 = vmul.f32 %v4803, %v5701
        %v5710 = vmul.f32 %v4804, %v5702
        %v5711 = vmul.f32 %v4805, %v5703
        %s5712 = scalar_lea.vmem %s906, 96 [#allocation3]
        %v5713 = vld [vmem:[%s5712] sm:$0xf]
        %v5714 = vld [vmem:[%s5712 + $0x4] sm:$0xf]
        %v5715 = vld [vmem:[%s5712 + $0x8] sm:$0xf]
        %v5716 = vld [vmem:[%s5712 + $0xc] sm:$0xf]
        %v5717 = vld [vmem:[%s5712 + $0x10] sm:$0xf]
        %v5718 = vld [vmem:[%s5712 + $0x14] sm:$0xf]
        %v5719 = vld [vmem:[%s5712 + $0x18] sm:$0xf]
        %v5720 = vld [vmem:[%s5712 + $0x1c] sm:$0xf]
        %v5721 = vunpack.c.l.bf16 %v5713
        %v5722 = vunpack.c.l.bf16 %v5714
        %v5723 = vunpack.c.l.bf16 %v5715
        %v5724 = vunpack.c.l.bf16 %v5716
        %v5725 = vunpack.c.l.bf16 %v5717
        %v5726 = vunpack.c.l.bf16 %v5718
        %v5727 = vunpack.c.l.bf16 %v5719
        %v5728 = vunpack.c.l.bf16 %v5720
        %v5729 = vadd.f32 %v5704, %v5721
        %v5730 = vadd.f32 %v5705, %v5722
        %v5731 = vadd.f32 %v5706, %v5723
        %v5732 = vadd.f32 %v5707, %v5724
        %v5733 = vadd.f32 %v5708, %v5725
        %v5734 = vadd.f32 %v5709, %v5726
        %v5735 = vadd.f32 %v5710, %v5727
        %v5736 = vadd.f32 %v5711, %v5728
        %v5737 = vpack.c.bf16 %v5730, %v5729
        %v5738 = vpack.c.bf16 %v5732, %v5731
        %v5739 = vpack.c.bf16 %v5734, %v5733
        %v5740 = vpack.c.bf16 %v5736, %v5735
        %5741 = vmatpush.bf16.msra.mxu0 %v2535
        %5742 = vmatpush.bf16.msra.mxu0 %v2534
        %5743 = vmatpush.bf16.msra.mxu0 %v2533
        %5744 = vmatpush.bf16.msra.mxu0 %v2532
        %5745 = vmatpush.bf16.msra.mxu0 %v2531
        %5746 = vmatpush.bf16.msra.mxu0 %v2530
        %5747 = vmatpush.bf16.msra.mxu0 %v2529
        %5748 = vmatpush.bf16.msra.mxu0 %v2528
        %5749 = vmatmul.bf16.gmra.mxu0 %v5737
        %v5750 = vpop.f32.mrf.mxu0
        %v5751 = vadd.f32 %v1005, %v5750
        %v5752 = vpop.f32.mrf.mxu0
        %v5753 = vadd.f32 %v1005, %v5752
        %5754 = vmatmul.bf16.gmra.mxu0 %v5738
        %v5755 = vpop.f32.mrf.mxu0
        %v5756 = vadd.f32 %v1005, %v5755
        %v5757 = vpop.f32.mrf.mxu0
        %v5758 = vadd.f32 %v1005, %v5757
        %5759 = vmatmul.bf16.gmra.mxu0 %v5739
        %v5760 = vpop.f32.mrf.mxu0
        %v5761 = vadd.f32 %v1005, %v5760
        %v5762 = vpop.f32.mrf.mxu0
        %v5763 = vadd.f32 %v1005, %v5762
        %5764 = vmatmul.bf16.gmra.mxu0 %v5740
        %v5765 = vpop.f32.mrf.mxu0
        %v5766 = vadd.f32 %v1005, %v5765
        %v5767 = vpop.f32.mrf.mxu0
        %v5768 = vadd.f32 %v1005, %v5767
        %5769 = vdwg.mxu0
        %v5770 = vmul.f32 %v4750, 0.9
        %v5771 = vmul.f32 %v4751, 0.9
        %v5772 = vmul.f32 %v4752, 0.9
        %v5773 = vmul.f32 %v4753, 0.9
        %v5774 = vmul.f32 %v4754, 0.9
        %v5775 = vmul.f32 %v4755, 0.9
        %v5776 = vmul.f32 %v4756, 0.9
        %v5777 = vmul.f32 %v4757, 0.9
        %v5778 = vadd.f32 %v5770, %v5751
        %v5779 = vadd.f32 %v5771, %v5753
        %v5780 = vadd.f32 %v5772, %v5756
        %v5781 = vadd.f32 %v5773, %v5758
        %v5782 = vadd.f32 %v5774, %v5761
        %v5783 = vadd.f32 %v5775, %v5763
        %v5784 = vadd.f32 %v5776, %v5766
        %v5785 = vadd.f32 %v5777, %v5768
        %vm5786 = vcmp.ge.f32.partialorder %v5778, 0.5
        %vm5787 = vcmp.ge.f32.partialorder %v5779, 0.5
        %vm5788 = vcmp.ge.f32.partialorder %v5780, 0.5
        %vm5789 = vcmp.ge.f32.partialorder %v5781, 0.5
        %vm5790 = vcmp.ge.f32.partialorder %v5782, 0.5
        %vm5791 = vcmp.ge.f32.partialorder %v5783, 0.5
        %vm5792 = vcmp.ge.f32.partialorder %v5784, 0.5
        %vm5793 = vcmp.ge.f32.partialorder %v5785, 0.5
        %v5794 = vsel %vm5786, 1, 0
        %v5795 = vsel %vm5787, 1, 0
        %v5796 = vsel %vm5788, 1, 0
        %v5797 = vsel %vm5789, 1, 0
        %v5798 = vsel %vm5790, 1, 0
        %v5799 = vsel %vm5791, 1, 0
        %v5800 = vsel %vm5792, 1, 0
        %v5801 = vsel %vm5793, 1, 0
        %v5802 = vcvt.s32.f32 %v5794
        %v5803 = vcvt.s32.f32 %v5795
        %v5804 = vcvt.s32.f32 %v5796
        %v5805 = vcvt.s32.f32 %v5797
        %v5806 = vcvt.s32.f32 %v5798
        %v5807 = vcvt.s32.f32 %v5799
        %v5808 = vcvt.s32.f32 %v5800
        %v5809 = vcvt.s32.f32 %v5801
        %v5810 = vmul.f32 %v5802, 0.5
        %v5811 = vmul.f32 %v5803, 0.5
        %v5812 = vmul.f32 %v5804, 0.5
        %v5813 = vmul.f32 %v5805, 0.5
        %v5814 = vmul.f32 %v5806, 0.5
        %v5815 = vmul.f32 %v5807, 0.5
        %v5816 = vmul.f32 %v5808, 0.5
        %v5817 = vmul.f32 %v5809, 0.5
        %v5818 = vsub.f32 %v5778, %v5810
        %v5819 = vsub.f32 %v5779, %v5811
        %v5820 = vsub.f32 %v5780, %v5812
        %v5821 = vsub.f32 %v5781, %v5813
        %v5822 = vsub.f32 %v5782, %v5814
        %v5823 = vsub.f32 %v5783, %v5815
        %v5824 = vsub.f32 %v5784, %v5816
        %v5825 = vsub.f32 %v5785, %v5817
        %v5826 = vadd.f32 %v4758, %v5802
        %v5827 = vadd.f32 %v4759, %v5803
        %v5828 = vadd.f32 %v4760, %v5804
        %v5829 = vadd.f32 %v4761, %v5805
        %v5830 = vadd.f32 %v4762, %v5806
        %v5831 = vadd.f32 %v4763, %v5807
        %v5832 = vadd.f32 %v4764, %v5808
        %v5833 = vadd.f32 %v4765, %v5809
        %v5834 = vmul.f32 %v4814, 0.9
        %v5835 = vmul.f32 %v4815, 0.9
        %v5836 = vmul.f32 %v4816, 0.9
        %v5837 = vmul.f32 %v4817, 0.9
        %v5838 = vmul.f32 %v4818, 0.9
        %v5839 = vmul.f32 %v4819, 0.9
        %v5840 = vmul.f32 %v4820, 0.9
        %v5841 = vmul.f32 %v4821, 0.9
        %v5842 = vadd.f32 %v5834, %v1446
        %v5843 = vadd.f32 %v5835, %v1448
        %v5844 = vadd.f32 %v5836, %v1451
        %v5845 = vadd.f32 %v5837, %v1453
        %v5846 = vadd.f32 %v5838, %v1456
        %v5847 = vadd.f32 %v5839, %v1458
        %v5848 = vadd.f32 %v5840, %v1461
        %v5849 = vadd.f32 %v5841, %v1463
        %vm5850 = vcmp.ge.f32.partialorder %v5842, 0.5
        %vm5851 = vcmp.ge.f32.partialorder %v5843, 0.5
        %vm5852 = vcmp.ge.f32.partialorder %v5844, 0.5
        %vm5853 = vcmp.ge.f32.partialorder %v5845, 0.5
        %vm5854 = vcmp.ge.f32.partialorder %v5846, 0.5
        %vm5855 = vcmp.ge.f32.partialorder %v5847, 0.5
        %vm5856 = vcmp.ge.f32.partialorder %v5848, 0.5
        %vm5857 = vcmp.ge.f32.partialorder %v5849, 0.5
        %v5858 = vsel %vm5850, 1, 0
        %v5859 = vsel %vm5851, 1, 0
        %v5860 = vsel %vm5852, 1, 0
        %v5861 = vsel %vm5853, 1, 0
        %v5862 = vsel %vm5854, 1, 0
        %v5863 = vsel %vm5855, 1, 0
        %v5864 = vsel %vm5856, 1, 0
        %v5865 = vsel %vm5857, 1, 0
        %v5866 = vcvt.s32.f32 %v5858
        %v5867 = vcvt.s32.f32 %v5859
        %v5868 = vcvt.s32.f32 %v5860
        %v5869 = vcvt.s32.f32 %v5861
        %v5870 = vcvt.s32.f32 %v5862
        %v5871 = vcvt.s32.f32 %v5863
        %v5872 = vcvt.s32.f32 %v5864
        %v5873 = vcvt.s32.f32 %v5865
        %v5874 = vmul.f32 %v5866, 0.5
        %v5875 = vmul.f32 %v5867, 0.5
        %v5876 = vmul.f32 %v5868, 0.5
        %v5877 = vmul.f32 %v5869, 0.5
        %v5878 = vmul.f32 %v5870, 0.5
        %v5879 = vmul.f32 %v5871, 0.5
        %v5880 = vmul.f32 %v5872, 0.5
        %v5881 = vmul.f32 %v5873, 0.5
        %v5882 = vsub.f32 %v5842, %v5874
        %v5883 = vsub.f32 %v5843, %v5875
        %v5884 = vsub.f32 %v5844, %v5876
        %v5885 = vsub.f32 %v5845, %v5877
        %v5886 = vsub.f32 %v5846, %v5878
        %v5887 = vsub.f32 %v5847, %v5879
        %v5888 = vsub.f32 %v5848, %v5880
        %v5889 = vsub.f32 %v5849, %v5881
        %v5890 = vpack.c.bf16 %v5866, %v5866
        %v5891 = vpack.c.bf16 %v5867, %v5867
        %v5892 = vpack.c.bf16 %v5868, %v5868
        %v5893 = vpack.c.bf16 %v5869, %v5869
        %v5894 = vpack.c.bf16 %v5870, %v5870
        %v5895 = vpack.c.bf16 %v5871, %v5871
        %v5896 = vpack.c.bf16 %v5872, %v5872
        %v5897 = vpack.c.bf16 %v5873, %v5873
        %v5906 = vrot.slane %v5890, 3
        %v5907 = vrot.slane %v5891, 3
        %v5908 = vrot.slane %v5892, 3
        %v5909 = vrot.slane %v5893, 3
        %v5910 = vrot.slane %v5894, 3
        %v5911 = vrot.slane %v5895, 3
        %v5912 = vrot.slane %v5896, 3
        %v5913 = vrot.slane %v5897, 3
        %v5916 = vsel %vm1597, %v5890, %v5906
        %v5918 = vsel %vm1602, %v5890, %v5906
        %v5920 = vrot.slane %v5918, 1
        %v5921 = vsel %vm1606, %v5890, %v5906
        %v5923 = vrot.slane %v5921, 2
        %v5924 = vsel %vm1610, %v5890, %v5906
        %v5926 = vrot.slane %v5924, 3
        %v5929 = vsel %vm1597, %v5891, %v5907
        %v5931 = vsel %vm1602, %v5891, %v5907
        %v5933 = vrot.slane %v5931, 1
        %v5934 = vsel %vm1606, %v5891, %v5907
        %v5936 = vrot.slane %v5934, 2
        %v5937 = vsel %vm1610, %v5891, %v5907
        %v5939 = vrot.slane %v5937, 3
        %v5942 = vsel %vm1597, %v5892, %v5908
        %v5944 = vsel %vm1602, %v5892, %v5908
        %v5946 = vrot.slane %v5944, 1
        %v5947 = vsel %vm1606, %v5892, %v5908
        %v5949 = vrot.slane %v5947, 2
        %v5950 = vsel %vm1610, %v5892, %v5908
        %v5952 = vrot.slane %v5950, 3
        %v5955 = vsel %vm1597, %v5893, %v5909
        %v5957 = vsel %vm1602, %v5893, %v5909
        %v5959 = vrot.slane %v5957, 1
        %v5960 = vsel %vm1606, %v5893, %v5909
        %v5962 = vrot.slane %v5960, 2
        %v5963 = vsel %vm1610, %v5893, %v5909
        %v5965 = vrot.slane %v5963, 3
        %v5968 = vsel %vm1597, %v5894, %v5910
        %v5970 = vsel %vm1602, %v5894, %v5910
        %v5972 = vrot.slane %v5970, 1
        %v5973 = vsel %vm1606, %v5894, %v5910
        %v5975 = vrot.slane %v5973, 2
        %v5976 = vsel %vm1610, %v5894, %v5910
        %v5978 = vrot.slane %v5976, 3
        %v5981 = vsel %vm1597, %v5895, %v5911
        %v5983 = vsel %vm1602, %v5895, %v5911
        %v5985 = vrot.slane %v5983, 1
        %v5986 = vsel %vm1606, %v5895, %v5911
        %v5988 = vrot.slane %v5986, 2
        %v5989 = vsel %vm1610, %v5895, %v5911
        %v5991 = vrot.slane %v5989, 3
        %v5994 = vsel %vm1597, %v5896, %v5912
        %v5996 = vsel %vm1602, %v5896, %v5912
        %v5998 = vrot.slane %v5996, 1
        %v5999 = vsel %vm1606, %v5896, %v5912
        %v6001 = vrot.slane %v5999, 2
        %v6002 = vsel %vm1610, %v5896, %v5912
        %v6004 = vrot.slane %v6002, 3
        %v6007 = vsel %vm1597, %v5897, %v5913
        %v6009 = vsel %vm1602, %v5897, %v5913
        %v6011 = vrot.slane %v6009, 1
        %v6012 = vsel %vm1606, %v5897, %v5913
        %v6014 = vrot.slane %v6012, 2
        %v6015 = vsel %vm1610, %v5897, %v5913
        %v6017 = vrot.slane %v6015, 3
        %v6018 = vunpack.i.l.s16 %v5916
        %v6019 = vunpack.i.h.s16 %v5916
        %v6020 = vunpack.i.l.s16 %v5920
        %v6021 = vunpack.i.h.s16 %v5920
        %v6022 = vunpack.i.l.s16 %v5923
        %v6023 = vunpack.i.h.s16 %v5923
        %v6024 = vunpack.i.l.s16 %v5926
        %v6025 = vunpack.i.h.s16 %v5926
        %v6026 = vunpack.i.l.s16 %v5929
        %v6027 = vunpack.i.h.s16 %v5929
        %v6028 = vunpack.i.l.s16 %v5933
        %v6029 = vunpack.i.h.s16 %v5933
        %v6030 = vunpack.i.l.s16 %v5936
        %v6031 = vunpack.i.h.s16 %v5936
        %v6032 = vunpack.i.l.s16 %v5939
        %v6033 = vunpack.i.h.s16 %v5939
        %v6034 = vunpack.i.l.s16 %v5942
        %v6035 = vunpack.i.h.s16 %v5942
        %v6036 = vunpack.i.l.s16 %v5946
        %v6037 = vunpack.i.h.s16 %v5946
        %v6038 = vunpack.i.l.s16 %v5949
        %v6039 = vunpack.i.h.s16 %v5949
        %v6040 = vunpack.i.l.s16 %v5952
        %v6041 = vunpack.i.h.s16 %v5952
        %v6042 = vunpack.i.l.s16 %v5955
        %v6043 = vunpack.i.h.s16 %v5955
        %v6044 = vunpack.i.l.s16 %v5959
        %v6045 = vunpack.i.h.s16 %v5959
        %v6046 = vunpack.i.l.s16 %v5962
        %v6047 = vunpack.i.h.s16 %v5962
        %v6048 = vunpack.i.l.s16 %v5965
        %v6049 = vunpack.i.h.s16 %v5965
        %v6050 = vunpack.i.l.s16 %v5968
        %v6051 = vunpack.i.h.s16 %v5968
        %v6052 = vunpack.i.l.s16 %v5972
        %v6053 = vunpack.i.h.s16 %v5972
        %v6054 = vunpack.i.l.s16 %v5975
        %v6055 = vunpack.i.h.s16 %v5975
        %v6056 = vunpack.i.l.s16 %v5978
        %v6057 = vunpack.i.h.s16 %v5978
        %v6058 = vunpack.i.l.s16 %v5981
        %v6059 = vunpack.i.h.s16 %v5981
        %v6060 = vunpack.i.l.s16 %v5985
        %v6061 = vunpack.i.h.s16 %v5985
        %v6062 = vunpack.i.l.s16 %v5988
        %v6063 = vunpack.i.h.s16 %v5988
        %v6064 = vunpack.i.l.s16 %v5991
        %v6065 = vunpack.i.h.s16 %v5991
        %v6066 = vunpack.i.l.s16 %v5994
        %v6067 = vunpack.i.h.s16 %v5994
        %v6068 = vunpack.i.l.s16 %v5998
        %v6069 = vunpack.i.h.s16 %v5998
        %v6070 = vunpack.i.l.s16 %v6001
        %v6071 = vunpack.i.h.s16 %v6001
        %v6072 = vunpack.i.l.s16 %v6004
        %v6073 = vunpack.i.h.s16 %v6004
        %v6074 = vunpack.i.l.s16 %v6007
        %v6075 = vunpack.i.h.s16 %v6007
        %v6076 = vunpack.i.l.s16 %v6011
        %v6077 = vunpack.i.h.s16 %v6011
        %v6078 = vunpack.i.l.s16 %v6014
        %v6079 = vunpack.i.h.s16 %v6014
        %v6080 = vunpack.i.l.s16 %v6017
        %v6081 = vunpack.i.h.s16 %v6017
        %v6082 = vpack.i.b16 %v6018, %v6018
        %v6083 = vpack.i.b16 %v6019, %v6019
        %v6084 = vpack.i.b16 %v6020, %v6020
        %v6085 = vpack.i.b16 %v6021, %v6021
        %v6086 = vpack.i.b16 %v6022, %v6022
        %v6087 = vpack.i.b16 %v6023, %v6023
        %v6088 = vpack.i.b16 %v6024, %v6024
        %v6089 = vpack.i.b16 %v6025, %v6025
        %v6090 = vpack.i.b16 %v6026, %v6026
        %v6091 = vpack.i.b16 %v6027, %v6027
        %v6092 = vpack.i.b16 %v6028, %v6028
        %v6093 = vpack.i.b16 %v6029, %v6029
        %v6094 = vpack.i.b16 %v6030, %v6030
        %v6095 = vpack.i.b16 %v6031, %v6031
        %v6096 = vpack.i.b16 %v6032, %v6032
        %v6097 = vpack.i.b16 %v6033, %v6033
        %v6098 = vpack.i.b16 %v6034, %v6034
        %v6099 = vpack.i.b16 %v6035, %v6035
        %v6100 = vpack.i.b16 %v6036, %v6036
        %v6101 = vpack.i.b16 %v6037, %v6037
        %v6102 = vpack.i.b16 %v6038, %v6038
        %v6103 = vpack.i.b16 %v6039, %v6039
        %v6104 = vpack.i.b16 %v6040, %v6040
        %v6105 = vpack.i.b16 %v6041, %v6041
        %v6106 = vpack.i.b16 %v6042, %v6042
        %v6107 = vpack.i.b16 %v6043, %v6043
        %v6108 = vpack.i.b16 %v6044, %v6044
        %v6109 = vpack.i.b16 %v6045, %v6045
        %v6110 = vpack.i.b16 %v6046, %v6046
        %v6111 = vpack.i.b16 %v6047, %v6047
        %v6112 = vpack.i.b16 %v6048, %v6048
        %v6113 = vpack.i.b16 %v6049, %v6049
        %v6114 = vpack.i.b16 %v6050, %v6050
        %v6115 = vpack.i.b16 %v6051, %v6051
        %v6116 = vpack.i.b16 %v6052, %v6052
        %v6117 = vpack.i.b16 %v6053, %v6053
        %v6118 = vpack.i.b16 %v6054, %v6054
        %v6119 = vpack.i.b16 %v6055, %v6055
        %v6120 = vpack.i.b16 %v6056, %v6056
        %v6121 = vpack.i.b16 %v6057, %v6057
        %v6122 = vpack.i.b16 %v6058, %v6058
        %v6123 = vpack.i.b16 %v6059, %v6059
        %v6124 = vpack.i.b16 %v6060, %v6060
        %v6125 = vpack.i.b16 %v6061, %v6061
        %v6126 = vpack.i.b16 %v6062, %v6062
        %v6127 = vpack.i.b16 %v6063, %v6063
        %v6128 = vpack.i.b16 %v6064, %v6064
        %v6129 = vpack.i.b16 %v6065, %v6065
        %v6130 = vpack.i.b16 %v6066, %v6066
        %v6131 = vpack.i.b16 %v6067, %v6067
        %v6132 = vpack.i.b16 %v6068, %v6068
        %v6133 = vpack.i.b16 %v6069, %v6069
        %v6134 = vpack.i.b16 %v6070, %v6070
        %v6135 = vpack.i.b16 %v6071, %v6071
        %v6136 = vpack.i.b16 %v6072, %v6072
        %v6137 = vpack.i.b16 %v6073, %v6073
        %v6138 = vpack.i.b16 %v6074, %v6074
        %v6139 = vpack.i.b16 %v6075, %v6075
        %v6140 = vpack.i.b16 %v6076, %v6076
        %v6141 = vpack.i.b16 %v6077, %v6077
        %v6142 = vpack.i.b16 %v6078, %v6078
        %v6143 = vpack.i.b16 %v6079, %v6079
        %v6144 = vpack.i.b16 %v6080, %v6080
        %v6145 = vpack.i.b16 %v6081, %v6081
        %v6147 = vunpack.c.l.s4 286326784
        %v6148 = vunpack.c.0.s8 %v6147
        %v6149 = vperm.slane %v6082, %v6148
        %v6151 = vunpack.c.l.s4 286326784
        %v6152 = vunpack.c.0.s8 %v6151
        %v6153 = vperm.slane %v6083, %v6152
        %v6155 = vunpack.c.l.s4 286326784
        %v6156 = vunpack.c.0.s8 %v6155
        %v6157 = vperm.slane %v6084, %v6156
        %v6159 = vunpack.c.l.s4 286326784
        %v6160 = vunpack.c.0.s8 %v6159
        %v6161 = vperm.slane %v6085, %v6160
        %v6163 = vunpack.c.l.s4 286326784
        %v6164 = vunpack.c.0.s8 %v6163
        %v6165 = vperm.slane %v6086, %v6164
        %v6167 = vunpack.c.l.s4 286326784
        %v6168 = vunpack.c.0.s8 %v6167
        %v6169 = vperm.slane %v6087, %v6168
        %v6171 = vunpack.c.l.s4 286326784
        %v6172 = vunpack.c.0.s8 %v6171
        %v6173 = vperm.slane %v6088, %v6172
        %v6175 = vunpack.c.l.s4 286326784
        %v6176 = vunpack.c.0.s8 %v6175
        %v6177 = vperm.slane %v6089, %v6176
        %v6179 = vunpack.c.l.s4 286326784
        %v6180 = vunpack.c.0.s8 %v6179
        %v6181 = vperm.slane %v6090, %v6180
        %v6183 = vunpack.c.l.s4 286326784
        %v6184 = vunpack.c.0.s8 %v6183
        %v6185 = vperm.slane %v6091, %v6184
        %v6187 = vunpack.c.l.s4 286326784
        %v6188 = vunpack.c.0.s8 %v6187
        %v6189 = vperm.slane %v6092, %v6188
        %v6191 = vunpack.c.l.s4 286326784
        %v6192 = vunpack.c.0.s8 %v6191
        %v6193 = vperm.slane %v6093, %v6192
        %v6195 = vunpack.c.l.s4 286326784
        %v6196 = vunpack.c.0.s8 %v6195
        %v6197 = vperm.slane %v6094, %v6196
        %v6199 = vunpack.c.l.s4 286326784
        %v6200 = vunpack.c.0.s8 %v6199
        %v6201 = vperm.slane %v6095, %v6200
        %v6203 = vunpack.c.l.s4 286326784
        %v6204 = vunpack.c.0.s8 %v6203
        %v6205 = vperm.slane %v6096, %v6204
        %v6207 = vunpack.c.l.s4 286326784
        %v6208 = vunpack.c.0.s8 %v6207
        %v6209 = vperm.slane %v6097, %v6208
        %v6211 = vunpack.c.l.s4 286326784
        %v6212 = vunpack.c.0.s8 %v6211
        %v6213 = vperm.slane %v6098, %v6212
        %v6215 = vunpack.c.l.s4 286326784
        %v6216 = vunpack.c.0.s8 %v6215
        %v6217 = vperm.slane %v6099, %v6216
        %v6219 = vunpack.c.l.s4 286326784
        %v6220 = vunpack.c.0.s8 %v6219
        %v6221 = vperm.slane %v6100, %v6220
        %v6223 = vunpack.c.l.s4 286326784
        %v6224 = vunpack.c.0.s8 %v6223
        %v6225 = vperm.slane %v6101, %v6224
        %v6227 = vunpack.c.l.s4 286326784
        %v6228 = vunpack.c.0.s8 %v6227
        %v6229 = vperm.slane %v6102, %v6228
        %v6231 = vunpack.c.l.s4 286326784
        %v6232 = vunpack.c.0.s8 %v6231
        %v6233 = vperm.slane %v6103, %v6232
        %v6235 = vunpack.c.l.s4 286326784
        %v6236 = vunpack.c.0.s8 %v6235
        %v6237 = vperm.slane %v6104, %v6236
        %v6239 = vunpack.c.l.s4 286326784
        %v6240 = vunpack.c.0.s8 %v6239
        %v6241 = vperm.slane %v6105, %v6240
        %v6243 = vunpack.c.l.s4 286326784
        %v6244 = vunpack.c.0.s8 %v6243
        %v6245 = vperm.slane %v6106, %v6244
        %v6247 = vunpack.c.l.s4 286326784
        %v6248 = vunpack.c.0.s8 %v6247
        %v6249 = vperm.slane %v6107, %v6248
        %v6251 = vunpack.c.l.s4 286326784
        %v6252 = vunpack.c.0.s8 %v6251
        %v6253 = vperm.slane %v6108, %v6252
        %v6255 = vunpack.c.l.s4 286326784
        %v6256 = vunpack.c.0.s8 %v6255
        %v6257 = vperm.slane %v6109, %v6256
        %v6259 = vunpack.c.l.s4 286326784
        %v6260 = vunpack.c.0.s8 %v6259
        %v6261 = vperm.slane %v6110, %v6260
        %v6263 = vunpack.c.l.s4 286326784
        %v6264 = vunpack.c.0.s8 %v6263
        %v6265 = vperm.slane %v6111, %v6264
        %v6267 = vunpack.c.l.s4 286326784
        %v6268 = vunpack.c.0.s8 %v6267
        %v6269 = vperm.slane %v6112, %v6268
        %v6271 = vunpack.c.l.s4 286326784
        %v6272 = vunpack.c.0.s8 %v6271
        %v6273 = vperm.slane %v6113, %v6272
        %v6275 = vunpack.c.l.s4 286326784
        %v6276 = vunpack.c.0.s8 %v6275
        %v6277 = vperm.slane %v6114, %v6276
        %v6279 = vunpack.c.l.s4 286326784
        %v6280 = vunpack.c.0.s8 %v6279
        %v6281 = vperm.slane %v6115, %v6280
        %v6283 = vunpack.c.l.s4 286326784
        %v6284 = vunpack.c.0.s8 %v6283
        %v6285 = vperm.slane %v6116, %v6284
        %v6287 = vunpack.c.l.s4 286326784
        %v6288 = vunpack.c.0.s8 %v6287
        %v6289 = vperm.slane %v6117, %v6288
        %v6291 = vunpack.c.l.s4 286326784
        %v6292 = vunpack.c.0.s8 %v6291
        %v6293 = vperm.slane %v6118, %v6292
        %v6295 = vunpack.c.l.s4 286326784
        %v6296 = vunpack.c.0.s8 %v6295
        %v6297 = vperm.slane %v6119, %v6296
        %v6299 = vunpack.c.l.s4 286326784
        %v6300 = vunpack.c.0.s8 %v6299
        %v6301 = vperm.slane %v6120, %v6300
        %v6303 = vunpack.c.l.s4 286326784
        %v6304 = vunpack.c.0.s8 %v6303
        %v6305 = vperm.slane %v6121, %v6304
        %v6307 = vunpack.c.l.s4 286326784
        %v6308 = vunpack.c.0.s8 %v6307
        %v6309 = vperm.slane %v6122, %v6308
        %v6311 = vunpack.c.l.s4 286326784
        %v6312 = vunpack.c.0.s8 %v6311
        %v6313 = vperm.slane %v6123, %v6312
        %v6315 = vunpack.c.l.s4 286326784
        %v6316 = vunpack.c.0.s8 %v6315
        %v6317 = vperm.slane %v6124, %v6316
        %v6319 = vunpack.c.l.s4 286326784
        %v6320 = vunpack.c.0.s8 %v6319
        %v6321 = vperm.slane %v6125, %v6320
        %v6323 = vunpack.c.l.s4 286326784
        %v6324 = vunpack.c.0.s8 %v6323
        %v6325 = vperm.slane %v6126, %v6324
        %v6327 = vunpack.c.l.s4 286326784
        %v6328 = vunpack.c.0.s8 %v6327
        %v6329 = vperm.slane %v6127, %v6328
        %v6331 = vunpack.c.l.s4 286326784
        %v6332 = vunpack.c.0.s8 %v6331
        %v6333 = vperm.slane %v6128, %v6332
        %v6335 = vunpack.c.l.s4 286326784
        %v6336 = vunpack.c.0.s8 %v6335
        %v6337 = vperm.slane %v6129, %v6336
        %v6339 = vunpack.c.l.s4 286326784
        %v6340 = vunpack.c.0.s8 %v6339
        %v6341 = vperm.slane %v6130, %v6340
        %v6343 = vunpack.c.l.s4 286326784
        %v6344 = vunpack.c.0.s8 %v6343
        %v6345 = vperm.slane %v6131, %v6344
        %v6347 = vunpack.c.l.s4 286326784
        %v6348 = vunpack.c.0.s8 %v6347
        %v6349 = vperm.slane %v6132, %v6348
        %v6351 = vunpack.c.l.s4 286326784
        %v6352 = vunpack.c.0.s8 %v6351
        %v6353 = vperm.slane %v6133, %v6352
        %v6355 = vunpack.c.l.s4 286326784
        %v6356 = vunpack.c.0.s8 %v6355
        %v6357 = vperm.slane %v6134, %v6356
        %v6359 = vunpack.c.l.s4 286326784
        %v6360 = vunpack.c.0.s8 %v6359
        %v6361 = vperm.slane %v6135, %v6360
        %v6363 = vunpack.c.l.s4 286326784
        %v6364 = vunpack.c.0.s8 %v6363
        %v6365 = vperm.slane %v6136, %v6364
        %v6367 = vunpack.c.l.s4 286326784
        %v6368 = vunpack.c.0.s8 %v6367
        %v6369 = vperm.slane %v6137, %v6368
        %v6371 = vunpack.c.l.s4 286326784
        %v6372 = vunpack.c.0.s8 %v6371
        %v6373 = vperm.slane %v6138, %v6372
        %v6375 = vunpack.c.l.s4 286326784
        %v6376 = vunpack.c.0.s8 %v6375
        %v6377 = vperm.slane %v6139, %v6376
        %v6379 = vunpack.c.l.s4 286326784
        %v6380 = vunpack.c.0.s8 %v6379
        %v6381 = vperm.slane %v6140, %v6380
        %v6383 = vunpack.c.l.s4 286326784
        %v6384 = vunpack.c.0.s8 %v6383
        %v6385 = vperm.slane %v6141, %v6384
        %v6387 = vunpack.c.l.s4 286326784
        %v6388 = vunpack.c.0.s8 %v6387
        %v6389 = vperm.slane %v6142, %v6388
        %v6391 = vunpack.c.l.s4 286326784
        %v6392 = vunpack.c.0.s8 %v6391
        %v6393 = vperm.slane %v6143, %v6392
        %v6395 = vunpack.c.l.s4 286326784
        %v6396 = vunpack.c.0.s8 %v6395
        %v6397 = vperm.slane %v6144, %v6396
        %v6399 = vunpack.c.l.s4 286326784
        %v6400 = vunpack.c.0.s8 %v6399
        %v6401 = vperm.slane %v6145, %v6400
        %vm6466 = vcmask 1042434
        %vm6467 = vsmask.f32 2304
        %vm6468 = vmand %vm6466, %vm6467
        %v6469 = vld [vmem:[%s960] sm:$0x4]
        %v6470 = vsel %vm6468, %v6149, %v6469
        %6471 = vst [vmem:[%s960] sm:$0x4] %v6470
        %v6472 = vld [vmem:[%s960 + $0x4] sm:$0x4]
        %v6473 = vsel %vm6468, %v6153, %v6472
        %6474 = vst [vmem:[%s960 + $0x4] sm:$0x4] %v6473
        %v6475 = vld [vmem:[%s960 + $0x8] sm:$0x4]
        %v6476 = vsel %vm6468, %v6157, %v6475
        %6477 = vst [vmem:[%s960 + $0x8] sm:$0x4] %v6476
        %v6478 = vld [vmem:[%s960 + $0xc] sm:$0x4]
        %v6479 = vsel %vm6468, %v6161, %v6478
        %6480 = vst [vmem:[%s960 + $0xc] sm:$0x4] %v6479
        %v6481 = vld [vmem:[%s960 + $0x10] sm:$0x4]
        %v6482 = vsel %vm6468, %v6165, %v6481
        %6483 = vst [vmem:[%s960 + $0x10] sm:$0x4] %v6482
        %v6484 = vld [vmem:[%s960 + $0x14] sm:$0x4]
        %v6485 = vsel %vm6468, %v6169, %v6484
        %6486 = vst [vmem:[%s960 + $0x14] sm:$0x4] %v6485
        %v6487 = vld [vmem:[%s960 + $0x18] sm:$0x4]
        %v6488 = vsel %vm6468, %v6173, %v6487
        %6489 = vst [vmem:[%s960 + $0x18] sm:$0x4] %v6488
        %v6490 = vld [vmem:[%s960 + $0x1c] sm:$0x4]
        %v6491 = vsel %vm6468, %v6177, %v6490
        %6492 = vst [vmem:[%s960 + $0x1c] sm:$0x4] %v6491
        %v6493 = vld [vmem:[%s960 + $0x20] sm:$0x4]
        %v6494 = vsel %vm6468, %v6181, %v6493
        %6495 = vst [vmem:[%s960 + $0x20] sm:$0x4] %v6494
        %v6496 = vld [vmem:[%s960 + $0x24] sm:$0x4]
        %v6497 = vsel %vm6468, %v6185, %v6496
        %6498 = vst [vmem:[%s960 + $0x24] sm:$0x4] %v6497
        %v6499 = vld [vmem:[%s960 + $0x28] sm:$0x4]
        %v6500 = vsel %vm6468, %v6189, %v6499
        %6501 = vst [vmem:[%s960 + $0x28] sm:$0x4] %v6500
        %v6502 = vld [vmem:[%s960 + $0x2c] sm:$0x4]
        %v6503 = vsel %vm6468, %v6193, %v6502
        %6504 = vst [vmem:[%s960 + $0x2c] sm:$0x4] %v6503
        %v6505 = vld [vmem:[%s960 + $0x30] sm:$0x4]
        %v6506 = vsel %vm6468, %v6197, %v6505
        %6507 = vst [vmem:[%s960 + $0x30] sm:$0x4] %v6506
        %v6508 = vld [vmem:[%s960 + $0x34] sm:$0x4]
        %v6509 = vsel %vm6468, %v6201, %v6508
        %6510 = vst [vmem:[%s960 + $0x34] sm:$0x4] %v6509
        %v6511 = vld [vmem:[%s960 + $0x38] sm:$0x4]
        %v6512 = vsel %vm6468, %v6205, %v6511
        %6513 = vst [vmem:[%s960 + $0x38] sm:$0x4] %v6512
        %v6514 = vld [vmem:[%s960 + $0x3c] sm:$0x4]
        %v6515 = vsel %vm6468, %v6209, %v6514
        %6516 = vst [vmem:[%s960 + $0x3c] sm:$0x4] %v6515
        %v6517 = vld [vmem:[%s960 + $0x40] sm:$0x4]
        %v6518 = vsel %vm6468, %v6213, %v6517
        %6519 = vst [vmem:[%s960 + $0x40] sm:$0x4] %v6518
        %v6520 = vld [vmem:[%s960 + $0x44] sm:$0x4]
        %v6521 = vsel %vm6468, %v6217, %v6520
        %6522 = vst [vmem:[%s960 + $0x44] sm:$0x4] %v6521
        %v6523 = vld [vmem:[%s960 + $0x48] sm:$0x4]
        %v6524 = vsel %vm6468, %v6221, %v6523
        %6525 = vst [vmem:[%s960 + $0x48] sm:$0x4] %v6524
        %v6526 = vld [vmem:[%s960 + $0x4c] sm:$0x4]
        %v6527 = vsel %vm6468, %v6225, %v6526
        %6528 = vst [vmem:[%s960 + $0x4c] sm:$0x4] %v6527
        %v6529 = vld [vmem:[%s960 + $0x50] sm:$0x4]
        %v6530 = vsel %vm6468, %v6229, %v6529
        %6531 = vst [vmem:[%s960 + $0x50] sm:$0x4] %v6530
        %v6532 = vld [vmem:[%s960 + $0x54] sm:$0x4]
        %v6533 = vsel %vm6468, %v6233, %v6532
        %6534 = vst [vmem:[%s960 + $0x54] sm:$0x4] %v6533
        %v6535 = vld [vmem:[%s960 + $0x58] sm:$0x4]
        %v6536 = vsel %vm6468, %v6237, %v6535
        %6537 = vst [vmem:[%s960 + $0x58] sm:$0x4] %v6536
        %v6538 = vld [vmem:[%s960 + $0x5c] sm:$0x4]
        %v6539 = vsel %vm6468, %v6241, %v6538
        %6540 = vst [vmem:[%s960 + $0x5c] sm:$0x4] %v6539
        %v6541 = vld [vmem:[%s960 + $0x60] sm:$0x4]
        %v6542 = vsel %vm6468, %v6245, %v6541
        %6543 = vst [vmem:[%s960 + $0x60] sm:$0x4] %v6542
        %v6544 = vld [vmem:[%s960 + $0x64] sm:$0x4]
        %v6545 = vsel %vm6468, %v6249, %v6544
        %6546 = vst [vmem:[%s960 + $0x64] sm:$0x4] %v6545
        %v6547 = vld [vmem:[%s960 + $0x68] sm:$0x4]
        %v6548 = vsel %vm6468, %v6253, %v6547
        %6549 = vst [vmem:[%s960 + $0x68] sm:$0x4] %v6548
        %v6550 = vld [vmem:[%s960 + $0x6c] sm:$0x4]
        %v6551 = vsel %vm6468, %v6257, %v6550
        %6552 = vst [vmem:[%s960 + $0x6c] sm:$0x4] %v6551
        %v6553 = vld [vmem:[%s960 + $0x70] sm:$0x4]
        %v6554 = vsel %vm6468, %v6261, %v6553
        %6555 = vst [vmem:[%s960 + $0x70] sm:$0x4] %v6554
        %v6556 = vld [vmem:[%s960 + $0x74] sm:$0x4]
        %v6557 = vsel %vm6468, %v6265, %v6556
        %6558 = vst [vmem:[%s960 + $0x74] sm:$0x4] %v6557
        %v6559 = vld [vmem:[%s960 + $0x78] sm:$0x4]
        %v6560 = vsel %vm6468, %v6269, %v6559
        %6561 = vst [vmem:[%s960 + $0x78] sm:$0x4] %v6560
        %v6562 = vld [vmem:[%s960 + $0x7c] sm:$0x4]
        %v6563 = vsel %vm6468, %v6273, %v6562
        %6564 = vst [vmem:[%s960 + $0x7c] sm:$0x4] %v6563
        %v6565 = vld [vmem:[%s960 + $0x80] sm:$0x4]
        %v6566 = vsel %vm6468, %v6277, %v6565
        %6567 = vst [vmem:[%s960 + $0x80] sm:$0x4] %v6566
        %v6568 = vld [vmem:[%s960 + $0x84] sm:$0x4]
        %v6569 = vsel %vm6468, %v6281, %v6568
        %6570 = vst [vmem:[%s960 + $0x84] sm:$0x4] %v6569
        %v6571 = vld [vmem:[%s960 + $0x88] sm:$0x4]
        %v6572 = vsel %vm6468, %v6285, %v6571
        %6573 = vst [vmem:[%s960 + $0x88] sm:$0x4] %v6572
        %v6574 = vld [vmem:[%s960 + $0x8c] sm:$0x4]
        %v6575 = vsel %vm6468, %v6289, %v6574
        %6576 = vst [vmem:[%s960 + $0x8c] sm:$0x4] %v6575
        %v6577 = vld [vmem:[%s960 + $0x90] sm:$0x4]
        %v6578 = vsel %vm6468, %v6293, %v6577
        %6579 = vst [vmem:[%s960 + $0x90] sm:$0x4] %v6578
        %v6580 = vld [vmem:[%s960 + $0x94] sm:$0x4]
        %v6581 = vsel %vm6468, %v6297, %v6580
        %6582 = vst [vmem:[%s960 + $0x94] sm:$0x4] %v6581
        %v6583 = vld [vmem:[%s960 + $0x98] sm:$0x4]
        %v6584 = vsel %vm6468, %v6301, %v6583
        %6585 = vst [vmem:[%s960 + $0x98] sm:$0x4] %v6584
        %v6586 = vld [vmem:[%s960 + $0x9c] sm:$0x4]
        %v6587 = vsel %vm6468, %v6305, %v6586
        %6588 = vst [vmem:[%s960 + $0x9c] sm:$0x4] %v6587
        %v6589 = vld [vmem:[%s960 + $0xa0] sm:$0x4]
        %v6590 = vsel %vm6468, %v6309, %v6589
        %6591 = vst [vmem:[%s960 + $0xa0] sm:$0x4] %v6590
        %v6592 = vld [vmem:[%s960 + $0xa4] sm:$0x4]
        %v6593 = vsel %vm6468, %v6313, %v6592
        %6594 = vst [vmem:[%s960 + $0xa4] sm:$0x4] %v6593
        %v6595 = vld [vmem:[%s960 + $0xa8] sm:$0x4]
        %v6596 = vsel %vm6468, %v6317, %v6595
        %6597 = vst [vmem:[%s960 + $0xa8] sm:$0x4] %v6596
        %v6598 = vld [vmem:[%s960 + $0xac] sm:$0x4]
        %v6599 = vsel %vm6468, %v6321, %v6598
        %6600 = vst [vmem:[%s960 + $0xac] sm:$0x4] %v6599
        %v6601 = vld [vmem:[%s960 + $0xb0] sm:$0x4]
        %v6602 = vsel %vm6468, %v6325, %v6601
        %6603 = vst [vmem:[%s960 + $0xb0] sm:$0x4] %v6602
        %v6604 = vld [vmem:[%s960 + $0xb4] sm:$0x4]
        %v6605 = vsel %vm6468, %v6329, %v6604
        %6606 = vst [vmem:[%s960 + $0xb4] sm:$0x4] %v6605
        %v6607 = vld [vmem:[%s960 + $0xb8] sm:$0x4]
        %v6608 = vsel %vm6468, %v6333, %v6607
        %6609 = vst [vmem:[%s960 + $0xb8] sm:$0x4] %v6608
        %v6610 = vld [vmem:[%s960 + $0xbc] sm:$0x4]
        %v6611 = vsel %vm6468, %v6337, %v6610
        %6612 = vst [vmem:[%s960 + $0xbc] sm:$0x4] %v6611
        %v6613 = vld [vmem:[%s960 + $0xc0] sm:$0x4]
        %v6614 = vsel %vm6468, %v6341, %v6613
        %6615 = vst [vmem:[%s960 + $0xc0] sm:$0x4] %v6614
        %v6616 = vld [vmem:[%s960 + $0xc4] sm:$0x4]
        %v6617 = vsel %vm6468, %v6345, %v6616
        %6618 = vst [vmem:[%s960 + $0xc4] sm:$0x4] %v6617
        %v6619 = vld [vmem:[%s960 + $0xc8] sm:$0x4]
        %v6620 = vsel %vm6468, %v6349, %v6619
        %6621 = vst [vmem:[%s960 + $0xc8] sm:$0x4] %v6620
        %v6622 = vld [vmem:[%s960 + $0xcc] sm:$0x4]
        %v6623 = vsel %vm6468, %v6353, %v6622
        %6624 = vst [vmem:[%s960 + $0xcc] sm:$0x4] %v6623
        %v6625 = vld [vmem:[%s960 + $0xd0] sm:$0x4]
        %v6626 = vsel %vm6468, %v6357, %v6625
        %6627 = vst [vmem:[%s960 + $0xd0] sm:$0x4] %v6626
        %v6628 = vld [vmem:[%s960 + $0xd4] sm:$0x4]
        %v6629 = vsel %vm6468, %v6361, %v6628
        %6630 = vst [vmem:[%s960 + $0xd4] sm:$0x4] %v6629
        %v6631 = vld [vmem:[%s960 + $0xd8] sm:$0x4]
        %v6632 = vsel %vm6468, %v6365, %v6631
        %6633 = vst [vmem:[%s960 + $0xd8] sm:$0x4] %v6632
        %v6634 = vld [vmem:[%s960 + $0xdc] sm:$0x4]
        %v6635 = vsel %vm6468, %v6369, %v6634
        %6636 = vst [vmem:[%s960 + $0xdc] sm:$0x4] %v6635
        %v6637 = vld [vmem:[%s960 + $0xe0] sm:$0x4]
        %v6638 = vsel %vm6468, %v6373, %v6637
        %6639 = vst [vmem:[%s960 + $0xe0] sm:$0x4] %v6638
        %v6640 = vld [vmem:[%s960 + $0xe4] sm:$0x4]
        %v6641 = vsel %vm6468, %v6377, %v6640
        %6642 = vst [vmem:[%s960 + $0xe4] sm:$0x4] %v6641
        %v6643 = vld [vmem:[%s960 + $0xe8] sm:$0x4]
        %v6644 = vsel %vm6468, %v6381, %v6643
        %6645 = vst [vmem:[%s960 + $0xe8] sm:$0x4] %v6644
        %v6646 = vld [vmem:[%s960 + $0xec] sm:$0x4]
        %v6647 = vsel %vm6468, %v6385, %v6646
        %6648 = vst [vmem:[%s960 + $0xec] sm:$0x4] %v6647
        %v6649 = vld [vmem:[%s960 + $0xf0] sm:$0x4]
        %v6650 = vsel %vm6468, %v6389, %v6649
        %6651 = vst [vmem:[%s960 + $0xf0] sm:$0x4] %v6650
        %v6652 = vld [vmem:[%s960 + $0xf4] sm:$0x4]
        %v6653 = vsel %vm6468, %v6393, %v6652
        %6654 = vst [vmem:[%s960 + $0xf4] sm:$0x4] %v6653
        %v6655 = vld [vmem:[%s960 + $0xf8] sm:$0x4]
        %v6656 = vsel %vm6468, %v6397, %v6655
        %6657 = vst [vmem:[%s960 + $0xf8] sm:$0x4] %v6656
        %v6658 = vld [vmem:[%s960 + $0xfc] sm:$0x4]
        %v6659 = vsel %vm6468, %v6401, %v6658
        %6660 = vst [vmem:[%s960 + $0xfc] sm:$0x4] %v6659
        %6661 = vadd.xlane.f32.xlu0 %v5866
        %v6662 = vpop.xlane.xlu0 %6661
        %6663 = vadd.xlane.f32.xlu0 %v5867
        %v6664 = vpop.xlane.xlu0 %6663
        %6665 = vadd.xlane.f32.xlu0 %v5868
        %v6666 = vpop.xlane.xlu0 %6665
        %6667 = vadd.xlane.f32.xlu0 %v5869
        %v6668 = vpop.xlane.xlu0 %6667
        %6669 = vadd.xlane.f32.xlu0 %v5870
        %v6670 = vpop.xlane.xlu0 %6669
        %6671 = vadd.xlane.f32.xlu0 %v5871
        %v6672 = vpop.xlane.xlu0 %6671
        %6673 = vadd.xlane.f32.xlu0 %v5872
        %v6674 = vpop.xlane.xlu0 %6673
        %6675 = vadd.xlane.f32.xlu0 %v5873
        %v6676 = vpop.xlane.xlu0 %6675
        %v6677 = vadd.f32 %v6662, 1e-06
        %v6678 = vadd.f32 %v6664, 1e-06
        %v6679 = vadd.f32 %v6666, 1e-06
        %v6680 = vadd.f32 %v6668, 1e-06
        %v6681 = vadd.f32 %v6670, 1e-06
        %v6682 = vadd.f32 %v6672, 1e-06
        %v6683 = vadd.f32 %v6674, 1e-06
        %v6684 = vadd.f32 %v6676, 1e-06
        %v6685 = vrsqrt.pop %v6677
        %v6686 = vmul.f32 %v6685, %v6677
        %v6687 = vmul.f32 %v6686, %v6685
        %v6688 = vmul.f32 0.5, %v6687
        %v6689 = vsub.f32 1.5, %v6688
        %v6690 = vmul.f32 %v6685, %v6689
        %vm6691 = vweird.f32 %v6677
        %vm6692 = vweird.f32 %v6685
        %vm6693 = vmor %vm6691, %vm6692
        %v6694 = vsel %vm6693, %v6685, %v6690
        %v6695 = vrsqrt.pop %v6678
        %v6696 = vmul.f32 %v6695, %v6678
        %v6697 = vmul.f32 %v6696, %v6695
        %v6698 = vmul.f32 0.5, %v6697
        %v6699 = vsub.f32 1.5, %v6698
        %v6700 = vmul.f32 %v6695, %v6699
        %vm6701 = vweird.f32 %v6678
        %vm6702 = vweird.f32 %v6695
        %vm6703 = vmor %vm6701, %vm6702
        %v6704 = vsel %vm6703, %v6695, %v6700
        %v6705 = vrsqrt.pop %v6679
        %v6706 = vmul.f32 %v6705, %v6679
        %v6707 = vmul.f32 %v6706, %v6705
        %v6708 = vmul.f32 0.5, %v6707
        %v6709 = vsub.f32 1.5, %v6708
        %v6710 = vmul.f32 %v6705, %v6709
        %vm6711 = vweird.f32 %v6679
        %vm6712 = vweird.f32 %v6705
        %vm6713 = vmor %vm6711, %vm6712
        %v6714 = vsel %vm6713, %v6705, %v6710
        %v6715 = vrsqrt.pop %v6680
        %v6716 = vmul.f32 %v6715, %v6680
        %v6717 = vmul.f32 %v6716, %v6715
        %v6718 = vmul.f32 0.5, %v6717
        %v6719 = vsub.f32 1.5, %v6718
        %v6720 = vmul.f32 %v6715, %v6719
        %vm6721 = vweird.f32 %v6680
        %vm6722 = vweird.f32 %v6715
        %vm6723 = vmor %vm6721, %vm6722
        %v6724 = vsel %vm6723, %v6715, %v6720
        %v6725 = vrsqrt.pop %v6681
        %v6726 = vmul.f32 %v6725, %v6681
        %v6727 = vmul.f32 %v6726, %v6725
        %v6728 = vmul.f32 0.5, %v6727
        %v6729 = vsub.f32 1.5, %v6728
        %v6730 = vmul.f32 %v6725, %v6729
        %vm6731 = vweird.f32 %v6681
        %vm6732 = vweird.f32 %v6725
        %vm6733 = vmor %vm6731, %vm6732
        %v6734 = vsel %vm6733, %v6725, %v6730
        %v6735 = vrsqrt.pop %v6682
        %v6736 = vmul.f32 %v6735, %v6682
        %v6737 = vmul.f32 %v6736, %v6735
        %v6738 = vmul.f32 0.5, %v6737
        %v6739 = vsub.f32 1.5, %v6738
        %v6740 = vmul.f32 %v6735, %v6739
        %vm6741 = vweird.f32 %v6682
        %vm6742 = vweird.f32 %v6735
        %vm6743 = vmor %vm6741, %vm6742
        %v6744 = vsel %vm6743, %v6735, %v6740
        %v6745 = vrsqrt.pop %v6683
        %v6746 = vmul.f32 %v6745, %v6683
        %v6747 = vmul.f32 %v6746, %v6745
        %v6748 = vmul.f32 0.5, %v6747
        %v6749 = vsub.f32 1.5, %v6748
        %v6750 = vmul.f32 %v6745, %v6749
        %vm6751 = vweird.f32 %v6683
        %vm6752 = vweird.f32 %v6745
        %vm6753 = vmor %vm6751, %vm6752
        %v6754 = vsel %vm6753, %v6745, %v6750
        %v6755 = vrsqrt.pop %v6684
        %v6756 = vmul.f32 %v6755, %v6684
        %v6757 = vmul.f32 %v6756, %v6755
        %v6758 = vmul.f32 0.5, %v6757
        %v6759 = vsub.f32 1.5, %v6758
        %v6760 = vmul.f32 %v6755, %v6759
        %vm6761 = vweird.f32 %v6684
        %vm6762 = vweird.f32 %v6755
        %vm6763 = vmor %vm6761, %vm6762
        %v6764 = vsel %vm6763, %v6755, %v6760
        %v6765 = vmul.f32 %v6694, 4.0
        %v6766 = vmul.f32 %v6704, 4.0
        %v6767 = vmul.f32 %v6714, 4.0
        %v6768 = vmul.f32 %v6724, 4.0
        %v6769 = vmul.f32 %v6734, 4.0
        %v6770 = vmul.f32 %v6744, 4.0
        %v6771 = vmul.f32 %v6754, 4.0
        %v6772 = vmul.f32 %v6764, 4.0
        %v6773 = vmul.f32 %v5866, %v6765
        %v6774 = vmul.f32 %v5867, %v6766
        %v6775 = vmul.f32 %v5868, %v6767
        %v6776 = vmul.f32 %v5869, %v6768
        %v6777 = vmul.f32 %v5870, %v6769
        %v6778 = vmul.f32 %v5871, %v6770
        %v6779 = vmul.f32 %v5872, %v6771
        %v6780 = vmul.f32 %v5873, %v6772
        %s6781 = scalar_lea.vmem %s906, 128 [#allocation3]
        %v6782 = vld [vmem:[%s6781] sm:$0xf]
        %v6783 = vld [vmem:[%s6781 + $0x4] sm:$0xf]
        %v6784 = vld [vmem:[%s6781 + $0x8] sm:$0xf]
        %v6785 = vld [vmem:[%s6781 + $0xc] sm:$0xf]
        %v6786 = vld [vmem:[%s6781 + $0x10] sm:$0xf]
        %v6787 = vld [vmem:[%s6781 + $0x14] sm:$0xf]
        %v6788 = vld [vmem:[%s6781 + $0x18] sm:$0xf]
        %v6789 = vld [vmem:[%s6781 + $0x1c] sm:$0xf]
        %v6790 = vunpack.c.l.bf16 %v6782
        %v6791 = vunpack.c.l.bf16 %v6783
        %v6792 = vunpack.c.l.bf16 %v6784
        %v6793 = vunpack.c.l.bf16 %v6785
        %v6794 = vunpack.c.l.bf16 %v6786
        %v6795 = vunpack.c.l.bf16 %v6787
        %v6796 = vunpack.c.l.bf16 %v6788
        %v6797 = vunpack.c.l.bf16 %v6789
        %v6798 = vadd.f32 %v6773, %v6790
        %v6799 = vadd.f32 %v6774, %v6791
        %v6800 = vadd.f32 %v6775, %v6792
        %v6801 = vadd.f32 %v6776, %v6793
        %v6802 = vadd.f32 %v6777, %v6794
        %v6803 = vadd.f32 %v6778, %v6795
        %v6804 = vadd.f32 %v6779, %v6796
        %v6805 = vadd.f32 %v6780, %v6797
        %v6806 = vpack.c.bf16 %v6799, %v6798
        %v6807 = vpack.c.bf16 %v6801, %v6800
        %v6808 = vpack.c.bf16 %v6803, %v6802
        %v6809 = vpack.c.bf16 %v6805, %v6804
        %6810 = vmatpush.bf16.msra.mxu0 %v2535
        %6811 = vmatpush.bf16.msra.mxu0 %v2534
        %6812 = vmatpush.bf16.msra.mxu0 %v2533
        %6813 = vmatpush.bf16.msra.mxu0 %v2532
        %6814 = vmatpush.bf16.msra.mxu0 %v2531
        %6815 = vmatpush.bf16.msra.mxu0 %v2530
        %6816 = vmatpush.bf16.msra.mxu0 %v2529
        %6817 = vmatpush.bf16.msra.mxu0 %v2528
        %6818 = vmatmul.bf16.gmra.mxu0 %v6806
        %v6819 = vpop.f32.mrf.mxu0
        %v6820 = vadd.f32 %v1005, %v6819
        %v6821 = vpop.f32.mrf.mxu0
        %v6822 = vadd.f32 %v1005, %v6821
        %6823 = vmatmul.bf16.gmra.mxu0 %v6807
        %v6824 = vpop.f32.mrf.mxu0
        %v6825 = vadd.f32 %v1005, %v6824
        %v6826 = vpop.f32.mrf.mxu0
        %v6827 = vadd.f32 %v1005, %v6826
        %6828 = vmatmul.bf16.gmra.mxu0 %v6808
        %v6829 = vpop.f32.mrf.mxu0
        %v6830 = vadd.f32 %v1005, %v6829
        %v6831 = vpop.f32.mrf.mxu0
        %v6832 = vadd.f32 %v1005, %v6831
        %6833 = vmatmul.bf16.gmra.mxu0 %v6809
        %v6834 = vpop.f32.mrf.mxu0
        %v6835 = vadd.f32 %v1005, %v6834
        %v6836 = vpop.f32.mrf.mxu0
        %v6837 = vadd.f32 %v1005, %v6836
        %6838 = vdwg.mxu0
        %v6839 = vmul.f32 %v5818, 0.9
        %v6840 = vmul.f32 %v5819, 0.9
        %v6841 = vmul.f32 %v5820, 0.9
        %v6842 = vmul.f32 %v5821, 0.9
        %v6843 = vmul.f32 %v5822, 0.9
        %v6844 = vmul.f32 %v5823, 0.9
        %v6845 = vmul.f32 %v5824, 0.9
        %v6846 = vmul.f32 %v5825, 0.9
        %v6847 = vadd.f32 %v6839, %v6820
        %v6848 = vadd.f32 %v6840, %v6822
        %v6849 = vadd.f32 %v6841, %v6825
        %v6850 = vadd.f32 %v6842, %v6827
        %v6851 = vadd.f32 %v6843, %v6830
        %v6852 = vadd.f32 %v6844, %v6832
        %v6853 = vadd.f32 %v6845, %v6835
        %v6854 = vadd.f32 %v6846, %v6837
        %vm6855 = vcmp.ge.f32.partialorder %v6847, 0.5
        %vm6856 = vcmp.ge.f32.partialorder %v6848, 0.5
        %vm6857 = vcmp.ge.f32.partialorder %v6849, 0.5
        %vm6858 = vcmp.ge.f32.partialorder %v6850, 0.5
        %vm6859 = vcmp.ge.f32.partialorder %v6851, 0.5
        %vm6860 = vcmp.ge.f32.partialorder %v6852, 0.5
        %vm6861 = vcmp.ge.f32.partialorder %v6853, 0.5
        %vm6862 = vcmp.ge.f32.partialorder %v6854, 0.5
        %v6863 = vsel %vm6855, 1, 0
        %v6864 = vsel %vm6856, 1, 0
        %v6865 = vsel %vm6857, 1, 0
        %v6866 = vsel %vm6858, 1, 0
        %v6867 = vsel %vm6859, 1, 0
        %v6868 = vsel %vm6860, 1, 0
        %v6869 = vsel %vm6861, 1, 0
        %v6870 = vsel %vm6862, 1, 0
        %v6871 = vcvt.s32.f32 %v6863
        %v6872 = vcvt.s32.f32 %v6864
        %v6873 = vcvt.s32.f32 %v6865
        %v6874 = vcvt.s32.f32 %v6866
        %v6875 = vcvt.s32.f32 %v6867
        %v6876 = vcvt.s32.f32 %v6868
        %v6877 = vcvt.s32.f32 %v6869
        %v6878 = vcvt.s32.f32 %v6870
        %v6879 = vmul.f32 %v6871, 0.5
        %v6880 = vmul.f32 %v6872, 0.5
        %v6881 = vmul.f32 %v6873, 0.5
        %v6882 = vmul.f32 %v6874, 0.5
        %v6883 = vmul.f32 %v6875, 0.5
        %v6884 = vmul.f32 %v6876, 0.5
        %v6885 = vmul.f32 %v6877, 0.5
        %v6886 = vmul.f32 %v6878, 0.5
        %v6887 = vsub.f32 %v6847, %v6879
        %v6888 = vsub.f32 %v6848, %v6880
        %v6889 = vsub.f32 %v6849, %v6881
        %v6890 = vsub.f32 %v6850, %v6882
        %v6891 = vsub.f32 %v6851, %v6883
        %v6892 = vsub.f32 %v6852, %v6884
        %v6893 = vsub.f32 %v6853, %v6885
        %v6894 = vsub.f32 %v6854, %v6886
        %v6895 = vadd.f32 %v5826, %v6871
        %v6896 = vadd.f32 %v5827, %v6872
        %v6897 = vadd.f32 %v5828, %v6873
        %v6898 = vadd.f32 %v5829, %v6874
        %v6899 = vadd.f32 %v5830, %v6875
        %v6900 = vadd.f32 %v5831, %v6876
        %v6901 = vadd.f32 %v5832, %v6877
        %v6902 = vadd.f32 %v5833, %v6878
        %v6903 = vmul.f32 %v5882, 0.9
        %v6904 = vmul.f32 %v5883, 0.9
        %v6905 = vmul.f32 %v5884, 0.9
        %v6906 = vmul.f32 %v5885, 0.9
        %v6907 = vmul.f32 %v5886, 0.9
        %v6908 = vmul.f32 %v5887, 0.9
        %v6909 = vmul.f32 %v5888, 0.9
        %v6910 = vmul.f32 %v5889, 0.9
        %v6911 = vadd.f32 %v6903, %v1466
        %v6912 = vadd.f32 %v6904, %v1468
        %v6913 = vadd.f32 %v6905, %v1471
        %v6914 = vadd.f32 %v6906, %v1473
        %v6915 = vadd.f32 %v6907, %v1476
        %v6916 = vadd.f32 %v6908, %v1478
        %v6917 = vadd.f32 %v6909, %v1481
        %v6918 = vadd.f32 %v6910, %v1483
        %vm6919 = vcmp.ge.f32.partialorder %v6911, 0.5
        %vm6920 = vcmp.ge.f32.partialorder %v6912, 0.5
        %vm6921 = vcmp.ge.f32.partialorder %v6913, 0.5
        %vm6922 = vcmp.ge.f32.partialorder %v6914, 0.5
        %vm6923 = vcmp.ge.f32.partialorder %v6915, 0.5
        %vm6924 = vcmp.ge.f32.partialorder %v6916, 0.5
        %vm6925 = vcmp.ge.f32.partialorder %v6917, 0.5
        %vm6926 = vcmp.ge.f32.partialorder %v6918, 0.5
        %v6927 = vsel %vm6919, 1, 0
        %v6928 = vsel %vm6920, 1, 0
        %v6929 = vsel %vm6921, 1, 0
        %v6930 = vsel %vm6922, 1, 0
        %v6931 = vsel %vm6923, 1, 0
        %v6932 = vsel %vm6924, 1, 0
        %v6933 = vsel %vm6925, 1, 0
        %v6934 = vsel %vm6926, 1, 0
        %v6935 = vcvt.s32.f32 %v6927
        %v6936 = vcvt.s32.f32 %v6928
        %v6937 = vcvt.s32.f32 %v6929
        %v6938 = vcvt.s32.f32 %v6930
        %v6939 = vcvt.s32.f32 %v6931
        %v6940 = vcvt.s32.f32 %v6932
        %v6941 = vcvt.s32.f32 %v6933
        %v6942 = vcvt.s32.f32 %v6934
        %v6943 = vmul.f32 %v6935, 0.5
        %v6944 = vmul.f32 %v6936, 0.5
        %v6945 = vmul.f32 %v6937, 0.5
        %v6946 = vmul.f32 %v6938, 0.5
        %v6947 = vmul.f32 %v6939, 0.5
        %v6948 = vmul.f32 %v6940, 0.5
        %v6949 = vmul.f32 %v6941, 0.5
        %v6950 = vmul.f32 %v6942, 0.5
        %v6951 = vsub.f32 %v6911, %v6943
        %v6952 = vsub.f32 %v6912, %v6944
        %v6953 = vsub.f32 %v6913, %v6945
        %v6954 = vsub.f32 %v6914, %v6946
        %v6955 = vsub.f32 %v6915, %v6947
        %v6956 = vsub.f32 %v6916, %v6948
        %v6957 = vsub.f32 %v6917, %v6949
        %v6958 = vsub.f32 %v6918, %v6950
        %v6959 = vpack.c.bf16 %v6935, %v6935
        %v6960 = vpack.c.bf16 %v6936, %v6936
        %v6961 = vpack.c.bf16 %v6937, %v6937
        %v6962 = vpack.c.bf16 %v6938, %v6938
        %v6963 = vpack.c.bf16 %v6939, %v6939
        %v6964 = vpack.c.bf16 %v6940, %v6940
        %v6965 = vpack.c.bf16 %v6941, %v6941
        %v6966 = vpack.c.bf16 %v6942, %v6942
        %v6975 = vrot.slane %v6959, 3
        %v6976 = vrot.slane %v6960, 3
        %v6977 = vrot.slane %v6961, 3
        %v6978 = vrot.slane %v6962, 3
        %v6979 = vrot.slane %v6963, 3
        %v6980 = vrot.slane %v6964, 3
        %v6981 = vrot.slane %v6965, 3
        %v6982 = vrot.slane %v6966, 3
        %v6985 = vsel %vm1597, %v6959, %v6975
        %v6987 = vsel %vm1602, %v6959, %v6975
        %v6989 = vrot.slane %v6987, 1
        %v6990 = vsel %vm1606, %v6959, %v6975
        %v6992 = vrot.slane %v6990, 2
        %v6993 = vsel %vm1610, %v6959, %v6975
        %v6995 = vrot.slane %v6993, 3
        %v6998 = vsel %vm1597, %v6960, %v6976
        %v7000 = vsel %vm1602, %v6960, %v6976
        %v7002 = vrot.slane %v7000, 1
        %v7003 = vsel %vm1606, %v6960, %v6976
        %v7005 = vrot.slane %v7003, 2
        %v7006 = vsel %vm1610, %v6960, %v6976
        %v7008 = vrot.slane %v7006, 3
        %v7011 = vsel %vm1597, %v6961, %v6977
        %v7013 = vsel %vm1602, %v6961, %v6977
        %v7015 = vrot.slane %v7013, 1
        %v7016 = vsel %vm1606, %v6961, %v6977
        %v7018 = vrot.slane %v7016, 2
        %v7019 = vsel %vm1610, %v6961, %v6977
        %v7021 = vrot.slane %v7019, 3
        %v7024 = vsel %vm1597, %v6962, %v6978
        %v7026 = vsel %vm1602, %v6962, %v6978
        %v7028 = vrot.slane %v7026, 1
        %v7029 = vsel %vm1606, %v6962, %v6978
        %v7031 = vrot.slane %v7029, 2
        %v7032 = vsel %vm1610, %v6962, %v6978
        %v7034 = vrot.slane %v7032, 3
        %v7037 = vsel %vm1597, %v6963, %v6979
        %v7039 = vsel %vm1602, %v6963, %v6979
        %v7041 = vrot.slane %v7039, 1
        %v7042 = vsel %vm1606, %v6963, %v6979
        %v7044 = vrot.slane %v7042, 2
        %v7045 = vsel %vm1610, %v6963, %v6979
        %v7047 = vrot.slane %v7045, 3
        %v7050 = vsel %vm1597, %v6964, %v6980
        %v7052 = vsel %vm1602, %v6964, %v6980
        %v7054 = vrot.slane %v7052, 1
        %v7055 = vsel %vm1606, %v6964, %v6980
        %v7057 = vrot.slane %v7055, 2
        %v7058 = vsel %vm1610, %v6964, %v6980
        %v7060 = vrot.slane %v7058, 3
        %v7063 = vsel %vm1597, %v6965, %v6981
        %v7065 = vsel %vm1602, %v6965, %v6981
        %v7067 = vrot.slane %v7065, 1
        %v7068 = vsel %vm1606, %v6965, %v6981
        %v7070 = vrot.slane %v7068, 2
        %v7071 = vsel %vm1610, %v6965, %v6981
        %v7073 = vrot.slane %v7071, 3
        %v7076 = vsel %vm1597, %v6966, %v6982
        %v7078 = vsel %vm1602, %v6966, %v6982
        %v7080 = vrot.slane %v7078, 1
        %v7081 = vsel %vm1606, %v6966, %v6982
        %v7083 = vrot.slane %v7081, 2
        %v7084 = vsel %vm1610, %v6966, %v6982
        %v7086 = vrot.slane %v7084, 3
        %v7087 = vunpack.i.l.s16 %v6985
        %v7088 = vunpack.i.h.s16 %v6985
        %v7089 = vunpack.i.l.s16 %v6989
        %v7090 = vunpack.i.h.s16 %v6989
        %v7091 = vunpack.i.l.s16 %v6992
        %v7092 = vunpack.i.h.s16 %v6992
        %v7093 = vunpack.i.l.s16 %v6995
        %v7094 = vunpack.i.h.s16 %v6995
        %v7095 = vunpack.i.l.s16 %v6998
        %v7096 = vunpack.i.h.s16 %v6998
        %v7097 = vunpack.i.l.s16 %v7002
        %v7098 = vunpack.i.h.s16 %v7002
        %v7099 = vunpack.i.l.s16 %v7005
        %v7100 = vunpack.i.h.s16 %v7005
        %v7101 = vunpack.i.l.s16 %v7008
        %v7102 = vunpack.i.h.s16 %v7008
        %v7103 = vunpack.i.l.s16 %v7011
        %v7104 = vunpack.i.h.s16 %v7011
        %v7105 = vunpack.i.l.s16 %v7015
        %v7106 = vunpack.i.h.s16 %v7015
        %v7107 = vunpack.i.l.s16 %v7018
        %v7108 = vunpack.i.h.s16 %v7018
        %v7109 = vunpack.i.l.s16 %v7021
        %v7110 = vunpack.i.h.s16 %v7021
        %v7111 = vunpack.i.l.s16 %v7024
        %v7112 = vunpack.i.h.s16 %v7024
        %v7113 = vunpack.i.l.s16 %v7028
        %v7114 = vunpack.i.h.s16 %v7028
        %v7115 = vunpack.i.l.s16 %v7031
        %v7116 = vunpack.i.h.s16 %v7031
        %v7117 = vunpack.i.l.s16 %v7034
        %v7118 = vunpack.i.h.s16 %v7034
        %v7119 = vunpack.i.l.s16 %v7037
        %v7120 = vunpack.i.h.s16 %v7037
        %v7121 = vunpack.i.l.s16 %v7041
        %v7122 = vunpack.i.h.s16 %v7041
        %v7123 = vunpack.i.l.s16 %v7044
        %v7124 = vunpack.i.h.s16 %v7044
        %v7125 = vunpack.i.l.s16 %v7047
        %v7126 = vunpack.i.h.s16 %v7047
        %v7127 = vunpack.i.l.s16 %v7050
        %v7128 = vunpack.i.h.s16 %v7050
        %v7129 = vunpack.i.l.s16 %v7054
        %v7130 = vunpack.i.h.s16 %v7054
        %v7131 = vunpack.i.l.s16 %v7057
        %v7132 = vunpack.i.h.s16 %v7057
        %v7133 = vunpack.i.l.s16 %v7060
        %v7134 = vunpack.i.h.s16 %v7060
        %v7135 = vunpack.i.l.s16 %v7063
        %v7136 = vunpack.i.h.s16 %v7063
        %v7137 = vunpack.i.l.s16 %v7067
        %v7138 = vunpack.i.h.s16 %v7067
        %v7139 = vunpack.i.l.s16 %v7070
        %v7140 = vunpack.i.h.s16 %v7070
        %v7141 = vunpack.i.l.s16 %v7073
        %v7142 = vunpack.i.h.s16 %v7073
        %v7143 = vunpack.i.l.s16 %v7076
        %v7144 = vunpack.i.h.s16 %v7076
        %v7145 = vunpack.i.l.s16 %v7080
        %v7146 = vunpack.i.h.s16 %v7080
        %v7147 = vunpack.i.l.s16 %v7083
        %v7148 = vunpack.i.h.s16 %v7083
        %v7149 = vunpack.i.l.s16 %v7086
        %v7150 = vunpack.i.h.s16 %v7086
        %v7151 = vpack.i.b16 %v7087, %v7087
        %v7152 = vpack.i.b16 %v7088, %v7088
        %v7153 = vpack.i.b16 %v7089, %v7089
        %v7154 = vpack.i.b16 %v7090, %v7090
        %v7155 = vpack.i.b16 %v7091, %v7091
        %v7156 = vpack.i.b16 %v7092, %v7092
        %v7157 = vpack.i.b16 %v7093, %v7093
        %v7158 = vpack.i.b16 %v7094, %v7094
        %v7159 = vpack.i.b16 %v7095, %v7095
        %v7160 = vpack.i.b16 %v7096, %v7096
        %v7161 = vpack.i.b16 %v7097, %v7097
        %v7162 = vpack.i.b16 %v7098, %v7098
        %v7163 = vpack.i.b16 %v7099, %v7099
        %v7164 = vpack.i.b16 %v7100, %v7100
        %v7165 = vpack.i.b16 %v7101, %v7101
        %v7166 = vpack.i.b16 %v7102, %v7102
        %v7167 = vpack.i.b16 %v7103, %v7103
        %v7168 = vpack.i.b16 %v7104, %v7104
        %v7169 = vpack.i.b16 %v7105, %v7105
        %v7170 = vpack.i.b16 %v7106, %v7106
        %v7171 = vpack.i.b16 %v7107, %v7107
        %v7172 = vpack.i.b16 %v7108, %v7108
        %v7173 = vpack.i.b16 %v7109, %v7109
        %v7174 = vpack.i.b16 %v7110, %v7110
        %v7175 = vpack.i.b16 %v7111, %v7111
        %v7176 = vpack.i.b16 %v7112, %v7112
        %v7177 = vpack.i.b16 %v7113, %v7113
        %v7178 = vpack.i.b16 %v7114, %v7114
        %v7179 = vpack.i.b16 %v7115, %v7115
        %v7180 = vpack.i.b16 %v7116, %v7116
        %v7181 = vpack.i.b16 %v7117, %v7117
        %v7182 = vpack.i.b16 %v7118, %v7118
        %v7183 = vpack.i.b16 %v7119, %v7119
        %v7184 = vpack.i.b16 %v7120, %v7120
        %v7185 = vpack.i.b16 %v7121, %v7121
        %v7186 = vpack.i.b16 %v7122, %v7122
        %v7187 = vpack.i.b16 %v7123, %v7123
        %v7188 = vpack.i.b16 %v7124, %v7124
        %v7189 = vpack.i.b16 %v7125, %v7125
        %v7190 = vpack.i.b16 %v7126, %v7126
        %v7191 = vpack.i.b16 %v7127, %v7127
        %v7192 = vpack.i.b16 %v7128, %v7128
        %v7193 = vpack.i.b16 %v7129, %v7129
        %v7194 = vpack.i.b16 %v7130, %v7130
        %v7195 = vpack.i.b16 %v7131, %v7131
        %v7196 = vpack.i.b16 %v7132, %v7132
        %v7197 = vpack.i.b16 %v7133, %v7133
        %v7198 = vpack.i.b16 %v7134, %v7134
        %v7199 = vpack.i.b16 %v7135, %v7135
        %v7200 = vpack.i.b16 %v7136, %v7136
        %v7201 = vpack.i.b16 %v7137, %v7137
        %v7202 = vpack.i.b16 %v7138, %v7138
        %v7203 = vpack.i.b16 %v7139, %v7139
        %v7204 = vpack.i.b16 %v7140, %v7140
        %v7205 = vpack.i.b16 %v7141, %v7141
        %v7206 = vpack.i.b16 %v7142, %v7142
        %v7207 = vpack.i.b16 %v7143, %v7143
        %v7208 = vpack.i.b16 %v7144, %v7144
        %v7209 = vpack.i.b16 %v7145, %v7145
        %v7210 = vpack.i.b16 %v7146, %v7146
        %v7211 = vpack.i.b16 %v7147, %v7147
        %v7212 = vpack.i.b16 %v7148, %v7148
        %v7213 = vpack.i.b16 %v7149, %v7149
        %v7214 = vpack.i.b16 %v7150, %v7150
        %v7216 = vunpack.c.l.s4 286326784
        %v7217 = vunpack.c.0.s8 %v7216
        %v7218 = vperm.slane %v7151, %v7217
        %v7220 = vunpack.c.l.s4 286326784
        %v7221 = vunpack.c.0.s8 %v7220
        %v7222 = vperm.slane %v7152, %v7221
        %v7224 = vunpack.c.l.s4 286326784
        %v7225 = vunpack.c.0.s8 %v7224
        %v7226 = vperm.slane %v7153, %v7225
        %v7228 = vunpack.c.l.s4 286326784
        %v7229 = vunpack.c.0.s8 %v7228
        %v7230 = vperm.slane %v7154, %v7229
        %v7232 = vunpack.c.l.s4 286326784
        %v7233 = vunpack.c.0.s8 %v7232
        %v7234 = vperm.slane %v7155, %v7233
        %v7236 = vunpack.c.l.s4 286326784
        %v7237 = vunpack.c.0.s8 %v7236
        %v7238 = vperm.slane %v7156, %v7237
        %v7240 = vunpack.c.l.s4 286326784
        %v7241 = vunpack.c.0.s8 %v7240
        %v7242 = vperm.slane %v7157, %v7241
        %v7244 = vunpack.c.l.s4 286326784
        %v7245 = vunpack.c.0.s8 %v7244
        %v7246 = vperm.slane %v7158, %v7245
        %v7248 = vunpack.c.l.s4 286326784
        %v7249 = vunpack.c.0.s8 %v7248
        %v7250 = vperm.slane %v7159, %v7249
        %v7252 = vunpack.c.l.s4 286326784
        %v7253 = vunpack.c.0.s8 %v7252
        %v7254 = vperm.slane %v7160, %v7253
        %v7256 = vunpack.c.l.s4 286326784
        %v7257 = vunpack.c.0.s8 %v7256
        %v7258 = vperm.slane %v7161, %v7257
        %v7260 = vunpack.c.l.s4 286326784
        %v7261 = vunpack.c.0.s8 %v7260
        %v7262 = vperm.slane %v7162, %v7261
        %v7264 = vunpack.c.l.s4 286326784
        %v7265 = vunpack.c.0.s8 %v7264
        %v7266 = vperm.slane %v7163, %v7265
        %v7268 = vunpack.c.l.s4 286326784
        %v7269 = vunpack.c.0.s8 %v7268
        %v7270 = vperm.slane %v7164, %v7269
        %v7272 = vunpack.c.l.s4 286326784
        %v7273 = vunpack.c.0.s8 %v7272
        %v7274 = vperm.slane %v7165, %v7273
        %v7276 = vunpack.c.l.s4 286326784
        %v7277 = vunpack.c.0.s8 %v7276
        %v7278 = vperm.slane %v7166, %v7277
        %v7280 = vunpack.c.l.s4 286326784
        %v7281 = vunpack.c.0.s8 %v7280
        %v7282 = vperm.slane %v7167, %v7281
        %v7284 = vunpack.c.l.s4 286326784
        %v7285 = vunpack.c.0.s8 %v7284
        %v7286 = vperm.slane %v7168, %v7285
        %v7288 = vunpack.c.l.s4 286326784
        %v7289 = vunpack.c.0.s8 %v7288
        %v7290 = vperm.slane %v7169, %v7289
        %v7292 = vunpack.c.l.s4 286326784
        %v7293 = vunpack.c.0.s8 %v7292
        %v7294 = vperm.slane %v7170, %v7293
        %v7296 = vunpack.c.l.s4 286326784
        %v7297 = vunpack.c.0.s8 %v7296
        %v7298 = vperm.slane %v7171, %v7297
        %v7300 = vunpack.c.l.s4 286326784
        %v7301 = vunpack.c.0.s8 %v7300
        %v7302 = vperm.slane %v7172, %v7301
        %v7304 = vunpack.c.l.s4 286326784
        %v7305 = vunpack.c.0.s8 %v7304
        %v7306 = vperm.slane %v7173, %v7305
        %v7308 = vunpack.c.l.s4 286326784
        %v7309 = vunpack.c.0.s8 %v7308
        %v7310 = vperm.slane %v7174, %v7309
        %v7312 = vunpack.c.l.s4 286326784
        %v7313 = vunpack.c.0.s8 %v7312
        %v7314 = vperm.slane %v7175, %v7313
        %v7316 = vunpack.c.l.s4 286326784
        %v7317 = vunpack.c.0.s8 %v7316
        %v7318 = vperm.slane %v7176, %v7317
        %v7320 = vunpack.c.l.s4 286326784
        %v7321 = vunpack.c.0.s8 %v7320
        %v7322 = vperm.slane %v7177, %v7321
        %v7324 = vunpack.c.l.s4 286326784
        %v7325 = vunpack.c.0.s8 %v7324
        %v7326 = vperm.slane %v7178, %v7325
        %v7328 = vunpack.c.l.s4 286326784
        %v7329 = vunpack.c.0.s8 %v7328
        %v7330 = vperm.slane %v7179, %v7329
        %v7332 = vunpack.c.l.s4 286326784
        %v7333 = vunpack.c.0.s8 %v7332
        %v7334 = vperm.slane %v7180, %v7333
        %v7336 = vunpack.c.l.s4 286326784
        %v7337 = vunpack.c.0.s8 %v7336
        %v7338 = vperm.slane %v7181, %v7337
        %v7340 = vunpack.c.l.s4 286326784
        %v7341 = vunpack.c.0.s8 %v7340
        %v7342 = vperm.slane %v7182, %v7341
        %v7344 = vunpack.c.l.s4 286326784
        %v7345 = vunpack.c.0.s8 %v7344
        %v7346 = vperm.slane %v7183, %v7345
        %v7348 = vunpack.c.l.s4 286326784
        %v7349 = vunpack.c.0.s8 %v7348
        %v7350 = vperm.slane %v7184, %v7349
        %v7352 = vunpack.c.l.s4 286326784
        %v7353 = vunpack.c.0.s8 %v7352
        %v7354 = vperm.slane %v7185, %v7353
        %v7356 = vunpack.c.l.s4 286326784
        %v7357 = vunpack.c.0.s8 %v7356
        %v7358 = vperm.slane %v7186, %v7357
        %v7360 = vunpack.c.l.s4 286326784
        %v7361 = vunpack.c.0.s8 %v7360
        %v7362 = vperm.slane %v7187, %v7361
        %v7364 = vunpack.c.l.s4 286326784
        %v7365 = vunpack.c.0.s8 %v7364
        %v7366 = vperm.slane %v7188, %v7365
        %v7368 = vunpack.c.l.s4 286326784
        %v7369 = vunpack.c.0.s8 %v7368
        %v7370 = vperm.slane %v7189, %v7369
        %v7372 = vunpack.c.l.s4 286326784
        %v7373 = vunpack.c.0.s8 %v7372
        %v7374 = vperm.slane %v7190, %v7373
        %v7376 = vunpack.c.l.s4 286326784
        %v7377 = vunpack.c.0.s8 %v7376
        %v7378 = vperm.slane %v7191, %v7377
        %v7380 = vunpack.c.l.s4 286326784
        %v7381 = vunpack.c.0.s8 %v7380
        %v7382 = vperm.slane %v7192, %v7381
        %v7384 = vunpack.c.l.s4 286326784
        %v7385 = vunpack.c.0.s8 %v7384
        %v7386 = vperm.slane %v7193, %v7385
        %v7388 = vunpack.c.l.s4 286326784
        %v7389 = vunpack.c.0.s8 %v7388
        %v7390 = vperm.slane %v7194, %v7389
        %v7392 = vunpack.c.l.s4 286326784
        %v7393 = vunpack.c.0.s8 %v7392
        %v7394 = vperm.slane %v7195, %v7393
        %v7396 = vunpack.c.l.s4 286326784
        %v7397 = vunpack.c.0.s8 %v7396
        %v7398 = vperm.slane %v7196, %v7397
        %v7400 = vunpack.c.l.s4 286326784
        %v7401 = vunpack.c.0.s8 %v7400
        %v7402 = vperm.slane %v7197, %v7401
        %v7404 = vunpack.c.l.s4 286326784
        %v7405 = vunpack.c.0.s8 %v7404
        %v7406 = vperm.slane %v7198, %v7405
        %v7408 = vunpack.c.l.s4 286326784
        %v7409 = vunpack.c.0.s8 %v7408
        %v7410 = vperm.slane %v7199, %v7409
        %v7412 = vunpack.c.l.s4 286326784
        %v7413 = vunpack.c.0.s8 %v7412
        %v7414 = vperm.slane %v7200, %v7413
        %v7416 = vunpack.c.l.s4 286326784
        %v7417 = vunpack.c.0.s8 %v7416
        %v7418 = vperm.slane %v7201, %v7417
        %v7420 = vunpack.c.l.s4 286326784
        %v7421 = vunpack.c.0.s8 %v7420
        %v7422 = vperm.slane %v7202, %v7421
        %v7424 = vunpack.c.l.s4 286326784
        %v7425 = vunpack.c.0.s8 %v7424
        %v7426 = vperm.slane %v7203, %v7425
        %v7428 = vunpack.c.l.s4 286326784
        %v7429 = vunpack.c.0.s8 %v7428
        %v7430 = vperm.slane %v7204, %v7429
        %v7432 = vunpack.c.l.s4 286326784
        %v7433 = vunpack.c.0.s8 %v7432
        %v7434 = vperm.slane %v7205, %v7433
        %v7436 = vunpack.c.l.s4 286326784
        %v7437 = vunpack.c.0.s8 %v7436
        %v7438 = vperm.slane %v7206, %v7437
        %v7440 = vunpack.c.l.s4 286326784
        %v7441 = vunpack.c.0.s8 %v7440
        %v7442 = vperm.slane %v7207, %v7441
        %v7444 = vunpack.c.l.s4 286326784
        %v7445 = vunpack.c.0.s8 %v7444
        %v7446 = vperm.slane %v7208, %v7445
        %v7448 = vunpack.c.l.s4 286326784
        %v7449 = vunpack.c.0.s8 %v7448
        %v7450 = vperm.slane %v7209, %v7449
        %v7452 = vunpack.c.l.s4 286326784
        %v7453 = vunpack.c.0.s8 %v7452
        %v7454 = vperm.slane %v7210, %v7453
        %v7456 = vunpack.c.l.s4 286326784
        %v7457 = vunpack.c.0.s8 %v7456
        %v7458 = vperm.slane %v7211, %v7457
        %v7460 = vunpack.c.l.s4 286326784
        %v7461 = vunpack.c.0.s8 %v7460
        %v7462 = vperm.slane %v7212, %v7461
        %v7464 = vunpack.c.l.s4 286326784
        %v7465 = vunpack.c.0.s8 %v7464
        %v7466 = vperm.slane %v7213, %v7465
        %v7468 = vunpack.c.l.s4 286326784
        %v7469 = vunpack.c.0.s8 %v7468
        %v7470 = vperm.slane %v7214, %v7469
        %vm7535 = vsmask.f32 7946
        %vm7536 = vmand %vm6466, %vm7535
        %v7537 = vld [vmem:[%s960] sm:$0x4]
        %v7538 = vsel %vm7536, %v7218, %v7537
        %7539 = vst [vmem:[%s960] sm:$0x4] %v7538
        %v7540 = vld [vmem:[%s960 + $0x4] sm:$0x4]
        %v7541 = vsel %vm7536, %v7222, %v7540
        %7542 = vst [vmem:[%s960 + $0x4] sm:$0x4] %v7541
        %v7543 = vld [vmem:[%s960 + $0x8] sm:$0x4]
        %v7544 = vsel %vm7536, %v7226, %v7543
        %7545 = vst [vmem:[%s960 + $0x8] sm:$0x4] %v7544
        %v7546 = vld [vmem:[%s960 + $0xc] sm:$0x4]
        %v7547 = vsel %vm7536, %v7230, %v7546
        %7548 = vst [vmem:[%s960 + $0xc] sm:$0x4] %v7547
        %v7549 = vld [vmem:[%s960 + $0x10] sm:$0x4]
        %v7550 = vsel %vm7536, %v7234, %v7549
        %7551 = vst [vmem:[%s960 + $0x10] sm:$0x4] %v7550
        %v7552 = vld [vmem:[%s960 + $0x14] sm:$0x4]
        %v7553 = vsel %vm7536, %v7238, %v7552
        %7554 = vst [vmem:[%s960 + $0x14] sm:$0x4] %v7553
        %v7555 = vld [vmem:[%s960 + $0x18] sm:$0x4]
        %v7556 = vsel %vm7536, %v7242, %v7555
        %7557 = vst [vmem:[%s960 + $0x18] sm:$0x4] %v7556
        %v7558 = vld [vmem:[%s960 + $0x1c] sm:$0x4]
        %v7559 = vsel %vm7536, %v7246, %v7558
        %7560 = vst [vmem:[%s960 + $0x1c] sm:$0x4] %v7559
        %v7561 = vld [vmem:[%s960 + $0x20] sm:$0x4]
        %v7562 = vsel %vm7536, %v7250, %v7561
        %7563 = vst [vmem:[%s960 + $0x20] sm:$0x4] %v7562
        %v7564 = vld [vmem:[%s960 + $0x24] sm:$0x4]
        %v7565 = vsel %vm7536, %v7254, %v7564
        %7566 = vst [vmem:[%s960 + $0x24] sm:$0x4] %v7565
        %v7567 = vld [vmem:[%s960 + $0x28] sm:$0x4]
        %v7568 = vsel %vm7536, %v7258, %v7567
        %7569 = vst [vmem:[%s960 + $0x28] sm:$0x4] %v7568
        %v7570 = vld [vmem:[%s960 + $0x2c] sm:$0x4]
        %v7571 = vsel %vm7536, %v7262, %v7570
        %7572 = vst [vmem:[%s960 + $0x2c] sm:$0x4] %v7571
        %v7573 = vld [vmem:[%s960 + $0x30] sm:$0x4]
        %v7574 = vsel %vm7536, %v7266, %v7573
        %7575 = vst [vmem:[%s960 + $0x30] sm:$0x4] %v7574
        %v7576 = vld [vmem:[%s960 + $0x34] sm:$0x4]
        %v7577 = vsel %vm7536, %v7270, %v7576
        %7578 = vst [vmem:[%s960 + $0x34] sm:$0x4] %v7577
        %v7579 = vld [vmem:[%s960 + $0x38] sm:$0x4]
        %v7580 = vsel %vm7536, %v7274, %v7579
        %7581 = vst [vmem:[%s960 + $0x38] sm:$0x4] %v7580
        %v7582 = vld [vmem:[%s960 + $0x3c] sm:$0x4]
        %v7583 = vsel %vm7536, %v7278, %v7582
        %7584 = vst [vmem:[%s960 + $0x3c] sm:$0x4] %v7583
        %v7585 = vld [vmem:[%s960 + $0x40] sm:$0x4]
        %v7586 = vsel %vm7536, %v7282, %v7585
        %7587 = vst [vmem:[%s960 + $0x40] sm:$0x4] %v7586
        %v7588 = vld [vmem:[%s960 + $0x44] sm:$0x4]
        %v7589 = vsel %vm7536, %v7286, %v7588
        %7590 = vst [vmem:[%s960 + $0x44] sm:$0x4] %v7589
        %v7591 = vld [vmem:[%s960 + $0x48] sm:$0x4]
        %v7592 = vsel %vm7536, %v7290, %v7591
        %7593 = vst [vmem:[%s960 + $0x48] sm:$0x4] %v7592
        %v7594 = vld [vmem:[%s960 + $0x4c] sm:$0x4]
        %v7595 = vsel %vm7536, %v7294, %v7594
        %7596 = vst [vmem:[%s960 + $0x4c] sm:$0x4] %v7595
        %v7597 = vld [vmem:[%s960 + $0x50] sm:$0x4]
        %v7598 = vsel %vm7536, %v7298, %v7597
        %7599 = vst [vmem:[%s960 + $0x50] sm:$0x4] %v7598
        %v7600 = vld [vmem:[%s960 + $0x54] sm:$0x4]
        %v7601 = vsel %vm7536, %v7302, %v7600
        %7602 = vst [vmem:[%s960 + $0x54] sm:$0x4] %v7601
        %v7603 = vld [vmem:[%s960 + $0x58] sm:$0x4]
        %v7604 = vsel %vm7536, %v7306, %v7603
        %7605 = vst [vmem:[%s960 + $0x58] sm:$0x4] %v7604
        %v7606 = vld [vmem:[%s960 + $0x5c] sm:$0x4]
        %v7607 = vsel %vm7536, %v7310, %v7606
        %7608 = vst [vmem:[%s960 + $0x5c] sm:$0x4] %v7607
        %v7609 = vld [vmem:[%s960 + $0x60] sm:$0x4]
        %v7610 = vsel %vm7536, %v7314, %v7609
        %7611 = vst [vmem:[%s960 + $0x60] sm:$0x4] %v7610
        %v7612 = vld [vmem:[%s960 + $0x64] sm:$0x4]
        %v7613 = vsel %vm7536, %v7318, %v7612
        %7614 = vst [vmem:[%s960 + $0x64] sm:$0x4] %v7613
        %v7615 = vld [vmem:[%s960 + $0x68] sm:$0x4]
        %v7616 = vsel %vm7536, %v7322, %v7615
        %7617 = vst [vmem:[%s960 + $0x68] sm:$0x4] %v7616
        %v7618 = vld [vmem:[%s960 + $0x6c] sm:$0x4]
        %v7619 = vsel %vm7536, %v7326, %v7618
        %7620 = vst [vmem:[%s960 + $0x6c] sm:$0x4] %v7619
        %v7621 = vld [vmem:[%s960 + $0x70] sm:$0x4]
        %v7622 = vsel %vm7536, %v7330, %v7621
        %7623 = vst [vmem:[%s960 + $0x70] sm:$0x4] %v7622
        %v7624 = vld [vmem:[%s960 + $0x74] sm:$0x4]
        %v7625 = vsel %vm7536, %v7334, %v7624
        %7626 = vst [vmem:[%s960 + $0x74] sm:$0x4] %v7625
        %v7627 = vld [vmem:[%s960 + $0x78] sm:$0x4]
        %v7628 = vsel %vm7536, %v7338, %v7627
        %7629 = vst [vmem:[%s960 + $0x78] sm:$0x4] %v7628
        %v7630 = vld [vmem:[%s960 + $0x7c] sm:$0x4]
        %v7631 = vsel %vm7536, %v7342, %v7630
        %7632 = vst [vmem:[%s960 + $0x7c] sm:$0x4] %v7631
        %v7633 = vld [vmem:[%s960 + $0x80] sm:$0x4]
        %v7634 = vsel %vm7536, %v7346, %v7633
        %7635 = vst [vmem:[%s960 + $0x80] sm:$0x4] %v7634
        %v7636 = vld [vmem:[%s960 + $0x84] sm:$0x4]
        %v7637 = vsel %vm7536, %v7350, %v7636
        %7638 = vst [vmem:[%s960 + $0x84] sm:$0x4] %v7637
        %v7639 = vld [vmem:[%s960 + $0x88] sm:$0x4]
        %v7640 = vsel %vm7536, %v7354, %v7639
        %7641 = vst [vmem:[%s960 + $0x88] sm:$0x4] %v7640
        %v7642 = vld [vmem:[%s960 + $0x8c] sm:$0x4]
        %v7643 = vsel %vm7536, %v7358, %v7642
        %7644 = vst [vmem:[%s960 + $0x8c] sm:$0x4] %v7643
        %v7645 = vld [vmem:[%s960 + $0x90] sm:$0x4]
        %v7646 = vsel %vm7536, %v7362, %v7645
        %7647 = vst [vmem:[%s960 + $0x90] sm:$0x4] %v7646
        %v7648 = vld [vmem:[%s960 + $0x94] sm:$0x4]
        %v7649 = vsel %vm7536, %v7366, %v7648
        %7650 = vst [vmem:[%s960 + $0x94] sm:$0x4] %v7649
        %v7651 = vld [vmem:[%s960 + $0x98] sm:$0x4]
        %v7652 = vsel %vm7536, %v7370, %v7651
        %7653 = vst [vmem:[%s960 + $0x98] sm:$0x4] %v7652
        %v7654 = vld [vmem:[%s960 + $0x9c] sm:$0x4]
        %v7655 = vsel %vm7536, %v7374, %v7654
        %7656 = vst [vmem:[%s960 + $0x9c] sm:$0x4] %v7655
        %v7657 = vld [vmem:[%s960 + $0xa0] sm:$0x4]
        %v7658 = vsel %vm7536, %v7378, %v7657
        %7659 = vst [vmem:[%s960 + $0xa0] sm:$0x4] %v7658
        %v7660 = vld [vmem:[%s960 + $0xa4] sm:$0x4]
        %v7661 = vsel %vm7536, %v7382, %v7660
        %7662 = vst [vmem:[%s960 + $0xa4] sm:$0x4] %v7661
        %v7663 = vld [vmem:[%s960 + $0xa8] sm:$0x4]
        %v7664 = vsel %vm7536, %v7386, %v7663
        %7665 = vst [vmem:[%s960 + $0xa8] sm:$0x4] %v7664
        %v7666 = vld [vmem:[%s960 + $0xac] sm:$0x4]
        %v7667 = vsel %vm7536, %v7390, %v7666
        %7668 = vst [vmem:[%s960 + $0xac] sm:$0x4] %v7667
        %v7669 = vld [vmem:[%s960 + $0xb0] sm:$0x4]
        %v7670 = vsel %vm7536, %v7394, %v7669
        %7671 = vst [vmem:[%s960 + $0xb0] sm:$0x4] %v7670
        %v7672 = vld [vmem:[%s960 + $0xb4] sm:$0x4]
        %v7673 = vsel %vm7536, %v7398, %v7672
        %7674 = vst [vmem:[%s960 + $0xb4] sm:$0x4] %v7673
        %v7675 = vld [vmem:[%s960 + $0xb8] sm:$0x4]
        %v7676 = vsel %vm7536, %v7402, %v7675
        %7677 = vst [vmem:[%s960 + $0xb8] sm:$0x4] %v7676
        %v7678 = vld [vmem:[%s960 + $0xbc] sm:$0x4]
        %v7679 = vsel %vm7536, %v7406, %v7678
        %7680 = vst [vmem:[%s960 + $0xbc] sm:$0x4] %v7679
        %v7681 = vld [vmem:[%s960 + $0xc0] sm:$0x4]
        %v7682 = vsel %vm7536, %v7410, %v7681
        %7683 = vst [vmem:[%s960 + $0xc0] sm:$0x4] %v7682
        %v7684 = vld [vmem:[%s960 + $0xc4] sm:$0x4]
        %v7685 = vsel %vm7536, %v7414, %v7684
        %7686 = vst [vmem:[%s960 + $0xc4] sm:$0x4] %v7685
        %v7687 = vld [vmem:[%s960 + $0xc8] sm:$0x4]
        %v7688 = vsel %vm7536, %v7418, %v7687
        %7689 = vst [vmem:[%s960 + $0xc8] sm:$0x4] %v7688
        %v7690 = vld [vmem:[%s960 + $0xcc] sm:$0x4]
        %v7691 = vsel %vm7536, %v7422, %v7690
        %7692 = vst [vmem:[%s960 + $0xcc] sm:$0x4] %v7691
        %v7693 = vld [vmem:[%s960 + $0xd0] sm:$0x4]
        %v7694 = vsel %vm7536, %v7426, %v7693
        %7695 = vst [vmem:[%s960 + $0xd0] sm:$0x4] %v7694
        %v7696 = vld [vmem:[%s960 + $0xd4] sm:$0x4]
        %v7697 = vsel %vm7536, %v7430, %v7696
        %7698 = vst [vmem:[%s960 + $0xd4] sm:$0x4] %v7697
        %v7699 = vld [vmem:[%s960 + $0xd8] sm:$0x4]
        %v7700 = vsel %vm7536, %v7434, %v7699
        %7701 = vst [vmem:[%s960 + $0xd8] sm:$0x4] %v7700
        %v7702 = vld [vmem:[%s960 + $0xdc] sm:$0x4]
        %v7703 = vsel %vm7536, %v7438, %v7702
        %7704 = vst [vmem:[%s960 + $0xdc] sm:$0x4] %v7703
        %v7705 = vld [vmem:[%s960 + $0xe0] sm:$0x4]
        %v7706 = vsel %vm7536, %v7442, %v7705
        %7707 = vst [vmem:[%s960 + $0xe0] sm:$0x4] %v7706
        %v7708 = vld [vmem:[%s960 + $0xe4] sm:$0x4]
        %v7709 = vsel %vm7536, %v7446, %v7708
        %7710 = vst [vmem:[%s960 + $0xe4] sm:$0x4] %v7709
        %v7711 = vld [vmem:[%s960 + $0xe8] sm:$0x4]
        %v7712 = vsel %vm7536, %v7450, %v7711
        %7713 = vst [vmem:[%s960 + $0xe8] sm:$0x4] %v7712
        %v7714 = vld [vmem:[%s960 + $0xec] sm:$0x4]
        %v7715 = vsel %vm7536, %v7454, %v7714
        %7716 = vst [vmem:[%s960 + $0xec] sm:$0x4] %v7715
        %v7717 = vld [vmem:[%s960 + $0xf0] sm:$0x4]
        %v7718 = vsel %vm7536, %v7458, %v7717
        %7719 = vst [vmem:[%s960 + $0xf0] sm:$0x4] %v7718
        %v7720 = vld [vmem:[%s960 + $0xf4] sm:$0x4]
        %v7721 = vsel %vm7536, %v7462, %v7720
        %7722 = vst [vmem:[%s960 + $0xf4] sm:$0x4] %v7721
        %v7723 = vld [vmem:[%s960 + $0xf8] sm:$0x4]
        %v7724 = vsel %vm7536, %v7466, %v7723
        %7725 = vst [vmem:[%s960 + $0xf8] sm:$0x4] %v7724
        %v7726 = vld [vmem:[%s960 + $0xfc] sm:$0x4]
        %v7727 = vsel %vm7536, %v7470, %v7726
        %7728 = vst [vmem:[%s960 + $0xfc] sm:$0x4] %v7727
        %7729 = vadd.xlane.f32.xlu0 %v6935
        %v7730 = vpop.xlane.xlu0 %7729
        %7731 = vadd.xlane.f32.xlu0 %v6936
        %v7732 = vpop.xlane.xlu0 %7731
        %7733 = vadd.xlane.f32.xlu0 %v6937
        %v7734 = vpop.xlane.xlu0 %7733
        %7735 = vadd.xlane.f32.xlu0 %v6938
        %v7736 = vpop.xlane.xlu0 %7735
        %7737 = vadd.xlane.f32.xlu0 %v6939
        %v7738 = vpop.xlane.xlu0 %7737
        %7739 = vadd.xlane.f32.xlu0 %v6940
        %v7740 = vpop.xlane.xlu0 %7739
        %7741 = vadd.xlane.f32.xlu0 %v6941
        %v7742 = vpop.xlane.xlu0 %7741
        %7743 = vadd.xlane.f32.xlu0 %v6942
        %v7744 = vpop.xlane.xlu0 %7743
        %v7745 = vadd.f32 %v7730, 1e-06
        %v7746 = vadd.f32 %v7732, 1e-06
        %v7747 = vadd.f32 %v7734, 1e-06
        %v7748 = vadd.f32 %v7736, 1e-06
        %v7749 = vadd.f32 %v7738, 1e-06
        %v7750 = vadd.f32 %v7740, 1e-06
        %v7751 = vadd.f32 %v7742, 1e-06
        %v7752 = vadd.f32 %v7744, 1e-06
        %v7753 = vrsqrt.pop %v7745
        %v7754 = vmul.f32 %v7753, %v7745
        %v7755 = vmul.f32 %v7754, %v7753
        %v7756 = vmul.f32 0.5, %v7755
        %v7757 = vsub.f32 1.5, %v7756
        %v7758 = vmul.f32 %v7753, %v7757
        %vm7759 = vweird.f32 %v7745
        %vm7760 = vweird.f32 %v7753
        %vm7761 = vmor %vm7759, %vm7760
        %v7762 = vsel %vm7761, %v7753, %v7758
        %v7763 = vrsqrt.pop %v7746
        %v7764 = vmul.f32 %v7763, %v7746
        %v7765 = vmul.f32 %v7764, %v7763
        %v7766 = vmul.f32 0.5, %v7765
        %v7767 = vsub.f32 1.5, %v7766
        %v7768 = vmul.f32 %v7763, %v7767
        %vm7769 = vweird.f32 %v7746
        %vm7770 = vweird.f32 %v7763
        %vm7771 = vmor %vm7769, %vm7770
        %v7772 = vsel %vm7771, %v7763, %v7768
        %v7773 = vrsqrt.pop %v7747
        %v7774 = vmul.f32 %v7773, %v7747
        %v7775 = vmul.f32 %v7774, %v7773
        %v7776 = vmul.f32 0.5, %v7775
        %v7777 = vsub.f32 1.5, %v7776
        %v7778 = vmul.f32 %v7773, %v7777
        %vm7779 = vweird.f32 %v7747
        %vm7780 = vweird.f32 %v7773
        %vm7781 = vmor %vm7779, %vm7780
        %v7782 = vsel %vm7781, %v7773, %v7778
        %v7783 = vrsqrt.pop %v7748
        %v7784 = vmul.f32 %v7783, %v7748
        %v7785 = vmul.f32 %v7784, %v7783
        %v7786 = vmul.f32 0.5, %v7785
        %v7787 = vsub.f32 1.5, %v7786
        %v7788 = vmul.f32 %v7783, %v7787
        %vm7789 = vweird.f32 %v7748
        %vm7790 = vweird.f32 %v7783
        %vm7791 = vmor %vm7789, %vm7790
        %v7792 = vsel %vm7791, %v7783, %v7788
        %v7793 = vrsqrt.pop %v7749
        %v7794 = vmul.f32 %v7793, %v7749
        %v7795 = vmul.f32 %v7794, %v7793
        %v7796 = vmul.f32 0.5, %v7795
        %v7797 = vsub.f32 1.5, %v7796
        %v7798 = vmul.f32 %v7793, %v7797
        %vm7799 = vweird.f32 %v7749
        %vm7800 = vweird.f32 %v7793
        %vm7801 = vmor %vm7799, %vm7800
        %v7802 = vsel %vm7801, %v7793, %v7798
        %v7803 = vrsqrt.pop %v7750
        %v7804 = vmul.f32 %v7803, %v7750
        %v7805 = vmul.f32 %v7804, %v7803
        %v7806 = vmul.f32 0.5, %v7805
        %v7807 = vsub.f32 1.5, %v7806
        %v7808 = vmul.f32 %v7803, %v7807
        %vm7809 = vweird.f32 %v7750
        %vm7810 = vweird.f32 %v7803
        %vm7811 = vmor %vm7809, %vm7810
        %v7812 = vsel %vm7811, %v7803, %v7808
        %v7813 = vrsqrt.pop %v7751
        %v7814 = vmul.f32 %v7813, %v7751
        %v7815 = vmul.f32 %v7814, %v7813
        %v7816 = vmul.f32 0.5, %v7815
        %v7817 = vsub.f32 1.5, %v7816
        %v7818 = vmul.f32 %v7813, %v7817
        %vm7819 = vweird.f32 %v7751
        %vm7820 = vweird.f32 %v7813
        %vm7821 = vmor %vm7819, %vm7820
        %v7822 = vsel %vm7821, %v7813, %v7818
        %v7823 = vrsqrt.pop %v7752
        %v7824 = vmul.f32 %v7823, %v7752
        %v7825 = vmul.f32 %v7824, %v7823
        %v7826 = vmul.f32 0.5, %v7825
        %v7827 = vsub.f32 1.5, %v7826
        %v7828 = vmul.f32 %v7823, %v7827
        %vm7829 = vweird.f32 %v7752
        %vm7830 = vweird.f32 %v7823
        %vm7831 = vmor %vm7829, %vm7830
        %v7832 = vsel %vm7831, %v7823, %v7828
        %v7833 = vmul.f32 %v7762, 4.0
        %v7834 = vmul.f32 %v7772, 4.0
        %v7835 = vmul.f32 %v7782, 4.0
        %v7836 = vmul.f32 %v7792, 4.0
        %v7837 = vmul.f32 %v7802, 4.0
        %v7838 = vmul.f32 %v7812, 4.0
        %v7839 = vmul.f32 %v7822, 4.0
        %v7840 = vmul.f32 %v7832, 4.0
        %v7841 = vmul.f32 %v6935, %v7833
        %v7842 = vmul.f32 %v6936, %v7834
        %v7843 = vmul.f32 %v6937, %v7835
        %v7844 = vmul.f32 %v6938, %v7836
        %v7845 = vmul.f32 %v6939, %v7837
        %v7846 = vmul.f32 %v6940, %v7838
        %v7847 = vmul.f32 %v6941, %v7839
        %v7848 = vmul.f32 %v6942, %v7840
        %s7849 = scalar_lea.vmem %s906, 160 [#allocation3]
        %v7850 = vld [vmem:[%s7849] sm:$0xf]
        %v7851 = vld [vmem:[%s7849 + $0x4] sm:$0xf]
        %v7852 = vld [vmem:[%s7849 + $0x8] sm:$0xf]
        %v7853 = vld [vmem:[%s7849 + $0xc] sm:$0xf]
        %v7854 = vld [vmem:[%s7849 + $0x10] sm:$0xf]
        %v7855 = vld [vmem:[%s7849 + $0x14] sm:$0xf]
        %v7856 = vld [vmem:[%s7849 + $0x18] sm:$0xf]
        %v7857 = vld [vmem:[%s7849 + $0x1c] sm:$0xf]
        %v7858 = vunpack.c.l.bf16 %v7850
        %v7859 = vunpack.c.l.bf16 %v7851
        %v7860 = vunpack.c.l.bf16 %v7852
        %v7861 = vunpack.c.l.bf16 %v7853
        %v7862 = vunpack.c.l.bf16 %v7854
        %v7863 = vunpack.c.l.bf16 %v7855
        %v7864 = vunpack.c.l.bf16 %v7856
        %v7865 = vunpack.c.l.bf16 %v7857
        %v7866 = vadd.f32 %v7841, %v7858
        %v7867 = vadd.f32 %v7842, %v7859
        %v7868 = vadd.f32 %v7843, %v7860
        %v7869 = vadd.f32 %v7844, %v7861
        %v7870 = vadd.f32 %v7845, %v7862
        %v7871 = vadd.f32 %v7846, %v7863
        %v7872 = vadd.f32 %v7847, %v7864
        %v7873 = vadd.f32 %v7848, %v7865
        %v7874 = vpack.c.bf16 %v7867, %v7866
        %v7875 = vpack.c.bf16 %v7869, %v7868
        %v7876 = vpack.c.bf16 %v7871, %v7870
        %v7877 = vpack.c.bf16 %v7873, %v7872
        %7878 = vmatpush.bf16.msra.mxu0 %v2535
        %7879 = vmatpush.bf16.msra.mxu0 %v2534
        %7880 = vmatpush.bf16.msra.mxu0 %v2533
        %7881 = vmatpush.bf16.msra.mxu0 %v2532
        %7882 = vmatpush.bf16.msra.mxu0 %v2531
        %7883 = vmatpush.bf16.msra.mxu0 %v2530
        %7884 = vmatpush.bf16.msra.mxu0 %v2529
        %7885 = vmatpush.bf16.msra.mxu0 %v2528
        %7886 = vmatmul.bf16.gmra.mxu0 %v7874
        %v7887 = vpop.f32.mrf.mxu0
        %v7888 = vadd.f32 %v1005, %v7887
        %v7889 = vpop.f32.mrf.mxu0
        %v7890 = vadd.f32 %v1005, %v7889
        %7891 = vmatmul.bf16.gmra.mxu0 %v7875
        %v7892 = vpop.f32.mrf.mxu0
        %v7893 = vadd.f32 %v1005, %v7892
        %v7894 = vpop.f32.mrf.mxu0
        %v7895 = vadd.f32 %v1005, %v7894
        %7896 = vmatmul.bf16.gmra.mxu0 %v7876
        %v7897 = vpop.f32.mrf.mxu0
        %v7898 = vadd.f32 %v1005, %v7897
        %v7899 = vpop.f32.mrf.mxu0
        %v7900 = vadd.f32 %v1005, %v7899
        %7901 = vmatmul.bf16.gmra.mxu0 %v7877
        %v7902 = vpop.f32.mrf.mxu0
        %v7903 = vadd.f32 %v1005, %v7902
        %v7904 = vpop.f32.mrf.mxu0
        %v7905 = vadd.f32 %v1005, %v7904
        %7906 = vdwg.mxu0
        %v7907 = vmul.f32 %v6887, 0.9
        %v7908 = vmul.f32 %v6888, 0.9
        %v7909 = vmul.f32 %v6889, 0.9
        %v7910 = vmul.f32 %v6890, 0.9
        %v7911 = vmul.f32 %v6891, 0.9
        %v7912 = vmul.f32 %v6892, 0.9
        %v7913 = vmul.f32 %v6893, 0.9
        %v7914 = vmul.f32 %v6894, 0.9
        %v7915 = vadd.f32 %v7907, %v7888
        %v7916 = vadd.f32 %v7908, %v7890
        %v7917 = vadd.f32 %v7909, %v7893
        %v7918 = vadd.f32 %v7910, %v7895
        %v7919 = vadd.f32 %v7911, %v7898
        %v7920 = vadd.f32 %v7912, %v7900
        %v7921 = vadd.f32 %v7913, %v7903
        %v7922 = vadd.f32 %v7914, %v7905
        %vm7923 = vcmp.ge.f32.partialorder %v7915, 0.5
        %vm7924 = vcmp.ge.f32.partialorder %v7916, 0.5
        %vm7925 = vcmp.ge.f32.partialorder %v7917, 0.5
        %vm7926 = vcmp.ge.f32.partialorder %v7918, 0.5
        %vm7927 = vcmp.ge.f32.partialorder %v7919, 0.5
        %vm7928 = vcmp.ge.f32.partialorder %v7920, 0.5
        %vm7929 = vcmp.ge.f32.partialorder %v7921, 0.5
        %vm7930 = vcmp.ge.f32.partialorder %v7922, 0.5
        %v7931 = vsel %vm7923, 1, 0
        %v7932 = vsel %vm7924, 1, 0
        %v7933 = vsel %vm7925, 1, 0
        %v7934 = vsel %vm7926, 1, 0
        %v7935 = vsel %vm7927, 1, 0
        %v7936 = vsel %vm7928, 1, 0
        %v7937 = vsel %vm7929, 1, 0
        %v7938 = vsel %vm7930, 1, 0
        %v7939 = vcvt.s32.f32 %v7931
        %v7940 = vcvt.s32.f32 %v7932
        %v7941 = vcvt.s32.f32 %v7933
        %v7942 = vcvt.s32.f32 %v7934
        %v7943 = vcvt.s32.f32 %v7935
        %v7944 = vcvt.s32.f32 %v7936
        %v7945 = vcvt.s32.f32 %v7937
        %v7946 = vcvt.s32.f32 %v7938
        %v7947 = vmul.f32 %v7939, 0.5
        %v7948 = vmul.f32 %v7940, 0.5
        %v7949 = vmul.f32 %v7941, 0.5
        %v7950 = vmul.f32 %v7942, 0.5
        %v7951 = vmul.f32 %v7943, 0.5
        %v7952 = vmul.f32 %v7944, 0.5
        %v7953 = vmul.f32 %v7945, 0.5
        %v7954 = vmul.f32 %v7946, 0.5
        %v7955 = vsub.f32 %v7915, %v7947
        %v7956 = vsub.f32 %v7916, %v7948
        %v7957 = vsub.f32 %v7917, %v7949
        %v7958 = vsub.f32 %v7918, %v7950
        %v7959 = vsub.f32 %v7919, %v7951
        %v7960 = vsub.f32 %v7920, %v7952
        %v7961 = vsub.f32 %v7921, %v7953
        %v7962 = vsub.f32 %v7922, %v7954
        %v7963 = vadd.f32 %v6895, %v7939
        %v7964 = vadd.f32 %v6896, %v7940
        %v7965 = vadd.f32 %v6897, %v7941
        %v7966 = vadd.f32 %v6898, %v7942
        %v7967 = vadd.f32 %v6899, %v7943
        %v7968 = vadd.f32 %v6900, %v7944
        %v7969 = vadd.f32 %v6901, %v7945
        %v7970 = vadd.f32 %v6902, %v7946
        %v7971 = vmul.f32 %v6951, 0.9
        %v7972 = vmul.f32 %v6952, 0.9
        %v7973 = vmul.f32 %v6953, 0.9
        %v7974 = vmul.f32 %v6954, 0.9
        %v7975 = vmul.f32 %v6955, 0.9
        %v7976 = vmul.f32 %v6956, 0.9
        %v7977 = vmul.f32 %v6957, 0.9
        %v7978 = vmul.f32 %v6958, 0.9
        %v7979 = vadd.f32 %v7971, %v1486
        %v7980 = vadd.f32 %v7972, %v1488
        %v7981 = vadd.f32 %v7973, %v1491
        %v7982 = vadd.f32 %v7974, %v1493
        %v7983 = vadd.f32 %v7975, %v1496
        %v7984 = vadd.f32 %v7976, %v1498
        %v7985 = vadd.f32 %v7977, %v1501
        %v7986 = vadd.f32 %v7978, %v1503
        %vm7987 = vcmp.ge.f32.partialorder %v7979, 0.5
        %vm7988 = vcmp.ge.f32.partialorder %v7980, 0.5
        %vm7989 = vcmp.ge.f32.partialorder %v7981, 0.5
        %vm7990 = vcmp.ge.f32.partialorder %v7982, 0.5
        %vm7991 = vcmp.ge.f32.partialorder %v7983, 0.5
        %vm7992 = vcmp.ge.f32.partialorder %v7984, 0.5
        %vm7993 = vcmp.ge.f32.partialorder %v7985, 0.5
        %vm7994 = vcmp.ge.f32.partialorder %v7986, 0.5
        %v7995 = vsel %vm7987, 1, 0
        %v7996 = vsel %vm7988, 1, 0
        %v7997 = vsel %vm7989, 1, 0
        %v7998 = vsel %vm7990, 1, 0
        %v7999 = vsel %vm7991, 1, 0
        %v8000 = vsel %vm7992, 1, 0
        %v8001 = vsel %vm7993, 1, 0
        %v8002 = vsel %vm7994, 1, 0
        %v8003 = vcvt.s32.f32 %v7995
        %v8004 = vcvt.s32.f32 %v7996
        %v8005 = vcvt.s32.f32 %v7997
        %v8006 = vcvt.s32.f32 %v7998
        %v8007 = vcvt.s32.f32 %v7999
        %v8008 = vcvt.s32.f32 %v8000
        %v8009 = vcvt.s32.f32 %v8001
        %v8010 = vcvt.s32.f32 %v8002
        %v8011 = vmul.f32 %v8003, 0.5
        %v8012 = vmul.f32 %v8004, 0.5
        %v8013 = vmul.f32 %v8005, 0.5
        %v8014 = vmul.f32 %v8006, 0.5
        %v8015 = vmul.f32 %v8007, 0.5
        %v8016 = vmul.f32 %v8008, 0.5
        %v8017 = vmul.f32 %v8009, 0.5
        %v8018 = vmul.f32 %v8010, 0.5
        %v8019 = vsub.f32 %v7979, %v8011
        %v8020 = vsub.f32 %v7980, %v8012
        %v8021 = vsub.f32 %v7981, %v8013
        %v8022 = vsub.f32 %v7982, %v8014
        %v8023 = vsub.f32 %v7983, %v8015
        %v8024 = vsub.f32 %v7984, %v8016
        %v8025 = vsub.f32 %v7985, %v8017
        %v8026 = vsub.f32 %v7986, %v8018
        %v8027 = vpack.c.bf16 %v8003, %v8003
        %v8028 = vpack.c.bf16 %v8004, %v8004
        %v8029 = vpack.c.bf16 %v8005, %v8005
        %v8030 = vpack.c.bf16 %v8006, %v8006
        %v8031 = vpack.c.bf16 %v8007, %v8007
        %v8032 = vpack.c.bf16 %v8008, %v8008
        %v8033 = vpack.c.bf16 %v8009, %v8009
        %v8034 = vpack.c.bf16 %v8010, %v8010
        %v8043 = vrot.slane %v8027, 3
        %v8044 = vrot.slane %v8028, 3
        %v8045 = vrot.slane %v8029, 3
        %v8046 = vrot.slane %v8030, 3
        %v8047 = vrot.slane %v8031, 3
        %v8048 = vrot.slane %v8032, 3
        %v8049 = vrot.slane %v8033, 3
        %v8050 = vrot.slane %v8034, 3
        %v8053 = vsel %vm1597, %v8027, %v8043
        %v8055 = vsel %vm1602, %v8027, %v8043
        %v8057 = vrot.slane %v8055, 1
        %v8058 = vsel %vm1606, %v8027, %v8043
        %v8060 = vrot.slane %v8058, 2
        %v8061 = vsel %vm1610, %v8027, %v8043
        %v8063 = vrot.slane %v8061, 3
        %v8066 = vsel %vm1597, %v8028, %v8044
        %v8068 = vsel %vm1602, %v8028, %v8044
        %v8070 = vrot.slane %v8068, 1
        %v8071 = vsel %vm1606, %v8028, %v8044
        %v8073 = vrot.slane %v8071, 2
        %v8074 = vsel %vm1610, %v8028, %v8044
        %v8076 = vrot.slane %v8074, 3
        %v8079 = vsel %vm1597, %v8029, %v8045
        %v8081 = vsel %vm1602, %v8029, %v8045
        %v8083 = vrot.slane %v8081, 1
        %v8084 = vsel %vm1606, %v8029, %v8045
        %v8086 = vrot.slane %v8084, 2
        %v8087 = vsel %vm1610, %v8029, %v8045
        %v8089 = vrot.slane %v8087, 3
        %v8092 = vsel %vm1597, %v8030, %v8046
        %v8094 = vsel %vm1602, %v8030, %v8046
        %v8096 = vrot.slane %v8094, 1
        %v8097 = vsel %vm1606, %v8030, %v8046
        %v8099 = vrot.slane %v8097, 2
        %v8100 = vsel %vm1610, %v8030, %v8046
        %v8102 = vrot.slane %v8100, 3
        %v8105 = vsel %vm1597, %v8031, %v8047
        %v8107 = vsel %vm1602, %v8031, %v8047
        %v8109 = vrot.slane %v8107, 1
        %v8110 = vsel %vm1606, %v8031, %v8047
        %v8112 = vrot.slane %v8110, 2
        %v8113 = vsel %vm1610, %v8031, %v8047
        %v8115 = vrot.slane %v8113, 3
        %v8118 = vsel %vm1597, %v8032, %v8048
        %v8120 = vsel %vm1602, %v8032, %v8048
        %v8122 = vrot.slane %v8120, 1
        %v8123 = vsel %vm1606, %v8032, %v8048
        %v8125 = vrot.slane %v8123, 2
        %v8126 = vsel %vm1610, %v8032, %v8048
        %v8128 = vrot.slane %v8126, 3
        %v8131 = vsel %vm1597, %v8033, %v8049
        %v8133 = vsel %vm1602, %v8033, %v8049
        %v8135 = vrot.slane %v8133, 1
        %v8136 = vsel %vm1606, %v8033, %v8049
        %v8138 = vrot.slane %v8136, 2
        %v8139 = vsel %vm1610, %v8033, %v8049
        %v8141 = vrot.slane %v8139, 3
        %v8144 = vsel %vm1597, %v8034, %v8050
        %v8146 = vsel %vm1602, %v8034, %v8050
        %v8148 = vrot.slane %v8146, 1
        %v8149 = vsel %vm1606, %v8034, %v8050
        %v8151 = vrot.slane %v8149, 2
        %v8152 = vsel %vm1610, %v8034, %v8050
        %v8154 = vrot.slane %v8152, 3
        %v8155 = vunpack.i.l.s16 %v8053
        %v8156 = vunpack.i.h.s16 %v8053
        %v8157 = vunpack.i.l.s16 %v8057
        %v8158 = vunpack.i.h.s16 %v8057
        %v8159 = vunpack.i.l.s16 %v8060
        %v8160 = vunpack.i.h.s16 %v8060
        %v8161 = vunpack.i.l.s16 %v8063
        %v8162 = vunpack.i.h.s16 %v8063
        %v8163 = vunpack.i.l.s16 %v8066
        %v8164 = vunpack.i.h.s16 %v8066
        %v8165 = vunpack.i.l.s16 %v8070
        %v8166 = vunpack.i.h.s16 %v8070
        %v8167 = vunpack.i.l.s16 %v8073
        %v8168 = vunpack.i.h.s16 %v8073
        %v8169 = vunpack.i.l.s16 %v8076
        %v8170 = vunpack.i.h.s16 %v8076
        %v8171 = vunpack.i.l.s16 %v8079
        %v8172 = vunpack.i.h.s16 %v8079
        %v8173 = vunpack.i.l.s16 %v8083
        %v8174 = vunpack.i.h.s16 %v8083
        %v8175 = vunpack.i.l.s16 %v8086
        %v8176 = vunpack.i.h.s16 %v8086
        %v8177 = vunpack.i.l.s16 %v8089
        %v8178 = vunpack.i.h.s16 %v8089
        %v8179 = vunpack.i.l.s16 %v8092
        %v8180 = vunpack.i.h.s16 %v8092
        %v8181 = vunpack.i.l.s16 %v8096
        %v8182 = vunpack.i.h.s16 %v8096
        %v8183 = vunpack.i.l.s16 %v8099
        %v8184 = vunpack.i.h.s16 %v8099
        %v8185 = vunpack.i.l.s16 %v8102
        %v8186 = vunpack.i.h.s16 %v8102
        %v8187 = vunpack.i.l.s16 %v8105
        %v8188 = vunpack.i.h.s16 %v8105
        %v8189 = vunpack.i.l.s16 %v8109
        %v8190 = vunpack.i.h.s16 %v8109
        %v8191 = vunpack.i.l.s16 %v8112
        %v8192 = vunpack.i.h.s16 %v8112
        %v8193 = vunpack.i.l.s16 %v8115
        %v8194 = vunpack.i.h.s16 %v8115
        %v8195 = vunpack.i.l.s16 %v8118
        %v8196 = vunpack.i.h.s16 %v8118
        %v8197 = vunpack.i.l.s16 %v8122
        %v8198 = vunpack.i.h.s16 %v8122
        %v8199 = vunpack.i.l.s16 %v8125
        %v8200 = vunpack.i.h.s16 %v8125
        %v8201 = vunpack.i.l.s16 %v8128
        %v8202 = vunpack.i.h.s16 %v8128
        %v8203 = vunpack.i.l.s16 %v8131
        %v8204 = vunpack.i.h.s16 %v8131
        %v8205 = vunpack.i.l.s16 %v8135
        %v8206 = vunpack.i.h.s16 %v8135
        %v8207 = vunpack.i.l.s16 %v8138
        %v8208 = vunpack.i.h.s16 %v8138
        %v8209 = vunpack.i.l.s16 %v8141
        %v8210 = vunpack.i.h.s16 %v8141
        %v8211 = vunpack.i.l.s16 %v8144
        %v8212 = vunpack.i.h.s16 %v8144
        %v8213 = vunpack.i.l.s16 %v8148
        %v8214 = vunpack.i.h.s16 %v8148
        %v8215 = vunpack.i.l.s16 %v8151
        %v8216 = vunpack.i.h.s16 %v8151
        %v8217 = vunpack.i.l.s16 %v8154
        %v8218 = vunpack.i.h.s16 %v8154
        %v8219 = vpack.i.b16 %v8155, %v8155
        %v8220 = vpack.i.b16 %v8156, %v8156
        %v8221 = vpack.i.b16 %v8157, %v8157
        %v8222 = vpack.i.b16 %v8158, %v8158
        %v8223 = vpack.i.b16 %v8159, %v8159
        %v8224 = vpack.i.b16 %v8160, %v8160
        %v8225 = vpack.i.b16 %v8161, %v8161
        %v8226 = vpack.i.b16 %v8162, %v8162
        %v8227 = vpack.i.b16 %v8163, %v8163
        %v8228 = vpack.i.b16 %v8164, %v8164
        %v8229 = vpack.i.b16 %v8165, %v8165
        %v8230 = vpack.i.b16 %v8166, %v8166
        %v8231 = vpack.i.b16 %v8167, %v8167
        %v8232 = vpack.i.b16 %v8168, %v8168
        %v8233 = vpack.i.b16 %v8169, %v8169
        %v8234 = vpack.i.b16 %v8170, %v8170
        %v8235 = vpack.i.b16 %v8171, %v8171
        %v8236 = vpack.i.b16 %v8172, %v8172
        %v8237 = vpack.i.b16 %v8173, %v8173
        %v8238 = vpack.i.b16 %v8174, %v8174
        %v8239 = vpack.i.b16 %v8175, %v8175
        %v8240 = vpack.i.b16 %v8176, %v8176
        %v8241 = vpack.i.b16 %v8177, %v8177
        %v8242 = vpack.i.b16 %v8178, %v8178
        %v8243 = vpack.i.b16 %v8179, %v8179
        %v8244 = vpack.i.b16 %v8180, %v8180
        %v8245 = vpack.i.b16 %v8181, %v8181
        %v8246 = vpack.i.b16 %v8182, %v8182
        %v8247 = vpack.i.b16 %v8183, %v8183
        %v8248 = vpack.i.b16 %v8184, %v8184
        %v8249 = vpack.i.b16 %v8185, %v8185
        %v8250 = vpack.i.b16 %v8186, %v8186
        %v8251 = vpack.i.b16 %v8187, %v8187
        %v8252 = vpack.i.b16 %v8188, %v8188
        %v8253 = vpack.i.b16 %v8189, %v8189
        %v8254 = vpack.i.b16 %v8190, %v8190
        %v8255 = vpack.i.b16 %v8191, %v8191
        %v8256 = vpack.i.b16 %v8192, %v8192
        %v8257 = vpack.i.b16 %v8193, %v8193
        %v8258 = vpack.i.b16 %v8194, %v8194
        %v8259 = vpack.i.b16 %v8195, %v8195
        %v8260 = vpack.i.b16 %v8196, %v8196
        %v8261 = vpack.i.b16 %v8197, %v8197
        %v8262 = vpack.i.b16 %v8198, %v8198
        %v8263 = vpack.i.b16 %v8199, %v8199
        %v8264 = vpack.i.b16 %v8200, %v8200
        %v8265 = vpack.i.b16 %v8201, %v8201
        %v8266 = vpack.i.b16 %v8202, %v8202
        %v8267 = vpack.i.b16 %v8203, %v8203
        %v8268 = vpack.i.b16 %v8204, %v8204
        %v8269 = vpack.i.b16 %v8205, %v8205
        %v8270 = vpack.i.b16 %v8206, %v8206
        %v8271 = vpack.i.b16 %v8207, %v8207
        %v8272 = vpack.i.b16 %v8208, %v8208
        %v8273 = vpack.i.b16 %v8209, %v8209
        %v8274 = vpack.i.b16 %v8210, %v8210
        %v8275 = vpack.i.b16 %v8211, %v8211
        %v8276 = vpack.i.b16 %v8212, %v8212
        %v8277 = vpack.i.b16 %v8213, %v8213
        %v8278 = vpack.i.b16 %v8214, %v8214
        %v8279 = vpack.i.b16 %v8215, %v8215
        %v8280 = vpack.i.b16 %v8216, %v8216
        %v8281 = vpack.i.b16 %v8217, %v8217
        %v8282 = vpack.i.b16 %v8218, %v8218
        %v8284 = vunpack.c.l.s4 286326784
        %v8285 = vunpack.c.0.s8 %v8284
        %v8286 = vperm.slane %v8219, %v8285
        %v8288 = vunpack.c.l.s4 286326784
        %v8289 = vunpack.c.0.s8 %v8288
        %v8290 = vperm.slane %v8220, %v8289
        %v8292 = vunpack.c.l.s4 286326784
        %v8293 = vunpack.c.0.s8 %v8292
        %v8294 = vperm.slane %v8221, %v8293
        %v8296 = vunpack.c.l.s4 286326784
        %v8297 = vunpack.c.0.s8 %v8296
        %v8298 = vperm.slane %v8222, %v8297
        %v8300 = vunpack.c.l.s4 286326784
        %v8301 = vunpack.c.0.s8 %v8300
        %v8302 = vperm.slane %v8223, %v8301
        %v8304 = vunpack.c.l.s4 286326784
        %v8305 = vunpack.c.0.s8 %v8304
        %v8306 = vperm.slane %v8224, %v8305
        %v8308 = vunpack.c.l.s4 286326784
        %v8309 = vunpack.c.0.s8 %v8308
        %v8310 = vperm.slane %v8225, %v8309
        %v8312 = vunpack.c.l.s4 286326784
        %v8313 = vunpack.c.0.s8 %v8312
        %v8314 = vperm.slane %v8226, %v8313
        %v8316 = vunpack.c.l.s4 286326784
        %v8317 = vunpack.c.0.s8 %v8316
        %v8318 = vperm.slane %v8227, %v8317
        %v8320 = vunpack.c.l.s4 286326784
        %v8321 = vunpack.c.0.s8 %v8320
        %v8322 = vperm.slane %v8228, %v8321
        %v8324 = vunpack.c.l.s4 286326784
        %v8325 = vunpack.c.0.s8 %v8324
        %v8326 = vperm.slane %v8229, %v8325
        %v8328 = vunpack.c.l.s4 286326784
        %v8329 = vunpack.c.0.s8 %v8328
        %v8330 = vperm.slane %v8230, %v8329
        %v8332 = vunpack.c.l.s4 286326784
        %v8333 = vunpack.c.0.s8 %v8332
        %v8334 = vperm.slane %v8231, %v8333
        %v8336 = vunpack.c.l.s4 286326784
        %v8337 = vunpack.c.0.s8 %v8336
        %v8338 = vperm.slane %v8232, %v8337
        %v8340 = vunpack.c.l.s4 286326784
        %v8341 = vunpack.c.0.s8 %v8340
        %v8342 = vperm.slane %v8233, %v8341
        %v8344 = vunpack.c.l.s4 286326784
        %v8345 = vunpack.c.0.s8 %v8344
        %v8346 = vperm.slane %v8234, %v8345
        %v8348 = vunpack.c.l.s4 286326784
        %v8349 = vunpack.c.0.s8 %v8348
        %v8350 = vperm.slane %v8235, %v8349
        %v8352 = vunpack.c.l.s4 286326784
        %v8353 = vunpack.c.0.s8 %v8352
        %v8354 = vperm.slane %v8236, %v8353
        %v8356 = vunpack.c.l.s4 286326784
        %v8357 = vunpack.c.0.s8 %v8356
        %v8358 = vperm.slane %v8237, %v8357
        %v8360 = vunpack.c.l.s4 286326784
        %v8361 = vunpack.c.0.s8 %v8360
        %v8362 = vperm.slane %v8238, %v8361
        %v8364 = vunpack.c.l.s4 286326784
        %v8365 = vunpack.c.0.s8 %v8364
        %v8366 = vperm.slane %v8239, %v8365
        %v8368 = vunpack.c.l.s4 286326784
        %v8369 = vunpack.c.0.s8 %v8368
        %v8370 = vperm.slane %v8240, %v8369
        %v8372 = vunpack.c.l.s4 286326784
        %v8373 = vunpack.c.0.s8 %v8372
        %v8374 = vperm.slane %v8241, %v8373
        %v8376 = vunpack.c.l.s4 286326784
        %v8377 = vunpack.c.0.s8 %v8376
        %v8378 = vperm.slane %v8242, %v8377
        %v8380 = vunpack.c.l.s4 286326784
        %v8381 = vunpack.c.0.s8 %v8380
        %v8382 = vperm.slane %v8243, %v8381
        %v8384 = vunpack.c.l.s4 286326784
        %v8385 = vunpack.c.0.s8 %v8384
        %v8386 = vperm.slane %v8244, %v8385
        %v8388 = vunpack.c.l.s4 286326784
        %v8389 = vunpack.c.0.s8 %v8388
        %v8390 = vperm.slane %v8245, %v8389
        %v8392 = vunpack.c.l.s4 286326784
        %v8393 = vunpack.c.0.s8 %v8392
        %v8394 = vperm.slane %v8246, %v8393
        %v8396 = vunpack.c.l.s4 286326784
        %v8397 = vunpack.c.0.s8 %v8396
        %v8398 = vperm.slane %v8247, %v8397
        %v8400 = vunpack.c.l.s4 286326784
        %v8401 = vunpack.c.0.s8 %v8400
        %v8402 = vperm.slane %v8248, %v8401
        %v8404 = vunpack.c.l.s4 286326784
        %v8405 = vunpack.c.0.s8 %v8404
        %v8406 = vperm.slane %v8249, %v8405
        %v8408 = vunpack.c.l.s4 286326784
        %v8409 = vunpack.c.0.s8 %v8408
        %v8410 = vperm.slane %v8250, %v8409
        %v8412 = vunpack.c.l.s4 286326784
        %v8413 = vunpack.c.0.s8 %v8412
        %v8414 = vperm.slane %v8251, %v8413
        %v8416 = vunpack.c.l.s4 286326784
        %v8417 = vunpack.c.0.s8 %v8416
        %v8418 = vperm.slane %v8252, %v8417
        %v8420 = vunpack.c.l.s4 286326784
        %v8421 = vunpack.c.0.s8 %v8420
        %v8422 = vperm.slane %v8253, %v8421
        %v8424 = vunpack.c.l.s4 286326784
        %v8425 = vunpack.c.0.s8 %v8424
        %v8426 = vperm.slane %v8254, %v8425
        %v8428 = vunpack.c.l.s4 286326784
        %v8429 = vunpack.c.0.s8 %v8428
        %v8430 = vperm.slane %v8255, %v8429
        %v8432 = vunpack.c.l.s4 286326784
        %v8433 = vunpack.c.0.s8 %v8432
        %v8434 = vperm.slane %v8256, %v8433
        %v8436 = vunpack.c.l.s4 286326784
        %v8437 = vunpack.c.0.s8 %v8436
        %v8438 = vperm.slane %v8257, %v8437
        %v8440 = vunpack.c.l.s4 286326784
        %v8441 = vunpack.c.0.s8 %v8440
        %v8442 = vperm.slane %v8258, %v8441
        %v8444 = vunpack.c.l.s4 286326784
        %v8445 = vunpack.c.0.s8 %v8444
        %v8446 = vperm.slane %v8259, %v8445
        %v8448 = vunpack.c.l.s4 286326784
        %v8449 = vunpack.c.0.s8 %v8448
        %v8450 = vperm.slane %v8260, %v8449
        %v8452 = vunpack.c.l.s4 286326784
        %v8453 = vunpack.c.0.s8 %v8452
        %v8454 = vperm.slane %v8261, %v8453
        %v8456 = vunpack.c.l.s4 286326784
        %v8457 = vunpack.c.0.s8 %v8456
        %v8458 = vperm.slane %v8262, %v8457
        %v8460 = vunpack.c.l.s4 286326784
        %v8461 = vunpack.c.0.s8 %v8460
        %v8462 = vperm.slane %v8263, %v8461
        %v8464 = vunpack.c.l.s4 286326784
        %v8465 = vunpack.c.0.s8 %v8464
        %v8466 = vperm.slane %v8264, %v8465
        %v8468 = vunpack.c.l.s4 286326784
        %v8469 = vunpack.c.0.s8 %v8468
        %v8470 = vperm.slane %v8265, %v8469
        %v8472 = vunpack.c.l.s4 286326784
        %v8473 = vunpack.c.0.s8 %v8472
        %v8474 = vperm.slane %v8266, %v8473
        %v8476 = vunpack.c.l.s4 286326784
        %v8477 = vunpack.c.0.s8 %v8476
        %v8478 = vperm.slane %v8267, %v8477
        %v8480 = vunpack.c.l.s4 286326784
        %v8481 = vunpack.c.0.s8 %v8480
        %v8482 = vperm.slane %v8268, %v8481
        %v8484 = vunpack.c.l.s4 286326784
        %v8485 = vunpack.c.0.s8 %v8484
        %v8486 = vperm.slane %v8269, %v8485
        %v8488 = vunpack.c.l.s4 286326784
        %v8489 = vunpack.c.0.s8 %v8488
        %v8490 = vperm.slane %v8270, %v8489
        %v8492 = vunpack.c.l.s4 286326784
        %v8493 = vunpack.c.0.s8 %v8492
        %v8494 = vperm.slane %v8271, %v8493
        %v8496 = vunpack.c.l.s4 286326784
        %v8497 = vunpack.c.0.s8 %v8496
        %v8498 = vperm.slane %v8272, %v8497
        %v8500 = vunpack.c.l.s4 286326784
        %v8501 = vunpack.c.0.s8 %v8500
        %v8502 = vperm.slane %v8273, %v8501
        %v8504 = vunpack.c.l.s4 286326784
        %v8505 = vunpack.c.0.s8 %v8504
        %v8506 = vperm.slane %v8274, %v8505
        %v8508 = vunpack.c.l.s4 286326784
        %v8509 = vunpack.c.0.s8 %v8508
        %v8510 = vperm.slane %v8275, %v8509
        %v8512 = vunpack.c.l.s4 286326784
        %v8513 = vunpack.c.0.s8 %v8512
        %v8514 = vperm.slane %v8276, %v8513
        %v8516 = vunpack.c.l.s4 286326784
        %v8517 = vunpack.c.0.s8 %v8516
        %v8518 = vperm.slane %v8277, %v8517
        %v8520 = vunpack.c.l.s4 286326784
        %v8521 = vunpack.c.0.s8 %v8520
        %v8522 = vperm.slane %v8278, %v8521
        %v8524 = vunpack.c.l.s4 286326784
        %v8525 = vunpack.c.0.s8 %v8524
        %v8526 = vperm.slane %v8279, %v8525
        %v8528 = vunpack.c.l.s4 286326784
        %v8529 = vunpack.c.0.s8 %v8528
        %v8530 = vperm.slane %v8280, %v8529
        %v8532 = vunpack.c.l.s4 286326784
        %v8533 = vunpack.c.0.s8 %v8532
        %v8534 = vperm.slane %v8281, %v8533
        %v8536 = vunpack.c.l.s4 286326784
        %v8537 = vunpack.c.0.s8 %v8536
        %v8538 = vperm.slane %v8282, %v8537
        %vm8603 = vcmask 1043459
        %vm8604 = vsmask.f32 3328
        %vm8605 = vmand %vm8603, %vm8604
        %v8606 = vld [vmem:[%s960] sm:$0x8]
        %v8607 = vsel %vm8605, %v8286, %v8606
        %8608 = vst [vmem:[%s960] sm:$0x8] %v8607
        %v8609 = vld [vmem:[%s960 + $0x4] sm:$0x8]
        %v8610 = vsel %vm8605, %v8290, %v8609
        %8611 = vst [vmem:[%s960 + $0x4] sm:$0x8] %v8610
        %v8612 = vld [vmem:[%s960 + $0x8] sm:$0x8]
        %v8613 = vsel %vm8605, %v8294, %v8612
        %8614 = vst [vmem:[%s960 + $0x8] sm:$0x8] %v8613
        %v8615 = vld [vmem:[%s960 + $0xc] sm:$0x8]
        %v8616 = vsel %vm8605, %v8298, %v8615
        %8617 = vst [vmem:[%s960 + $0xc] sm:$0x8] %v8616
        %v8618 = vld [vmem:[%s960 + $0x10] sm:$0x8]
        %v8619 = vsel %vm8605, %v8302, %v8618
        %8620 = vst [vmem:[%s960 + $0x10] sm:$0x8] %v8619
        %v8621 = vld [vmem:[%s960 + $0x14] sm:$0x8]
        %v8622 = vsel %vm8605, %v8306, %v8621
        %8623 = vst [vmem:[%s960 + $0x14] sm:$0x8] %v8622
        %v8624 = vld [vmem:[%s960 + $0x18] sm:$0x8]
        %v8625 = vsel %vm8605, %v8310, %v8624
        %8626 = vst [vmem:[%s960 + $0x18] sm:$0x8] %v8625
        %v8627 = vld [vmem:[%s960 + $0x1c] sm:$0x8]
        %v8628 = vsel %vm8605, %v8314, %v8627
        %8629 = vst [vmem:[%s960 + $0x1c] sm:$0x8] %v8628
        %v8630 = vld [vmem:[%s960 + $0x20] sm:$0x8]
        %v8631 = vsel %vm8605, %v8318, %v8630
        %8632 = vst [vmem:[%s960 + $0x20] sm:$0x8] %v8631
        %v8633 = vld [vmem:[%s960 + $0x24] sm:$0x8]
        %v8634 = vsel %vm8605, %v8322, %v8633
        %8635 = vst [vmem:[%s960 + $0x24] sm:$0x8] %v8634
        %v8636 = vld [vmem:[%s960 + $0x28] sm:$0x8]
        %v8637 = vsel %vm8605, %v8326, %v8636
        %8638 = vst [vmem:[%s960 + $0x28] sm:$0x8] %v8637
        %v8639 = vld [vmem:[%s960 + $0x2c] sm:$0x8]
        %v8640 = vsel %vm8605, %v8330, %v8639
        %8641 = vst [vmem:[%s960 + $0x2c] sm:$0x8] %v8640
        %v8642 = vld [vmem:[%s960 + $0x30] sm:$0x8]
        %v8643 = vsel %vm8605, %v8334, %v8642
        %8644 = vst [vmem:[%s960 + $0x30] sm:$0x8] %v8643
        %v8645 = vld [vmem:[%s960 + $0x34] sm:$0x8]
        %v8646 = vsel %vm8605, %v8338, %v8645
        %8647 = vst [vmem:[%s960 + $0x34] sm:$0x8] %v8646
        %v8648 = vld [vmem:[%s960 + $0x38] sm:$0x8]
        %v8649 = vsel %vm8605, %v8342, %v8648
        %8650 = vst [vmem:[%s960 + $0x38] sm:$0x8] %v8649
        %v8651 = vld [vmem:[%s960 + $0x3c] sm:$0x8]
        %v8652 = vsel %vm8605, %v8346, %v8651
        %8653 = vst [vmem:[%s960 + $0x3c] sm:$0x8] %v8652
        %v8654 = vld [vmem:[%s960 + $0x40] sm:$0x8]
        %v8655 = vsel %vm8605, %v8350, %v8654
        %8656 = vst [vmem:[%s960 + $0x40] sm:$0x8] %v8655
        %v8657 = vld [vmem:[%s960 + $0x44] sm:$0x8]
        %v8658 = vsel %vm8605, %v8354, %v8657
        %8659 = vst [vmem:[%s960 + $0x44] sm:$0x8] %v8658
        %v8660 = vld [vmem:[%s960 + $0x48] sm:$0x8]
        %v8661 = vsel %vm8605, %v8358, %v8660
        %8662 = vst [vmem:[%s960 + $0x48] sm:$0x8] %v8661
        %v8663 = vld [vmem:[%s960 + $0x4c] sm:$0x8]
        %v8664 = vsel %vm8605, %v8362, %v8663
        %8665 = vst [vmem:[%s960 + $0x4c] sm:$0x8] %v8664
        %v8666 = vld [vmem:[%s960 + $0x50] sm:$0x8]
        %v8667 = vsel %vm8605, %v8366, %v8666
        %8668 = vst [vmem:[%s960 + $0x50] sm:$0x8] %v8667
        %v8669 = vld [vmem:[%s960 + $0x54] sm:$0x8]
        %v8670 = vsel %vm8605, %v8370, %v8669
        %8671 = vst [vmem:[%s960 + $0x54] sm:$0x8] %v8670
        %v8672 = vld [vmem:[%s960 + $0x58] sm:$0x8]
        %v8673 = vsel %vm8605, %v8374, %v8672
        %8674 = vst [vmem:[%s960 + $0x58] sm:$0x8] %v8673
        %v8675 = vld [vmem:[%s960 + $0x5c] sm:$0x8]
        %v8676 = vsel %vm8605, %v8378, %v8675
        %8677 = vst [vmem:[%s960 + $0x5c] sm:$0x8] %v8676
        %v8678 = vld [vmem:[%s960 + $0x60] sm:$0x8]
        %v8679 = vsel %vm8605, %v8382, %v8678
        %8680 = vst [vmem:[%s960 + $0x60] sm:$0x8] %v8679
        %v8681 = vld [vmem:[%s960 + $0x64] sm:$0x8]
        %v8682 = vsel %vm8605, %v8386, %v8681
        %8683 = vst [vmem:[%s960 + $0x64] sm:$0x8] %v8682
        %v8684 = vld [vmem:[%s960 + $0x68] sm:$0x8]
        %v8685 = vsel %vm8605, %v8390, %v8684
        %8686 = vst [vmem:[%s960 + $0x68] sm:$0x8] %v8685
        %v8687 = vld [vmem:[%s960 + $0x6c] sm:$0x8]
        %v8688 = vsel %vm8605, %v8394, %v8687
        %8689 = vst [vmem:[%s960 + $0x6c] sm:$0x8] %v8688
        %v8690 = vld [vmem:[%s960 + $0x70] sm:$0x8]
        %v8691 = vsel %vm8605, %v8398, %v8690
        %8692 = vst [vmem:[%s960 + $0x70] sm:$0x8] %v8691
        %v8693 = vld [vmem:[%s960 + $0x74] sm:$0x8]
        %v8694 = vsel %vm8605, %v8402, %v8693
        %8695 = vst [vmem:[%s960 + $0x74] sm:$0x8] %v8694
        %v8696 = vld [vmem:[%s960 + $0x78] sm:$0x8]
        %v8697 = vsel %vm8605, %v8406, %v8696
        %8698 = vst [vmem:[%s960 + $0x78] sm:$0x8] %v8697
        %v8699 = vld [vmem:[%s960 + $0x7c] sm:$0x8]
        %v8700 = vsel %vm8605, %v8410, %v8699
        %8701 = vst [vmem:[%s960 + $0x7c] sm:$0x8] %v8700
        %v8702 = vld [vmem:[%s960 + $0x80] sm:$0x8]
        %v8703 = vsel %vm8605, %v8414, %v8702
        %8704 = vst [vmem:[%s960 + $0x80] sm:$0x8] %v8703
        %v8705 = vld [vmem:[%s960 + $0x84] sm:$0x8]
        %v8706 = vsel %vm8605, %v8418, %v8705
        %8707 = vst [vmem:[%s960 + $0x84] sm:$0x8] %v8706
        %v8708 = vld [vmem:[%s960 + $0x88] sm:$0x8]
        %v8709 = vsel %vm8605, %v8422, %v8708
        %8710 = vst [vmem:[%s960 + $0x88] sm:$0x8] %v8709
        %v8711 = vld [vmem:[%s960 + $0x8c] sm:$0x8]
        %v8712 = vsel %vm8605, %v8426, %v8711
        %8713 = vst [vmem:[%s960 + $0x8c] sm:$0x8] %v8712
        %v8714 = vld [vmem:[%s960 + $0x90] sm:$0x8]
        %v8715 = vsel %vm8605, %v8430, %v8714
        %8716 = vst [vmem:[%s960 + $0x90] sm:$0x8] %v8715
        %v8717 = vld [vmem:[%s960 + $0x94] sm:$0x8]
        %v8718 = vsel %vm8605, %v8434, %v8717
        %8719 = vst [vmem:[%s960 + $0x94] sm:$0x8] %v8718
        %v8720 = vld [vmem:[%s960 + $0x98] sm:$0x8]
        %v8721 = vsel %vm8605, %v8438, %v8720
        %8722 = vst [vmem:[%s960 + $0x98] sm:$0x8] %v8721
        %v8723 = vld [vmem:[%s960 + $0x9c] sm:$0x8]
        %v8724 = vsel %vm8605, %v8442, %v8723
        %8725 = vst [vmem:[%s960 + $0x9c] sm:$0x8] %v8724
        %v8726 = vld [vmem:[%s960 + $0xa0] sm:$0x8]
        %v8727 = vsel %vm8605, %v8446, %v8726
        %8728 = vst [vmem:[%s960 + $0xa0] sm:$0x8] %v8727
        %v8729 = vld [vmem:[%s960 + $0xa4] sm:$0x8]
        %v8730 = vsel %vm8605, %v8450, %v8729
        %8731 = vst [vmem:[%s960 + $0xa4] sm:$0x8] %v8730
        %v8732 = vld [vmem:[%s960 + $0xa8] sm:$0x8]
        %v8733 = vsel %vm8605, %v8454, %v8732
        %8734 = vst [vmem:[%s960 + $0xa8] sm:$0x8] %v8733
        %v8735 = vld [vmem:[%s960 + $0xac] sm:$0x8]
        %v8736 = vsel %vm8605, %v8458, %v8735
        %8737 = vst [vmem:[%s960 + $0xac] sm:$0x8] %v8736
        %v8738 = vld [vmem:[%s960 + $0xb0] sm:$0x8]
        %v8739 = vsel %vm8605, %v8462, %v8738
        %8740 = vst [vmem:[%s960 + $0xb0] sm:$0x8] %v8739
        %v8741 = vld [vmem:[%s960 + $0xb4] sm:$0x8]
        %v8742 = vsel %vm8605, %v8466, %v8741
        %8743 = vst [vmem:[%s960 + $0xb4] sm:$0x8] %v8742
        %v8744 = vld [vmem:[%s960 + $0xb8] sm:$0x8]
        %v8745 = vsel %vm8605, %v8470, %v8744
        %8746 = vst [vmem:[%s960 + $0xb8] sm:$0x8] %v8745
        %v8747 = vld [vmem:[%s960 + $0xbc] sm:$0x8]
        %v8748 = vsel %vm8605, %v8474, %v8747
        %8749 = vst [vmem:[%s960 + $0xbc] sm:$0x8] %v8748
        %v8750 = vld [vmem:[%s960 + $0xc0] sm:$0x8]
        %v8751 = vsel %vm8605, %v8478, %v8750
        %8752 = vst [vmem:[%s960 + $0xc0] sm:$0x8] %v8751
        %v8753 = vld [vmem:[%s960 + $0xc4] sm:$0x8]
        %v8754 = vsel %vm8605, %v8482, %v8753
        %8755 = vst [vmem:[%s960 + $0xc4] sm:$0x8] %v8754
        %v8756 = vld [vmem:[%s960 + $0xc8] sm:$0x8]
        %v8757 = vsel %vm8605, %v8486, %v8756
        %8758 = vst [vmem:[%s960 + $0xc8] sm:$0x8] %v8757
        %v8759 = vld [vmem:[%s960 + $0xcc] sm:$0x8]
        %v8760 = vsel %vm8605, %v8490, %v8759
        %8761 = vst [vmem:[%s960 + $0xcc] sm:$0x8] %v8760
        %v8762 = vld [vmem:[%s960 + $0xd0] sm:$0x8]
        %v8763 = vsel %vm8605, %v8494, %v8762
        %8764 = vst [vmem:[%s960 + $0xd0] sm:$0x8] %v8763
        %v8765 = vld [vmem:[%s960 + $0xd4] sm:$0x8]
        %v8766 = vsel %vm8605, %v8498, %v8765
        %8767 = vst [vmem:[%s960 + $0xd4] sm:$0x8] %v8766
        %v8768 = vld [vmem:[%s960 + $0xd8] sm:$0x8]
        %v8769 = vsel %vm8605, %v8502, %v8768
        %8770 = vst [vmem:[%s960 + $0xd8] sm:$0x8] %v8769
        %v8771 = vld [vmem:[%s960 + $0xdc] sm:$0x8]
        %v8772 = vsel %vm8605, %v8506, %v8771
        %8773 = vst [vmem:[%s960 + $0xdc] sm:$0x8] %v8772
        %v8774 = vld [vmem:[%s960 + $0xe0] sm:$0x8]
        %v8775 = vsel %vm8605, %v8510, %v8774
        %8776 = vst [vmem:[%s960 + $0xe0] sm:$0x8] %v8775
        %v8777 = vld [vmem:[%s960 + $0xe4] sm:$0x8]
        %v8778 = vsel %vm8605, %v8514, %v8777
        %8779 = vst [vmem:[%s960 + $0xe4] sm:$0x8] %v8778
        %v8780 = vld [vmem:[%s960 + $0xe8] sm:$0x8]
        %v8781 = vsel %vm8605, %v8518, %v8780
        %8782 = vst [vmem:[%s960 + $0xe8] sm:$0x8] %v8781
        %v8783 = vld [vmem:[%s960 + $0xec] sm:$0x8]
        %v8784 = vsel %vm8605, %v8522, %v8783
        %8785 = vst [vmem:[%s960 + $0xec] sm:$0x8] %v8784
        %v8786 = vld [vmem:[%s960 + $0xf0] sm:$0x8]
        %v8787 = vsel %vm8605, %v8526, %v8786
        %8788 = vst [vmem:[%s960 + $0xf0] sm:$0x8] %v8787
        %v8789 = vld [vmem:[%s960 + $0xf4] sm:$0x8]
        %v8790 = vsel %vm8605, %v8530, %v8789
        %8791 = vst [vmem:[%s960 + $0xf4] sm:$0x8] %v8790
        %v8792 = vld [vmem:[%s960 + $0xf8] sm:$0x8]
        %v8793 = vsel %vm8605, %v8534, %v8792
        %8794 = vst [vmem:[%s960 + $0xf8] sm:$0x8] %v8793
        %v8795 = vld [vmem:[%s960 + $0xfc] sm:$0x8]
        %v8796 = vsel %vm8605, %v8538, %v8795
        %8797 = vst [vmem:[%s960 + $0xfc] sm:$0x8] %v8796
        %8798 = vadd.xlane.f32.xlu0 %v8003
        %v8799 = vpop.xlane.xlu0 %8798
        %8800 = vadd.xlane.f32.xlu0 %v8004
        %v8801 = vpop.xlane.xlu0 %8800
        %8802 = vadd.xlane.f32.xlu0 %v8005
        %v8803 = vpop.xlane.xlu0 %8802
        %8804 = vadd.xlane.f32.xlu0 %v8006
        %v8805 = vpop.xlane.xlu0 %8804
        %8806 = vadd.xlane.f32.xlu0 %v8007
        %v8807 = vpop.xlane.xlu0 %8806
        %8808 = vadd.xlane.f32.xlu0 %v8008
        %v8809 = vpop.xlane.xlu0 %8808
        %8810 = vadd.xlane.f32.xlu0 %v8009
        %v8811 = vpop.xlane.xlu0 %8810
        %8812 = vadd.xlane.f32.xlu0 %v8010
        %v8813 = vpop.xlane.xlu0 %8812
        %v8814 = vadd.f32 %v8799, 1e-06
        %v8815 = vadd.f32 %v8801, 1e-06
        %v8816 = vadd.f32 %v8803, 1e-06
        %v8817 = vadd.f32 %v8805, 1e-06
        %v8818 = vadd.f32 %v8807, 1e-06
        %v8819 = vadd.f32 %v8809, 1e-06
        %v8820 = vadd.f32 %v8811, 1e-06
        %v8821 = vadd.f32 %v8813, 1e-06
        %v8822 = vrsqrt.pop %v8814
        %v8823 = vmul.f32 %v8822, %v8814
        %v8824 = vmul.f32 %v8823, %v8822
        %v8825 = vmul.f32 0.5, %v8824
        %v8826 = vsub.f32 1.5, %v8825
        %v8827 = vmul.f32 %v8822, %v8826
        %vm8828 = vweird.f32 %v8814
        %vm8829 = vweird.f32 %v8822
        %vm8830 = vmor %vm8828, %vm8829
        %v8831 = vsel %vm8830, %v8822, %v8827
        %v8832 = vrsqrt.pop %v8815
        %v8833 = vmul.f32 %v8832, %v8815
        %v8834 = vmul.f32 %v8833, %v8832
        %v8835 = vmul.f32 0.5, %v8834
        %v8836 = vsub.f32 1.5, %v8835
        %v8837 = vmul.f32 %v8832, %v8836
        %vm8838 = vweird.f32 %v8815
        %vm8839 = vweird.f32 %v8832
        %vm8840 = vmor %vm8838, %vm8839
        %v8841 = vsel %vm8840, %v8832, %v8837
        %v8842 = vrsqrt.pop %v8816
        %v8843 = vmul.f32 %v8842, %v8816
        %v8844 = vmul.f32 %v8843, %v8842
        %v8845 = vmul.f32 0.5, %v8844
        %v8846 = vsub.f32 1.5, %v8845
        %v8847 = vmul.f32 %v8842, %v8846
        %vm8848 = vweird.f32 %v8816
        %vm8849 = vweird.f32 %v8842
        %vm8850 = vmor %vm8848, %vm8849
        %v8851 = vsel %vm8850, %v8842, %v8847
        %v8852 = vrsqrt.pop %v8817
        %v8853 = vmul.f32 %v8852, %v8817
        %v8854 = vmul.f32 %v8853, %v8852
        %v8855 = vmul.f32 0.5, %v8854
        %v8856 = vsub.f32 1.5, %v8855
        %v8857 = vmul.f32 %v8852, %v8856
        %vm8858 = vweird.f32 %v8817
        %vm8859 = vweird.f32 %v8852
        %vm8860 = vmor %vm8858, %vm8859
        %v8861 = vsel %vm8860, %v8852, %v8857
        %v8862 = vrsqrt.pop %v8818
        %v8863 = vmul.f32 %v8862, %v8818
        %v8864 = vmul.f32 %v8863, %v8862
        %v8865 = vmul.f32 0.5, %v8864
        %v8866 = vsub.f32 1.5, %v8865
        %v8867 = vmul.f32 %v8862, %v8866
        %vm8868 = vweird.f32 %v8818
        %vm8869 = vweird.f32 %v8862
        %vm8870 = vmor %vm8868, %vm8869
        %v8871 = vsel %vm8870, %v8862, %v8867
        %v8872 = vrsqrt.pop %v8819
        %v8873 = vmul.f32 %v8872, %v8819
        %v8874 = vmul.f32 %v8873, %v8872
        %v8875 = vmul.f32 0.5, %v8874
        %v8876 = vsub.f32 1.5, %v8875
        %v8877 = vmul.f32 %v8872, %v8876
        %vm8878 = vweird.f32 %v8819
        %vm8879 = vweird.f32 %v8872
        %vm8880 = vmor %vm8878, %vm8879
        %v8881 = vsel %vm8880, %v8872, %v8877
        %v8882 = vrsqrt.pop %v8820
        %v8883 = vmul.f32 %v8882, %v8820
        %v8884 = vmul.f32 %v8883, %v8882
        %v8885 = vmul.f32 0.5, %v8884
        %v8886 = vsub.f32 1.5, %v8885
        %v8887 = vmul.f32 %v8882, %v8886
        %vm8888 = vweird.f32 %v8820
        %vm8889 = vweird.f32 %v8882
        %vm8890 = vmor %vm8888, %vm8889
        %v8891 = vsel %vm8890, %v8882, %v8887
        %v8892 = vrsqrt.pop %v8821
        %v8893 = vmul.f32 %v8892, %v8821
        %v8894 = vmul.f32 %v8893, %v8892
        %v8895 = vmul.f32 0.5, %v8894
        %v8896 = vsub.f32 1.5, %v8895
        %v8897 = vmul.f32 %v8892, %v8896
        %vm8898 = vweird.f32 %v8821
        %vm8899 = vweird.f32 %v8892
        %vm8900 = vmor %vm8898, %vm8899
        %v8901 = vsel %vm8900, %v8892, %v8897
        %v8902 = vmul.f32 %v8831, 4.0
        %v8903 = vmul.f32 %v8841, 4.0
        %v8904 = vmul.f32 %v8851, 4.0
        %v8905 = vmul.f32 %v8861, 4.0
        %v8906 = vmul.f32 %v8871, 4.0
        %v8907 = vmul.f32 %v8881, 4.0
        %v8908 = vmul.f32 %v8891, 4.0
        %v8909 = vmul.f32 %v8901, 4.0
        %v8910 = vmul.f32 %v8003, %v8902
        %v8911 = vmul.f32 %v8004, %v8903
        %v8912 = vmul.f32 %v8005, %v8904
        %v8913 = vmul.f32 %v8006, %v8905
        %v8914 = vmul.f32 %v8007, %v8906
        %v8915 = vmul.f32 %v8008, %v8907
        %v8916 = vmul.f32 %v8009, %v8908
        %v8917 = vmul.f32 %v8010, %v8909
        %s8918 = scalar_lea.vmem %s906, 192 [#allocation3]
        %v8919 = vld [vmem:[%s8918] sm:$0xf]
        %v8920 = vld [vmem:[%s8918 + $0x4] sm:$0xf]
        %v8921 = vld [vmem:[%s8918 + $0x8] sm:$0xf]
        %v8922 = vld [vmem:[%s8918 + $0xc] sm:$0xf]
        %v8923 = vld [vmem:[%s8918 + $0x10] sm:$0xf]
        %v8924 = vld [vmem:[%s8918 + $0x14] sm:$0xf]
        %v8925 = vld [vmem:[%s8918 + $0x18] sm:$0xf]
        %v8926 = vld [vmem:[%s8918 + $0x1c] sm:$0xf]
        %v8927 = vunpack.c.l.bf16 %v8919
        %v8928 = vunpack.c.l.bf16 %v8920
        %v8929 = vunpack.c.l.bf16 %v8921
        %v8930 = vunpack.c.l.bf16 %v8922
        %v8931 = vunpack.c.l.bf16 %v8923
        %v8932 = vunpack.c.l.bf16 %v8924
        %v8933 = vunpack.c.l.bf16 %v8925
        %v8934 = vunpack.c.l.bf16 %v8926
        %v8935 = vadd.f32 %v8910, %v8927
        %v8936 = vadd.f32 %v8911, %v8928
        %v8937 = vadd.f32 %v8912, %v8929
        %v8938 = vadd.f32 %v8913, %v8930
        %v8939 = vadd.f32 %v8914, %v8931
        %v8940 = vadd.f32 %v8915, %v8932
        %v8941 = vadd.f32 %v8916, %v8933
        %v8942 = vadd.f32 %v8917, %v8934
        %v8943 = vpack.c.bf16 %v8936, %v8935
        %v8944 = vpack.c.bf16 %v8938, %v8937
        %v8945 = vpack.c.bf16 %v8940, %v8939
        %v8946 = vpack.c.bf16 %v8942, %v8941
        %8947 = vmatpush.bf16.msra.mxu0 %v2535
        %8948 = vmatpush.bf16.msra.mxu0 %v2534
        %8949 = vmatpush.bf16.msra.mxu0 %v2533
        %8950 = vmatpush.bf16.msra.mxu0 %v2532
        %8951 = vmatpush.bf16.msra.mxu0 %v2531
        %8952 = vmatpush.bf16.msra.mxu0 %v2530
        %8953 = vmatpush.bf16.msra.mxu0 %v2529
        %8954 = vmatpush.bf16.msra.mxu0 %v2528
        %8955 = vmatmul.bf16.gmra.mxu0 %v8943
        %v8956 = vpop.f32.mrf.mxu0
        %v8957 = vadd.f32 %v1005, %v8956
        %v8958 = vpop.f32.mrf.mxu0
        %v8959 = vadd.f32 %v1005, %v8958
        %8960 = vmatmul.bf16.gmra.mxu0 %v8944
        %v8961 = vpop.f32.mrf.mxu0
        %v8962 = vadd.f32 %v1005, %v8961
        %v8963 = vpop.f32.mrf.mxu0
        %v8964 = vadd.f32 %v1005, %v8963
        %8965 = vmatmul.bf16.gmra.mxu0 %v8945
        %v8966 = vpop.f32.mrf.mxu0
        %v8967 = vadd.f32 %v1005, %v8966
        %v8968 = vpop.f32.mrf.mxu0
        %v8969 = vadd.f32 %v1005, %v8968
        %8970 = vmatmul.bf16.gmra.mxu0 %v8946
        %v8971 = vpop.f32.mrf.mxu0
        %v8972 = vadd.f32 %v1005, %v8971
        %v8973 = vpop.f32.mrf.mxu0
        %v8974 = vadd.f32 %v1005, %v8973
        %8975 = vdwg.mxu0
        %v8976 = vmul.f32 %v7955, 0.9
        %v8977 = vmul.f32 %v7956, 0.9
        %v8978 = vmul.f32 %v7957, 0.9
        %v8979 = vmul.f32 %v7958, 0.9
        %v8980 = vmul.f32 %v7959, 0.9
        %v8981 = vmul.f32 %v7960, 0.9
        %v8982 = vmul.f32 %v7961, 0.9
        %v8983 = vmul.f32 %v7962, 0.9
        %v8984 = vadd.f32 %v8976, %v8957
        %v8985 = vadd.f32 %v8977, %v8959
        %v8986 = vadd.f32 %v8978, %v8962
        %v8987 = vadd.f32 %v8979, %v8964
        %v8988 = vadd.f32 %v8980, %v8967
        %v8989 = vadd.f32 %v8981, %v8969
        %v8990 = vadd.f32 %v8982, %v8972
        %v8991 = vadd.f32 %v8983, %v8974
        %vm8992 = vcmp.ge.f32.partialorder %v8984, 0.5
        %vm8993 = vcmp.ge.f32.partialorder %v8985, 0.5
        %vm8994 = vcmp.ge.f32.partialorder %v8986, 0.5
        %vm8995 = vcmp.ge.f32.partialorder %v8987, 0.5
        %vm8996 = vcmp.ge.f32.partialorder %v8988, 0.5
        %vm8997 = vcmp.ge.f32.partialorder %v8989, 0.5
        %vm8998 = vcmp.ge.f32.partialorder %v8990, 0.5
        %vm8999 = vcmp.ge.f32.partialorder %v8991, 0.5
        %v9000 = vsel %vm8992, 1, 0
        %v9001 = vsel %vm8993, 1, 0
        %v9002 = vsel %vm8994, 1, 0
        %v9003 = vsel %vm8995, 1, 0
        %v9004 = vsel %vm8996, 1, 0
        %v9005 = vsel %vm8997, 1, 0
        %v9006 = vsel %vm8998, 1, 0
        %v9007 = vsel %vm8999, 1, 0
        %v9008 = vcvt.s32.f32 %v9000
        %v9009 = vcvt.s32.f32 %v9001
        %v9010 = vcvt.s32.f32 %v9002
        %v9011 = vcvt.s32.f32 %v9003
        %v9012 = vcvt.s32.f32 %v9004
        %v9013 = vcvt.s32.f32 %v9005
        %v9014 = vcvt.s32.f32 %v9006
        %v9015 = vcvt.s32.f32 %v9007
        %v9016 = vmul.f32 %v9008, 0.5
        %v9017 = vmul.f32 %v9009, 0.5
        %v9018 = vmul.f32 %v9010, 0.5
        %v9019 = vmul.f32 %v9011, 0.5
        %v9020 = vmul.f32 %v9012, 0.5
        %v9021 = vmul.f32 %v9013, 0.5
        %v9022 = vmul.f32 %v9014, 0.5
        %v9023 = vmul.f32 %v9015, 0.5
        %v9024 = vsub.f32 %v8984, %v9016
        %v9025 = vsub.f32 %v8985, %v9017
        %v9026 = vsub.f32 %v8986, %v9018
        %v9027 = vsub.f32 %v8987, %v9019
        %v9028 = vsub.f32 %v8988, %v9020
        %v9029 = vsub.f32 %v8989, %v9021
        %v9030 = vsub.f32 %v8990, %v9022
        %v9031 = vsub.f32 %v8991, %v9023
        %v9032 = vadd.f32 %v7963, %v9008
        %v9033 = vadd.f32 %v7964, %v9009
        %v9034 = vadd.f32 %v7965, %v9010
        %v9035 = vadd.f32 %v7966, %v9011
        %v9036 = vadd.f32 %v7967, %v9012
        %v9037 = vadd.f32 %v7968, %v9013
        %v9038 = vadd.f32 %v7969, %v9014
        %v9039 = vadd.f32 %v7970, %v9015
        %v9040 = vmul.f32 %v8019, 0.9
        %v9041 = vmul.f32 %v8020, 0.9
        %v9042 = vmul.f32 %v8021, 0.9
        %v9043 = vmul.f32 %v8022, 0.9
        %v9044 = vmul.f32 %v8023, 0.9
        %v9045 = vmul.f32 %v8024, 0.9
        %v9046 = vmul.f32 %v8025, 0.9
        %v9047 = vmul.f32 %v8026, 0.9
        %v9048 = vadd.f32 %v9040, %v1506
        %v9049 = vadd.f32 %v9041, %v1508
        %v9050 = vadd.f32 %v9042, %v1511
        %v9051 = vadd.f32 %v9043, %v1513
        %v9052 = vadd.f32 %v9044, %v1516
        %v9053 = vadd.f32 %v9045, %v1518
        %v9054 = vadd.f32 %v9046, %v1521
        %v9055 = vadd.f32 %v9047, %v1523
        %vm9056 = vcmp.ge.f32.partialorder %v9048, 0.5
        %vm9057 = vcmp.ge.f32.partialorder %v9049, 0.5
        %vm9058 = vcmp.ge.f32.partialorder %v9050, 0.5
        %vm9059 = vcmp.ge.f32.partialorder %v9051, 0.5
        %vm9060 = vcmp.ge.f32.partialorder %v9052, 0.5
        %vm9061 = vcmp.ge.f32.partialorder %v9053, 0.5
        %vm9062 = vcmp.ge.f32.partialorder %v9054, 0.5
        %vm9063 = vcmp.ge.f32.partialorder %v9055, 0.5
        %v9064 = vsel %vm9056, 1, 0
        %v9065 = vsel %vm9057, 1, 0
        %v9066 = vsel %vm9058, 1, 0
        %v9067 = vsel %vm9059, 1, 0
        %v9068 = vsel %vm9060, 1, 0
        %v9069 = vsel %vm9061, 1, 0
        %v9070 = vsel %vm9062, 1, 0
        %v9071 = vsel %vm9063, 1, 0
        %v9072 = vcvt.s32.f32 %v9064
        %v9073 = vcvt.s32.f32 %v9065
        %v9074 = vcvt.s32.f32 %v9066
        %v9075 = vcvt.s32.f32 %v9067
        %v9076 = vcvt.s32.f32 %v9068
        %v9077 = vcvt.s32.f32 %v9069
        %v9078 = vcvt.s32.f32 %v9070
        %v9079 = vcvt.s32.f32 %v9071
        %v9080 = vpack.c.bf16 %v9072, %v9072
        %v9081 = vpack.c.bf16 %v9073, %v9073
        %v9082 = vpack.c.bf16 %v9074, %v9074
        %v9083 = vpack.c.bf16 %v9075, %v9075
        %v9084 = vpack.c.bf16 %v9076, %v9076
        %v9085 = vpack.c.bf16 %v9077, %v9077
        %v9086 = vpack.c.bf16 %v9078, %v9078
        %v9087 = vpack.c.bf16 %v9079, %v9079
        %v9096 = vrot.slane %v9080, 3
        %v9097 = vrot.slane %v9081, 3
        %v9098 = vrot.slane %v9082, 3
        %v9099 = vrot.slane %v9083, 3
        %v9100 = vrot.slane %v9084, 3
        %v9101 = vrot.slane %v9085, 3
        %v9102 = vrot.slane %v9086, 3
        %v9103 = vrot.slane %v9087, 3
        %v9106 = vsel %vm1597, %v9080, %v9096
        %v9108 = vsel %vm1602, %v9080, %v9096
        %v9110 = vrot.slane %v9108, 1
        %v9111 = vsel %vm1606, %v9080, %v9096
        %v9113 = vrot.slane %v9111, 2
        %v9114 = vsel %vm1610, %v9080, %v9096
        %v9116 = vrot.slane %v9114, 3
        %v9119 = vsel %vm1597, %v9081, %v9097
        %v9121 = vsel %vm1602, %v9081, %v9097
        %v9123 = vrot.slane %v9121, 1
        %v9124 = vsel %vm1606, %v9081, %v9097
        %v9126 = vrot.slane %v9124, 2
        %v9127 = vsel %vm1610, %v9081, %v9097
        %v9129 = vrot.slane %v9127, 3
        %v9132 = vsel %vm1597, %v9082, %v9098
        %v9134 = vsel %vm1602, %v9082, %v9098
        %v9136 = vrot.slane %v9134, 1
        %v9137 = vsel %vm1606, %v9082, %v9098
        %v9139 = vrot.slane %v9137, 2
        %v9140 = vsel %vm1610, %v9082, %v9098
        %v9142 = vrot.slane %v9140, 3
        %v9145 = vsel %vm1597, %v9083, %v9099
        %v9147 = vsel %vm1602, %v9083, %v9099
        %v9149 = vrot.slane %v9147, 1
        %v9150 = vsel %vm1606, %v9083, %v9099
        %v9152 = vrot.slane %v9150, 2
        %v9153 = vsel %vm1610, %v9083, %v9099
        %v9155 = vrot.slane %v9153, 3
        %v9158 = vsel %vm1597, %v9084, %v9100
        %v9160 = vsel %vm1602, %v9084, %v9100
        %v9162 = vrot.slane %v9160, 1
        %v9163 = vsel %vm1606, %v9084, %v9100
        %v9165 = vrot.slane %v9163, 2
        %v9166 = vsel %vm1610, %v9084, %v9100
        %v9168 = vrot.slane %v9166, 3
        %v9171 = vsel %vm1597, %v9085, %v9101
        %v9173 = vsel %vm1602, %v9085, %v9101
        %v9175 = vrot.slane %v9173, 1
        %v9176 = vsel %vm1606, %v9085, %v9101
        %v9178 = vrot.slane %v9176, 2
        %v9179 = vsel %vm1610, %v9085, %v9101
        %v9181 = vrot.slane %v9179, 3
        %v9184 = vsel %vm1597, %v9086, %v9102
        %v9186 = vsel %vm1602, %v9086, %v9102
        %v9188 = vrot.slane %v9186, 1
        %v9189 = vsel %vm1606, %v9086, %v9102
        %v9191 = vrot.slane %v9189, 2
        %v9192 = vsel %vm1610, %v9086, %v9102
        %v9194 = vrot.slane %v9192, 3
        %v9197 = vsel %vm1597, %v9087, %v9103
        %v9199 = vsel %vm1602, %v9087, %v9103
        %v9201 = vrot.slane %v9199, 1
        %v9202 = vsel %vm1606, %v9087, %v9103
        %v9204 = vrot.slane %v9202, 2
        %v9205 = vsel %vm1610, %v9087, %v9103
        %v9207 = vrot.slane %v9205, 3
        %v9208 = vunpack.i.l.s16 %v9106
        %v9209 = vunpack.i.h.s16 %v9106
        %v9210 = vunpack.i.l.s16 %v9110
        %v9211 = vunpack.i.h.s16 %v9110
        %v9212 = vunpack.i.l.s16 %v9113
        %v9213 = vunpack.i.h.s16 %v9113
        %v9214 = vunpack.i.l.s16 %v9116
        %v9215 = vunpack.i.h.s16 %v9116
        %v9216 = vunpack.i.l.s16 %v9119
        %v9217 = vunpack.i.h.s16 %v9119
        %v9218 = vunpack.i.l.s16 %v9123
        %v9219 = vunpack.i.h.s16 %v9123
        %v9220 = vunpack.i.l.s16 %v9126
        %v9221 = vunpack.i.h.s16 %v9126
        %v9222 = vunpack.i.l.s16 %v9129
        %v9223 = vunpack.i.h.s16 %v9129
        %v9224 = vunpack.i.l.s16 %v9132
        %v9225 = vunpack.i.h.s16 %v9132
        %v9226 = vunpack.i.l.s16 %v9136
        %v9227 = vunpack.i.h.s16 %v9136
        %v9228 = vunpack.i.l.s16 %v9139
        %v9229 = vunpack.i.h.s16 %v9139
        %v9230 = vunpack.i.l.s16 %v9142
        %v9231 = vunpack.i.h.s16 %v9142
        %v9232 = vunpack.i.l.s16 %v9145
        %v9233 = vunpack.i.h.s16 %v9145
        %v9234 = vunpack.i.l.s16 %v9149
        %v9235 = vunpack.i.h.s16 %v9149
        %v9236 = vunpack.i.l.s16 %v9152
        %v9237 = vunpack.i.h.s16 %v9152
        %v9238 = vunpack.i.l.s16 %v9155
        %v9239 = vunpack.i.h.s16 %v9155
        %v9240 = vunpack.i.l.s16 %v9158
        %v9241 = vunpack.i.h.s16 %v9158
        %v9242 = vunpack.i.l.s16 %v9162
        %v9243 = vunpack.i.h.s16 %v9162
        %v9244 = vunpack.i.l.s16 %v9165
        %v9245 = vunpack.i.h.s16 %v9165
        %v9246 = vunpack.i.l.s16 %v9168
        %v9247 = vunpack.i.h.s16 %v9168
        %v9248 = vunpack.i.l.s16 %v9171
        %v9249 = vunpack.i.h.s16 %v9171
        %v9250 = vunpack.i.l.s16 %v9175
        %v9251 = vunpack.i.h.s16 %v9175
        %v9252 = vunpack.i.l.s16 %v9178
        %v9253 = vunpack.i.h.s16 %v9178
        %v9254 = vunpack.i.l.s16 %v9181
        %v9255 = vunpack.i.h.s16 %v9181
        %v9256 = vunpack.i.l.s16 %v9184
        %v9257 = vunpack.i.h.s16 %v9184
        %v9258 = vunpack.i.l.s16 %v9188
        %v9259 = vunpack.i.h.s16 %v9188
        %v9260 = vunpack.i.l.s16 %v9191
        %v9261 = vunpack.i.h.s16 %v9191
        %v9262 = vunpack.i.l.s16 %v9194
        %v9263 = vunpack.i.h.s16 %v9194
        %v9264 = vunpack.i.l.s16 %v9197
        %v9265 = vunpack.i.h.s16 %v9197
        %v9266 = vunpack.i.l.s16 %v9201
        %v9267 = vunpack.i.h.s16 %v9201
        %v9268 = vunpack.i.l.s16 %v9204
        %v9269 = vunpack.i.h.s16 %v9204
        %v9270 = vunpack.i.l.s16 %v9207
        %v9271 = vunpack.i.h.s16 %v9207
        %v9272 = vpack.i.b16 %v9208, %v9208
        %v9273 = vpack.i.b16 %v9209, %v9209
        %v9274 = vpack.i.b16 %v9210, %v9210
        %v9275 = vpack.i.b16 %v9211, %v9211
        %v9276 = vpack.i.b16 %v9212, %v9212
        %v9277 = vpack.i.b16 %v9213, %v9213
        %v9278 = vpack.i.b16 %v9214, %v9214
        %v9279 = vpack.i.b16 %v9215, %v9215
        %v9280 = vpack.i.b16 %v9216, %v9216
        %v9281 = vpack.i.b16 %v9217, %v9217
        %v9282 = vpack.i.b16 %v9218, %v9218
        %v9283 = vpack.i.b16 %v9219, %v9219
        %v9284 = vpack.i.b16 %v9220, %v9220
        %v9285 = vpack.i.b16 %v9221, %v9221
        %v9286 = vpack.i.b16 %v9222, %v9222
        %v9287 = vpack.i.b16 %v9223, %v9223
        %v9288 = vpack.i.b16 %v9224, %v9224
        %v9289 = vpack.i.b16 %v9225, %v9225
        %v9290 = vpack.i.b16 %v9226, %v9226
        %v9291 = vpack.i.b16 %v9227, %v9227
        %v9292 = vpack.i.b16 %v9228, %v9228
        %v9293 = vpack.i.b16 %v9229, %v9229
        %v9294 = vpack.i.b16 %v9230, %v9230
        %v9295 = vpack.i.b16 %v9231, %v9231
        %v9296 = vpack.i.b16 %v9232, %v9232
        %v9297 = vpack.i.b16 %v9233, %v9233
        %v9298 = vpack.i.b16 %v9234, %v9234
        %v9299 = vpack.i.b16 %v9235, %v9235
        %v9300 = vpack.i.b16 %v9236, %v9236
        %v9301 = vpack.i.b16 %v9237, %v9237
        %v9302 = vpack.i.b16 %v9238, %v9238
        %v9303 = vpack.i.b16 %v9239, %v9239
        %v9304 = vpack.i.b16 %v9240, %v9240
        %v9305 = vpack.i.b16 %v9241, %v9241
        %v9306 = vpack.i.b16 %v9242, %v9242
        %v9307 = vpack.i.b16 %v9243, %v9243
        %v9308 = vpack.i.b16 %v9244, %v9244
        %v9309 = vpack.i.b16 %v9245, %v9245
        %v9310 = vpack.i.b16 %v9246, %v9246
        %v9311 = vpack.i.b16 %v9247, %v9247
        %v9312 = vpack.i.b16 %v9248, %v9248
        %v9313 = vpack.i.b16 %v9249, %v9249
        %v9314 = vpack.i.b16 %v9250, %v9250
        %v9315 = vpack.i.b16 %v9251, %v9251
        %v9316 = vpack.i.b16 %v9252, %v9252
        %v9317 = vpack.i.b16 %v9253, %v9253
        %v9318 = vpack.i.b16 %v9254, %v9254
        %v9319 = vpack.i.b16 %v9255, %v9255
        %v9320 = vpack.i.b16 %v9256, %v9256
        %v9321 = vpack.i.b16 %v9257, %v9257
        %v9322 = vpack.i.b16 %v9258, %v9258
        %v9323 = vpack.i.b16 %v9259, %v9259
        %v9324 = vpack.i.b16 %v9260, %v9260
        %v9325 = vpack.i.b16 %v9261, %v9261
        %v9326 = vpack.i.b16 %v9262, %v9262
        %v9327 = vpack.i.b16 %v9263, %v9263
        %v9328 = vpack.i.b16 %v9264, %v9264
        %v9329 = vpack.i.b16 %v9265, %v9265
        %v9330 = vpack.i.b16 %v9266, %v9266
        %v9331 = vpack.i.b16 %v9267, %v9267
        %v9332 = vpack.i.b16 %v9268, %v9268
        %v9333 = vpack.i.b16 %v9269, %v9269
        %v9334 = vpack.i.b16 %v9270, %v9270
        %v9335 = vpack.i.b16 %v9271, %v9271
        %v9337 = vunpack.c.l.s4 286326784
        %v9338 = vunpack.c.0.s8 %v9337
        %v9339 = vperm.slane %v9272, %v9338
        %v9341 = vunpack.c.l.s4 286326784
        %v9342 = vunpack.c.0.s8 %v9341
        %v9343 = vperm.slane %v9273, %v9342
        %v9345 = vunpack.c.l.s4 286326784
        %v9346 = vunpack.c.0.s8 %v9345
        %v9347 = vperm.slane %v9274, %v9346
        %v9349 = vunpack.c.l.s4 286326784
        %v9350 = vunpack.c.0.s8 %v9349
        %v9351 = vperm.slane %v9275, %v9350
        %v9353 = vunpack.c.l.s4 286326784
        %v9354 = vunpack.c.0.s8 %v9353
        %v9355 = vperm.slane %v9276, %v9354
        %v9357 = vunpack.c.l.s4 286326784
        %v9358 = vunpack.c.0.s8 %v9357
        %v9359 = vperm.slane %v9277, %v9358
        %v9361 = vunpack.c.l.s4 286326784
        %v9362 = vunpack.c.0.s8 %v9361
        %v9363 = vperm.slane %v9278, %v9362
        %v9365 = vunpack.c.l.s4 286326784
        %v9366 = vunpack.c.0.s8 %v9365
        %v9367 = vperm.slane %v9279, %v9366
        %v9369 = vunpack.c.l.s4 286326784
        %v9370 = vunpack.c.0.s8 %v9369
        %v9371 = vperm.slane %v9280, %v9370
        %v9373 = vunpack.c.l.s4 286326784
        %v9374 = vunpack.c.0.s8 %v9373
        %v9375 = vperm.slane %v9281, %v9374
        %v9377 = vunpack.c.l.s4 286326784
        %v9378 = vunpack.c.0.s8 %v9377
        %v9379 = vperm.slane %v9282, %v9378
        %v9381 = vunpack.c.l.s4 286326784
        %v9382 = vunpack.c.0.s8 %v9381
        %v9383 = vperm.slane %v9283, %v9382
        %v9385 = vunpack.c.l.s4 286326784
        %v9386 = vunpack.c.0.s8 %v9385
        %v9387 = vperm.slane %v9284, %v9386
        %v9389 = vunpack.c.l.s4 286326784
        %v9390 = vunpack.c.0.s8 %v9389
        %v9391 = vperm.slane %v9285, %v9390
        %v9393 = vunpack.c.l.s4 286326784
        %v9394 = vunpack.c.0.s8 %v9393
        %v9395 = vperm.slane %v9286, %v9394
        %v9397 = vunpack.c.l.s4 286326784
        %v9398 = vunpack.c.0.s8 %v9397
        %v9399 = vperm.slane %v9287, %v9398
        %v9401 = vunpack.c.l.s4 286326784
        %v9402 = vunpack.c.0.s8 %v9401
        %v9403 = vperm.slane %v9288, %v9402
        %v9405 = vunpack.c.l.s4 286326784
        %v9406 = vunpack.c.0.s8 %v9405
        %v9407 = vperm.slane %v9289, %v9406
        %v9409 = vunpack.c.l.s4 286326784
        %v9410 = vunpack.c.0.s8 %v9409
        %v9411 = vperm.slane %v9290, %v9410
        %v9413 = vunpack.c.l.s4 286326784
        %v9414 = vunpack.c.0.s8 %v9413
        %v9415 = vperm.slane %v9291, %v9414
        %v9417 = vunpack.c.l.s4 286326784
        %v9418 = vunpack.c.0.s8 %v9417
        %v9419 = vperm.slane %v9292, %v9418
        %v9421 = vunpack.c.l.s4 286326784
        %v9422 = vunpack.c.0.s8 %v9421
        %v9423 = vperm.slane %v9293, %v9422
        %v9425 = vunpack.c.l.s4 286326784
        %v9426 = vunpack.c.0.s8 %v9425
        %v9427 = vperm.slane %v9294, %v9426
        %v9429 = vunpack.c.l.s4 286326784
        %v9430 = vunpack.c.0.s8 %v9429
        %v9431 = vperm.slane %v9295, %v9430
        %v9433 = vunpack.c.l.s4 286326784
        %v9434 = vunpack.c.0.s8 %v9433
        %v9435 = vperm.slane %v9296, %v9434
        %v9437 = vunpack.c.l.s4 286326784
        %v9438 = vunpack.c.0.s8 %v9437
        %v9439 = vperm.slane %v9297, %v9438
        %v9441 = vunpack.c.l.s4 286326784
        %v9442 = vunpack.c.0.s8 %v9441
        %v9443 = vperm.slane %v9298, %v9442
        %v9445 = vunpack.c.l.s4 286326784
        %v9446 = vunpack.c.0.s8 %v9445
        %v9447 = vperm.slane %v9299, %v9446
        %v9449 = vunpack.c.l.s4 286326784
        %v9450 = vunpack.c.0.s8 %v9449
        %v9451 = vperm.slane %v9300, %v9450
        %v9453 = vunpack.c.l.s4 286326784
        %v9454 = vunpack.c.0.s8 %v9453
        %v9455 = vperm.slane %v9301, %v9454
        %v9457 = vunpack.c.l.s4 286326784
        %v9458 = vunpack.c.0.s8 %v9457
        %v9459 = vperm.slane %v9302, %v9458
        %v9461 = vunpack.c.l.s4 286326784
        %v9462 = vunpack.c.0.s8 %v9461
        %v9463 = vperm.slane %v9303, %v9462
        %v9465 = vunpack.c.l.s4 286326784
        %v9466 = vunpack.c.0.s8 %v9465
        %v9467 = vperm.slane %v9304, %v9466
        %v9469 = vunpack.c.l.s4 286326784
        %v9470 = vunpack.c.0.s8 %v9469
        %v9471 = vperm.slane %v9305, %v9470
        %v9473 = vunpack.c.l.s4 286326784
        %v9474 = vunpack.c.0.s8 %v9473
        %v9475 = vperm.slane %v9306, %v9474
        %v9477 = vunpack.c.l.s4 286326784
        %v9478 = vunpack.c.0.s8 %v9477
        %v9479 = vperm.slane %v9307, %v9478
        %v9481 = vunpack.c.l.s4 286326784
        %v9482 = vunpack.c.0.s8 %v9481
        %v9483 = vperm.slane %v9308, %v9482
        %v9485 = vunpack.c.l.s4 286326784
        %v9486 = vunpack.c.0.s8 %v9485
        %v9487 = vperm.slane %v9309, %v9486
        %v9489 = vunpack.c.l.s4 286326784
        %v9490 = vunpack.c.0.s8 %v9489
        %v9491 = vperm.slane %v9310, %v9490
        %v9493 = vunpack.c.l.s4 286326784
        %v9494 = vunpack.c.0.s8 %v9493
        %v9495 = vperm.slane %v9311, %v9494
        %v9497 = vunpack.c.l.s4 286326784
        %v9498 = vunpack.c.0.s8 %v9497
        %v9499 = vperm.slane %v9312, %v9498
        %v9501 = vunpack.c.l.s4 286326784
        %v9502 = vunpack.c.0.s8 %v9501
        %v9503 = vperm.slane %v9313, %v9502
        %v9505 = vunpack.c.l.s4 286326784
        %v9506 = vunpack.c.0.s8 %v9505
        %v9507 = vperm.slane %v9314, %v9506
        %v9509 = vunpack.c.l.s4 286326784
        %v9510 = vunpack.c.0.s8 %v9509
        %v9511 = vperm.slane %v9315, %v9510
        %v9513 = vunpack.c.l.s4 286326784
        %v9514 = vunpack.c.0.s8 %v9513
        %v9515 = vperm.slane %v9316, %v9514
        %v9517 = vunpack.c.l.s4 286326784
        %v9518 = vunpack.c.0.s8 %v9517
        %v9519 = vperm.slane %v9317, %v9518
        %v9521 = vunpack.c.l.s4 286326784
        %v9522 = vunpack.c.0.s8 %v9521
        %v9523 = vperm.slane %v9318, %v9522
        %v9525 = vunpack.c.l.s4 286326784
        %v9526 = vunpack.c.0.s8 %v9525
        %v9527 = vperm.slane %v9319, %v9526
        %v9529 = vunpack.c.l.s4 286326784
        %v9530 = vunpack.c.0.s8 %v9529
        %v9531 = vperm.slane %v9320, %v9530
        %v9533 = vunpack.c.l.s4 286326784
        %v9534 = vunpack.c.0.s8 %v9533
        %v9535 = vperm.slane %v9321, %v9534
        %v9537 = vunpack.c.l.s4 286326784
        %v9538 = vunpack.c.0.s8 %v9537
        %v9539 = vperm.slane %v9322, %v9538
        %v9541 = vunpack.c.l.s4 286326784
        %v9542 = vunpack.c.0.s8 %v9541
        %v9543 = vperm.slane %v9323, %v9542
        %v9545 = vunpack.c.l.s4 286326784
        %v9546 = vunpack.c.0.s8 %v9545
        %v9547 = vperm.slane %v9324, %v9546
        %v9549 = vunpack.c.l.s4 286326784
        %v9550 = vunpack.c.0.s8 %v9549
        %v9551 = vperm.slane %v9325, %v9550
        %v9553 = vunpack.c.l.s4 286326784
        %v9554 = vunpack.c.0.s8 %v9553
        %v9555 = vperm.slane %v9326, %v9554
        %v9557 = vunpack.c.l.s4 286326784
        %v9558 = vunpack.c.0.s8 %v9557
        %v9559 = vperm.slane %v9327, %v9558
        %v9561 = vunpack.c.l.s4 286326784
        %v9562 = vunpack.c.0.s8 %v9561
        %v9563 = vperm.slane %v9328, %v9562
        %v9565 = vunpack.c.l.s4 286326784
        %v9566 = vunpack.c.0.s8 %v9565
        %v9567 = vperm.slane %v9329, %v9566
        %v9569 = vunpack.c.l.s4 286326784
        %v9570 = vunpack.c.0.s8 %v9569
        %v9571 = vperm.slane %v9330, %v9570
        %v9573 = vunpack.c.l.s4 286326784
        %v9574 = vunpack.c.0.s8 %v9573
        %v9575 = vperm.slane %v9331, %v9574
        %v9577 = vunpack.c.l.s4 286326784
        %v9578 = vunpack.c.0.s8 %v9577
        %v9579 = vperm.slane %v9332, %v9578
        %v9581 = vunpack.c.l.s4 286326784
        %v9582 = vunpack.c.0.s8 %v9581
        %v9583 = vperm.slane %v9333, %v9582
        %v9585 = vunpack.c.l.s4 286326784
        %v9586 = vunpack.c.0.s8 %v9585
        %v9587 = vperm.slane %v9334, %v9586
        %v9589 = vunpack.c.l.s4 286326784
        %v9590 = vunpack.c.0.s8 %v9589
        %v9591 = vperm.slane %v9335, %v9590
        %vm9656 = vsmask.f32 7950
        %vm9657 = vmand %vm8603, %vm9656
        %v9658 = vld [vmem:[%s960] sm:$0x8]
        %v9659 = vsel %vm9657, %v9339, %v9658
        %9660 = vst [vmem:[%s960] sm:$0x8] %v9659
        %v9661 = vld [vmem:[%s960 + $0x4] sm:$0x8]
        %v9662 = vsel %vm9657, %v9343, %v9661
        %9663 = vst [vmem:[%s960 + $0x4] sm:$0x8] %v9662
        %v9664 = vld [vmem:[%s960 + $0x8] sm:$0x8]
        %v9665 = vsel %vm9657, %v9347, %v9664
        %9666 = vst [vmem:[%s960 + $0x8] sm:$0x8] %v9665
        %v9667 = vld [vmem:[%s960 + $0xc] sm:$0x8]
        %v9668 = vsel %vm9657, %v9351, %v9667
        %9669 = vst [vmem:[%s960 + $0xc] sm:$0x8] %v9668
        %v9670 = vld [vmem:[%s960 + $0x10] sm:$0x8]
        %v9671 = vsel %vm9657, %v9355, %v9670
        %9672 = vst [vmem:[%s960 + $0x10] sm:$0x8] %v9671
        %v9673 = vld [vmem:[%s960 + $0x14] sm:$0x8]
        %v9674 = vsel %vm9657, %v9359, %v9673
        %9675 = vst [vmem:[%s960 + $0x14] sm:$0x8] %v9674
        %v9676 = vld [vmem:[%s960 + $0x18] sm:$0x8]
        %v9677 = vsel %vm9657, %v9363, %v9676
        %9678 = vst [vmem:[%s960 + $0x18] sm:$0x8] %v9677
        %v9679 = vld [vmem:[%s960 + $0x1c] sm:$0x8]
        %v9680 = vsel %vm9657, %v9367, %v9679
        %9681 = vst [vmem:[%s960 + $0x1c] sm:$0x8] %v9680
        %v9682 = vld [vmem:[%s960 + $0x20] sm:$0x8]
        %v9683 = vsel %vm9657, %v9371, %v9682
        %9684 = vst [vmem:[%s960 + $0x20] sm:$0x8] %v9683
        %v9685 = vld [vmem:[%s960 + $0x24] sm:$0x8]
        %v9686 = vsel %vm9657, %v9375, %v9685
        %9687 = vst [vmem:[%s960 + $0x24] sm:$0x8] %v9686
        %v9688 = vld [vmem:[%s960 + $0x28] sm:$0x8]
        %v9689 = vsel %vm9657, %v9379, %v9688
        %9690 = vst [vmem:[%s960 + $0x28] sm:$0x8] %v9689
        %v9691 = vld [vmem:[%s960 + $0x2c] sm:$0x8]
        %v9692 = vsel %vm9657, %v9383, %v9691
        %9693 = vst [vmem:[%s960 + $0x2c] sm:$0x8] %v9692
        %v9694 = vld [vmem:[%s960 + $0x30] sm:$0x8]
        %v9695 = vsel %vm9657, %v9387, %v9694
        %9696 = vst [vmem:[%s960 + $0x30] sm:$0x8] %v9695
        %v9697 = vld [vmem:[%s960 + $0x34] sm:$0x8]
        %v9698 = vsel %vm9657, %v9391, %v9697
        %9699 = vst [vmem:[%s960 + $0x34] sm:$0x8] %v9698
        %v9700 = vld [vmem:[%s960 + $0x38] sm:$0x8]
        %v9701 = vsel %vm9657, %v9395, %v9700
        %9702 = vst [vmem:[%s960 + $0x38] sm:$0x8] %v9701
        %v9703 = vld [vmem:[%s960 + $0x3c] sm:$0x8]
        %v9704 = vsel %vm9657, %v9399, %v9703
        %9705 = vst [vmem:[%s960 + $0x3c] sm:$0x8] %v9704
        %v9706 = vld [vmem:[%s960 + $0x40] sm:$0x8]
        %v9707 = vsel %vm9657, %v9403, %v9706
        %9708 = vst [vmem:[%s960 + $0x40] sm:$0x8] %v9707
        %v9709 = vld [vmem:[%s960 + $0x44] sm:$0x8]
        %v9710 = vsel %vm9657, %v9407, %v9709
        %9711 = vst [vmem:[%s960 + $0x44] sm:$0x8] %v9710
        %v9712 = vld [vmem:[%s960 + $0x48] sm:$0x8]
        %v9713 = vsel %vm9657, %v9411, %v9712
        %9714 = vst [vmem:[%s960 + $0x48] sm:$0x8] %v9713
        %v9715 = vld [vmem:[%s960 + $0x4c] sm:$0x8]
        %v9716 = vsel %vm9657, %v9415, %v9715
        %9717 = vst [vmem:[%s960 + $0x4c] sm:$0x8] %v9716
        %v9718 = vld [vmem:[%s960 + $0x50] sm:$0x8]
        %v9719 = vsel %vm9657, %v9419, %v9718
        %9720 = vst [vmem:[%s960 + $0x50] sm:$0x8] %v9719
        %v9721 = vld [vmem:[%s960 + $0x54] sm:$0x8]
        %v9722 = vsel %vm9657, %v9423, %v9721
        %9723 = vst [vmem:[%s960 + $0x54] sm:$0x8] %v9722
        %v9724 = vld [vmem:[%s960 + $0x58] sm:$0x8]
        %v9725 = vsel %vm9657, %v9427, %v9724
        %9726 = vst [vmem:[%s960 + $0x58] sm:$0x8] %v9725
        %v9727 = vld [vmem:[%s960 + $0x5c] sm:$0x8]
        %v9728 = vsel %vm9657, %v9431, %v9727
        %9729 = vst [vmem:[%s960 + $0x5c] sm:$0x8] %v9728
        %v9730 = vld [vmem:[%s960 + $0x60] sm:$0x8]
        %v9731 = vsel %vm9657, %v9435, %v9730
        %9732 = vst [vmem:[%s960 + $0x60] sm:$0x8] %v9731
        %v9733 = vld [vmem:[%s960 + $0x64] sm:$0x8]
        %v9734 = vsel %vm9657, %v9439, %v9733
        %9735 = vst [vmem:[%s960 + $0x64] sm:$0x8] %v9734
        %v9736 = vld [vmem:[%s960 + $0x68] sm:$0x8]
        %v9737 = vsel %vm9657, %v9443, %v9736
        %9738 = vst [vmem:[%s960 + $0x68] sm:$0x8] %v9737
        %v9739 = vld [vmem:[%s960 + $0x6c] sm:$0x8]
        %v9740 = vsel %vm9657, %v9447, %v9739
        %9741 = vst [vmem:[%s960 + $0x6c] sm:$0x8] %v9740
        %v9742 = vld [vmem:[%s960 + $0x70] sm:$0x8]
        %v9743 = vsel %vm9657, %v9451, %v9742
        %9744 = vst [vmem:[%s960 + $0x70] sm:$0x8] %v9743
        %v9745 = vld [vmem:[%s960 + $0x74] sm:$0x8]
        %v9746 = vsel %vm9657, %v9455, %v9745
        %9747 = vst [vmem:[%s960 + $0x74] sm:$0x8] %v9746
        %v9748 = vld [vmem:[%s960 + $0x78] sm:$0x8]
        %v9749 = vsel %vm9657, %v9459, %v9748
        %9750 = vst [vmem:[%s960 + $0x78] sm:$0x8] %v9749
        %v9751 = vld [vmem:[%s960 + $0x7c] sm:$0x8]
        %v9752 = vsel %vm9657, %v9463, %v9751
        %9753 = vst [vmem:[%s960 + $0x7c] sm:$0x8] %v9752
        %v9754 = vld [vmem:[%s960 + $0x80] sm:$0x8]
        %v9755 = vsel %vm9657, %v9467, %v9754
        %9756 = vst [vmem:[%s960 + $0x80] sm:$0x8] %v9755
        %v9757 = vld [vmem:[%s960 + $0x84] sm:$0x8]
        %v9758 = vsel %vm9657, %v9471, %v9757
        %9759 = vst [vmem:[%s960 + $0x84] sm:$0x8] %v9758
        %v9760 = vld [vmem:[%s960 + $0x88] sm:$0x8]
        %v9761 = vsel %vm9657, %v9475, %v9760
        %9762 = vst [vmem:[%s960 + $0x88] sm:$0x8] %v9761
        %v9763 = vld [vmem:[%s960 + $0x8c] sm:$0x8]
        %v9764 = vsel %vm9657, %v9479, %v9763
        %9765 = vst [vmem:[%s960 + $0x8c] sm:$0x8] %v9764
        %v9766 = vld [vmem:[%s960 + $0x90] sm:$0x8]
        %v9767 = vsel %vm9657, %v9483, %v9766
        %9768 = vst [vmem:[%s960 + $0x90] sm:$0x8] %v9767
        %v9769 = vld [vmem:[%s960 + $0x94] sm:$0x8]
        %v9770 = vsel %vm9657, %v9487, %v9769
        %9771 = vst [vmem:[%s960 + $0x94] sm:$0x8] %v9770
        %v9772 = vld [vmem:[%s960 + $0x98] sm:$0x8]
        %v9773 = vsel %vm9657, %v9491, %v9772
        %9774 = vst [vmem:[%s960 + $0x98] sm:$0x8] %v9773
        %v9775 = vld [vmem:[%s960 + $0x9c] sm:$0x8]
        %v9776 = vsel %vm9657, %v9495, %v9775
        %9777 = vst [vmem:[%s960 + $0x9c] sm:$0x8] %v9776
        %v9778 = vld [vmem:[%s960 + $0xa0] sm:$0x8]
        %v9779 = vsel %vm9657, %v9499, %v9778
        %9780 = vst [vmem:[%s960 + $0xa0] sm:$0x8] %v9779
        %v9781 = vld [vmem:[%s960 + $0xa4] sm:$0x8]
        %v9782 = vsel %vm9657, %v9503, %v9781
        %9783 = vst [vmem:[%s960 + $0xa4] sm:$0x8] %v9782
        %v9784 = vld [vmem:[%s960 + $0xa8] sm:$0x8]
        %v9785 = vsel %vm9657, %v9507, %v9784
        %9786 = vst [vmem:[%s960 + $0xa8] sm:$0x8] %v9785
        %v9787 = vld [vmem:[%s960 + $0xac] sm:$0x8]
        %v9788 = vsel %vm9657, %v9511, %v9787
        %9789 = vst [vmem:[%s960 + $0xac] sm:$0x8] %v9788
        %v9790 = vld [vmem:[%s960 + $0xb0] sm:$0x8]
        %v9791 = vsel %vm9657, %v9515, %v9790
        %9792 = vst [vmem:[%s960 + $0xb0] sm:$0x8] %v9791
        %v9793 = vld [vmem:[%s960 + $0xb4] sm:$0x8]
        %v9794 = vsel %vm9657, %v9519, %v9793
        %9795 = vst [vmem:[%s960 + $0xb4] sm:$0x8] %v9794
        %v9796 = vld [vmem:[%s960 + $0xb8] sm:$0x8]
        %v9797 = vsel %vm9657, %v9523, %v9796
        %9798 = vst [vmem:[%s960 + $0xb8] sm:$0x8] %v9797
        %v9799 = vld [vmem:[%s960 + $0xbc] sm:$0x8]
        %v9800 = vsel %vm9657, %v9527, %v9799
        %9801 = vst [vmem:[%s960 + $0xbc] sm:$0x8] %v9800
        %v9802 = vld [vmem:[%s960 + $0xc0] sm:$0x8]
        %v9803 = vsel %vm9657, %v9531, %v9802
        %9804 = vst [vmem:[%s960 + $0xc0] sm:$0x8] %v9803
        %v9805 = vld [vmem:[%s960 + $0xc4] sm:$0x8]
        %v9806 = vsel %vm9657, %v9535, %v9805
        %9807 = vst [vmem:[%s960 + $0xc4] sm:$0x8] %v9806
        %v9808 = vld [vmem:[%s960 + $0xc8] sm:$0x8]
        %v9809 = vsel %vm9657, %v9539, %v9808
        %9810 = vst [vmem:[%s960 + $0xc8] sm:$0x8] %v9809
        %v9811 = vld [vmem:[%s960 + $0xcc] sm:$0x8]
        %v9812 = vsel %vm9657, %v9543, %v9811
        %9813 = vst [vmem:[%s960 + $0xcc] sm:$0x8] %v9812
        %v9814 = vld [vmem:[%s960 + $0xd0] sm:$0x8]
        %v9815 = vsel %vm9657, %v9547, %v9814
        %9816 = vst [vmem:[%s960 + $0xd0] sm:$0x8] %v9815
        %v9817 = vld [vmem:[%s960 + $0xd4] sm:$0x8]
        %v9818 = vsel %vm9657, %v9551, %v9817
        %9819 = vst [vmem:[%s960 + $0xd4] sm:$0x8] %v9818
        %v9820 = vld [vmem:[%s960 + $0xd8] sm:$0x8]
        %v9821 = vsel %vm9657, %v9555, %v9820
        %9822 = vst [vmem:[%s960 + $0xd8] sm:$0x8] %v9821
        %v9823 = vld [vmem:[%s960 + $0xdc] sm:$0x8]
        %v9824 = vsel %vm9657, %v9559, %v9823
        %9825 = vst [vmem:[%s960 + $0xdc] sm:$0x8] %v9824
        %v9826 = vld [vmem:[%s960 + $0xe0] sm:$0x8]
        %v9827 = vsel %vm9657, %v9563, %v9826
        %9828 = vst [vmem:[%s960 + $0xe0] sm:$0x8] %v9827
        %v9829 = vld [vmem:[%s960 + $0xe4] sm:$0x8]
        %v9830 = vsel %vm9657, %v9567, %v9829
        %9831 = vst [vmem:[%s960 + $0xe4] sm:$0x8] %v9830
        %v9832 = vld [vmem:[%s960 + $0xe8] sm:$0x8]
        %v9833 = vsel %vm9657, %v9571, %v9832
        %9834 = vst [vmem:[%s960 + $0xe8] sm:$0x8] %v9833
        %v9835 = vld [vmem:[%s960 + $0xec] sm:$0x8]
        %v9836 = vsel %vm9657, %v9575, %v9835
        %9837 = vst [vmem:[%s960 + $0xec] sm:$0x8] %v9836
        %v9838 = vld [vmem:[%s960 + $0xf0] sm:$0x8]
        %v9839 = vsel %vm9657, %v9579, %v9838
        %9840 = vst [vmem:[%s960 + $0xf0] sm:$0x8] %v9839
        %v9841 = vld [vmem:[%s960 + $0xf4] sm:$0x8]
        %v9842 = vsel %vm9657, %v9583, %v9841
        %9843 = vst [vmem:[%s960 + $0xf4] sm:$0x8] %v9842
        %v9844 = vld [vmem:[%s960 + $0xf8] sm:$0x8]
        %v9845 = vsel %vm9657, %v9587, %v9844
        %9846 = vst [vmem:[%s960 + $0xf8] sm:$0x8] %v9845
        %v9847 = vld [vmem:[%s960 + $0xfc] sm:$0x8]
        %v9848 = vsel %vm9657, %v9591, %v9847
        %9849 = vst [vmem:[%s960 + $0xfc] sm:$0x8] %v9848
        %9850 = vadd.xlane.f32.xlu0 %v9072
        %v9851 = vpop.xlane.xlu0 %9850
        %9852 = vadd.xlane.f32.xlu0 %v9073
        %v9853 = vpop.xlane.xlu0 %9852
        %9854 = vadd.xlane.f32.xlu0 %v9074
        %v9855 = vpop.xlane.xlu0 %9854
        %9856 = vadd.xlane.f32.xlu0 %v9075
        %v9857 = vpop.xlane.xlu0 %9856
        %9858 = vadd.xlane.f32.xlu0 %v9076
        %v9859 = vpop.xlane.xlu0 %9858
        %9860 = vadd.xlane.f32.xlu0 %v9077
        %v9861 = vpop.xlane.xlu0 %9860
        %9862 = vadd.xlane.f32.xlu0 %v9078
        %v9863 = vpop.xlane.xlu0 %9862
        %9864 = vadd.xlane.f32.xlu0 %v9079
        %v9865 = vpop.xlane.xlu0 %9864
        %v9866 = vadd.f32 %v9851, 1e-06
        %v9867 = vadd.f32 %v9853, 1e-06
        %v9868 = vadd.f32 %v9855, 1e-06
        %v9869 = vadd.f32 %v9857, 1e-06
        %v9870 = vadd.f32 %v9859, 1e-06
        %v9871 = vadd.f32 %v9861, 1e-06
        %v9872 = vadd.f32 %v9863, 1e-06
        %v9873 = vadd.f32 %v9865, 1e-06
        %v9874 = vrsqrt.pop %v9866
        %v9875 = vmul.f32 %v9874, %v9866
        %v9876 = vmul.f32 %v9875, %v9874
        %v9877 = vmul.f32 0.5, %v9876
        %v9878 = vsub.f32 1.5, %v9877
        %v9879 = vmul.f32 %v9874, %v9878
        %vm9880 = vweird.f32 %v9866
        %vm9881 = vweird.f32 %v9874
        %vm9882 = vmor %vm9880, %vm9881
        %v9883 = vsel %vm9882, %v9874, %v9879
        %v9884 = vrsqrt.pop %v9867
        %v9885 = vmul.f32 %v9884, %v9867
        %v9886 = vmul.f32 %v9885, %v9884
        %v9887 = vmul.f32 0.5, %v9886
        %v9888 = vsub.f32 1.5, %v9887
        %v9889 = vmul.f32 %v9884, %v9888
        %vm9890 = vweird.f32 %v9867
        %vm9891 = vweird.f32 %v9884
        %vm9892 = vmor %vm9890, %vm9891
        %v9893 = vsel %vm9892, %v9884, %v9889
        %v9894 = vrsqrt.pop %v9868
        %v9895 = vmul.f32 %v9894, %v9868
        %v9896 = vmul.f32 %v9895, %v9894
        %v9897 = vmul.f32 0.5, %v9896
        %v9898 = vsub.f32 1.5, %v9897
        %v9899 = vmul.f32 %v9894, %v9898
        %vm9900 = vweird.f32 %v9868
        %vm9901 = vweird.f32 %v9894
        %vm9902 = vmor %vm9900, %vm9901
        %v9903 = vsel %vm9902, %v9894, %v9899
        %v9904 = vrsqrt.pop %v9869
        %v9905 = vmul.f32 %v9904, %v9869
        %v9906 = vmul.f32 %v9905, %v9904
        %v9907 = vmul.f32 0.5, %v9906
        %v9908 = vsub.f32 1.5, %v9907
        %v9909 = vmul.f32 %v9904, %v9908
        %vm9910 = vweird.f32 %v9869
        %vm9911 = vweird.f32 %v9904
        %vm9912 = vmor %vm9910, %vm9911
        %v9913 = vsel %vm9912, %v9904, %v9909
        %v9914 = vrsqrt.pop %v9870
        %v9915 = vmul.f32 %v9914, %v9870
        %v9916 = vmul.f32 %v9915, %v9914
        %v9917 = vmul.f32 0.5, %v9916
        %v9918 = vsub.f32 1.5, %v9917
        %v9919 = vmul.f32 %v9914, %v9918
        %vm9920 = vweird.f32 %v9870
        %vm9921 = vweird.f32 %v9914
        %vm9922 = vmor %vm9920, %vm9921
        %v9923 = vsel %vm9922, %v9914, %v9919
        %v9924 = vrsqrt.pop %v9871
        %v9925 = vmul.f32 %v9924, %v9871
        %v9926 = vmul.f32 %v9925, %v9924
        %v9927 = vmul.f32 0.5, %v9926
        %v9928 = vsub.f32 1.5, %v9927
        %v9929 = vmul.f32 %v9924, %v9928
        %vm9930 = vweird.f32 %v9871
        %vm9931 = vweird.f32 %v9924
        %vm9932 = vmor %vm9930, %vm9931
        %v9933 = vsel %vm9932, %v9924, %v9929
        %v9934 = vrsqrt.pop %v9872
        %v9935 = vmul.f32 %v9934, %v9872
        %v9936 = vmul.f32 %v9935, %v9934
        %v9937 = vmul.f32 0.5, %v9936
        %v9938 = vsub.f32 1.5, %v9937
        %v9939 = vmul.f32 %v9934, %v9938
        %vm9940 = vweird.f32 %v9872
        %vm9941 = vweird.f32 %v9934
        %vm9942 = vmor %vm9940, %vm9941
        %v9943 = vsel %vm9942, %v9934, %v9939
        %v9944 = vrsqrt.pop %v9873
        %v9945 = vmul.f32 %v9944, %v9873
        %v9946 = vmul.f32 %v9945, %v9944
        %v9947 = vmul.f32 0.5, %v9946
        %v9948 = vsub.f32 1.5, %v9947
        %v9949 = vmul.f32 %v9944, %v9948
        %vm9950 = vweird.f32 %v9873
        %vm9951 = vweird.f32 %v9944
        %vm9952 = vmor %vm9950, %vm9951
        %v9953 = vsel %vm9952, %v9944, %v9949
        %v9954 = vmul.f32 %v9883, 4.0
        %v9955 = vmul.f32 %v9893, 4.0
        %v9956 = vmul.f32 %v9903, 4.0
        %v9957 = vmul.f32 %v9913, 4.0
        %v9958 = vmul.f32 %v9923, 4.0
        %v9959 = vmul.f32 %v9933, 4.0
        %v9960 = vmul.f32 %v9943, 4.0
        %v9961 = vmul.f32 %v9953, 4.0
        %v9962 = vmul.f32 %v9072, %v9954
        %v9963 = vmul.f32 %v9073, %v9955
        %v9964 = vmul.f32 %v9074, %v9956
        %v9965 = vmul.f32 %v9075, %v9957
        %v9966 = vmul.f32 %v9076, %v9958
        %v9967 = vmul.f32 %v9077, %v9959
        %v9968 = vmul.f32 %v9078, %v9960
        %v9969 = vmul.f32 %v9079, %v9961
        %s9970 = scalar_lea.vmem %s906, 224 [#allocation3]
        %v9971 = vld [vmem:[%s9970] sm:$0xf]
        %v9972 = vld [vmem:[%s9970 + $0x4] sm:$0xf]
        %v9973 = vld [vmem:[%s9970 + $0x8] sm:$0xf]
        %v9974 = vld [vmem:[%s9970 + $0xc] sm:$0xf]
        %v9975 = vld [vmem:[%s9970 + $0x10] sm:$0xf]
        %v9976 = vld [vmem:[%s9970 + $0x14] sm:$0xf]
        %v9977 = vld [vmem:[%s9970 + $0x18] sm:$0xf]
        %v9978 = vld [vmem:[%s9970 + $0x1c] sm:$0xf]
        %v9979 = vunpack.c.l.bf16 %v9971
        %v9980 = vunpack.c.l.bf16 %v9972
        %v9981 = vunpack.c.l.bf16 %v9973
        %v9982 = vunpack.c.l.bf16 %v9974
        %v9983 = vunpack.c.l.bf16 %v9975
        %v9984 = vunpack.c.l.bf16 %v9976
        %v9985 = vunpack.c.l.bf16 %v9977
        %v9986 = vunpack.c.l.bf16 %v9978
        %v9987 = vadd.f32 %v9962, %v9979
        %v9988 = vadd.f32 %v9963, %v9980
        %v9989 = vadd.f32 %v9964, %v9981
        %v9990 = vadd.f32 %v9965, %v9982
        %v9991 = vadd.f32 %v9966, %v9983
        %v9992 = vadd.f32 %v9967, %v9984
        %v9993 = vadd.f32 %v9968, %v9985
        %v9994 = vadd.f32 %v9969, %v9986
        %v9995 = vpack.c.bf16 %v9988, %v9987
        %v9996 = vpack.c.bf16 %v9990, %v9989
        %v9997 = vpack.c.bf16 %v9992, %v9991
        %v9998 = vpack.c.bf16 %v9994, %v9993
        %9999 = vmatpush.bf16.msra.mxu0 %v2535
        %10000 = vmatpush.bf16.msra.mxu0 %v2534
        %10001 = vmatpush.bf16.msra.mxu0 %v2533
        %10002 = vmatpush.bf16.msra.mxu0 %v2532
        %10003 = vmatpush.bf16.msra.mxu0 %v2531
        %10004 = vmatpush.bf16.msra.mxu0 %v2530
        %10005 = vmatpush.bf16.msra.mxu0 %v2529
        %10006 = vmatpush.bf16.msra.mxu0 %v2528
        %10007 = vmatmul.bf16.gmra.mxu0 %v9995
        %v10008 = vpop.f32.mrf.mxu0
        %v10009 = vadd.f32 %v1005, %v10008
        %v10010 = vpop.f32.mrf.mxu0
        %v10011 = vadd.f32 %v1005, %v10010
        %10012 = vmatmul.bf16.gmra.mxu0 %v9996
        %v10013 = vpop.f32.mrf.mxu0
        %v10014 = vadd.f32 %v1005, %v10013
        %v10015 = vpop.f32.mrf.mxu0
        %v10016 = vadd.f32 %v1005, %v10015
        %10017 = vmatmul.bf16.gmra.mxu0 %v9997
        %v10018 = vpop.f32.mrf.mxu0
        %v10019 = vadd.f32 %v1005, %v10018
        %v10020 = vpop.f32.mrf.mxu0
        %v10021 = vadd.f32 %v1005, %v10020
        %10022 = vmatmul.bf16.gmra.mxu0 %v9998
        %v10023 = vpop.f32.mrf.mxu0
        %v10024 = vadd.f32 %v1005, %v10023
        %v10025 = vpop.f32.mrf.mxu0
        %v10026 = vadd.f32 %v1005, %v10025
        %10027 = vdwg.mxu0
        %v10028 = vmul.f32 %v9024, 0.9
        %v10029 = vmul.f32 %v9025, 0.9
        %v10030 = vmul.f32 %v9026, 0.9
        %v10031 = vmul.f32 %v9027, 0.9
        %v10032 = vmul.f32 %v9028, 0.9
        %v10033 = vmul.f32 %v9029, 0.9
        %v10034 = vmul.f32 %v9030, 0.9
        %v10035 = vmul.f32 %v9031, 0.9
        %v10036 = vadd.f32 %v10028, %v10009
        %v10037 = vadd.f32 %v10029, %v10011
        %v10038 = vadd.f32 %v10030, %v10014
        %v10039 = vadd.f32 %v10031, %v10016
        %v10040 = vadd.f32 %v10032, %v10019
        %v10041 = vadd.f32 %v10033, %v10021
        %v10042 = vadd.f32 %v10034, %v10024
        %v10043 = vadd.f32 %v10035, %v10026
        %vm10044 = vcmp.ge.f32.partialorder %v10036, 0.5
        %vm10045 = vcmp.ge.f32.partialorder %v10037, 0.5
        %vm10046 = vcmp.ge.f32.partialorder %v10038, 0.5
        %vm10047 = vcmp.ge.f32.partialorder %v10039, 0.5
        %vm10048 = vcmp.ge.f32.partialorder %v10040, 0.5
        %vm10049 = vcmp.ge.f32.partialorder %v10041, 0.5
        %vm10050 = vcmp.ge.f32.partialorder %v10042, 0.5
        %vm10051 = vcmp.ge.f32.partialorder %v10043, 0.5
        %v10052 = vsel %vm10044, 1, 0
        %v10053 = vsel %vm10045, 1, 0
        %v10054 = vsel %vm10046, 1, 0
        %v10055 = vsel %vm10047, 1, 0
        %v10056 = vsel %vm10048, 1, 0
        %v10057 = vsel %vm10049, 1, 0
        %v10058 = vsel %vm10050, 1, 0
        %v10059 = vsel %vm10051, 1, 0
        %v10060 = vcvt.s32.f32 %v10052
        %v10061 = vcvt.s32.f32 %v10053
        %v10062 = vcvt.s32.f32 %v10054
        %v10063 = vcvt.s32.f32 %v10055
        %v10064 = vcvt.s32.f32 %v10056
        %v10065 = vcvt.s32.f32 %v10057
        %v10066 = vcvt.s32.f32 %v10058
        %v10067 = vcvt.s32.f32 %v10059
        %v10068 = vadd.f32 %v9032, %v10060
        %v10069 = vadd.f32 %v9033, %v10061
        %v10070 = vadd.f32 %v9034, %v10062
        %v10071 = vadd.f32 %v9035, %v10063
        %v10072 = vadd.f32 %v9036, %v10064
        %v10073 = vadd.f32 %v9037, %v10065
        %v10074 = vadd.f32 %v9038, %v10066
        %v10075 = vadd.f32 %v9039, %v10067
        %v10076 = vpack.c.bf16 %v10069, %v10068
        %v10077 = vpack.c.bf16 %v10071, %v10070
        %v10078 = vpack.c.bf16 %v10073, %v10072
        %v10079 = vpack.c.bf16 %v10075, %v10074
        %v10096 = vunpack.c.l.b16 %v987
        %v10097 = vunpack.c.l.b16 %v988
        %v10098 = vunpack.c.l.b16 %v989
        %v10099 = vunpack.c.l.b16 %v990
        %v10100 = vunpack.c.l.b16 %v991
        %v10101 = vunpack.c.l.b16 %v992
        %v10102 = vunpack.c.l.b16 %v993
        %v10103 = vunpack.c.l.b16 %v994
        %v10104 = vunpack.c.l.b16 %v995
        %v10105 = vunpack.c.l.b16 %v996
        %v10106 = vunpack.c.l.b16 %v997
        %v10107 = vunpack.c.l.b16 %v998
        %v10108 = vunpack.c.l.b16 %v999
        %v10109 = vunpack.c.l.b16 %v1000
        %v10110 = vunpack.c.l.b16 %v1001
        %v10111 = vunpack.c.l.b16 %v1002
        %v10112 = vpack.c.b16 %v10097, %v10096
        %v10113 = vpack.c.b16 %v10099, %v10098
        %v10114 = vpack.c.b16 %v10101, %v10100
        %v10115 = vpack.c.b16 %v10103, %v10102
        %v10116 = vpack.c.b16 %v10105, %v10104
        %v10117 = vpack.c.b16 %v10107, %v10106
        %v10118 = vpack.c.b16 %v10109, %v10108
        %v10119 = vpack.c.b16 %v10111, %v10110
        %10128 = vmatpush.bf16.msra.mxu0 %v10119
        %10129 = vmatpush.bf16.msra.mxu0 %v10118
        %10130 = vmatpush.bf16.msra.mxu0 %v10117
        %10131 = vmatpush.bf16.msra.mxu0 %v10116
        %10132 = vmatpush.bf16.msra.mxu0 %v10115
        %10133 = vmatpush.bf16.msra.mxu0 %v10114
        %10134 = vmatpush.bf16.msra.mxu0 %v10113
        %10135 = vmatpush.bf16.msra.mxu0 %v10112
        %10136 = vmatmul.bf16.gmra.mxu0 %v10076
        %v10137 = vpop.f32.mrf.mxu0
        %v10138 = vadd.f32 0.0, %v10137
        %v10139 = vpop.f32.mrf.mxu0
        %v10140 = vadd.f32 0.0, %v10139
        %10141 = vmatmul.bf16.gmra.mxu0 %v10077
        %v10142 = vpop.f32.mrf.mxu0
        %v10143 = vadd.f32 0.0, %v10142
        %v10144 = vpop.f32.mrf.mxu0
        %v10145 = vadd.f32 0.0, %v10144
        %10146 = vmatmul.bf16.gmra.mxu0 %v10078
        %v10147 = vpop.f32.mrf.mxu0
        %v10148 = vadd.f32 0.0, %v10147
        %v10149 = vpop.f32.mrf.mxu0
        %v10150 = vadd.f32 0.0, %v10149
        %10151 = vmatmul.bf16.gmra.mxu0 %v10079
        %v10152 = vpop.f32.mrf.mxu0
        %v10153 = vadd.f32 0.0, %v10152
        %v10154 = vpop.f32.mrf.mxu0
        %v10155 = vadd.f32 0.0, %v10154
        %10156 = vdwg.mxu0
        %v10157 = vmul.f32 %v10138, 0.125
        %v10158 = vmul.f32 %v10140, 0.125
        %v10159 = vmul.f32 %v10143, 0.125
        %v10160 = vmul.f32 %v10145, 0.125
        %v10161 = vmul.f32 %v10148, 0.125
        %v10162 = vmul.f32 %v10150, 0.125
        %v10163 = vmul.f32 %v10153, 0.125
        %v10164 = vmul.f32 %v10155, 0.125
        %v10165 = vld [vmem:[%s7] sm:$0x1]
        %v10167 = vperm.slane %v10165, 0
        %v10169 = vadd.f32 %v10157, %v10167
        %v10170 = vadd.f32 %v10158, %v10167
        %v10171 = vadd.f32 %v10159, %v10167
        %v10172 = vadd.f32 %v10160, %v10167
        %v10173 = vadd.f32 %v10161, %v10167
        %v10174 = vadd.f32 %v10162, %v10167
        %v10175 = vadd.f32 %v10163, %v10167
        %v10176 = vadd.f32 %v10164, %v10167
        %10177 = vst [vmem:[%s954] sm:$0xff] %v10169
        %10178 = vst [vmem:[%s954 + $0x8] sm:$0xff] %v10170
        %10179 = vst [vmem:[%s954 + $0x10] sm:$0xff] %v10171
        %10180 = vst [vmem:[%s954 + $0x18] sm:$0xff] %v10172
        %10181 = vst [vmem:[%s954 + $0x20] sm:$0xff] %v10173
        %10182 = vst [vmem:[%s954 + $0x28] sm:$0xff] %v10174
        %10183 = vst [vmem:[%s954 + $0x30] sm:$0xff] %v10175
        %10184 = vst [vmem:[%s954 + $0x38] sm:$0xff] %v10176
        %s10185 = smul.u32 8, %s21
        %p10186 = scmp.lt.s32.totalorder %s10185, 15
        %s10187 = scalar_select %p10186, %s10185, 15
        %s10188 = smul.addr %s10187, 8
        %s10189 = scalar_lea.vmem %s8, %s10188
        %s10190 = smul.u32 64, %s21
        %p10191 = scmp.lt.s32.totalorder %s10190, 127
        %s10192 = scalar_select %p10191, %s10190, 127
        %s10193 = smul.addr %s10192, 4
        %s10194 = scalar_lea.vmem %s9, %s10193
        // Predicated region
        $region135: #{shd_jscc_forward.1} parent=125 // pred_check
          %p10195 = pneg %p217
        $region136: #{shd_jscc_forward.1} parent=125 // pred_check_branch
          %10197 = sbr.rel (%p10195) target = $region138
        $region137: #{shd_jscc_forward.1} parent=125 // pred_region
          %s10198 = smul.u32 8, %s21
        $region138: #{shd_jscc_forward.1} parent=125 // pred_fallthru
          _
        // Predicated region
        $region139: #{shd_jscc_forward.1} parent=125 // pred_check
          %p10199 = pneg %p243
        $region140: #{shd_jscc_forward.1} parent=125 // pred_check_branch
          %10201 = sbr.rel (%p10199) target = $region142
        $region141: #{shd_jscc_forward.1} parent=125 // pred_region
          %s10202 = smul.u32 64, %s21
        $region142: #{shd_jscc_forward.1} parent=125 // pred_fallthru
          _
      $region126: #{shd_jscc_forward.1} parent=5 // pred_fallthru
        _
      %p10203 = scmp.le.s32.totalorder 2, %s16
      // Predicated region
      $region143: #{shd_jscc_forward.1} parent=5 // pred_check
        %p10204 = pneg %p10203
      $region144: #{shd_jscc_forward.1} parent=5 // pred_check_branch
        %10206 = sbr.rel (%p10204) target = $region146
      $region145: #{shd_jscc_forward.1} parent=5 // pred_region
        %s10207 = ssub.s32 %s16, 2
        // Predicated region
        $region147: #{shd_jscc_forward.1} parent=145 // pred_check
          %p10208 = pneg %p223
        $region148: #{shd_jscc_forward.1} parent=145 // pred_check_branch
          %10210 = sbr.rel (%p10208) target = $region150
        $region149: #{shd_jscc_forward.1} parent=145 // pred_region
          %s10211 = smul.u32 8, %s22
          %p10212 = scmp.lt.s32.totalorder %s10211, 15
          %s10213 = scalar_select %p10212, %s10211, 15
          %s10214 = smul.addr %s10213, 8
          %s10215 = scalar_lea.vmem %s8, %s10214
        $region150: #{shd_jscc_forward.1} parent=145 // pred_fallthru
          _
        // Predicated region
        $region151: #{shd_jscc_forward.1} parent=145 // pred_check
          %p10216 = pneg %p249
        $region152: #{shd_jscc_forward.1} parent=145 // pred_check_branch
          %10218 = sbr.rel (%p10216) target = $region154
        $region153: #{shd_jscc_forward.1} parent=145 // pred_region
          %s10219 = smul.u32 64, %s22
          %p10220 = scmp.lt.s32.totalorder %s10219, 127
          %s10221 = scalar_select %p10220, %s10219, 127
          %s10222 = smul.addr %s10221, 4
          %s10223 = scalar_lea.vmem %s9, %s10222
        $region154: #{shd_jscc_forward.1} parent=145 // pred_fallthru
          _
      $region146: #{shd_jscc_forward.1} parent=5 // pred_fallthru
        _
    $region6: #{shd_jscc_forward.1} parent=1 // loop_footer
      %s20 = sadd.s32 1, %s16
    $region7: #{shd_jscc_forward.1} parent=1 // loop_footer_branch
      %15 = sbr.rel target = $region3
    $region8: #{shd_jscc_forward.1} parent=1 // loop_exit
      _

</llo_original>
